<compile_context>
chip_gen: v5e
topology: v5e:2x2
jax: 0.10.0
libtpu: 0.0.40
codegen_flags: <defaults>
</compile_context>

<pallas_src>
import numpy as np
import jax
import jax.numpy as jnp
from jax import lax
from jax.experimental import pallas as pl
from jax.experimental.pallas import tpu as pltpu

BN_EPS = 1e-5
LANE = 128          # TPU lane width; channel dims are zero-padded to this


def _vmem_limit_bytes():
    # Budget ~3/4 of physical VMEM, clamped to [32, 96] MiB (v5e/v6e: 128 MiB,
    # v7x: 64 MiB).  This is a cap, not a reservation — safe on all generations.
    try:
        cap = int(pltpu.get_tpu_info().vmem_capacity_bytes)
    except Exception:
        cap = 64 * 1024 * 1024
    return max(32 * 1024 * 1024, min(cap * 3 // 4, 96 * 1024 * 1024))


# ----------------------------------------------------------------------------- kernels
def make_double_conv_kernel(B, H, W, Cp):
    """Per batch-block: conv3x3(pad=1) -> conv3x3(pad=1).  Emits pre-BN activations
    plus per-block per-channel (sum, sum_sq) partials for the cross-block BatchNorm.
    Each conv = 9 accumulating bf16 MXU matmuls over shifted slices (no im2col concat)."""
    Hp, Wp = H + 2, W + 2
    M = B * H * W
    f32, bf16 = jnp.float32, jnp.bfloat16

    def conv3x3(get_tap, w_ref, bias_row):
        acc = jnp.zeros((M, Cp), f32)
        for t in range(9):
            dy, dx = t // 3, t % 3
            tap = get_tap(dy, dx).reshape(M, Cp).astype(bf16)       # bf16 MXU operand
            acc = acc + jnp.dot(tap, w_ref[t], preferred_element_type=f32)
        return acc + bias_row

    def kernel(xp_ref, w1_ref, b1_ref, w2_ref, b2_ref, y2_ref, pst_ref, y1p_ref):
        xp = xp_ref[...]                                            # (B, Hp, Wp, Cp) f32
        y1 = conv3x3(lambda dy, dx: xp[:, dy:dy + H, dx:dx + W, :],
                     w1_ref, b1_ref[...])                           # (M, Cp) f32

        # Re-pad conv1's output for conv2: zero ONLY the 1-px halo (the interior is
        # fully overwritten right below) — no full-buffer zero fill on the vst slot.
        y1p_ref[:, 0:1, :, :] = jnp.zeros((B, 1, Wp, Cp), f32)
        y1p_ref[:, H + 1:H + 2, :, :] = jnp.zeros((B, 1, Wp, Cp), f32)
        y1p_ref[:, :, 0:1, :] = jnp.zeros((B, Hp, 1, Cp), f32)
        y1p_ref[:, :, W + 1:W + 2, :] = jnp.zeros((B, Hp, 1, Cp), f32)
        y1p_ref[:, 1:H + 1, 1:W + 1, :] = y1.reshape(B, H, W, Cp)

        yp = y1p_ref[...]                                           # (B, Hp, Wp, Cp)
        y2 = conv3x3(lambda dy, dx: yp[:, dy:dy + H, dx:dx + W, :],
                     w2_ref, b2_ref[...])                           # (M, Cp) f32

        y2_ref[...] = y2.reshape(B, H, W, Cp)
        pst_ref[...] = jnp.concatenate(
            [jnp.sum(y2, axis=0, keepdims=True),
             jnp.sum(y2 * y2, axis=0, keepdims=True)], axis=0)      # (2, Cp)

    return kernel


def make_bn_relu_down_kernel(Rtot, B, H, W, Cp):
    """Per batch-block: BatchNorm(batch stats)+ReLU fused with the 2x2/stride-2 conv;
    BN1+ReLU applied per strided tap, 4 accumulating bf16 matmuls (no lane concat).
    Emits per-block (sum, sum_sq) partials for the second BatchNorm."""
    Ho, Wo = H // 2, W // 2
    M = B * Ho * Wo
    inv_R = 1.0 / float(Rtot)
    f32, bf16 = jnp.float32, jnp.bfloat16

    def kernel(y2_ref, pst1_ref, g1_ref, be1_ref, w3_ref, b3_ref, y3_ref, pst2_ref):
        # Combine per-block partials -> batch stats (single-pass E[x^2]-E[x]^2 form).
        s = jnp.sum(pst1_ref[...], axis=0)                          # (2, Cp)
        mean = s[0:1, :] * inv_R
        var = jnp.maximum(s[1:2, :] * inv_R - mean * mean, 0.0)     # clamp f32 roundoff
        scale = lax.rsqrt(var + BN_EPS) * g1_ref[...]               # (1, Cp)
        shift = be1_ref[...] - mean * scale                         # (1, Cp)

        acc = jnp.zeros((M, Cp), f32)
        for t in range(4):
            dy, dx = t // 2, t % 2
            tap = y2_ref[:, pl.ds(dy, Ho, stride=2), pl.ds(dx, Wo, stride=2), :]
            tap = tap.reshape(M, Cp)                                # (M, Cp) f32
            act = jnp.maximum(tap * scale + shift, 0.0)             # BN1 + ReLU
            acc = acc + jnp.dot(act.astype(bf16), w3_ref[t],
                                preferred_element_type=f32)
        y3 = acc + b3_ref[...]                                      # (M, Cp) f32

        y3_ref[...] = y3.reshape(B, Ho * Wo, Cp)
        pst2_ref[...] = jnp.concatenate(
            [jnp.sum(y3, axis=0, keepdims=True),
             jnp.sum(y3 * y3, axis=0, keepdims=True)], axis=0)      # (2, Cp)

    return kernel


def make_bn_relu_kernel(Rtot, Cp):
    """Per batch-block: final BatchNorm(batch stats) + ReLU."""
    inv_R = 1.0 / float(Rtot)

    def kernel(y3_ref, pst_ref, g_ref, be_ref, o_ref):
        s = jnp.sum(pst_ref[...], axis=0)                           # (2, Cp)
        mean = s[0:1, :] * inv_R
        var = jnp.maximum(s[1:2, :] * inv_R - mean * mean, 0.0)
        scale = lax.rsqrt(var + BN_EPS) * g_ref[...]
        shift = be_ref[...] - mean * scale
        o_ref[...] = jnp.maximum(y3_ref[...] * scale + shift, 0.0)

    return kernel


# ----------------------------------------------------------------------------- wrapper
def downblock_forward(x_nchw, params):
    N, Cin, H, W = x_nchw.shape
    Cout = params["w3"].shape[-1]
    assert H % 2 == 0 and W % 2 == 0
    assert Cin <= LANE and Cout <= LANE      # TODO(synk): tile channels when C > 128
    Cp = LANE
    Hp, Wp = H + 2, W + 2
    Ho, Wo = H // 2, W // 2
    f32, bf16 = jnp.float32, jnp.bfloat16

    # Several images per grid step (amortize ~0.35us/step + taller matmul M).
    B = 1
    for cand in (8, 4, 2):
        if N % cand == 0:
            B = cand
            break
    nblk = N // B

    # Layout glue: NCHW -> NHWC, 1-px zero spatial halo, zero channel pad to 128 lanes.
    # NOTE: zero-padding of biases / gamma / beta is load-bearing — padded channels stay
    # exactly 0 through every conv/BN/ReLU stage (gamma_pad=0 => scale=shift=0).
    x = jnp.transpose(x_nchw, (0, 2, 3, 1)).astype(f32)
    xp = jnp.pad(x, ((0, 0), (1, 1), (1, 1), (0, Cp - Cin)))

    def pad_w(w):   # (kh, kw, ci, co) -> (kh*kw, Cp, Cp) bf16 (MXU operand)
        kh, kw, ci, co = w.shape
        wp = jnp.pad(w.astype(f32), ((0, 0), (0, 0), (0, Cp - ci), (0, Cp - co)))
        return wp.reshape(kh * kw, Cp, Cp).astype(bf16)

    def pad_v(v):   # (1, c) -> (1, Cp) f32 (VPU side stays f32)
        return jnp.pad(v.astype(f32).reshape(1, -1), ((0, 0), (0, Cp - v.shape[-1])))

    w1, b1 = pad_w(params["w1"]), pad_v(params["b1"])
    w2, b2 = pad_w(params["w2"]), pad_v(params["b2"])
    w3, b3 = pad_w(params["w3"]), pad_v(params["b3"])
    g1, be1 = pad_v(params["g1"]), pad_v(params["be1"])
    g2, be2 = pad_v(params["g2"]), pad_v(params["be2"])

    cparams = pltpu.CompilerParams(
        dimension_semantics=("parallel",),           # independent per batch block
        vmem_limit_bytes=_vmem_limit_bytes())

    # Pass 1: DoubleConv (conv3x3 -> conv3x3) + per-block BN1 partial stats.
    y2, ps1 = pl.pallas_call(
        make_double_conv_kernel(B, H, W, Cp),
        out_shape=(jax.ShapeDtypeStruct((N, H, W, Cp), f32),
                   jax.ShapeDtypeStruct((nblk, 2, Cp), f32)),
        grid=(nblk,),
        in_specs=[
            pl.BlockSpec((B, Hp, Wp, Cp), lambda n: (n, 0, 0, 0)),
            pl.BlockSpec((9, Cp, Cp), lambda n: (0, 0, 0)),
            pl.BlockSpec((1, Cp), lambda n: (0, 0)),
            pl.BlockSpec((9, Cp, Cp), lambda n: (0, 0, 0)),
            pl.BlockSpec((1, Cp), lambda n: (0, 0)),
        ],
        out_specs=(
            pl.BlockSpec((B, H, W, Cp), lambda n: (n, 0, 0, 0)),
            pl.BlockSpec((pl.Squeezed(), 2, Cp), lambda n: (n, 0, 0)),
        ),
        scratch_shapes=[pltpu.VMEM((B, Hp, Wp, Cp), f32)],
        compiler_params=cparams,
    )(xp, w1, b1, w2, b2)

    # Pass 2: BN1 + ReLU fused with the 2x2/stride-2 conv, + BN2 partial stats.
    y3, ps2 = pl.pallas_call(
        make_bn_relu_down_kernel(N * H * W, B, H, W, Cp),
        out_shape=(jax.ShapeDtypeStruct((N, Ho * Wo, Cp), f32),
                   jax.ShapeDtypeStruct((nblk, 2, Cp), f32)),
        grid=(nblk,),
        in_specs=[
            pl.BlockSpec((B, H, W, Cp), lambda n: (n, 0, 0, 0)),
            pl.BlockSpec((nblk, 2, Cp), lambda n: (0, 0, 0)),
            pl.BlockSpec((1, Cp), lambda n: (0, 0)),
            pl.BlockSpec((1, Cp), lambda n: (0, 0)),
            pl.BlockSpec((4, Cp, Cp), lambda n: (0, 0, 0)),
            pl.BlockSpec((1, Cp), lambda n: (0, 0)),
        ],
        out_specs=(
            pl.BlockSpec((B, Ho * Wo, Cp), lambda n: (n, 0, 0)),
            pl.BlockSpec((pl.Squeezed(), 2, Cp), lambda n: (n, 0, 0)),
        ),
        compiler_params=cparams,
    )(y2, ps1, g1, be1, w3, b3)

    # Pass 3: BN2 + ReLU.
    out = pl.pallas_call(
        make_bn_relu_kernel(N * Ho * Wo, Cp),
        out_shape=jax.ShapeDtypeStruct((N, Ho * Wo, Cp), f32),
        grid=(nblk,),
        in_specs=[
            pl.BlockSpec((B, Ho * Wo, Cp), lambda n: (n, 0, 0)),
            pl.BlockSpec((nblk, 2, Cp), lambda n: (0, 0, 0)),
            pl.BlockSpec((1, Cp), lambda n: (0, 0)),
            pl.BlockSpec((1, Cp), lambda n: (0, 0)),
        ],
        out_specs=pl.BlockSpec((B, Ho * Wo, Cp), lambda n: (n, 0, 0)),
        compiler_params=cparams,
    )(y3, ps2, g2, be2)

    # Strip channel padding, NHWC -> NCHW.
    out = out.reshape(N, Ho, Wo, Cp)[:, :, :, :Cout]
    return jnp.transpose(out, (0, 3, 1, 2))


# ----------------------------------------------------------------------------- params / ref
def init_params(key, cin, cout):
    # Deterministic synthetic parameters (shapes from the module __init__).
    # Conv weights stored as (kh, kw, Cin, Cout); biases / BN params as (1, C).
    ks = jax.random.split(key, 8)
    s = 0.2
    return dict(
        w1=s * jax.random.normal(ks[0], (3, 3, cin, cin), jnp.float32),
        b1=s * jax.random.normal(ks[1], (1, cin), jnp.float32),
        w2=s * jax.random.normal(ks[2], (3, 3, cin, cin), jnp.float32),
        b2=s * jax.random.normal(ks[3], (1, cin), jnp.float32),
        g1=1.0 + 0.1 * jax.random.normal(ks[4], (1, cin), jnp.float32),
        be1=0.1 * jax.random.normal(ks[5], (1, cin), jnp.float32),
        w3=s * jax.random.normal(ks[6], (2, 2, cin, cout), jnp.float32),
        b3=s * jax.random.normal(ks[7], (1, cout), jnp.float32),
        g2=jnp.ones((1, cout), jnp.float32),     # PyTorch BN default affine init
        be2=jnp.zeros((1, cout), jnp.float32),
    )


def downblock_reference(x_nchw, p):
    # Pure-JAX f32 reference (different code path: explicit padding / strided slicing).
    x = jnp.transpose(x_nchw, (0, 2, 3, 1)).astype(jnp.float32)   # NHWC

    def conv3x3(x, w, b):
        N, H, W, _ = x.shape
        xp = jnp.pad(x, ((0, 0), (1, 1), (1, 1), (0, 0)))
        out = jnp.zeros((N, H, W, w.shape[-1]), jnp.float32)
        for dy in range(3):
            for dx in range(3):
                out = out + jnp.einsum("nhwc,cd->nhwd",
                                       xp[:, dy:dy + H, dx:dx + W, :], w[dy, dx])
        return out + b.reshape(1, 1, 1, -1)

    def bn_relu(x, g, be):
        mean = x.mean(axis=(0, 1, 2), keepdims=True)
        var = jnp.mean(jnp.square(x - mean), axis=(0, 1, 2), keepdims=True)
        xn = (x - mean) * jax.lax.rsqrt(var + BN_EPS) * g.reshape(1, 1, 1, -1) \
             + be.reshape(1, 1, 1, -1)
        return jnp.maximum(xn, 0.0)

    y = conv3x3(x, p["w1"], p["b1"])
    y = conv3x3(y, p["w2"], p["b2"])
    y = bn_relu(y, p["g1"], p["be1"])
    N, H, W, _ = y.shape
    out = jnp.zeros((N, H // 2, W // 2, p["w3"].shape[-1]), jnp.float32)
    for dy in range(2):
        for dx in range(2):
            out = out + jnp.einsum("nhwc,cd->nhwd", y[:, dy::2, dx::2, :],
                                   p["w3"][dy, dx])
    out = out + p["b3"].reshape(1, 1, 1, -1)
    out = bn_relu(out, p["g2"], p["be2"])
    return jnp.transpose(out, (0, 3, 1, 2))


if __name__ == "__main__":
    key = jax.random.PRNGKey(0)
    kx, kp = jax.random.split(key)
    N, Cin, Cout, H, W = 2, 4, 16, 16, 16
    N, Cin, Cout, H, W = 2, 4, 8, 16, 16
    x = jax.random.normal(kx, (N, Cin, H, W), jnp.float32)
    params = init_params(kp, Cin, Cout)

    out = jax.jit(downblock_forward)(x, params)
    out = jax.block_until_ready(out)

    assert out.shape == (N, Cout, H // 2, W // 2), out.shape
    ref = downblock_reference(x, params)
    np.testing.assert_allclose(np.asarray(out), np.asarray(ref), atol=5e-2, rtol=5e-2)
    print("KERNEL_OK")
</pallas_src>

<mosaic_0001>
module attributes {stable_mosaic.version = 11 : i64} {
  func.func @kernel(%arg0: i32, %arg1: memref<2x64x128xf32, #tpu.memory_space<vmem>>, %arg2: memref<1x2x128xf32, #tpu.memory_space<vmem>>, %arg3: memref<1x128xf32, #tpu.memory_space<vmem>>, %arg4: memref<1x128xf32, #tpu.memory_space<vmem>>, %arg5: memref<2x64x128xf32, #tpu.memory_space<vmem>>) attributes {dimension_semantics = [#tpu.dimension_semantics<parallel>], iteration_bounds = array<i64: 1>, scalar_prefetch = 0 : i64, scratch_operands = 0 : i64, tpu.core_type = #tpu.core_type<tc>, window_params = [{transform_indices = @transform_0, window_bounds = array<i64: 2, 64, 128>}, {pipeline_mode = #tpu.pipeline_mode<synchronous>, transform_indices = @transform_1, window_bounds = array<i64: 1, 2, 128>}, {pipeline_mode = #tpu.pipeline_mode<synchronous>, transform_indices = @transform_2, window_bounds = array<i64: 1, 128>}, {pipeline_mode = #tpu.pipeline_mode<synchronous>, transform_indices = @transform_3, window_bounds = array<i64: 1, 128>}, {transform_indices = @transform_4, window_bounds = array<i64: 2, 64, 128>}]} {
    %c0 = arith.constant 0 : index
    %c0_0 = arith.constant 0 : index
    %c0_1 = arith.constant 0 : index
    %0 = vector.load %arg2[%c0, %c0_0, %c0_1] : memref<1x2x128xf32, #tpu.memory_space<vmem>>, vector<1x2x128xf32>
    %cst = arith.constant dense<0.000000e+00> : vector<2x128xf32>
    %1 = vector.multi_reduction <add>, %0, %cst [0] : vector<1x2x128xf32> to vector<2x128xf32>
    %2 = vector.extract_strided_slice %1 {offsets = [0, 0], sizes = [1, 128], strides = [1, 1]} : vector<2x128xf32> to vector<1x128xf32>
    %cst_2 = arith.constant 7.812500e-03 : f32
    %3 = vector.broadcast %cst_2 : f32 to vector<1x128xf32>
    %4 = arith.mulf %2, %3 : vector<1x128xf32>
    %5 = vector.extract_strided_slice %1 {offsets = [1, 0], sizes = [1, 128], strides = [1, 1]} : vector<2x128xf32> to vector<1x128xf32>
    %cst_3 = arith.constant 7.812500e-03 : f32
    %6 = vector.broadcast %cst_3 : f32 to vector<1x128xf32>
    %7 = arith.mulf %5, %6 : vector<1x128xf32>
    %8 = arith.mulf %4, %4 : vector<1x128xf32>
    %9 = arith.subf %7, %8 : vector<1x128xf32>
    %cst_4 = arith.constant 0.000000e+00 : f32
    %10 = vector.broadcast %cst_4 : f32 to vector<1x128xf32>
    %11 = arith.maximumf %9, %10 : vector<1x128xf32>
    %cst_5 = arith.constant 9.99999974E-6 : f32
    %12 = vector.broadcast %cst_5 : f32 to vector<1x128xf32>
    %13 = arith.addf %11, %12 : vector<1x128xf32>
    %14 = math.rsqrt %13 : vector<1x128xf32>
    %c0_6 = arith.constant 0 : index
    %c0_7 = arith.constant 0 : index
    %15 = vector.load %arg3[%c0_6, %c0_7] : memref<1x128xf32, #tpu.memory_space<vmem>>, vector<1x128xf32>
    %16 = arith.mulf %14, %15 : vector<1x128xf32>
    %c0_8 = arith.constant 0 : index
    %c0_9 = arith.constant 0 : index
    %17 = vector.load %arg4[%c0_8, %c0_9] : memref<1x128xf32, #tpu.memory_space<vmem>>, vector<1x128xf32>
    %18 = arith.mulf %4, %16 : vector<1x128xf32>
    %19 = arith.subf %17, %18 : vector<1x128xf32>
    %c0_10 = arith.constant 0 : index
    %c0_11 = arith.constant 0 : index
    %c0_12 = arith.constant 0 : index
    %20 = vector.load %arg1[%c0_10, %c0_11, %c0_12] : memref<2x64x128xf32, #tpu.memory_space<vmem>>, vector<2x64x128xf32>
    %21 = vector.shape_cast %16 : vector<1x128xf32> to vector<1x1x128xf32>
    %22 = vector.broadcast %21 : vector<1x1x128xf32> to vector<2x64x128xf32>
    %23 = arith.mulf %20, %22 : vector<2x64x128xf32>
    %24 = vector.shape_cast %19 : vector<1x128xf32> to vector<1x1x128xf32>
    %25 = vector.broadcast %24 : vector<1x1x128xf32> to vector<2x64x128xf32>
    %26 = arith.addf %23, %25 : vector<2x64x128xf32>
    %cst_13 = arith.constant 0.000000e+00 : f32
    %27 = vector.broadcast %cst_13 : f32 to vector<2x64x128xf32>
    %28 = arith.maximumf %26, %27 : vector<2x64x128xf32>
    %c0_14 = arith.constant 0 : index
    %c0_15 = arith.constant 0 : index
    %c0_16 = arith.constant 0 : index
    %29 = vector.load %arg5[%c0_14, %c0_15, %c0_16] : memref<2x64x128xf32, #tpu.memory_space<vmem>>, vector<2x64x128xf32>
    tpu.vector_store %arg5[%c0_14, %c0_15, %c0_16], %28 {strides = array<i32>} : memref<2x64x128xf32, #tpu.memory_space<vmem>>, vector<2x64x128xf32>,
    return
  }
  func.func @transform_0(%arg0: i32) -> (i32, i32, i32) {
    %c0_i32 = arith.constant 0 : i32
    %c0_i32_0 = arith.constant 0 : i32
    %c0_i32_1 = arith.constant 0 : i32
    return %arg0, %c0_i32, %c0_i32_0 : i32, i32, i32
  }
  func.func @transform_1(%arg0: i32) -> (i32, i32, i32) {
    %c0_i32 = arith.constant 0 : i32
    %c0_i32_0 = arith.constant 0 : i32
    %c0_i32_1 = arith.constant 0 : i32
    %c0_i32_2 = arith.constant 0 : i32
    return %c0_i32, %c0_i32_0, %c0_i32_1 : i32, i32, i32
  }
  func.func @transform_2(%arg0: i32) -> (i32, i32) {
    %c0_i32 = arith.constant 0 : i32
    %c0_i32_0 = arith.constant 0 : i32
    %c0_i32_1 = arith.constant 0 : i32
    return %c0_i32, %c0_i32_0 : i32, i32
  }
  func.func @transform_3(%arg0: i32) -> (i32, i32) {
    %c0_i32 = arith.constant 0 : i32
    %c0_i32_0 = arith.constant 0 : i32
    %c0_i32_1 = arith.constant 0 : i32
    return %c0_i32, %c0_i32_0 : i32, i32
  }
  func.func @transform_4(%arg0: i32) -> (i32, i32, i32) {
    %c0_i32 = arith.constant 0 : i32
    %c0_i32_0 = arith.constant 0 : i32
    %c0_i32_1 = arith.constant 0 : i32
    return %arg0, %c0_i32, %c0_i32_0 : i32, i32, i32
  }
}

module attributes {stable_mosaic.version = 11 : i64} {
  func.func @kernel(%arg0: i32, %arg1: memref<2x16x16x128xf32, #tpu.memory_space<vmem>>, %arg2: memref<1x2x128xf32, #tpu.memory_space<vmem>>, %arg3: memref<1x128xf32, #tpu.memory_space<vmem>>, %arg4: memref<1x128xf32, #tpu.memory_space<vmem>>, %arg5: memref<4x128x128xbf16, #tpu.memory_space<vmem>>, %arg6: memref<1x128xf32, #tpu.memory_space<vmem>>, %arg7: memref<2x64x128xf32, #tpu.memory_space<vmem>>, %arg8: memref<1x2x128xf32, #tpu.memory_space<vmem>>) attributes {dimension_semantics = [#tpu.dimension_semantics<parallel>], iteration_bounds = array<i64: 1>, scalar_prefetch = 0 : i64, scratch_operands = 0 : i64, tpu.core_type = #tpu.core_type<tc>, window_params = [{transform_indices = @transform_0, window_bounds = array<i64: 2, 16, 16, 128>}, {pipeline_mode = #tpu.pipeline_mode<synchronous>, transform_indices = @transform_1, window_bounds = array<i64: 1, 2, 128>}, {pipeline_mode = #tpu.pipeline_mode<synchronous>, transform_indices = @transform_2, window_bounds = array<i64: 1, 128>}, {pipeline_mode = #tpu.pipeline_mode<synchronous>, transform_indices = @transform_3, window_bounds = array<i64: 1, 128>}, {pipeline_mode = #tpu.pipeline_mode<synchronous>, transform_indices = @transform_4, window_bounds = array<i64: 4, 128, 128>}, {pipeline_mode = #tpu.pipeline_mode<synchronous>, transform_indices = @transform_5, window_bounds = array<i64: 1, 128>}, {transform_indices = @transform_6, window_bounds = array<i64: 2, 64, 128>}, {transform_indices = @transform_7, window_bounds = array<i64: 1, 2, 128>}]} {
    %c0 = arith.constant 0 : index
    %c0_0 = arith.constant 0 : index
    %c0_1 = arith.constant 0 : index
    %0 = vector.load %arg2[%c0, %c0_0, %c0_1] : memref<1x2x128xf32, #tpu.memory_space<vmem>>, vector<1x2x128xf32>
    %cst = arith.constant dense<0.000000e+00> : vector<2x128xf32>
    %1 = vector.multi_reduction <add>, %0, %cst [0] : vector<1x2x128xf32> to vector<2x128xf32>
    %2 = vector.extract_strided_slice %1 {offsets = [0, 0], sizes = [1, 128], strides = [1, 1]} : vector<2x128xf32> to vector<1x128xf32>
    %cst_2 = arith.constant 0.001953125 : f32
    %3 = vector.broadcast %cst_2 : f32 to vector<1x128xf32>
    %4 = arith.mulf %2, %3 : vector<1x128xf32>
    %5 = vector.extract_strided_slice %1 {offsets = [1, 0], sizes = [1, 128], strides = [1, 1]} : vector<2x128xf32> to vector<1x128xf32>
    %cst_3 = arith.constant 0.001953125 : f32
    %6 = vector.broadcast %cst_3 : f32 to vector<1x128xf32>
    %7 = arith.mulf %5, %6 : vector<1x128xf32>
    %8 = arith.mulf %4, %4 : vector<1x128xf32>
    %9 = arith.subf %7, %8 : vector<1x128xf32>
    %cst_4 = arith.constant 0.000000e+00 : f32
    %10 = vector.broadcast %cst_4 : f32 to vector<1x128xf32>
    %11 = arith.maximumf %9, %10 : vector<1x128xf32>
    %cst_5 = arith.constant 9.99999974E-6 : f32
    %12 = vector.broadcast %cst_5 : f32 to vector<1x128xf32>
    %13 = arith.addf %11, %12 : vector<1x128xf32>
    %14 = math.rsqrt %13 : vector<1x128xf32>
    %c0_6 = arith.constant 0 : index
    %c0_7 = arith.constant 0 : index
    %15 = vector.load %arg3[%c0_6, %c0_7] : memref<1x128xf32, #tpu.memory_space<vmem>>, vector<1x128xf32>
    %16 = arith.mulf %14, %15 : vector<1x128xf32>
    %c0_8 = arith.constant 0 : index
    %c0_9 = arith.constant 0 : index
    %17 = vector.load %arg4[%c0_8, %c0_9] : memref<1x128xf32, #tpu.memory_space<vmem>>, vector<1x128xf32>
    %18 = arith.mulf %4, %16 : vector<1x128xf32>
    %19 = arith.subf %17, %18 : vector<1x128xf32>
    %cst_10 = arith.constant 0.000000e+00 : f32
    %20 = vector.broadcast %cst_10 : f32 to vector<128x128xf32>
    %c0_11 = arith.constant 0 : index
    %c0_12 = arith.constant 0 : index
    %c0_13 = arith.constant 0 : index
    %c0_14 = arith.constant 0 : index
    %21 = tpu.strided_load %arg1[%c0_11, %c0_12, %c0_13, %c0_14] {strides = array<i32: 1, 2, 2, 1>} : memref<2x16x16x128xf32, #tpu.memory_space<vmem>>, vector<2x8x8x128xf32>
    %22 = vector.shape_cast %21 : vector<2x8x8x128xf32> to vector<128x128xf32>
    %23 = vector.broadcast %16 : vector<1x128xf32> to vector<128x128xf32>
    %24 = arith.mulf %22, %23 : vector<128x128xf32>
    %25 = vector.broadcast %19 : vector<1x128xf32> to vector<128x128xf32>
    %26 = arith.addf %24, %25 : vector<128x128xf32>
    %cst_15 = arith.constant 0.000000e+00 : f32
    %27 = vector.broadcast %cst_15 : f32 to vector<128x128xf32>
    %28 = arith.maximumf %26, %27 : vector<128x128xf32>
    %29 = arith.truncf %28 : vector<128x128xf32> to vector<128x128xbf16>
    %c0_16 = arith.constant 0 : index
    %c0_17 = arith.constant 0 : index
    %c0_18 = arith.constant 0 : index
    %30 = vector.load %arg5[%c0_16, %c0_17, %c0_18] : memref<4x128x128xbf16, #tpu.memory_space<vmem>>, vector<1x128x128xbf16>
    %31 = vector.shape_cast %30 : vector<1x128x128xbf16> to vector<128x128xbf16>
    %cst_19 = arith.constant dense<0.000000e+00> : vector<128x128xf32>
    %32 = tpu.matmul %29, %31, %cst_19 {dimension_numbers = #tpu.dot_dimension_numbers<[1], [0], [0], [1], [0, 0, 1, 1], [], []>} : vector<128x128xbf16>, vector<128x128xbf16>, vector<128x128xf32> -> vector<128x128xf32>
    %33 = arith.addf %20, %32 : vector<128x128xf32>
    %c0_20 = arith.constant 0 : index
    %c0_21 = arith.constant 0 : index
    %c1 = arith.constant 1 : index
    %c0_22 = arith.constant 0 : index
    %34 = tpu.strided_load %arg1[%c0_20, %c0_21, %c1, %c0_22] {strides = array<i32: 1, 2, 2, 1>} : memref<2x16x16x128xf32, #tpu.memory_space<vmem>>, vector<2x8x8x128xf32>
    %35 = vector.shape_cast %34 : vector<2x8x8x128xf32> to vector<128x128xf32>
    %36 = vector.broadcast %16 : vector<1x128xf32> to vector<128x128xf32>
    %37 = arith.mulf %35, %36 : vector<128x128xf32>
    %38 = vector.broadcast %19 : vector<1x128xf32> to vector<128x128xf32>
    %39 = arith.addf %37, %38 : vector<128x128xf32>
    %cst_23 = arith.constant 0.000000e+00 : f32
    %40 = vector.broadcast %cst_23 : f32 to vector<128x128xf32>
    %41 = arith.maximumf %39, %40 : vector<128x128xf32>
    %42 = arith.truncf %41 : vector<128x128xf32> to vector<128x128xbf16>
    %c1_24 = arith.constant 1 : index
    %c0_25 = arith.constant 0 : index
    %c0_26 = arith.constant 0 : index
    %43 = vector.load %arg5[%c1_24, %c0_25, %c0_26] : memref<4x128x128xbf16, #tpu.memory_space<vmem>>, vector<1x128x128xbf16>
    %44 = vector.shape_cast %43 : vector<1x128x128xbf16> to vector<128x128xbf16>
    %cst_27 = arith.constant dense<0.000000e+00> : vector<128x128xf32>
    %45 = tpu.matmul %42, %44, %cst_27 {dimension_numbers = #tpu.dot_dimension_numbers<[1], [0], [0], [1], [0, 0, 1, 1], [], []>} : vector<128x128xbf16>, vector<128x128xbf16>, vector<128x128xf32> -> vector<128x128xf32>
    %46 = arith.addf %33, %45 : vector<128x128xf32>
    %c0_28 = arith.constant 0 : index
    %c1_29 = arith.constant 1 : index
    %c0_30 = arith.constant 0 : index
    %c0_31 = arith.constant 0 : index
    %47 = tpu.strided_load %arg1[%c0_28, %c1_29, %c0_30, %c0_31] {strides = array<i32: 1, 2, 2, 1>} : memref<2x16x16x128xf32, #tpu.memory_space<vmem>>, vector<2x8x8x128xf32>
    %48 = vector.shape_cast %47 : vector<2x8x8x128xf32> to vector<128x128xf32>
    %49 = vector.broadcast %16 : vector<1x128xf32> to vector<128x128xf32>
    %50 = arith.mulf %48, %49 : vector<128x128xf32>
    %51 = vector.broadcast %19 : vector<1x128xf32> to vector<128x128xf32>
    %52 = arith.addf %50, %51 : vector<128x128xf32>
    %cst_32 = arith.constant 0.000000e+00 : f32
    %53 = vector.broadcast %cst_32 : f32 to vector<128x128xf32>
    %54 = arith.maximumf %52, %53 : vector<128x128xf32>
    %55 = arith.truncf %54 : vector<128x128xf32> to vector<128x128xbf16>
    %c2 = arith.constant 2 : index
    %c0_33 = arith.constant 0 : index
    %c0_34 = arith.constant 0 : index
    %56 = vector.load %arg5[%c2, %c0_33, %c0_34] : memref<4x128x128xbf16, #tpu.memory_space<vmem>>, vector<1x128x128xbf16>
    %57 = vector.shape_cast %56 : vector<1x128x128xbf16> to vector<128x128xbf16>
    %cst_35 = arith.constant dense<0.000000e+00> : vector<128x128xf32>
    %58 = tpu.matmul %55, %57, %cst_35 {dimension_numbers = #tpu.dot_dimension_numbers<[1], [0], [0], [1], [0, 0, 1, 1], [], []>} : vector<128x128xbf16>, vector<128x128xbf16>, vector<128x128xf32> -> vector<128x128xf32>
    %59 = arith.addf %46, %58 : vector<128x128xf32>
    %c0_36 = arith.constant 0 : index
    %c1_37 = arith.constant 1 : index
    %c1_38 = arith.constant 1 : index
    %c0_39 = arith.constant 0 : index
    %60 = tpu.strided_load %arg1[%c0_36, %c1_37, %c1_38, %c0_39] {strides = array<i32: 1, 2, 2, 1>} : memref<2x16x16x128xf32, #tpu.memory_space<vmem>>, vector<2x8x8x128xf32>
    %61 = vector.shape_cast %60 : vector<2x8x8x128xf32> to vector<128x128xf32>
    %62 = vector.broadcast %16 : vector<1x128xf32> to vector<128x128xf32>
    %63 = arith.mulf %61, %62 : vector<128x128xf32>
    %64 = vector.broadcast %19 : vector<1x128xf32> to vector<128x128xf32>
    %65 = arith.addf %63, %64 : vector<128x128xf32>
    %cst_40 = arith.constant 0.000000e+00 : f32
    %66 = vector.broadcast %cst_40 : f32 to vector<128x128xf32>
    %67 = arith.maximumf %65, %66 : vector<128x128xf32>
    %68 = arith.truncf %67 : vector<128x128xf32> to vector<128x128xbf16>
    %c3 = arith.constant 3 : index
    %c0_41 = arith.constant 0 : index
    %c0_42 = arith.constant 0 : index
    %69 = vector.load %arg5[%c3, %c0_41, %c0_42] : memref<4x128x128xbf16, #tpu.memory_space<vmem>>, vector<1x128x128xbf16>
    %70 = vector.shape_cast %69 : vector<1x128x128xbf16> to vector<128x128xbf16>
    %cst_43 = arith.constant dense<0.000000e+00> : vector<128x128xf32>
    %71 = tpu.matmul %68, %70, %cst_43 {dimension_numbers = #tpu.dot_dimension_numbers<[1], [0], [0], [1], [0, 0, 1, 1], [], []>} : vector<128x128xbf16>, vector<128x128xbf16>, vector<128x128xf32> -> vector<128x128xf32>
    %72 = arith.addf %59, %71 : vector<128x128xf32>
    %c0_44 = arith.constant 0 : index
    %c0_45 = arith.constant 0 : index
    %73 = vector.load %arg6[%c0_44, %c0_45] : memref<1x128xf32, #tpu.memory_space<vmem>>, vector<1x128xf32>
    %74 = vector.broadcast %73 : vector<1x128xf32> to vector<128x128xf32>
    %75 = arith.addf %72, %74 : vector<128x128xf32>
    %76 = vector.shape_cast %75 : vector<128x128xf32> to vector<2x64x128xf32>
    %c0_46 = arith.constant 0 : index
    %c0_47 = arith.constant 0 : index
    %c0_48 = arith.constant 0 : index
    %77 = vector.load %arg7[%c0_46, %c0_47, %c0_48] : memref<2x64x128xf32, #tpu.memory_space<vmem>>, vector<2x64x128xf32>
    tpu.vector_store %arg7[%c0_46, %c0_47, %c0_48], %76 {strides = array<i32>} : memref<2x64x128xf32, #tpu.memory_space<vmem>>, vector<2x64x128xf32>,
    %cst_49 = arith.constant dense<0.000000e+00> : vector<128xf32>
    %78 = vector.multi_reduction <add>, %75, %cst_49 [0] : vector<128x128xf32> to vector<128xf32>
    %79 = vector.shape_cast %78 : vector<128xf32> to vector<1x128xf32>
    %80 = arith.mulf %75, %75 : vector<128x128xf32>
    %cst_50 = arith.constant dense<0.000000e+00> : vector<128xf32>
    %81 = vector.multi_reduction <add>, %80, %cst_50 [0] : vector<128x128xf32> to vector<128xf32>
    %82 = vector.shape_cast %81 : vector<128xf32> to vector<1x128xf32>
    %83 = tpu.concatenate %79, %82 in 0 : vector<1x128xf32>, vector<1x128xf32> -> vector<2x128xf32>
    %c0_51 = arith.constant 0 : index
    %c0_52 = arith.constant 0 : index
    %c0_53 = arith.constant 0 : index
    %84 = vector.load %arg8[%c0_51, %c0_52, %c0_53] : memref<1x2x128xf32, #tpu.memory_space<vmem>>, vector<1x2x128xf32>
    %85 = vector.shape_cast %84 : vector<1x2x128xf32> to vector<2x128xf32>
    %86 = vector.shape_cast %83 : vector<2x128xf32> to vector<1x2x128xf32>
    tpu.vector_store %arg8[%c0_51, %c0_52, %c0_53], %86 {strides = array<i32>} : memref<1x2x128xf32, #tpu.memory_space<vmem>>, vector<1x2x128xf32>,
    return
  }
  func.func @transform_0(%arg0: i32) -> (i32, i32, i32, i32) {
    %c0_i32 = arith.constant 0 : i32
    %c0_i32_0 = arith.constant 0 : i32
    %c0_i32_1 = arith.constant 0 : i32
    %c0_i32_2 = arith.constant 0 : i32
    return %arg0, %c0_i32, %c0_i32_0, %c0_i32_1 : i32, i32, i32, i32
  }
  func.func @transform_1(%arg0: i32) -> (i32, i32, i32) {
    %c0_i32 = arith.constant 0 : i32
    %c0_i32_0 = arith.constant 0 : i32
    %c0_i32_1 = arith.constant 0 : i32
    %c0_i32_2 = arith.constant 0 : i32
    return %c0_i32, %c0_i32_0, %c0_i32_1 : i32, i32, i32
  }
  func.func @transform_2(%arg0: i32) -> (i32, i32) {
    %c0_i32 = arith.constant 0 : i32
    %c0_i32_0 = arith.constant 0 : i32
    %c0_i32_1 = arith.constant 0 : i32
    return %c0_i32, %c0_i32_0 : i32, i32
  }
  func.func @transform_3(%arg0: i32) -> (i32, i32) {
    %c0_i32 = arith.constant 0 : i32
    %c0_i32_0 = arith.constant 0 : i32
    %c0_i32_1 = arith.constant 0 : i32
    return %c0_i32, %c0_i32_0 : i32, i32
  }
  func.func @transform_4(%arg0: i32) -> (i32, i32, i32) {
    %c0_i32 = arith.constant 0 : i32
    %c0_i32_0 = arith.constant 0 : i32
    %c0_i32_1 = arith.constant 0 : i32
    %c0_i32_2 = arith.constant 0 : i32
    return %c0_i32, %c0_i32_0, %c0_i32_1 : i32, i32, i32
  }
  func.func @transform_5(%arg0: i32) -> (i32, i32) {
    %c0_i32 = arith.constant 0 : i32
    %c0_i32_0 = arith.constant 0 : i32
    %c0_i32_1 = arith.constant 0 : i32
    return %c0_i32, %c0_i32_0 : i32, i32
  }
  func.func @transform_6(%arg0: i32) -> (i32, i32, i32) {
    %c0_i32 = arith.constant 0 : i32
    %c0_i32_0 = arith.constant 0 : i32
    %c0_i32_1 = arith.constant 0 : i32
    return %arg0, %c0_i32, %c0_i32_0 : i32, i32, i32
  }
  func.func @transform_7(%arg0: i32) -> (i32, i32, i32) {
    %c0_i32 = arith.constant 0 : i32
    %c0_i32_0 = arith.constant 0 : i32
    %c0_i32_1 = arith.constant 0 : i32
    return %arg0, %c0_i32, %c0_i32_0 : i32, i32, i32
  }
}

module attributes {stable_mosaic.version = 11 : i64} {
  func.func @kernel(%arg0: i32, %arg1: memref<2x18x18x128xf32, #tpu.memory_space<vmem>>, %arg2: memref<9x128x128xbf16, #tpu.memory_space<vmem>>, %arg3: memref<1x128xf32, #tpu.memory_space<vmem>>, %arg4: memref<9x128x128xbf16, #tpu.memory_space<vmem>>, %arg5: memref<1x128xf32, #tpu.memory_space<vmem>>, %arg6: memref<2x16x16x128xf32, #tpu.memory_space<vmem>>, %arg7: memref<1x2x128xf32, #tpu.memory_space<vmem>>, %arg8: memref<2x18x18x128xf32, #tpu.memory_space<vmem>>) attributes {dimension_semantics = [#tpu.dimension_semantics<parallel>], iteration_bounds = array<i64: 1>, scalar_prefetch = 0 : i64, scratch_operands = 1 : i64, tpu.core_type = #tpu.core_type<tc>, window_params = [{transform_indices = @transform_0, window_bounds = array<i64: 2, 18, 18, 128>}, {pipeline_mode = #tpu.pipeline_mode<synchronous>, transform_indices = @transform_1, window_bounds = array<i64: 9, 128, 128>}, {pipeline_mode = #tpu.pipeline_mode<synchronous>, transform_indices = @transform_2, window_bounds = array<i64: 1, 128>}, {pipeline_mode = #tpu.pipeline_mode<synchronous>, transform_indices = @transform_3, window_bounds = array<i64: 9, 128, 128>}, {pipeline_mode = #tpu.pipeline_mode<synchronous>, transform_indices = @transform_4, window_bounds = array<i64: 1, 128>}, {transform_indices = @transform_5, window_bounds = array<i64: 2, 16, 16, 128>}, {transform_indices = @transform_6, window_bounds = array<i64: 1, 2, 128>}]} {
    %c0 = arith.constant 0 : index
    %c0_0 = arith.constant 0 : index
    %c0_1 = arith.constant 0 : index
    %c0_2 = arith.constant 0 : index
    %0 = vector.load %arg1[%c0, %c0_0, %c0_1, %c0_2] : memref<2x18x18x128xf32, #tpu.memory_space<vmem>>, vector<2x18x18x128xf32>
    %c0_3 = arith.constant 0 : index
    %c0_4 = arith.constant 0 : index
    %1 = vector.load %arg3[%c0_3, %c0_4] : memref<1x128xf32, #tpu.memory_space<vmem>>, vector<1x128xf32>
    %cst = arith.constant 0.000000e+00 : f32
    %2 = vector.broadcast %cst : f32 to vector<512x128xf32>
    %3 = vector.extract_strided_slice %0 {offsets = [0, 0, 0, 0], sizes = [2, 16, 16, 128], strides = [1, 1, 1, 1]} : vector<2x18x18x128xf32> to vector<2x16x16x128xf32>
    %4 = vector.shape_cast %3 : vector<2x16x16x128xf32> to vector<512x128xf32>
    %5 = arith.truncf %4 : vector<512x128xf32> to vector<512x128xbf16>
    %c0_5 = arith.constant 0 : index
    %c0_6 = arith.constant 0 : index
    %c0_7 = arith.constant 0 : index
    %6 = vector.load %arg2[%c0_5, %c0_6, %c0_7] : memref<9x128x128xbf16, #tpu.memory_space<vmem>>, vector<1x128x128xbf16>
    %7 = vector.shape_cast %6 : vector<1x128x128xbf16> to vector<128x128xbf16>
    %cst_8 = arith.constant dense<0.000000e+00> : vector<512x128xf32>
    %8 = tpu.matmul %5, %7, %cst_8 {dimension_numbers = #tpu.dot_dimension_numbers<[1], [0], [0], [1], [0, 0, 1, 1], [], []>} : vector<512x128xbf16>, vector<128x128xbf16>, vector<512x128xf32> -> vector<512x128xf32>
    %9 = arith.addf %2, %8 : vector<512x128xf32>
    %10 = vector.extract_strided_slice %0 {offsets = [0, 0, 1, 0], sizes = [2, 16, 16, 128], strides = [1, 1, 1, 1]} : vector<2x18x18x128xf32> to vector<2x16x16x128xf32>
    %11 = vector.shape_cast %10 : vector<2x16x16x128xf32> to vector<512x128xf32>
    %12 = arith.truncf %11 : vector<512x128xf32> to vector<512x128xbf16>
    %c1 = arith.constant 1 : index
    %c0_9 = arith.constant 0 : index
    %c0_10 = arith.constant 0 : index
    %13 = vector.load %arg2[%c1, %c0_9, %c0_10] : memref<9x128x128xbf16, #tpu.memory_space<vmem>>, vector<1x128x128xbf16>
    %14 = vector.shape_cast %13 : vector<1x128x128xbf16> to vector<128x128xbf16>
    %cst_11 = arith.constant dense<0.000000e+00> : vector<512x128xf32>
    %15 = tpu.matmul %12, %14, %cst_11 {dimension_numbers = #tpu.dot_dimension_numbers<[1], [0], [0], [1], [0, 0, 1, 1], [], []>} : vector<512x128xbf16>, vector<128x128xbf16>, vector<512x128xf32> -> vector<512x128xf32>
    %16 = arith.addf %9, %15 : vector<512x128xf32>
    %17 = vector.extract_strided_slice %0 {offsets = [0, 0, 2, 0], sizes = [2, 16, 16, 128], strides = [1, 1, 1, 1]} : vector<2x18x18x128xf32> to vector<2x16x16x128xf32>
    %18 = vector.shape_cast %17 : vector<2x16x16x128xf32> to vector<512x128xf32>
    %19 = arith.truncf %18 : vector<512x128xf32> to vector<512x128xbf16>
    %c2 = arith.constant 2 : index
    %c0_12 = arith.constant 0 : index
    %c0_13 = arith.constant 0 : index
    %20 = vector.load %arg2[%c2, %c0_12, %c0_13] : memref<9x128x128xbf16, #tpu.memory_space<vmem>>, vector<1x128x128xbf16>
    %21 = vector.shape_cast %20 : vector<1x128x128xbf16> to vector<128x128xbf16>
    %cst_14 = arith.constant dense<0.000000e+00> : vector<512x128xf32>
    %22 = tpu.matmul %19, %21, %cst_14 {dimension_numbers = #tpu.dot_dimension_numbers<[1], [0], [0], [1], [0, 0, 1, 1], [], []>} : vector<512x128xbf16>, vector<128x128xbf16>, vector<512x128xf32> -> vector<512x128xf32>
    %23 = arith.addf %16, %22 : vector<512x128xf32>
    %24 = vector.extract_strided_slice %0 {offsets = [0, 1, 0, 0], sizes = [2, 16, 16, 128], strides = [1, 1, 1, 1]} : vector<2x18x18x128xf32> to vector<2x16x16x128xf32>
    %25 = vector.shape_cast %24 : vector<2x16x16x128xf32> to vector<512x128xf32>
    %26 = arith.truncf %25 : vector<512x128xf32> to vector<512x128xbf16>
    %c3 = arith.constant 3 : index
    %c0_15 = arith.constant 0 : index
    %c0_16 = arith.constant 0 : index
    %27 = vector.load %arg2[%c3, %c0_15, %c0_16] : memref<9x128x128xbf16, #tpu.memory_space<vmem>>, vector<1x128x128xbf16>
    %28 = vector.shape_cast %27 : vector<1x128x128xbf16> to vector<128x128xbf16>
    %cst_17 = arith.constant dense<0.000000e+00> : vector<512x128xf32>
    %29 = tpu.matmul %26, %28, %cst_17 {dimension_numbers = #tpu.dot_dimension_numbers<[1], [0], [0], [1], [0, 0, 1, 1], [], []>} : vector<512x128xbf16>, vector<128x128xbf16>, vector<512x128xf32> -> vector<512x128xf32>
    %30 = arith.addf %23, %29 : vector<512x128xf32>
    %31 = vector.extract_strided_slice %0 {offsets = [0, 1, 1, 0], sizes = [2, 16, 16, 128], strides = [1, 1, 1, 1]} : vector<2x18x18x128xf32> to vector<2x16x16x128xf32>
    %32 = vector.shape_cast %31 : vector<2x16x16x128xf32> to vector<512x128xf32>
    %33 = arith.truncf %32 : vector<512x128xf32> to vector<512x128xbf16>
    %c4 = arith.constant 4 : index
    %c0_18 = arith.constant 0 : index
    %c0_19 = arith.constant 0 : index
    %34 = vector.load %arg2[%c4, %c0_18, %c0_19] : memref<9x128x128xbf16, #tpu.memory_space<vmem>>, vector<1x128x128xbf16>
    %35 = vector.shape_cast %34 : vector<1x128x128xbf16> to vector<128x128xbf16>
    %cst_20 = arith.constant dense<0.000000e+00> : vector<512x128xf32>
    %36 = tpu.matmul %33, %35, %cst_20 {dimension_numbers = #tpu.dot_dimension_numbers<[1], [0], [0], [1], [0, 0, 1, 1], [], []>} : vector<512x128xbf16>, vector<128x128xbf16>, vector<512x128xf32> -> vector<512x128xf32>
    %37 = arith.addf %30, %36 : vector<512x128xf32>
    %38 = vector.extract_strided_slice %0 {offsets = [0, 1, 2, 0], sizes = [2, 16, 16, 128], strides = [1, 1, 1, 1]} : vector<2x18x18x128xf32> to vector<2x16x16x128xf32>
    %39 = vector.shape_cast %38 : vector<2x16x16x128xf32> to vector<512x128xf32>
    %40 = arith.truncf %39 : vector<512x128xf32> to vector<512x128xbf16>
    %c5 = arith.constant 5 : index
    %c0_21 = arith.constant 0 : index
    %c0_22 = arith.constant 0 : index
    %41 = vector.load %arg2[%c5, %c0_21, %c0_22] : memref<9x128x128xbf16, #tpu.memory_space<vmem>>, vector<1x128x128xbf16>
    %42 = vector.shape_cast %41 : vector<1x128x128xbf16> to vector<128x128xbf16>
    %cst_23 = arith.constant dense<0.000000e+00> : vector<512x128xf32>
    %43 = tpu.matmul %40, %42, %cst_23 {dimension_numbers = #tpu.dot_dimension_numbers<[1], [0], [0], [1], [0, 0, 1, 1], [], []>} : vector<512x128xbf16>, vector<128x128xbf16>, vector<512x128xf32> -> vector<512x128xf32>
    %44 = arith.addf %37, %43 : vector<512x128xf32>
    %45 = vector.extract_strided_slice %0 {offsets = [0, 2, 0, 0], sizes = [2, 16, 16, 128], strides = [1, 1, 1, 1]} : vector<2x18x18x128xf32> to vector<2x16x16x128xf32>
    %46 = vector.shape_cast %45 : vector<2x16x16x128xf32> to vector<512x128xf32>
    %47 = arith.truncf %46 : vector<512x128xf32> to vector<512x128xbf16>
    %c6 = arith.constant 6 : index
    %c0_24 = arith.constant 0 : index
    %c0_25 = arith.constant 0 : index
    %48 = vector.load %arg2[%c6, %c0_24, %c0_25] : memref<9x128x128xbf16, #tpu.memory_space<vmem>>, vector<1x128x128xbf16>
    %49 = vector.shape_cast %48 : vector<1x128x128xbf16> to vector<128x128xbf16>
    %cst_26 = arith.constant dense<0.000000e+00> : vector<512x128xf32>
    %50 = tpu.matmul %47, %49, %cst_26 {dimension_numbers = #tpu.dot_dimension_numbers<[1], [0], [0], [1], [0, 0, 1, 1], [], []>} : vector<512x128xbf16>, vector<128x128xbf16>, vector<512x128xf32> -> vector<512x128xf32>
    %51 = arith.addf %44, %50 : vector<512x128xf32>
    %52 = vector.extract_strided_slice %0 {offsets = [0, 2, 1, 0], sizes = [2, 16, 16, 128], strides = [1, 1, 1, 1]} : vector<2x18x18x128xf32> to vector<2x16x16x128xf32>
    %53 = vector.shape_cast %52 : vector<2x16x16x128xf32> to vector<512x128xf32>
    %54 = arith.truncf %53 : vector<512x128xf32> to vector<512x128xbf16>
    %c7 = arith.constant 7 : index
    %c0_27 = arith.constant 0 : index
    %c0_28 = arith.constant 0 : index
    %55 = vector.load %arg2[%c7, %c0_27, %c0_28] : memref<9x128x128xbf16, #tpu.memory_space<vmem>>, vector<1x128x128xbf16>
    %56 = vector.shape_cast %55 : vector<1x128x128xbf16> to vector<128x128xbf16>
    %cst_29 = arith.constant dense<0.000000e+00> : vector<512x128xf32>
    %57 = tpu.matmul %54, %56, %cst_29 {dimension_numbers = #tpu.dot_dimension_numbers<[1], [0], [0], [1], [0, 0, 1, 1], [], []>} : vector<512x128xbf16>, vector<128x128xbf16>, vector<512x128xf32> -> vector<512x128xf32>
    %58 = arith.addf %51, %57 : vector<512x128xf32>
    %59 = vector.extract_strided_slice %0 {offsets = [0, 2, 2, 0], sizes = [2, 16, 16, 128], strides = [1, 1, 1, 1]} : vector<2x18x18x128xf32> to vector<2x16x16x128xf32>
    %60 = vector.shape_cast %59 : vector<2x16x16x128xf32> to vector<512x128xf32>
    %61 = arith.truncf %60 : vector<512x128xf32> to vector<512x128xbf16>
    %c8 = arith.constant 8 : index
    %c0_30 = arith.constant 0 : index
    %c0_31 = arith.constant 0 : index
    %62 = vector.load %arg2[%c8, %c0_30, %c0_31] : memref<9x128x128xbf16, #tpu.memory_space<vmem>>, vector<1x128x128xbf16>
    %63 = vector.shape_cast %62 : vector<1x128x128xbf16> to vector<128x128xbf16>
    %cst_32 = arith.constant dense<0.000000e+00> : vector<512x128xf32>
    %64 = tpu.matmul %61, %63, %cst_32 {dimension_numbers = #tpu.dot_dimension_numbers<[1], [0], [0], [1], [0, 0, 1, 1], [], []>} : vector<512x128xbf16>, vector<128x128xbf16>, vector<512x128xf32> -> vector<512x128xf32>
    %65 = arith.addf %58, %64 : vector<512x128xf32>
    %66 = vector.broadcast %1 : vector<1x128xf32> to vector<512x128xf32>
    %67 = arith.addf %65, %66 : vector<512x128xf32>
    %cst_33 = arith.constant 0.000000e+00 : f32
    %68 = vector.broadcast %cst_33 : f32 to vector<2x1x18x128xf32>
    %c0_34 = arith.constant 0 : index
    %c0_35 = arith.constant 0 : index
    %c0_36 = arith.constant 0 : index
    %c0_37 = arith.constant 0 : index
    %69 = vector.load %arg8[%c0_34, %c0_35, %c0_36, %c0_37] : memref<2x18x18x128xf32, #tpu.memory_space<vmem>>, vector<2x1x18x128xf32>
    tpu.vector_store %arg8[%c0_34, %c0_35, %c0_36, %c0_37], %68 {strides = array<i32>} : memref<2x18x18x128xf32, #tpu.memory_space<vmem>>, vector<2x1x18x128xf32>,
    %cst_38 = arith.constant 0.000000e+00 : f32
    %70 = vector.broadcast %cst_38 : f32 to vector<2x1x18x128xf32>
    %c0_39 = arith.constant 0 : index
    %c17 = arith.constant 17 : index
    %c0_40 = arith.constant 0 : index
    %c0_41 = arith.constant 0 : index
    %71 = vector.load %arg8[%c0_39, %c17, %c0_40, %c0_41] : memref<2x18x18x128xf32, #tpu.memory_space<vmem>>, vector<2x1x18x128xf32>
    tpu.vector_store %arg8[%c0_39, %c17, %c0_40, %c0_41], %70 {strides = array<i32>} : memref<2x18x18x128xf32, #tpu.memory_space<vmem>>, vector<2x1x18x128xf32>,
    %cst_42 = arith.constant 0.000000e+00 : f32
    %72 = vector.broadcast %cst_42 : f32 to vector<2x18x1x128xf32>
    %c0_43 = arith.constant 0 : index
    %c0_44 = arith.constant 0 : index
    %c0_45 = arith.constant 0 : index
    %c0_46 = arith.constant 0 : index
    %73 = vector.load %arg8[%c0_43, %c0_44, %c0_45, %c0_46] : memref<2x18x18x128xf32, #tpu.memory_space<vmem>>, vector<2x18x1x128xf32>
    tpu.vector_store %arg8[%c0_43, %c0_44, %c0_45, %c0_46], %72 {strides = array<i32>} : memref<2x18x18x128xf32, #tpu.memory_space<vmem>>, vector<2x18x1x128xf32>,
    %cst_47 = arith.constant 0.000000e+00 : f32
    %74 = vector.broadcast %cst_47 : f32 to vector<2x18x1x128xf32>
    %c0_48 = arith.constant 0 : index
    %c0_49 = arith.constant 0 : index
    %c17_50 = arith.constant 17 : index
    %c0_51 = arith.constant 0 : index
    %75 = vector.load %arg8[%c0_48, %c0_49, %c17_50, %c0_51] : memref<2x18x18x128xf32, #tpu.memory_space<vmem>>, vector<2x18x1x128xf32>
    tpu.vector_store %arg8[%c0_48, %c0_49, %c17_50, %c0_51], %74 {strides = array<i32>} : memref<2x18x18x128xf32, #tpu.memory_space<vmem>>, vector<2x18x1x128xf32>,
    %76 = vector.shape_cast %67 : vector<512x128xf32> to vector<2x16x16x128xf32>
    %c0_52 = arith.constant 0 : index
    %c1_53 = arith.constant 1 : index
    %c1_54 = arith.constant 1 : index
    %c0_55 = arith.constant 0 : index
    %77 = vector.load %arg8[%c0_52, %c1_53, %c1_54, %c0_55] : memref<2x18x18x128xf32, #tpu.memory_space<vmem>>, vector<2x16x16x128xf32>
    tpu.vector_store %arg8[%c0_52, %c1_53, %c1_54, %c0_55], %76 {strides = array<i32>} : memref<2x18x18x128xf32, #tpu.memory_space<vmem>>, vector<2x16x16x128xf32>,
    %c0_56 = arith.constant 0 : index
    %c0_57 = arith.constant 0 : index
    %c0_58 = arith.constant 0 : index
    %c0_59 = arith.constant 0 : index
    %78 = vector.load %arg8[%c0_56, %c0_57, %c0_58, %c0_59] : memref<2x18x18x128xf32, #tpu.memory_space<vmem>>, vector<2x18x18x128xf32>
    %c0_60 = arith.constant 0 : index
    %c0_61 = arith.constant 0 : index
    %79 = vector.load %arg5[%c0_60, %c0_61] : memref<1x128xf32, #tpu.memory_space<vmem>>, vector<1x128xf32>
    %cst_62 = arith.constant 0.000000e+00 : f32
    %80 = vector.broadcast %cst_62 : f32 to vector<512x128xf32>
    %81 = vector.extract_strided_slice %78 {offsets = [0, 0, 0, 0], sizes = [2, 16, 16, 128], strides = [1, 1, 1, 1]} : vector<2x18x18x128xf32> to vector<2x16x16x128xf32>
    %82 = vector.shape_cast %81 : vector<2x16x16x128xf32> to vector<512x128xf32>
    %83 = arith.truncf %82 : vector<512x128xf32> to vector<512x128xbf16>
    %c0_63 = arith.constant 0 : index
    %c0_64 = arith.constant 0 : index
    %c0_65 = arith.constant 0 : index
    %84 = vector.load %arg4[%c0_63, %c0_64, %c0_65] : memref<9x128x128xbf16, #tpu.memory_space<vmem>>, vector<1x128x128xbf16>
    %85 = vector.shape_cast %84 : vector<1x128x128xbf16> to vector<128x128xbf16>
    %cst_66 = arith.constant dense<0.000000e+00> : vector<512x128xf32>
    %86 = tpu.matmul %83, %85, %cst_66 {dimension_numbers = #tpu.dot_dimension_numbers<[1], [0], [0], [1], [0, 0, 1, 1], [], []>} : vector<512x128xbf16>, vector<128x128xbf16>, vector<512x128xf32> -> vector<512x128xf32>
    %87 = arith.addf %80, %86 : vector<512x128xf32>
    %88 = vector.extract_strided_slice %78 {offsets = [0, 0, 1, 0], sizes = [2, 16, 16, 128], strides = [1, 1, 1, 1]} : vector<2x18x18x128xf32> to vector<2x16x16x128xf32>
    %89 = vector.shape_cast %88 : vector<2x16x16x128xf32> to vector<512x128xf32>
    %90 = arith.truncf %89 : vector<512x128xf32> to vector<512x128xbf16>
    %c1_67 = arith.constant 1 : index
    %c0_68 = arith.constant 0 : index
    %c0_69 = arith.constant 0 : index
    %91 = vector.load %arg4[%c1_67, %c0_68, %c0_69] : memref<9x128x128xbf16, #tpu.memory_space<vmem>>, vector<1x128x128xbf16>
    %92 = vector.shape_cast %91 : vector<1x128x128xbf16> to vector<128x128xbf16>
    %cst_70 = arith.constant dense<0.000000e+00> : vector<512x128xf32>
    %93 = tpu.matmul %90, %92, %cst_70 {dimension_numbers = #tpu.dot_dimension_numbers<[1], [0], [0], [1], [0, 0, 1, 1], [], []>} : vector<512x128xbf16>, vector<128x128xbf16>, vector<512x128xf32> -> vector<512x128xf32>
    %94 = arith.addf %87, %93 : vector<512x128xf32>
    %95 = vector.extract_strided_slice %78 {offsets = [0, 0, 2, 0], sizes = [2, 16, 16, 128], strides = [1, 1, 1, 1]} : vector<2x18x18x128xf32> to vector<2x16x16x128xf32>
    %96 = vector.shape_cast %95 : vector<2x16x16x128xf32> to vector<512x128xf32>
    %97 = arith.truncf %96 : vector<512x128xf32> to vector<512x128xbf16>
    %c2_71 = arith.constant 2 : index
    %c0_72 = arith.constant 0 : index
    %c0_73 = arith.constant 0 : index
    %98 = vector.load %arg4[%c2_71, %c0_72, %c0_73] : memref<9x128x128xbf16, #tpu.memory_space<vmem>>, vector<1x128x128xbf16>
    %99 = vector.shape_cast %98 : vector<1x128x128xbf16> to vector<128x128xbf16>
    %cst_74 = arith.constant dense<0.000000e+00> : vector<512x128xf32>
    %100 = tpu.matmul %97, %99, %cst_74 {dimension_numbers = #tpu.dot_dimension_numbers<[1], [0], [0], [1], [0, 0, 1, 1], [], []>} : vector<512x128xbf16>, vector<128x128xbf16>, vector<512x128xf32> -> vector<512x128xf32>
    %101 = arith.addf %94, %100 : vector<512x128xf32>
    %102 = vector.extract_strided_slice %78 {offsets = [0, 1, 0, 0], sizes = [2, 16, 16, 128], strides = [1, 1, 1, 1]} : vector<2x18x18x128xf32> to vector<2x16x16x128xf32>
    %103 = vector.shape_cast %102 : vector<2x16x16x128xf32> to vector<512x128xf32>
    %104 = arith.truncf %103 : vector<512x128xf32> to vector<512x128xbf16>
    %c3_75 = arith.constant 3 : index
    %c0_76 = arith.constant 0 : index
    %c0_77 = arith.constant 0 : index
    %105 = vector.load %arg4[%c3_75, %c0_76, %c0_77] : memref<9x128x128xbf16, #tpu.memory_space<vmem>>, vector<1x128x128xbf16>
    %106 = vector.shape_cast %105 : vector<1x128x128xbf16> to vector<128x128xbf16>
    %cst_78 = arith.constant dense<0.000000e+00> : vector<512x128xf32>
    %107 = tpu.matmul %104, %106, %cst_78 {dimension_numbers = #tpu.dot_dimension_numbers<[1], [0], [0], [1], [0, 0, 1, 1], [], []>} : vector<512x128xbf16>, vector<128x128xbf16>, vector<512x128xf32> -> vector<512x128xf32>
    %108 = arith.addf %101, %107 : vector<512x128xf32>
    %109 = vector.extract_strided_slice %78 {offsets = [0, 1, 1, 0], sizes = [2, 16, 16, 128], strides = [1, 1, 1, 1]} : vector<2x18x18x128xf32> to vector<2x16x16x128xf32>
    %110 = vector.shape_cast %109 : vector<2x16x16x128xf32> to vector<512x128xf32>
    %111 = arith.truncf %110 : vector<512x128xf32> to vector<512x128xbf16>
    %c4_79 = arith.constant 4 : index
    %c0_80 = arith.constant 0 : index
    %c0_81 = arith.constant 0 : index
    %112 = vector.load %arg4[%c4_79, %c0_80, %c0_81] : memref<9x128x128xbf16, #tpu.memory_space<vmem>>, vector<1x128x128xbf16>
    %113 = vector.shape_cast %112 : vector<1x128x128xbf16> to vector<128x128xbf16>
    %cst_82 = arith.constant dense<0.000000e+00> : vector<512x128xf32>
    %114 = tpu.matmul %111, %113, %cst_82 {dimension_numbers = #tpu.dot_dimension_numbers<[1], [0], [0], [1], [0, 0, 1, 1], [], []>} : vector<512x128xbf16>, vector<128x128xbf16>, vector<512x128xf32> -> vector<512x128xf32>
    %115 = arith.addf %108, %114 : vector<512x128xf32>
    %116 = vector.extract_strided_slice %78 {offsets = [0, 1, 2, 0], sizes = [2, 16, 16, 128], strides = [1, 1, 1, 1]} : vector<2x18x18x128xf32> to vector<2x16x16x128xf32>
    %117 = vector.shape_cast %116 : vector<2x16x16x128xf32> to vector<512x128xf32>
    %118 = arith.truncf %117 : vector<512x128xf32> to vector<512x128xbf16>
    %c5_83 = arith.constant 5 : index
    %c0_84 = arith.constant 0 : index
    %c0_85 = arith.constant 0 : index
    %119 = vector.load %arg4[%c5_83, %c0_84, %c0_85] : memref<9x128x128xbf16, #tpu.memory_space<vmem>>, vector<1x128x128xbf16>
    %120 = vector.shape_cast %119 : vector<1x128x128xbf16> to vector<128x128xbf16>
    %cst_86 = arith.constant dense<0.000000e+00> : vector<512x128xf32>
    %121 = tpu.matmul %118, %120, %cst_86 {dimension_numbers = #tpu.dot_dimension_numbers<[1], [0], [0], [1], [0, 0, 1, 1], [], []>} : vector<512x128xbf16>, vector<128x128xbf16>, vector<512x128xf32> -> vector<512x128xf32>
    %122 = arith.addf %115, %121 : vector<512x128xf32>
    %123 = vector.extract_strided_slice %78 {offsets = [0, 2, 0, 0], sizes = [2, 16, 16, 128], strides = [1, 1, 1, 1]} : vector<2x18x18x128xf32> to vector<2x16x16x128xf32>
    %124 = vector.shape_cast %123 : vector<2x16x16x128xf32> to vector<512x128xf32>
    %125 = arith.truncf %124 : vector<512x128xf32> to vector<512x128xbf16>
    %c6_87 = arith.constant 6 : index
    %c0_88 = arith.constant 0 : index
    %c0_89 = arith.constant 0 : index
    %126 = vector.load %arg4[%c6_87, %c0_88, %c0_89] : memref<9x128x128xbf16, #tpu.memory_space<vmem>>, vector<1x128x128xbf16>
    %127 = vector.shape_cast %126 : vector<1x128x128xbf16> to vector<128x128xbf16>
    %cst_90 = arith.constant dense<0.000000e+00> : vector<512x128xf32>
    %128 = tpu.matmul %125, %127, %cst_90 {dimension_numbers = #tpu.dot_dimension_numbers<[1], [0], [0], [1], [0, 0, 1, 1], [], []>} : vector<512x128xbf16>, vector<128x128xbf16>, vector<512x128xf32> -> vector<512x128xf32>
    %129 = arith.addf %122, %128 : vector<512x128xf32>
    %130 = vector.extract_strided_slice %78 {offsets = [0, 2, 1, 0], sizes = [2, 16, 16, 128], strides = [1, 1, 1, 1]} : vector<2x18x18x128xf32> to vector<2x16x16x128xf32>
    %131 = vector.shape_cast %130 : vector<2x16x16x128xf32> to vector<512x128xf32>
    %132 = arith.truncf %131 : vector<512x128xf32> to vector<512x128xbf16>
    %c7_91 = arith.constant 7 : index
    %c0_92 = arith.constant 0 : index
    %c0_93 = arith.constant 0 : index
    %133 = vector.load %arg4[%c7_91, %c0_92, %c0_93] : memref<9x128x128xbf16, #tpu.memory_space<vmem>>, vector<1x128x128xbf16>
    %134 = vector.shape_cast %133 : vector<1x128x128xbf16> to vector<128x128xbf16>
    %cst_94 = arith.constant dense<0.000000e+00> : vector<512x128xf32>
    %135 = tpu.matmul %132, %134, %cst_94 {dimension_numbers = #tpu.dot_dimension_numbers<[1], [0], [0], [1], [0, 0, 1, 1], [], []>} : vector<512x128xbf16>, vector<128x128xbf16>, vector<512x128xf32> -> vector<512x128xf32>
    %136 = arith.addf %129, %135 : vector<512x128xf32>
    %137 = vector.extract_strided_slice %78 {offsets = [0, 2, 2, 0], sizes = [2, 16, 16, 128], strides = [1, 1, 1, 1]} : vector<2x18x18x128xf32> to vector<2x16x16x128xf32>
    %138 = vector.shape_cast %137 : vector<2x16x16x128xf32> to vector<512x128xf32>
    %139 = arith.truncf %138 : vector<512x128xf32> to vector<512x128xbf16>
    %c8_95 = arith.constant 8 : index
    %c0_96 = arith.constant 0 : index
    %c0_97 = arith.constant 0 : index
    %140 = vector.load %arg4[%c8_95, %c0_96, %c0_97] : memref<9x128x128xbf16, #tpu.memory_space<vmem>>, vector<1x128x128xbf16>
    %141 = vector.shape_cast %140 : vector<1x128x128xbf16> to vector<128x128xbf16>
    %cst_98 = arith.constant dense<0.000000e+00> : vector<512x128xf32>
    %142 = tpu.matmul %139, %141, %cst_98 {dimension_numbers = #tpu.dot_dimension_numbers<[1], [0], [0], [1], [0, 0, 1, 1], [], []>} : vector<512x128xbf16>, vector<128x128xbf16>, vector<512x128xf32> -> vector<512x128xf32>
    %143 = arith.addf %136, %142 : vector<512x128xf32>
    %144 = vector.broadcast %79 : vector<1x128xf32> to vector<512x128xf32>
    %145 = arith.addf %143, %144 : vector<512x128xf32>
    %146 = vector.shape_cast %145 : vector<512x128xf32> to vector<2x16x16x128xf32>
    %c0_99 = arith.constant 0 : index
    %c0_100 = arith.constant 0 : index
    %c0_101 = arith.constant 0 : index
    %c0_102 = arith.constant 0 : index
    %147 = vector.load %arg6[%c0_99, %c0_100, %c0_101, %c0_102] : memref<2x16x16x128xf32, #tpu.memory_space<vmem>>, vector<2x16x16x128xf32>
    tpu.vector_store %arg6[%c0_99, %c0_100, %c0_101, %c0_102], %146 {strides = array<i32>} : memref<2x16x16x128xf32, #tpu.memory_space<vmem>>, vector<2x16x16x128xf32>,
    %cst_103 = arith.constant dense<0.000000e+00> : vector<128xf32>
    %148 = vector.multi_reduction <add>, %145, %cst_103 [0] : vector<512x128xf32> to vector<128xf32>
    %149 = vector.shape_cast %148 : vector<128xf32> to vector<1x128xf32>
    %150 = arith.mulf %145, %145 : vector<512x128xf32>
    %cst_104 = arith.constant dense<0.000000e+00> : vector<128xf32>
    %151 = vector.multi_reduction <add>, %150, %cst_104 [0] : vector<512x128xf32> to vector<128xf32>
    %152 = vector.shape_cast %151 : vector<128xf32> to vector<1x128xf32>
    %153 = tpu.concatenate %149, %152 in 0 : vector<1x128xf32>, vector<1x128xf32> -> vector<2x128xf32>
    %c0_105 = arith.constant 0 : index
    %c0_106 = arith.constant 0 : index
    %c0_107 = arith.constant 0 : index
    %154 = vector.load %arg7[%c0_105, %c0_106, %c0_107] : memref<1x2x128xf32, #tpu.memory_space<vmem>>, vector<1x2x128xf32>
    %155 = vector.shape_cast %154 : vector<1x2x128xf32> to vector<2x128xf32>
    %156 = vector.shape_cast %153 : vector<2x128xf32> to vector<1x2x128xf32>
    tpu.vector_store %arg7[%c0_105, %c0_106, %c0_107], %156 {strides = array<i32>} : memref<1x2x128xf32, #tpu.memory_space<vmem>>, vector<1x2x128xf32>,
    return
  }
  func.func @transform_0(%arg0: i32) -> (i32, i32, i32, i32) {
    %c0_i32 = arith.constant 0 : i32
    %c0_i32_0 = arith.constant 0 : i32
    %c0_i32_1 = arith.constant 0 : i32
    %c0_i32_2 = arith.constant 0 : i32
    return %arg0, %c0_i32, %c0_i32_0, %c0_i32_1 : i32, i32, i32, i32
  }
  func.func @transform_1(%arg0: i32) -> (i32, i32, i32) {
    %c0_i32 = arith.constant 0 : i32
    %c0_i32_0 = arith.constant 0 : i32
    %c0_i32_1 = arith.constant 0 : i32
    %c0_i32_2 = arith.constant 0 : i32
    return %c0_i32, %c0_i32_0, %c0_i32_1 : i32, i32, i32
  }
  func.func @transform_2(%arg0: i32) -> (i32, i32) {
    %c0_i32 = arith.constant 0 : i32
    %c0_i32_0 = arith.constant 0 : i32
    %c0_i32_1 = arith.constant 0 : i32
    return %c0_i32, %c0_i32_0 : i32, i32
  }
  func.func @transform_3(%arg0: i32) -> (i32, i32, i32) {
    %c0_i32 = arith.constant 0 : i32
    %c0_i32_0 = arith.constant 0 : i32
    %c0_i32_1 = arith.constant 0 : i32
    %c0_i32_2 = arith.constant 0 : i32
    return %c0_i32, %c0_i32_0, %c0_i32_1 : i32, i32, i32
  }
  func.func @transform_4(%arg0: i32) -> (i32, i32) {
    %c0_i32 = arith.constant 0 : i32
    %c0_i32_0 = arith.constant 0 : i32
    %c0_i32_1 = arith.constant 0 : i32
    return %c0_i32, %c0_i32_0 : i32, i32
  }
  func.func @transform_5(%arg0: i32) -> (i32, i32, i32, i32) {
    %c0_i32 = arith.constant 0 : i32
    %c0_i32_0 = arith.constant 0 : i32
    %c0_i32_1 = arith.constant 0 : i32
    %c0_i32_2 = arith.constant 0 : i32
    return %arg0, %c0_i32, %c0_i32_0, %c0_i32_1 : i32, i32, i32, i32
  }
  func.func @transform_6(%arg0: i32) -> (i32, i32, i32) {
    %c0_i32 = arith.constant 0 : i32
    %c0_i32_0 = arith.constant 0 : i32
    %c0_i32_1 = arith.constant 0 : i32
    return %arg0, %c0_i32, %c0_i32_0 : i32, i32, i32
  }
}

</mosaic_0001>

<llo_original>
// kernel: downblock_forward.5
$region0: #{downblock_forward.5}
  #allocation0 [shape = 'u32[]', space=smem, size = 0x4, offset = 0x4, fixed_abs, tag = 'smem constant byte address 0x4 - core index']
  #allocation1 [shape = 'u32[72,128]{1,0:T(1,128)}', space=vmem, size = 0x9000, scoped, tag = 'internal scratch']
  %s0 = inlined_call_operand.vmem [shape: f32[2,64,128], index: 0, kind: input, shape index: {}]
  %s1 = inlined_call_operand.vmem [shape: f32[1,2,128], index: 1, kind: input, shape index: {}]
  %s2 = inlined_call_operand.vmem [shape: f32[1,128], index: 2, kind: input, shape index: {}]
  %s3 = inlined_call_operand.vmem [shape: f32[1,128], index: 3, kind: input, shape index: {}]
  %s4 = inlined_call_operand.vmem [shape: f32[2,64,128], index: 4, kind: output, shape index: {}]
  %s5 = sld [smem:[#allocation0]]
  $region26: #{downblock_forward.5} parent=0
    _
  %s7 = ssub.s32 1, %s5
  %s8 = scalar_select 0, %s7, %s5
  // Predicated region
  $region2: #{downblock_forward.5} parent=0 // pred_check
    _
  $region3: #{downblock_forward.5} parent=0 // pred_check_branch
    %10 = sbr.rel (0) target = $region5
  $region4: #{downblock_forward.5} parent=0 // pred_region
    _
  $region5: #{downblock_forward.5} parent=0 // pred_fallthru
    _
  // Predicated region
  $region6: #{downblock_forward.5} parent=0 // pred_check
    _
  $region7: #{downblock_forward.5} parent=0 // pred_check_branch
    %12 = sbr.rel (0) target = $region9
  $region8: #{downblock_forward.5} parent=0 // pred_region
    _
  $region9: #{downblock_forward.5} parent=0 // pred_fallthru
    _
  // Predicated region
  $region10: #{downblock_forward.5} parent=0 // pred_check
    _
  $region11: #{downblock_forward.5} parent=0 // pred_check_branch
    %14 = sbr.rel (0) target = $region13
  $region12: #{downblock_forward.5} parent=0 // pred_region
    _
  $region13: #{downblock_forward.5} parent=0 // pred_fallthru
    _
  // Predicated region
  $region14: #{downblock_forward.5} parent=0 // pred_check
    _
  $region15: #{downblock_forward.5} parent=0 // pred_check_branch
    %16 = sbr.rel (0) target = $region17
  $region16: #{downblock_forward.5} parent=0 // pred_region
    _
  $region17: #{downblock_forward.5} parent=0 // pred_fallthru
    _
  %v17 = vld [vmem:[%s1] sm:$0x3]
  %v18 = vadd.f32 %v17, 0.0
  %v19 = vmul.f32 %v18, 0.0078125
  %v20 = vmul.f32 %v19, %v19
  %v22 = vrot.slane %v20, 7
  %v24 = vsub.f32 %v19, %v22
  %v25 = vmax.f32 %v24, 0.0
  %v26 = vadd.f32 %v25, 1e-05
  %v27 = vrsqrt.pop %v26
  %v28 = vmul.f32 %v27, %v26
  %v29 = vmul.f32 %v28, %v27
  %v30 = vmul.f32 0.5, %v29
  %v31 = vsub.f32 1.5, %v30
  %v32 = vmul.f32 %v27, %v31
  %vm33 = vweird.f32 %v26
  %vm34 = vweird.f32 %v27
  %vm35 = vmor %vm33, %vm34
  %v36 = vsel %vm35, %v27, %v32
  %v37 = vld [vmem:[%s2] sm:$0x1]
  %v39 = vperm.slane %v37, 0
  %v41 = vmul.f32 %v36, %v39
  %v42 = vld [vmem:[%s3] sm:$0x1]
  %v44 = vrot.slane %v41, 1
  %v46 = vmul.f32 %v19, %v44
  %v47 = vsub.f32 %v42, %v46
  %v48 = vld [vmem:[%s0] sm:$0xff]
  %v49 = vld [vmem:[%s0 + $0x8] sm:$0xff]
  %v50 = vld [vmem:[%s0 + $0x10] sm:$0xff]
  %v51 = vld [vmem:[%s0 + $0x18] sm:$0xff]
  %v52 = vld [vmem:[%s0 + $0x20] sm:$0xff]
  %v53 = vld [vmem:[%s0 + $0x28] sm:$0xff]
  %v54 = vld [vmem:[%s0 + $0x30] sm:$0xff]
  %v55 = vld [vmem:[%s0 + $0x38] sm:$0xff]
  %v56 = vld [vmem:[%s0 + $0x40] sm:$0xff]
  %v57 = vld [vmem:[%s0 + $0x48] sm:$0xff]
  %v58 = vld [vmem:[%s0 + $0x50] sm:$0xff]
  %v59 = vld [vmem:[%s0 + $0x58] sm:$0xff]
  %v60 = vld [vmem:[%s0 + $0x60] sm:$0xff]
  %v61 = vld [vmem:[%s0 + $0x68] sm:$0xff]
  %v62 = vld [vmem:[%s0 + $0x70] sm:$0xff]
  %v63 = vld [vmem:[%s0 + $0x78] sm:$0xff]
  %v64 = vperm.slane %v41, 1
  %v65 = vmul.f32 %v48, %v64
  %v66 = vmul.f32 %v49, %v64
  %v67 = vmul.f32 %v50, %v64
  %v68 = vmul.f32 %v51, %v64
  %v69 = vmul.f32 %v52, %v64
  %v70 = vmul.f32 %v53, %v64
  %v71 = vmul.f32 %v54, %v64
  %v72 = vmul.f32 %v55, %v64
  %v73 = vmul.f32 %v56, %v64
  %v74 = vmul.f32 %v57, %v64
  %v75 = vmul.f32 %v58, %v64
  %v76 = vmul.f32 %v59, %v64
  %v77 = vmul.f32 %v60, %v64
  %v78 = vmul.f32 %v61, %v64
  %v79 = vmul.f32 %v62, %v64
  %v80 = vmul.f32 %v63, %v64
  %v82 = vperm.slane %v47, 0
  %v84 = vadd.f32 %v65, %v82
  %v85 = vadd.f32 %v66, %v82
  %v86 = vadd.f32 %v67, %v82
  %v87 = vadd.f32 %v68, %v82
  %v88 = vadd.f32 %v69, %v82
  %v89 = vadd.f32 %v70, %v82
  %v90 = vadd.f32 %v71, %v82
  %v91 = vadd.f32 %v72, %v82
  %v92 = vadd.f32 %v73, %v82
  %v93 = vadd.f32 %v74, %v82
  %v94 = vadd.f32 %v75, %v82
  %v95 = vadd.f32 %v76, %v82
  %v96 = vadd.f32 %v77, %v82
  %v97 = vadd.f32 %v78, %v82
  %v98 = vadd.f32 %v79, %v82
  %v99 = vadd.f32 %v80, %v82
  %v100 = vmax.f32 %v84, 0.0
  %v101 = vmax.f32 %v85, 0.0
  %v102 = vmax.f32 %v86, 0.0
  %v103 = vmax.f32 %v87, 0.0
  %v104 = vmax.f32 %v88, 0.0
  %v105 = vmax.f32 %v89, 0.0
  %v106 = vmax.f32 %v90, 0.0
  %v107 = vmax.f32 %v91, 0.0
  %v108 = vmax.f32 %v92, 0.0
  %v109 = vmax.f32 %v93, 0.0
  %v110 = vmax.f32 %v94, 0.0
  %v111 = vmax.f32 %v95, 0.0
  %v112 = vmax.f32 %v96, 0.0
  %v113 = vmax.f32 %v97, 0.0
  %v114 = vmax.f32 %v98, 0.0
  %v115 = vmax.f32 %v99, 0.0
  %116 = vst [vmem:[%s4] sm:$0xff] %v100
  %117 = vst [vmem:[%s4 + $0x8] sm:$0xff] %v101
  %118 = vst [vmem:[%s4 + $0x10] sm:$0xff] %v102
  %119 = vst [vmem:[%s4 + $0x18] sm:$0xff] %v103
  %120 = vst [vmem:[%s4 + $0x20] sm:$0xff] %v104
  %121 = vst [vmem:[%s4 + $0x28] sm:$0xff] %v105
  %122 = vst [vmem:[%s4 + $0x30] sm:$0xff] %v106
  %123 = vst [vmem:[%s4 + $0x38] sm:$0xff] %v107
  %124 = vst [vmem:[%s4 + $0x40] sm:$0xff] %v108
  %125 = vst [vmem:[%s4 + $0x48] sm:$0xff] %v109
  %126 = vst [vmem:[%s4 + $0x50] sm:$0xff] %v110
  %127 = vst [vmem:[%s4 + $0x58] sm:$0xff] %v111
  %128 = vst [vmem:[%s4 + $0x60] sm:$0xff] %v112
  %129 = vst [vmem:[%s4 + $0x68] sm:$0xff] %v113
  %130 = vst [vmem:[%s4 + $0x70] sm:$0xff] %v114
  %131 = vst [vmem:[%s4 + $0x78] sm:$0xff] %v115
  // Predicated region
  $region18: #{downblock_forward.5} parent=0 // pred_check
    _
  $region19: #{downblock_forward.5} parent=0 // pred_check_branch
    %133 = sbr.rel (0) target = $region21
  $region20: #{downblock_forward.5} parent=0 // pred_region
    _
  $region21: #{downblock_forward.5} parent=0 // pred_fallthru
    _
  // Predicated region
  $region22: #{downblock_forward.5} parent=0 // pred_check
    _
  $region23: #{downblock_forward.5} parent=0 // pred_check_branch
    %135 = sbr.rel (0) target = $region25
  $region24: #{downblock_forward.5} parent=0 // pred_region
    _
  $region25: #{downblock_forward.5} parent=0 // pred_fallthru
    _

// kernel: downblock_forward.4
$region0: #{downblock_forward.4}
  #allocation0 [shape = 'u32[]', space=smem, size = 0x4, offset = 0x4, fixed_abs, tag = 'smem constant byte address 0x4 - core index']
  #allocation1 [shape = 'u32[72,128]{1,0:T(1,128)}', space=vmem, size = 0x9000, scoped, tag = 'internal scratch']
  %s0 = inlined_call_operand.vmem [shape: f32[2,16,16,128], index: 0, kind: input, shape index: {}]
  %s1 = inlined_call_operand.vmem [shape: f32[1,2,128], index: 1, kind: input, shape index: {}]
  %s2 = inlined_call_operand.vmem [shape: f32[1,128], index: 2, kind: input, shape index: {}]
  %s3 = inlined_call_operand.vmem [shape: f32[1,128], index: 3, kind: input, shape index: {}]
  %s4 = inlined_call_operand.vmem [shape: bf16[4,128,128], index: 4, kind: input, shape index: {}]
  %s5 = inlined_call_operand.vmem [shape: f32[1,128], index: 5, kind: input, shape index: {}]
  %s6 = inlined_call_operand.vmem [shape: f32[2,64,128], index: 6, kind: output, shape index: {0}]
  %s7 = inlined_call_operand.vmem [shape: f32[1,2,128], index: 7, kind: output, shape index: {1}]
  %8 = xla_tuple %s6, %s7
  %s9 = sld [smem:[#allocation0]]
  $region42: #{downblock_forward.4} parent=0
    _
  %s11 = ssub.s32 1, %s9
  %s12 = scalar_select 0, %s11, %s9
  // Predicated region
  $region2: #{downblock_forward.4} parent=0 // pred_check
    _
  $region3: #{downblock_forward.4} parent=0 // pred_check_branch
    %14 = sbr.rel (0) target = $region5
  $region4: #{downblock_forward.4} parent=0 // pred_region
    _
  $region5: #{downblock_forward.4} parent=0 // pred_fallthru
    _
  // Predicated region
  $region6: #{downblock_forward.4} parent=0 // pred_check
    _
  $region7: #{downblock_forward.4} parent=0 // pred_check_branch
    %16 = sbr.rel (0) target = $region9
  $region8: #{downblock_forward.4} parent=0 // pred_region
    _
  $region9: #{downblock_forward.4} parent=0 // pred_fallthru
    _
  // Predicated region
  $region10: #{downblock_forward.4} parent=0 // pred_check
    _
  $region11: #{downblock_forward.4} parent=0 // pred_check_branch
    %18 = sbr.rel (0) target = $region13
  $region12: #{downblock_forward.4} parent=0 // pred_region
    _
  $region13: #{downblock_forward.4} parent=0 // pred_fallthru
    _
  // Predicated region
  $region14: #{downblock_forward.4} parent=0 // pred_check
    _
  $region15: #{downblock_forward.4} parent=0 // pred_check_branch
    %20 = sbr.rel (0) target = $region17
  $region16: #{downblock_forward.4} parent=0 // pred_region
    _
  $region17: #{downblock_forward.4} parent=0 // pred_fallthru
    _
  // Predicated region
  $region18: #{downblock_forward.4} parent=0 // pred_check
    _
  $region19: #{downblock_forward.4} parent=0 // pred_check_branch
    %22 = sbr.rel (0) target = $region21
  $region20: #{downblock_forward.4} parent=0 // pred_region
    _
  $region21: #{downblock_forward.4} parent=0 // pred_fallthru
    _
  // Predicated region
  $region22: #{downblock_forward.4} parent=0 // pred_check
    _
  $region23: #{downblock_forward.4} parent=0 // pred_check_branch
    %24 = sbr.rel (0) target = $region25
  $region24: #{downblock_forward.4} parent=0 // pred_region
    _
  $region25: #{downblock_forward.4} parent=0 // pred_fallthru
    _
  %v25 = vld [vmem:[%s1] sm:$0x3]
  %v26 = vadd.f32 %v25, 0.0
  %v27 = vmul.f32 %v26, 0.001953125
  %v28 = vmul.f32 %v27, %v27
  %v30 = vrot.slane %v28, 7
  %v32 = vsub.f32 %v27, %v30
  %v33 = vmax.f32 %v32, 0.0
  %v34 = vadd.f32 %v33, 1e-05
  %v35 = vrsqrt.pop %v34
  %v36 = vmul.f32 %v35, %v34
  %v37 = vmul.f32 %v36, %v35
  %v38 = vmul.f32 0.5, %v37
  %v39 = vsub.f32 1.5, %v38
  %v40 = vmul.f32 %v35, %v39
  %vm41 = vweird.f32 %v34
  %vm42 = vweird.f32 %v35
  %vm43 = vmor %vm41, %vm42
  %v44 = vsel %vm43, %v35, %v40
  %v45 = vld [vmem:[%s2] sm:$0x1]
  %v47 = vperm.slane %v45, 0
  %v49 = vmul.f32 %v44, %v47
  %v50 = vld [vmem:[%s3] sm:$0x1]
  %v52 = vrot.slane %v49, 1
  %v54 = vmul.f32 %v27, %v52
  %v55 = vsub.f32 %v50, %v54
  %v56 = vld [vmem:[%s0] ss:$2 sm:$0xff]
  %s57 = scalar_lea.vmem %s0, 32
  %v58 = vld [vmem:[%s57] ss:$2 sm:$0xff]
  %s59 = scalar_lea.vmem %s0, 64
  %v60 = vld [vmem:[%s59] ss:$2 sm:$0xff]
  %s61 = scalar_lea.vmem %s0, 96
  %v62 = vld [vmem:[%s61] ss:$2 sm:$0xff]
  %s63 = scalar_lea.vmem %s0, 128
  %v64 = vld [vmem:[%s63] ss:$2 sm:$0xff]
  %s65 = scalar_lea.vmem %s0, 160
  %v66 = vld [vmem:[%s65] ss:$2 sm:$0xff]
  %s67 = scalar_lea.vmem %s0, 192
  %v68 = vld [vmem:[%s67] ss:$2 sm:$0xff]
  %s69 = scalar_lea.vmem %s0, 224
  %v70 = vld [vmem:[%s69] ss:$2 sm:$0xff]
  %s71 = scalar_lea.vmem %s0, 256
  %v72 = vld [vmem:[%s71] ss:$2 sm:$0xff]
  %s73 = scalar_lea.vmem %s0, 288
  %v74 = vld [vmem:[%s73] ss:$2 sm:$0xff]
  %s75 = scalar_lea.vmem %s0, 320
  %v76 = vld [vmem:[%s75] ss:$2 sm:$0xff]
  %s77 = scalar_lea.vmem %s0, 352
  %v78 = vld [vmem:[%s77] ss:$2 sm:$0xff]
  %s79 = scalar_lea.vmem %s0, 384
  %v80 = vld [vmem:[%s79] ss:$2 sm:$0xff]
  %s81 = scalar_lea.vmem %s0, 416
  %v82 = vld [vmem:[%s81] ss:$2 sm:$0xff]
  %s83 = scalar_lea.vmem %s0, 448
  %v84 = vld [vmem:[%s83] ss:$2 sm:$0xff]
  %s85 = scalar_lea.vmem %s0, 480
  %v86 = vld [vmem:[%s85] ss:$2 sm:$0xff]
  %v87 = vperm.slane %v49, 1
  %v88 = vmul.f32 %v56, %v87
  %v89 = vmul.f32 %v58, %v87
  %v90 = vmul.f32 %v60, %v87
  %v91 = vmul.f32 %v62, %v87
  %v92 = vmul.f32 %v64, %v87
  %v93 = vmul.f32 %v66, %v87
  %v94 = vmul.f32 %v68, %v87
  %v95 = vmul.f32 %v70, %v87
  %v96 = vmul.f32 %v72, %v87
  %v97 = vmul.f32 %v74, %v87
  %v98 = vmul.f32 %v76, %v87
  %v99 = vmul.f32 %v78, %v87
  %v100 = vmul.f32 %v80, %v87
  %v101 = vmul.f32 %v82, %v87
  %v102 = vmul.f32 %v84, %v87
  %v103 = vmul.f32 %v86, %v87
  %v105 = vperm.slane %v55, 0
  %v107 = vadd.f32 %v88, %v105
  %v108 = vadd.f32 %v89, %v105
  %v109 = vadd.f32 %v90, %v105
  %v110 = vadd.f32 %v91, %v105
  %v111 = vadd.f32 %v92, %v105
  %v112 = vadd.f32 %v93, %v105
  %v113 = vadd.f32 %v94, %v105
  %v114 = vadd.f32 %v95, %v105
  %v115 = vadd.f32 %v96, %v105
  %v116 = vadd.f32 %v97, %v105
  %v117 = vadd.f32 %v98, %v105
  %v118 = vadd.f32 %v99, %v105
  %v119 = vadd.f32 %v100, %v105
  %v120 = vadd.f32 %v101, %v105
  %v121 = vadd.f32 %v102, %v105
  %v122 = vadd.f32 %v103, %v105
  %v123 = vmax.f32 %v107, 0.0
  %v124 = vmax.f32 %v108, 0.0
  %v125 = vmax.f32 %v109, 0.0
  %v126 = vmax.f32 %v110, 0.0
  %v127 = vmax.f32 %v111, 0.0
  %v128 = vmax.f32 %v112, 0.0
  %v129 = vmax.f32 %v113, 0.0
  %v130 = vmax.f32 %v114, 0.0
  %v131 = vmax.f32 %v115, 0.0
  %v132 = vmax.f32 %v116, 0.0
  %v133 = vmax.f32 %v117, 0.0
  %v134 = vmax.f32 %v118, 0.0
  %v135 = vmax.f32 %v119, 0.0
  %v136 = vmax.f32 %v120, 0.0
  %v137 = vmax.f32 %v121, 0.0
  %v138 = vmax.f32 %v122, 0.0
  %v139 = vpack.c.bf16 %v124, %v123
  %v140 = vpack.c.bf16 %v126, %v125
  %v141 = vpack.c.bf16 %v128, %v127
  %v142 = vpack.c.bf16 %v130, %v129
  %v143 = vpack.c.bf16 %v132, %v131
  %v144 = vpack.c.bf16 %v134, %v133
  %v145 = vpack.c.bf16 %v136, %v135
  %v146 = vpack.c.bf16 %v138, %v137
  %v147 = vld [vmem:[%s4] sm:$0xf]
  %v148 = vld [vmem:[%s4 + $0x4] sm:$0xf]
  %v149 = vld [vmem:[%s4 + $0x8] sm:$0xf]
  %v150 = vld [vmem:[%s4 + $0xc] sm:$0xf]
  %v151 = vld [vmem:[%s4 + $0x10] sm:$0xf]
  %v152 = vld [vmem:[%s4 + $0x14] sm:$0xf]
  %v153 = vld [vmem:[%s4 + $0x18] sm:$0xf]
  %v154 = vld [vmem:[%s4 + $0x1c] sm:$0xf]
  %v155 = vld [vmem:[%s4 + $0x20] sm:$0xf]
  %v156 = vld [vmem:[%s4 + $0x24] sm:$0xf]
  %v157 = vld [vmem:[%s4 + $0x28] sm:$0xf]
  %v158 = vld [vmem:[%s4 + $0x2c] sm:$0xf]
  %v159 = vld [vmem:[%s4 + $0x30] sm:$0xf]
  %v160 = vld [vmem:[%s4 + $0x34] sm:$0xf]
  %v161 = vld [vmem:[%s4 + $0x38] sm:$0xf]
  %v162 = vld [vmem:[%s4 + $0x3c] sm:$0xf]
  %s163 = scalar_lea.vmem %s0, 1
  %v164 = vld [vmem:[%s163] ss:$2 sm:$0xff]
  %s165 = scalar_lea.vmem %s0, 33
  %v166 = vld [vmem:[%s165] ss:$2 sm:$0xff]
  %s167 = scalar_lea.vmem %s0, 65
  %v168 = vld [vmem:[%s167] ss:$2 sm:$0xff]
  %s169 = scalar_lea.vmem %s0, 97
  %v170 = vld [vmem:[%s169] ss:$2 sm:$0xff]
  %s171 = scalar_lea.vmem %s0, 129
  %v172 = vld [vmem:[%s171] ss:$2 sm:$0xff]
  %s173 = scalar_lea.vmem %s0, 161
  %v174 = vld [vmem:[%s173] ss:$2 sm:$0xff]
  %s175 = scalar_lea.vmem %s0, 193
  %v176 = vld [vmem:[%s175] ss:$2 sm:$0xff]
  %s177 = scalar_lea.vmem %s0, 225
  %v178 = vld [vmem:[%s177] ss:$2 sm:$0xff]
  %s179 = scalar_lea.vmem %s0, 257
  %v180 = vld [vmem:[%s179] ss:$2 sm:$0xff]
  %s181 = scalar_lea.vmem %s0, 289
  %v182 = vld [vmem:[%s181] ss:$2 sm:$0xff]
  %s183 = scalar_lea.vmem %s0, 321
  %v184 = vld [vmem:[%s183] ss:$2 sm:$0xff]
  %s185 = scalar_lea.vmem %s0, 353
  %v186 = vld [vmem:[%s185] ss:$2 sm:$0xff]
  %s187 = scalar_lea.vmem %s0, 385
  %v188 = vld [vmem:[%s187] ss:$2 sm:$0xff]
  %s189 = scalar_lea.vmem %s0, 417
  %v190 = vld [vmem:[%s189] ss:$2 sm:$0xff]
  %s191 = scalar_lea.vmem %s0, 449
  %v192 = vld [vmem:[%s191] ss:$2 sm:$0xff]
  %s193 = scalar_lea.vmem %s0, 481
  %v194 = vld [vmem:[%s193] ss:$2 sm:$0xff]
  %v195 = vmul.f32 %v164, %v87
  %v196 = vmul.f32 %v166, %v87
  %v197 = vmul.f32 %v168, %v87
  %v198 = vmul.f32 %v170, %v87
  %v199 = vmul.f32 %v172, %v87
  %v200 = vmul.f32 %v174, %v87
  %v201 = vmul.f32 %v176, %v87
  %v202 = vmul.f32 %v178, %v87
  %v203 = vmul.f32 %v180, %v87
  %v204 = vmul.f32 %v182, %v87
  %v205 = vmul.f32 %v184, %v87
  %v206 = vmul.f32 %v186, %v87
  %v207 = vmul.f32 %v188, %v87
  %v208 = vmul.f32 %v190, %v87
  %v209 = vmul.f32 %v192, %v87
  %v210 = vmul.f32 %v194, %v87
  %v211 = vadd.f32 %v195, %v105
  %v212 = vadd.f32 %v196, %v105
  %v213 = vadd.f32 %v197, %v105
  %v214 = vadd.f32 %v198, %v105
  %v215 = vadd.f32 %v199, %v105
  %v216 = vadd.f32 %v200, %v105
  %v217 = vadd.f32 %v201, %v105
  %v218 = vadd.f32 %v202, %v105
  %v219 = vadd.f32 %v203, %v105
  %v220 = vadd.f32 %v204, %v105
  %v221 = vadd.f32 %v205, %v105
  %v222 = vadd.f32 %v206, %v105
  %v223 = vadd.f32 %v207, %v105
  %v224 = vadd.f32 %v208, %v105
  %v225 = vadd.f32 %v209, %v105
  %v226 = vadd.f32 %v210, %v105
  %v227 = vmax.f32 %v211, 0.0
  %v228 = vmax.f32 %v212, 0.0
  %v229 = vmax.f32 %v213, 0.0
  %v230 = vmax.f32 %v214, 0.0
  %v231 = vmax.f32 %v215, 0.0
  %v232 = vmax.f32 %v216, 0.0
  %v233 = vmax.f32 %v217, 0.0
  %v234 = vmax.f32 %v218, 0.0
  %v235 = vmax.f32 %v219, 0.0
  %v236 = vmax.f32 %v220, 0.0
  %v237 = vmax.f32 %v221, 0.0
  %v238 = vmax.f32 %v222, 0.0
  %v239 = vmax.f32 %v223, 0.0
  %v240 = vmax.f32 %v224, 0.0
  %v241 = vmax.f32 %v225, 0.0
  %v242 = vmax.f32 %v226, 0.0
  %v243 = vpack.c.bf16 %v228, %v227
  %v244 = vpack.c.bf16 %v230, %v229
  %v245 = vpack.c.bf16 %v232, %v231
  %v246 = vpack.c.bf16 %v234, %v233
  %v247 = vpack.c.bf16 %v236, %v235
  %v248 = vpack.c.bf16 %v238, %v237
  %v249 = vpack.c.bf16 %v240, %v239
  %v250 = vpack.c.bf16 %v242, %v241
  %s251 = scalar_lea.vmem %s4, 64
  %v252 = vld [vmem:[%s251] sm:$0xf]
  %v253 = vld [vmem:[%s251 + $0x4] sm:$0xf]
  %v254 = vld [vmem:[%s251 + $0x8] sm:$0xf]
  %v255 = vld [vmem:[%s251 + $0xc] sm:$0xf]
  %v256 = vld [vmem:[%s251 + $0x10] sm:$0xf]
  %v257 = vld [vmem:[%s251 + $0x14] sm:$0xf]
  %v258 = vld [vmem:[%s251 + $0x18] sm:$0xf]
  %v259 = vld [vmem:[%s251 + $0x1c] sm:$0xf]
  %v260 = vld [vmem:[%s251 + $0x20] sm:$0xf]
  %v261 = vld [vmem:[%s251 + $0x24] sm:$0xf]
  %v262 = vld [vmem:[%s251 + $0x28] sm:$0xf]
  %v263 = vld [vmem:[%s251 + $0x2c] sm:$0xf]
  %v264 = vld [vmem:[%s251 + $0x30] sm:$0xf]
  %v265 = vld [vmem:[%s251 + $0x34] sm:$0xf]
  %v266 = vld [vmem:[%s251 + $0x38] sm:$0xf]
  %v267 = vld [vmem:[%s251 + $0x3c] sm:$0xf]
  %v284 = vunpack.c.l.b16 %v252
  %v285 = vunpack.c.l.b16 %v253
  %v286 = vunpack.c.l.b16 %v254
  %v287 = vunpack.c.l.b16 %v255
  %v288 = vunpack.c.l.b16 %v256
  %v289 = vunpack.c.l.b16 %v257
  %v290 = vunpack.c.l.b16 %v258
  %v291 = vunpack.c.l.b16 %v259
  %v292 = vunpack.c.l.b16 %v260
  %v293 = vunpack.c.l.b16 %v261
  %v294 = vunpack.c.l.b16 %v262
  %v295 = vunpack.c.l.b16 %v263
  %v296 = vunpack.c.l.b16 %v264
  %v297 = vunpack.c.l.b16 %v265
  %v298 = vunpack.c.l.b16 %v266
  %v299 = vunpack.c.l.b16 %v267
  %v300 = vpack.c.b16 %v285, %v284
  %v301 = vpack.c.b16 %v287, %v286
  %v302 = vpack.c.b16 %v289, %v288
  %v303 = vpack.c.b16 %v291, %v290
  %v304 = vpack.c.b16 %v293, %v292
  %v305 = vpack.c.b16 %v295, %v294
  %v306 = vpack.c.b16 %v297, %v296
  %v307 = vpack.c.b16 %v299, %v298
  %316 = vmatpush.bf16.msra.mxu0 %v307
  %317 = vmatpush.bf16.msra.mxu0 %v306
  %318 = vmatpush.bf16.msra.mxu0 %v305
  %319 = vmatpush.bf16.msra.mxu0 %v304
  %320 = vmatpush.bf16.msra.mxu0 %v303
  %321 = vmatpush.bf16.msra.mxu0 %v302
  %322 = vmatpush.bf16.msra.mxu0 %v301
  %323 = vmatpush.bf16.msra.mxu0 %v300
  %324 = vmatmul.bf16.gmra.mxu0 %v243
  %v325 = vpop.f32.mrf.mxu0
  %v326 = vadd.f32 0.0, %v325
  %v327 = vpop.f32.mrf.mxu0
  %v328 = vadd.f32 0.0, %v327
  %329 = vmatmul.bf16.gmra.mxu0 %v244
  %v330 = vpop.f32.mrf.mxu0
  %v331 = vadd.f32 0.0, %v330
  %v332 = vpop.f32.mrf.mxu0
  %v333 = vadd.f32 0.0, %v332
  %334 = vmatmul.bf16.gmra.mxu0 %v245
  %v335 = vpop.f32.mrf.mxu0
  %v336 = vadd.f32 0.0, %v335
  %v337 = vpop.f32.mrf.mxu0
  %v338 = vadd.f32 0.0, %v337
  %339 = vmatmul.bf16.gmra.mxu0 %v246
  %v340 = vpop.f32.mrf.mxu0
  %v341 = vadd.f32 0.0, %v340
  %v342 = vpop.f32.mrf.mxu0
  %v343 = vadd.f32 0.0, %v342
  %344 = vmatmul.bf16.gmra.mxu0 %v247
  %v345 = vpop.f32.mrf.mxu0
  %v346 = vadd.f32 0.0, %v345
  %v347 = vpop.f32.mrf.mxu0
  %v348 = vadd.f32 0.0, %v347
  %349 = vmatmul.bf16.gmra.mxu0 %v248
  %v350 = vpop.f32.mrf.mxu0
  %v351 = vadd.f32 0.0, %v350
  %v352 = vpop.f32.mrf.mxu0
  %v353 = vadd.f32 0.0, %v352
  %354 = vmatmul.bf16.gmra.mxu0 %v249
  %v355 = vpop.f32.mrf.mxu0
  %v356 = vadd.f32 0.0, %v355
  %v357 = vpop.f32.mrf.mxu0
  %v358 = vadd.f32 0.0, %v357
  %359 = vmatmul.bf16.gmra.mxu0 %v250
  %v360 = vpop.f32.mrf.mxu0
  %v361 = vadd.f32 0.0, %v360
  %v362 = vpop.f32.mrf.mxu0
  %v363 = vadd.f32 0.0, %v362
  %364 = vdwg.mxu0
  %v381 = vunpack.c.l.b16 %v147
  %v382 = vunpack.c.l.b16 %v148
  %v383 = vunpack.c.l.b16 %v149
  %v384 = vunpack.c.l.b16 %v150
  %v385 = vunpack.c.l.b16 %v151
  %v386 = vunpack.c.l.b16 %v152
  %v387 = vunpack.c.l.b16 %v153
  %v388 = vunpack.c.l.b16 %v154
  %v389 = vunpack.c.l.b16 %v155
  %v390 = vunpack.c.l.b16 %v156
  %v391 = vunpack.c.l.b16 %v157
  %v392 = vunpack.c.l.b16 %v158
  %v393 = vunpack.c.l.b16 %v159
  %v394 = vunpack.c.l.b16 %v160
  %v395 = vunpack.c.l.b16 %v161
  %v396 = vunpack.c.l.b16 %v162
  %v397 = vpack.c.b16 %v382, %v381
  %v398 = vpack.c.b16 %v384, %v383
  %v399 = vpack.c.b16 %v386, %v385
  %v400 = vpack.c.b16 %v388, %v387
  %v401 = vpack.c.b16 %v390, %v389
  %v402 = vpack.c.b16 %v392, %v391
  %v403 = vpack.c.b16 %v394, %v393
  %v404 = vpack.c.b16 %v396, %v395
  %413 = vmatpush.bf16.msra.mxu0 %v404
  %414 = vmatpush.bf16.msra.mxu0 %v403
  %415 = vmatpush.bf16.msra.mxu0 %v402
  %416 = vmatpush.bf16.msra.mxu0 %v401
  %417 = vmatpush.bf16.msra.mxu0 %v400
  %418 = vmatpush.bf16.msra.mxu0 %v399
  %419 = vmatpush.bf16.msra.mxu0 %v398
  %420 = vmatpush.bf16.msra.mxu0 %v397
  %421 = vmatmul.bf16.gmra.mxu0 %v139
  %v422 = vpop.f32.mrf.mxu0
  %v423 = vadd.f32 %v326, %v422
  %v424 = vpop.f32.mrf.mxu0
  %v425 = vadd.f32 %v328, %v424
  %426 = vmatmul.bf16.gmra.mxu0 %v140
  %v427 = vpop.f32.mrf.mxu0
  %v428 = vadd.f32 %v331, %v427
  %v429 = vpop.f32.mrf.mxu0
  %v430 = vadd.f32 %v333, %v429
  %431 = vmatmul.bf16.gmra.mxu0 %v141
  %v432 = vpop.f32.mrf.mxu0
  %v433 = vadd.f32 %v336, %v432
  %v434 = vpop.f32.mrf.mxu0
  %v435 = vadd.f32 %v338, %v434
  %436 = vmatmul.bf16.gmra.mxu0 %v142
  %v437 = vpop.f32.mrf.mxu0
  %v438 = vadd.f32 %v341, %v437
  %v439 = vpop.f32.mrf.mxu0
  %v440 = vadd.f32 %v343, %v439
  %441 = vmatmul.bf16.gmra.mxu0 %v143
  %v442 = vpop.f32.mrf.mxu0
  %v443 = vadd.f32 %v346, %v442
  %v444 = vpop.f32.mrf.mxu0
  %v445 = vadd.f32 %v348, %v444
  %446 = vmatmul.bf16.gmra.mxu0 %v144
  %v447 = vpop.f32.mrf.mxu0
  %v448 = vadd.f32 %v351, %v447
  %v449 = vpop.f32.mrf.mxu0
  %v450 = vadd.f32 %v353, %v449
  %451 = vmatmul.bf16.gmra.mxu0 %v145
  %v452 = vpop.f32.mrf.mxu0
  %v453 = vadd.f32 %v356, %v452
  %v454 = vpop.f32.mrf.mxu0
  %v455 = vadd.f32 %v358, %v454
  %456 = vmatmul.bf16.gmra.mxu0 %v146
  %v457 = vpop.f32.mrf.mxu0
  %v458 = vadd.f32 %v361, %v457
  %v459 = vpop.f32.mrf.mxu0
  %v460 = vadd.f32 %v363, %v459
  %461 = vdwg.mxu0
  %s462 = scalar_lea.vmem %s0, 16
  %v463 = vld [vmem:[%s462] ss:$2 sm:$0xff]
  %s464 = scalar_lea.vmem %s462, 32
  %v465 = vld [vmem:[%s464] ss:$2 sm:$0xff]
  %s466 = scalar_lea.vmem %s462, 64
  %v467 = vld [vmem:[%s466] ss:$2 sm:$0xff]
  %s468 = scalar_lea.vmem %s462, 96
  %v469 = vld [vmem:[%s468] ss:$2 sm:$0xff]
  %s470 = scalar_lea.vmem %s462, 128
  %v471 = vld [vmem:[%s470] ss:$2 sm:$0xff]
  %s472 = scalar_lea.vmem %s462, 160
  %v473 = vld [vmem:[%s472] ss:$2 sm:$0xff]
  %s474 = scalar_lea.vmem %s462, 192
  %v475 = vld [vmem:[%s474] ss:$2 sm:$0xff]
  %s476 = scalar_lea.vmem %s462, 224
  %v477 = vld [vmem:[%s476] ss:$2 sm:$0xff]
  %s478 = scalar_lea.vmem %s462, 256
  %v479 = vld [vmem:[%s478] ss:$2 sm:$0xff]
  %s480 = scalar_lea.vmem %s462, 288
  %v481 = vld [vmem:[%s480] ss:$2 sm:$0xff]
  %s482 = scalar_lea.vmem %s462, 320
  %v483 = vld [vmem:[%s482] ss:$2 sm:$0xff]
  %s484 = scalar_lea.vmem %s462, 352
  %v485 = vld [vmem:[%s484] ss:$2 sm:$0xff]
  %s486 = scalar_lea.vmem %s462, 384
  %v487 = vld [vmem:[%s486] ss:$2 sm:$0xff]
  %s488 = scalar_lea.vmem %s462, 416
  %v489 = vld [vmem:[%s488] ss:$2 sm:$0xff]
  %s490 = scalar_lea.vmem %s462, 448
  %v491 = vld [vmem:[%s490] ss:$2 sm:$0xff]
  %s492 = scalar_lea.vmem %s462, 480
  %v493 = vld [vmem:[%s492] ss:$2 sm:$0xff]
  %v494 = vmul.f32 %v463, %v87
  %v495 = vmul.f32 %v465, %v87
  %v496 = vmul.f32 %v467, %v87
  %v497 = vmul.f32 %v469, %v87
  %v498 = vmul.f32 %v471, %v87
  %v499 = vmul.f32 %v473, %v87
  %v500 = vmul.f32 %v475, %v87
  %v501 = vmul.f32 %v477, %v87
  %v502 = vmul.f32 %v479, %v87
  %v503 = vmul.f32 %v481, %v87
  %v504 = vmul.f32 %v483, %v87
  %v505 = vmul.f32 %v485, %v87
  %v506 = vmul.f32 %v487, %v87
  %v507 = vmul.f32 %v489, %v87
  %v508 = vmul.f32 %v491, %v87
  %v509 = vmul.f32 %v493, %v87
  %v510 = vadd.f32 %v494, %v105
  %v511 = vadd.f32 %v495, %v105
  %v512 = vadd.f32 %v496, %v105
  %v513 = vadd.f32 %v497, %v105
  %v514 = vadd.f32 %v498, %v105
  %v515 = vadd.f32 %v499, %v105
  %v516 = vadd.f32 %v500, %v105
  %v517 = vadd.f32 %v501, %v105
  %v518 = vadd.f32 %v502, %v105
  %v519 = vadd.f32 %v503, %v105
  %v520 = vadd.f32 %v504, %v105
  %v521 = vadd.f32 %v505, %v105
  %v522 = vadd.f32 %v506, %v105
  %v523 = vadd.f32 %v507, %v105
  %v524 = vadd.f32 %v508, %v105
  %v525 = vadd.f32 %v509, %v105
  %v526 = vmax.f32 %v510, 0.0
  %v527 = vmax.f32 %v511, 0.0
  %v528 = vmax.f32 %v512, 0.0
  %v529 = vmax.f32 %v513, 0.0
  %v530 = vmax.f32 %v514, 0.0
  %v531 = vmax.f32 %v515, 0.0
  %v532 = vmax.f32 %v516, 0.0
  %v533 = vmax.f32 %v517, 0.0
  %v534 = vmax.f32 %v518, 0.0
  %v535 = vmax.f32 %v519, 0.0
  %v536 = vmax.f32 %v520, 0.0
  %v537 = vmax.f32 %v521, 0.0
  %v538 = vmax.f32 %v522, 0.0
  %v539 = vmax.f32 %v523, 0.0
  %v540 = vmax.f32 %v524, 0.0
  %v541 = vmax.f32 %v525, 0.0
  %v542 = vpack.c.bf16 %v527, %v526
  %v543 = vpack.c.bf16 %v529, %v528
  %v544 = vpack.c.bf16 %v531, %v530
  %v545 = vpack.c.bf16 %v533, %v532
  %v546 = vpack.c.bf16 %v535, %v534
  %v547 = vpack.c.bf16 %v537, %v536
  %v548 = vpack.c.bf16 %v539, %v538
  %v549 = vpack.c.bf16 %v541, %v540
  %s550 = scalar_lea.vmem %s4, 128
  %v551 = vld [vmem:[%s550] sm:$0xf]
  %v552 = vld [vmem:[%s550 + $0x4] sm:$0xf]
  %v553 = vld [vmem:[%s550 + $0x8] sm:$0xf]
  %v554 = vld [vmem:[%s550 + $0xc] sm:$0xf]
  %v555 = vld [vmem:[%s550 + $0x10] sm:$0xf]
  %v556 = vld [vmem:[%s550 + $0x14] sm:$0xf]
  %v557 = vld [vmem:[%s550 + $0x18] sm:$0xf]
  %v558 = vld [vmem:[%s550 + $0x1c] sm:$0xf]
  %v559 = vld [vmem:[%s550 + $0x20] sm:$0xf]
  %v560 = vld [vmem:[%s550 + $0x24] sm:$0xf]
  %v561 = vld [vmem:[%s550 + $0x28] sm:$0xf]
  %v562 = vld [vmem:[%s550 + $0x2c] sm:$0xf]
  %v563 = vld [vmem:[%s550 + $0x30] sm:$0xf]
  %v564 = vld [vmem:[%s550 + $0x34] sm:$0xf]
  %v565 = vld [vmem:[%s550 + $0x38] sm:$0xf]
  %v566 = vld [vmem:[%s550 + $0x3c] sm:$0xf]
  %v583 = vunpack.c.l.b16 %v551
  %v584 = vunpack.c.l.b16 %v552
  %v585 = vunpack.c.l.b16 %v553
  %v586 = vunpack.c.l.b16 %v554
  %v587 = vunpack.c.l.b16 %v555
  %v588 = vunpack.c.l.b16 %v556
  %v589 = vunpack.c.l.b16 %v557
  %v590 = vunpack.c.l.b16 %v558
  %v591 = vunpack.c.l.b16 %v559
  %v592 = vunpack.c.l.b16 %v560
  %v593 = vunpack.c.l.b16 %v561
  %v594 = vunpack.c.l.b16 %v562
  %v595 = vunpack.c.l.b16 %v563
  %v596 = vunpack.c.l.b16 %v564
  %v597 = vunpack.c.l.b16 %v565
  %v598 = vunpack.c.l.b16 %v566
  %v599 = vpack.c.b16 %v584, %v583
  %v600 = vpack.c.b16 %v586, %v585
  %v601 = vpack.c.b16 %v588, %v587
  %v602 = vpack.c.b16 %v590, %v589
  %v603 = vpack.c.b16 %v592, %v591
  %v604 = vpack.c.b16 %v594, %v593
  %v605 = vpack.c.b16 %v596, %v595
  %v606 = vpack.c.b16 %v598, %v597
  %615 = vmatpush.bf16.msra.mxu0 %v606
  %616 = vmatpush.bf16.msra.mxu0 %v605
  %617 = vmatpush.bf16.msra.mxu0 %v604
  %618 = vmatpush.bf16.msra.mxu0 %v603
  %619 = vmatpush.bf16.msra.mxu0 %v602
  %620 = vmatpush.bf16.msra.mxu0 %v601
  %621 = vmatpush.bf16.msra.mxu0 %v600
  %622 = vmatpush.bf16.msra.mxu0 %v599
  %623 = vmatmul.bf16.gmra.mxu0 %v542
  %v624 = vpop.f32.mrf.mxu0
  %v625 = vadd.f32 0.0, %v624
  %v626 = vpop.f32.mrf.mxu0
  %v627 = vadd.f32 0.0, %v626
  %628 = vmatmul.bf16.gmra.mxu0 %v543
  %v629 = vpop.f32.mrf.mxu0
  %v630 = vadd.f32 0.0, %v629
  %v631 = vpop.f32.mrf.mxu0
  %v632 = vadd.f32 0.0, %v631
  %633 = vmatmul.bf16.gmra.mxu0 %v544
  %v634 = vpop.f32.mrf.mxu0
  %v635 = vadd.f32 0.0, %v634
  %v636 = vpop.f32.mrf.mxu0
  %v637 = vadd.f32 0.0, %v636
  %638 = vmatmul.bf16.gmra.mxu0 %v545
  %v639 = vpop.f32.mrf.mxu0
  %v640 = vadd.f32 0.0, %v639
  %v641 = vpop.f32.mrf.mxu0
  %v642 = vadd.f32 0.0, %v641
  %643 = vmatmul.bf16.gmra.mxu0 %v546
  %v644 = vpop.f32.mrf.mxu0
  %v645 = vadd.f32 0.0, %v644
  %v646 = vpop.f32.mrf.mxu0
  %v647 = vadd.f32 0.0, %v646
  %648 = vmatmul.bf16.gmra.mxu0 %v547
  %v649 = vpop.f32.mrf.mxu0
  %v650 = vadd.f32 0.0, %v649
  %v651 = vpop.f32.mrf.mxu0
  %v652 = vadd.f32 0.0, %v651
  %653 = vmatmul.bf16.gmra.mxu0 %v548
  %v654 = vpop.f32.mrf.mxu0
  %v655 = vadd.f32 0.0, %v654
  %v656 = vpop.f32.mrf.mxu0
  %v657 = vadd.f32 0.0, %v656
  %658 = vmatmul.bf16.gmra.mxu0 %v549
  %v659 = vpop.f32.mrf.mxu0
  %v660 = vadd.f32 0.0, %v659
  %v661 = vpop.f32.mrf.mxu0
  %v662 = vadd.f32 0.0, %v661
  %663 = vdwg.mxu0
  %v664 = vadd.f32 %v423, %v625
  %v665 = vadd.f32 %v425, %v627
  %v666 = vadd.f32 %v428, %v630
  %v667 = vadd.f32 %v430, %v632
  %v668 = vadd.f32 %v433, %v635
  %v669 = vadd.f32 %v435, %v637
  %v670 = vadd.f32 %v438, %v640
  %v671 = vadd.f32 %v440, %v642
  %v672 = vadd.f32 %v443, %v645
  %v673 = vadd.f32 %v445, %v647
  %v674 = vadd.f32 %v448, %v650
  %v675 = vadd.f32 %v450, %v652
  %v676 = vadd.f32 %v453, %v655
  %v677 = vadd.f32 %v455, %v657
  %v678 = vadd.f32 %v458, %v660
  %v679 = vadd.f32 %v460, %v662
  %s680 = scalar_lea.vmem %s462, 1
  %v681 = vld [vmem:[%s680] ss:$2 sm:$0xff]
  %s682 = scalar_lea.vmem %s462, 33
  %v683 = vld [vmem:[%s682] ss:$2 sm:$0xff]
  %s684 = scalar_lea.vmem %s462, 65
  %v685 = vld [vmem:[%s684] ss:$2 sm:$0xff]
  %s686 = scalar_lea.vmem %s462, 97
  %v687 = vld [vmem:[%s686] ss:$2 sm:$0xff]
  %s688 = scalar_lea.vmem %s462, 129
  %v689 = vld [vmem:[%s688] ss:$2 sm:$0xff]
  %s690 = scalar_lea.vmem %s462, 161
  %v691 = vld [vmem:[%s690] ss:$2 sm:$0xff]
  %s692 = scalar_lea.vmem %s462, 193
  %v693 = vld [vmem:[%s692] ss:$2 sm:$0xff]
  %s694 = scalar_lea.vmem %s462, 225
  %v695 = vld [vmem:[%s694] ss:$2 sm:$0xff]
  %s696 = scalar_lea.vmem %s462, 257
  %v697 = vld [vmem:[%s696] ss:$2 sm:$0xff]
  %s698 = scalar_lea.vmem %s462, 289
  %v699 = vld [vmem:[%s698] ss:$2 sm:$0xff]
  %s700 = scalar_lea.vmem %s462, 321
  %v701 = vld [vmem:[%s700] ss:$2 sm:$0xff]
  %s702 = scalar_lea.vmem %s462, 353
  %v703 = vld [vmem:[%s702] ss:$2 sm:$0xff]
  %s704 = scalar_lea.vmem %s462, 385
  %v705 = vld [vmem:[%s704] ss:$2 sm:$0xff]
  %s706 = scalar_lea.vmem %s462, 417
  %v707 = vld [vmem:[%s706] ss:$2 sm:$0xff]
  %s708 = scalar_lea.vmem %s462, 449
  %v709 = vld [vmem:[%s708] ss:$2 sm:$0xff]
  %s710 = scalar_lea.vmem %s462, 481
  %v711 = vld [vmem:[%s710] ss:$2 sm:$0xff]
  %v712 = vmul.f32 %v681, %v87
  %v713 = vmul.f32 %v683, %v87
  %v714 = vmul.f32 %v685, %v87
  %v715 = vmul.f32 %v687, %v87
  %v716 = vmul.f32 %v689, %v87
  %v717 = vmul.f32 %v691, %v87
  %v718 = vmul.f32 %v693, %v87
  %v719 = vmul.f32 %v695, %v87
  %v720 = vmul.f32 %v697, %v87
  %v721 = vmul.f32 %v699, %v87
  %v722 = vmul.f32 %v701, %v87
  %v723 = vmul.f32 %v703, %v87
  %v724 = vmul.f32 %v705, %v87
  %v725 = vmul.f32 %v707, %v87
  %v726 = vmul.f32 %v709, %v87
  %v727 = vmul.f32 %v711, %v87
  %v728 = vadd.f32 %v712, %v105
  %v729 = vadd.f32 %v713, %v105
  %v730 = vadd.f32 %v714, %v105
  %v731 = vadd.f32 %v715, %v105
  %v732 = vadd.f32 %v716, %v105
  %v733 = vadd.f32 %v717, %v105
  %v734 = vadd.f32 %v718, %v105
  %v735 = vadd.f32 %v719, %v105
  %v736 = vadd.f32 %v720, %v105
  %v737 = vadd.f32 %v721, %v105
  %v738 = vadd.f32 %v722, %v105
  %v739 = vadd.f32 %v723, %v105
  %v740 = vadd.f32 %v724, %v105
  %v741 = vadd.f32 %v725, %v105
  %v742 = vadd.f32 %v726, %v105
  %v743 = vadd.f32 %v727, %v105
  %v744 = vmax.f32 %v728, 0.0
  %v745 = vmax.f32 %v729, 0.0
  %v746 = vmax.f32 %v730, 0.0
  %v747 = vmax.f32 %v731, 0.0
  %v748 = vmax.f32 %v732, 0.0
  %v749 = vmax.f32 %v733, 0.0
  %v750 = vmax.f32 %v734, 0.0
  %v751 = vmax.f32 %v735, 0.0
  %v752 = vmax.f32 %v736, 0.0
  %v753 = vmax.f32 %v737, 0.0
  %v754 = vmax.f32 %v738, 0.0
  %v755 = vmax.f32 %v739, 0.0
  %v756 = vmax.f32 %v740, 0.0
  %v757 = vmax.f32 %v741, 0.0
  %v758 = vmax.f32 %v742, 0.0
  %v759 = vmax.f32 %v743, 0.0
  %v760 = vpack.c.bf16 %v745, %v744
  %v761 = vpack.c.bf16 %v747, %v746
  %v762 = vpack.c.bf16 %v749, %v748
  %v763 = vpack.c.bf16 %v751, %v750
  %v764 = vpack.c.bf16 %v753, %v752
  %v765 = vpack.c.bf16 %v755, %v754
  %v766 = vpack.c.bf16 %v757, %v756
  %v767 = vpack.c.bf16 %v759, %v758
  %s768 = scalar_lea.vmem %s4, 192
  %v769 = vld [vmem:[%s768] sm:$0xf]
  %v770 = vld [vmem:[%s768 + $0x4] sm:$0xf]
  %v771 = vld [vmem:[%s768 + $0x8] sm:$0xf]
  %v772 = vld [vmem:[%s768 + $0xc] sm:$0xf]
  %v773 = vld [vmem:[%s768 + $0x10] sm:$0xf]
  %v774 = vld [vmem:[%s768 + $0x14] sm:$0xf]
  %v775 = vld [vmem:[%s768 + $0x18] sm:$0xf]
  %v776 = vld [vmem:[%s768 + $0x1c] sm:$0xf]
  %v777 = vld [vmem:[%s768 + $0x20] sm:$0xf]
  %v778 = vld [vmem:[%s768 + $0x24] sm:$0xf]
  %v779 = vld [vmem:[%s768 + $0x28] sm:$0xf]
  %v780 = vld [vmem:[%s768 + $0x2c] sm:$0xf]
  %v781 = vld [vmem:[%s768 + $0x30] sm:$0xf]
  %v782 = vld [vmem:[%s768 + $0x34] sm:$0xf]
  %v783 = vld [vmem:[%s768 + $0x38] sm:$0xf]
  %v784 = vld [vmem:[%s768 + $0x3c] sm:$0xf]
  %v801 = vunpack.c.l.b16 %v769
  %v802 = vunpack.c.l.b16 %v770
  %v803 = vunpack.c.l.b16 %v771
  %v804 = vunpack.c.l.b16 %v772
  %v805 = vunpack.c.l.b16 %v773
  %v806 = vunpack.c.l.b16 %v774
  %v807 = vunpack.c.l.b16 %v775
  %v808 = vunpack.c.l.b16 %v776
  %v809 = vunpack.c.l.b16 %v777
  %v810 = vunpack.c.l.b16 %v778
  %v811 = vunpack.c.l.b16 %v779
  %v812 = vunpack.c.l.b16 %v780
  %v813 = vunpack.c.l.b16 %v781
  %v814 = vunpack.c.l.b16 %v782
  %v815 = vunpack.c.l.b16 %v783
  %v816 = vunpack.c.l.b16 %v784
  %v817 = vpack.c.b16 %v802, %v801
  %v818 = vpack.c.b16 %v804, %v803
  %v819 = vpack.c.b16 %v806, %v805
  %v820 = vpack.c.b16 %v808, %v807
  %v821 = vpack.c.b16 %v810, %v809
  %v822 = vpack.c.b16 %v812, %v811
  %v823 = vpack.c.b16 %v814, %v813
  %v824 = vpack.c.b16 %v816, %v815
  %833 = vmatpush.bf16.msra.mxu0 %v824
  %834 = vmatpush.bf16.msra.mxu0 %v823
  %835 = vmatpush.bf16.msra.mxu0 %v822
  %836 = vmatpush.bf16.msra.mxu0 %v821
  %837 = vmatpush.bf16.msra.mxu0 %v820
  %838 = vmatpush.bf16.msra.mxu0 %v819
  %839 = vmatpush.bf16.msra.mxu0 %v818
  %840 = vmatpush.bf16.msra.mxu0 %v817
  %841 = vmatmul.bf16.gmra.mxu0 %v760
  %v842 = vpop.f32.mrf.mxu0
  %v843 = vadd.f32 0.0, %v842
  %v844 = vpop.f32.mrf.mxu0
  %v845 = vadd.f32 0.0, %v844
  %846 = vmatmul.bf16.gmra.mxu0 %v761
  %v847 = vpop.f32.mrf.mxu0
  %v848 = vadd.f32 0.0, %v847
  %v849 = vpop.f32.mrf.mxu0
  %v850 = vadd.f32 0.0, %v849
  %851 = vmatmul.bf16.gmra.mxu0 %v762
  %v852 = vpop.f32.mrf.mxu0
  %v853 = vadd.f32 0.0, %v852
  %v854 = vpop.f32.mrf.mxu0
  %v855 = vadd.f32 0.0, %v854
  %856 = vmatmul.bf16.gmra.mxu0 %v763
  %v857 = vpop.f32.mrf.mxu0
  %v858 = vadd.f32 0.0, %v857
  %v859 = vpop.f32.mrf.mxu0
  %v860 = vadd.f32 0.0, %v859
  %861 = vmatmul.bf16.gmra.mxu0 %v764
  %v862 = vpop.f32.mrf.mxu0
  %v863 = vadd.f32 0.0, %v862
  %v864 = vpop.f32.mrf.mxu0
  %v865 = vadd.f32 0.0, %v864
  %866 = vmatmul.bf16.gmra.mxu0 %v765
  %v867 = vpop.f32.mrf.mxu0
  %v868 = vadd.f32 0.0, %v867
  %v869 = vpop.f32.mrf.mxu0
  %v870 = vadd.f32 0.0, %v869
  %871 = vmatmul.bf16.gmra.mxu0 %v766
  %v872 = vpop.f32.mrf.mxu0
  %v873 = vadd.f32 0.0, %v872
  %v874 = vpop.f32.mrf.mxu0
  %v875 = vadd.f32 0.0, %v874
  %876 = vmatmul.bf16.gmra.mxu0 %v767
  %v877 = vpop.f32.mrf.mxu0
  %v878 = vadd.f32 0.0, %v877
  %v879 = vpop.f32.mrf.mxu0
  %v880 = vadd.f32 0.0, %v879
  %881 = vdwg.mxu0
  %v882 = vadd.f32 %v664, %v843
  %v883 = vadd.f32 %v665, %v845
  %v884 = vadd.f32 %v666, %v848
  %v885 = vadd.f32 %v667, %v850
  %v886 = vadd.f32 %v668, %v853
  %v887 = vadd.f32 %v669, %v855
  %v888 = vadd.f32 %v670, %v858
  %v889 = vadd.f32 %v671, %v860
  %v890 = vadd.f32 %v672, %v863
  %v891 = vadd.f32 %v673, %v865
  %v892 = vadd.f32 %v674, %v868
  %v893 = vadd.f32 %v675, %v870
  %v894 = vadd.f32 %v676, %v873
  %v895 = vadd.f32 %v677, %v875
  %v896 = vadd.f32 %v678, %v878
  %v897 = vadd.f32 %v679, %v880
  %v898 = vld [vmem:[%s5] sm:$0x1]
  %v900 = vperm.slane %v898, 0
  %v902 = vadd.f32 %v882, %v900
  %v903 = vadd.f32 %v883, %v900
  %v904 = vadd.f32 %v884, %v900
  %v905 = vadd.f32 %v885, %v900
  %v906 = vadd.f32 %v886, %v900
  %v907 = vadd.f32 %v887, %v900
  %v908 = vadd.f32 %v888, %v900
  %v909 = vadd.f32 %v889, %v900
  %v910 = vadd.f32 %v890, %v900
  %v911 = vadd.f32 %v891, %v900
  %v912 = vadd.f32 %v892, %v900
  %v913 = vadd.f32 %v893, %v900
  %v914 = vadd.f32 %v894, %v900
  %v915 = vadd.f32 %v895, %v900
  %v916 = vadd.f32 %v896, %v900
  %v917 = vadd.f32 %v897, %v900
  %918 = vst [vmem:[%s6] sm:$0xff] %v902
  %919 = vst [vmem:[%s6 + $0x8] sm:$0xff] %v903
  %920 = vst [vmem:[%s6 + $0x10] sm:$0xff] %v904
  %921 = vst [vmem:[%s6 + $0x18] sm:$0xff] %v905
  %922 = vst [vmem:[%s6 + $0x20] sm:$0xff] %v906
  %923 = vst [vmem:[%s6 + $0x28] sm:$0xff] %v907
  %924 = vst [vmem:[%s6 + $0x30] sm:$0xff] %v908
  %925 = vst [vmem:[%s6 + $0x38] sm:$0xff] %v909
  %926 = vst [vmem:[%s6 + $0x40] sm:$0xff] %v910
  %927 = vst [vmem:[%s6 + $0x48] sm:$0xff] %v911
  %928 = vst [vmem:[%s6 + $0x50] sm:$0xff] %v912
  %929 = vst [vmem:[%s6 + $0x58] sm:$0xff] %v913
  %930 = vst [vmem:[%s6 + $0x60] sm:$0xff] %v914
  %931 = vst [vmem:[%s6 + $0x68] sm:$0xff] %v915
  %932 = vst [vmem:[%s6 + $0x70] sm:$0xff] %v916
  %933 = vst [vmem:[%s6 + $0x78] sm:$0xff] %v917
  %v934 = vadd.f32 %v902, %v903
  %v935 = vadd.f32 %v934, %v904
  %v936 = vadd.f32 %v935, %v905
  %v937 = vadd.f32 %v936, %v906
  %v938 = vadd.f32 %v937, %v907
  %v939 = vadd.f32 %v938, %v908
  %v940 = vadd.f32 %v939, %v909
  %v941 = vadd.f32 %v940, %v910
  %v942 = vadd.f32 %v941, %v911
  %v943 = vadd.f32 %v942, %v912
  %v944 = vadd.f32 %v943, %v913
  %v945 = vadd.f32 %v944, %v914
  %v946 = vadd.f32 %v945, %v915
  %v947 = vadd.f32 %v946, %v916
  %v948 = vadd.f32 %v947, %v917
  %v949 = vrot.slane %v948, 4
  %v950 = vadd.f32 %v948, %v949
  %v951 = vrot.slane %v950, 2
  %v952 = vadd.f32 %v950, %v951
  %v953 = vrot.slane %v952, 1
  %v954 = vadd.f32 %v952, %v953
  %v955 = vmul.f32 %v902, %v902
  %v956 = vmul.f32 %v903, %v903
  %v957 = vmul.f32 %v904, %v904
  %v958 = vmul.f32 %v905, %v905
  %v959 = vmul.f32 %v906, %v906
  %v960 = vmul.f32 %v907, %v907
  %v961 = vmul.f32 %v908, %v908
  %v962 = vmul.f32 %v909, %v909
  %v963 = vmul.f32 %v910, %v910
  %v964 = vmul.f32 %v911, %v911
  %v965 = vmul.f32 %v912, %v912
  %v966 = vmul.f32 %v913, %v913
  %v967 = vmul.f32 %v914, %v914
  %v968 = vmul.f32 %v915, %v915
  %v969 = vmul.f32 %v916, %v916
  %v970 = vmul.f32 %v917, %v917
  %v971 = vadd.f32 %v955, %v956
  %v972 = vadd.f32 %v971, %v957
  %v973 = vadd.f32 %v972, %v958
  %v974 = vadd.f32 %v973, %v959
  %v975 = vadd.f32 %v974, %v960
  %v976 = vadd.f32 %v975, %v961
  %v977 = vadd.f32 %v976, %v962
  %v978 = vadd.f32 %v977, %v963
  %v979 = vadd.f32 %v978, %v964
  %v980 = vadd.f32 %v979, %v965
  %v981 = vadd.f32 %v980, %v966
  %v982 = vadd.f32 %v981, %v967
  %v983 = vadd.f32 %v982, %v968
  %v984 = vadd.f32 %v983, %v969
  %v985 = vadd.f32 %v984, %v970
  %v986 = vrot.slane %v985, 4
  %v987 = vadd.f32 %v985, %v986
  %v988 = vrot.slane %v987, 2
  %v989 = vadd.f32 %v987, %v988
  %v990 = vrot.slane %v989, 1
  %v991 = vadd.f32 %v989, %v990
  %vm992 = vcmask 1040384
  %v993 = vsel %vm992, %v954, %v991
  %994 = vst [vmem:[%s7] sm:$0x3] %v993
  // Predicated region
  $region26: #{downblock_forward.4} parent=0 // pred_check
    _
  $region27: #{downblock_forward.4} parent=0 // pred_check_branch
    %996 = sbr.rel (0) target = $region29
  $region28: #{downblock_forward.4} parent=0 // pred_region
    _
  $region29: #{downblock_forward.4} parent=0 // pred_fallthru
    _
  // Predicated region
  $region30: #{downblock_forward.4} parent=0 // pred_check
    _
  $region31: #{downblock_forward.4} parent=0 // pred_check_branch
    %998 = sbr.rel (0) target = $region33
  $region32: #{downblock_forward.4} parent=0 // pred_region
    _
  $region33: #{downblock_forward.4} parent=0 // pred_fallthru
    _
  // Predicated region
  $region34: #{downblock_forward.4} parent=0 // pred_check
    _
  $region35: #{downblock_forward.4} parent=0 // pred_check_branch
    %1000 = sbr.rel (0) target = $region37
  $region36: #{downblock_forward.4} parent=0 // pred_region
    _
  $region37: #{downblock_forward.4} parent=0 // pred_fallthru
    _
  // Predicated region
  $region38: #{downblock_forward.4} parent=0 // pred_check
    _
  $region39: #{downblock_forward.4} parent=0 // pred_check_branch
    %1002 = sbr.rel (0) target = $region41
  $region40: #{downblock_forward.4} parent=0 // pred_region
    _
  $region41: #{downblock_forward.4} parent=0 // pred_fallthru
    _

// kernel: downblock_forward.3
$region0: #{downblock_forward.3}
  #allocation0 [shape = 'u32[]', space=smem, size = 0x4, offset = 0x4, fixed_abs, tag = 'smem constant byte address 0x4 - core index']
  #allocation1 [shape = 'u32[72,128]{1,0:T(1,128)}', space=vmem, size = 0x9000, scoped, tag = 'internal scratch']
  #allocation2 [shape = 'f32[2,18,18,128]{3,2,1,0:T(8,128)}', space=vmem, size = 0x6c000, scoped, tag = 'scratch operand']
  %s0 = inlined_call_operand.vmem [shape: f32[2,18,18,128], index: 0, kind: input, shape index: {}]
  %s1 = inlined_call_operand.vmem [shape: bf16[9,128,128], index: 1, kind: input, shape index: {}]
  %s2 = inlined_call_operand.vmem [shape: f32[1,128], index: 2, kind: input, shape index: {}]
  %s3 = inlined_call_operand.vmem [shape: bf16[9,128,128], index: 3, kind: input, shape index: {}]
  %s4 = inlined_call_operand.vmem [shape: f32[1,128], index: 4, kind: input, shape index: {}]
  %s5 = inlined_call_operand.vmem [shape: f32[2,16,16,128], index: 5, kind: output, shape index: {0}]
  %s6 = inlined_call_operand.vmem [shape: f32[1,2,128], index: 6, kind: output, shape index: {1}]
  %7 = xla_tuple %s5, %s6
  %s8 = sld [smem:[#allocation0]]
  $region38: #{downblock_forward.3} parent=0
    _
  %s10 = ssub.s32 1, %s8
  %s11 = scalar_select 0, %s10, %s8
  // Predicated region
  $region2: #{downblock_forward.3} parent=0 // pred_check
    _
  $region3: #{downblock_forward.3} parent=0 // pred_check_branch
    %13 = sbr.rel (0) target = $region5
  $region4: #{downblock_forward.3} parent=0 // pred_region
    _
  $region5: #{downblock_forward.3} parent=0 // pred_fallthru
    _
  // Predicated region
  $region6: #{downblock_forward.3} parent=0 // pred_check
    _
  $region7: #{downblock_forward.3} parent=0 // pred_check_branch
    %15 = sbr.rel (0) target = $region9
  $region8: #{downblock_forward.3} parent=0 // pred_region
    _
  $region9: #{downblock_forward.3} parent=0 // pred_fallthru
    _
  // Predicated region
  $region10: #{downblock_forward.3} parent=0 // pred_check
    _
  $region11: #{downblock_forward.3} parent=0 // pred_check_branch
    %17 = sbr.rel (0) target = $region13
  $region12: #{downblock_forward.3} parent=0 // pred_region
    _
  $region13: #{downblock_forward.3} parent=0 // pred_fallthru
    _
  // Predicated region
  $region14: #{downblock_forward.3} parent=0 // pred_check
    _
  $region15: #{downblock_forward.3} parent=0 // pred_check_branch
    %19 = sbr.rel (0) target = $region17
  $region16: #{downblock_forward.3} parent=0 // pred_region
    _
  $region17: #{downblock_forward.3} parent=0 // pred_fallthru
    _
  // Predicated region
  $region18: #{downblock_forward.3} parent=0 // pred_check
    _
  $region19: #{downblock_forward.3} parent=0 // pred_check_branch
    %21 = sbr.rel (0) target = $region21
  $region20: #{downblock_forward.3} parent=0 // pred_region
    _
  $region21: #{downblock_forward.3} parent=0 // pred_fallthru
    _
  %v22 = vld [vmem:[%s0] sm:$0xff]
  %v23 = vld [vmem:[%s0 + $0x8] sm:$0xff]
  %v24 = vld [vmem:[%s0 + $0x10] sm:$0x3]
  %v25 = vld [vmem:[%s0 + $0x18] sm:$0xff]
  %v26 = vld [vmem:[%s0 + $0x20] sm:$0xff]
  %v27 = vld [vmem:[%s0 + $0x28] sm:$0x3]
  %v28 = vld [vmem:[%s0 + $0x30] sm:$0xff]
  %v29 = vld [vmem:[%s0 + $0x38] sm:$0xff]
  %v30 = vld [vmem:[%s0 + $0x40] sm:$0x3]
  %v31 = vld [vmem:[%s0 + $0x48] sm:$0xff]
  %v32 = vld [vmem:[%s0 + $0x50] sm:$0xff]
  %v33 = vld [vmem:[%s0 + $0x58] sm:$0x3]
  %v34 = vld [vmem:[%s0 + $0x60] sm:$0xff]
  %v35 = vld [vmem:[%s0 + $0x68] sm:$0xff]
  %v36 = vld [vmem:[%s0 + $0x70] sm:$0x3]
  %v37 = vld [vmem:[%s0 + $0x78] sm:$0xff]
  %v38 = vld [vmem:[%s0 + $0x80] sm:$0xff]
  %v39 = vld [vmem:[%s0 + $0x88] sm:$0x3]
  %v40 = vld [vmem:[%s0 + $0x90] sm:$0xff]
  %v41 = vld [vmem:[%s0 + $0x98] sm:$0xff]
  %v42 = vld [vmem:[%s0 + $0xa0] sm:$0x3]
  %v43 = vld [vmem:[%s0 + $0xa8] sm:$0xff]
  %v44 = vld [vmem:[%s0 + $0xb0] sm:$0xff]
  %v45 = vld [vmem:[%s0 + $0xb8] sm:$0x3]
  %v46 = vld [vmem:[%s0 + $0xc0] sm:$0xff]
  %v47 = vld [vmem:[%s0 + $0xc8] sm:$0xff]
  %v48 = vld [vmem:[%s0 + $0xd0] sm:$0x3]
  %v49 = vld [vmem:[%s0 + $0xd8] sm:$0xff]
  %v50 = vld [vmem:[%s0 + $0xe0] sm:$0xff]
  %v51 = vld [vmem:[%s0 + $0xe8] sm:$0x3]
  %v52 = vld [vmem:[%s0 + $0xf0] sm:$0xff]
  %v53 = vld [vmem:[%s0 + $0xf8] sm:$0xff]
  %v54 = vld [vmem:[%s0 + $0x100] sm:$0x3]
  %v55 = vld [vmem:[%s0 + $0x108] sm:$0xff]
  %v56 = vld [vmem:[%s0 + $0x110] sm:$0xff]
  %v57 = vld [vmem:[%s0 + $0x118] sm:$0x3]
  %v58 = vld [vmem:[%s0 + $0x120] sm:$0xff]
  %v59 = vld [vmem:[%s0 + $0x128] sm:$0xff]
  %v60 = vld [vmem:[%s0 + $0x130] sm:$0x3]
  %v61 = vld [vmem:[%s0 + $0x138] sm:$0xff]
  %v62 = vld [vmem:[%s0 + $0x140] sm:$0xff]
  %v63 = vld [vmem:[%s0 + $0x148] sm:$0x3]
  %v64 = vld [vmem:[%s0 + $0x150] sm:$0xff]
  %v65 = vld [vmem:[%s0 + $0x158] sm:$0xff]
  %v66 = vld [vmem:[%s0 + $0x160] sm:$0x3]
  %v67 = vld [vmem:[%s0 + $0x168] sm:$0xff]
  %v68 = vld [vmem:[%s0 + $0x170] sm:$0xff]
  %v69 = vld [vmem:[%s0 + $0x178] sm:$0x3]
  %v70 = vld [vmem:[%s0 + $0x180] sm:$0xff]
  %v71 = vld [vmem:[%s0 + $0x188] sm:$0xff]
  %v72 = vld [vmem:[%s0 + $0x190] sm:$0x3]
  %v73 = vld [vmem:[%s0 + $0x198] sm:$0xff]
  %v74 = vld [vmem:[%s0 + $0x1a0] sm:$0xff]
  %v75 = vld [vmem:[%s0 + $0x1a8] sm:$0x3]
  %v76 = vld [vmem:[%s0 + $0x1b0] sm:$0xff]
  %v77 = vld [vmem:[%s0 + $0x1b8] sm:$0xff]
  %v78 = vld [vmem:[%s0 + $0x1c0] sm:$0x3]
  %v79 = vld [vmem:[%s0 + $0x1c8] sm:$0xff]
  %v80 = vld [vmem:[%s0 + $0x1d0] sm:$0xff]
  %v81 = vld [vmem:[%s0 + $0x1d8] sm:$0x3]
  %v82 = vld [vmem:[%s0 + $0x1e0] sm:$0xff]
  %v83 = vld [vmem:[%s0 + $0x1e8] sm:$0xff]
  %v84 = vld [vmem:[%s0 + $0x1f0] sm:$0x3]
  %v85 = vld [vmem:[%s0 + $0x1f8] sm:$0xff]
  %v86 = vld [vmem:[%s0 + $0x200] sm:$0xff]
  %v87 = vld [vmem:[%s0 + $0x208] sm:$0x3]
  %v88 = vld [vmem:[%s0 + $0x210] sm:$0xff]
  %v89 = vld [vmem:[%s0 + $0x218] sm:$0xff]
  %v90 = vld [vmem:[%s0 + $0x220] sm:$0x3]
  %v91 = vld [vmem:[%s0 + $0x228] sm:$0xff]
  %v92 = vld [vmem:[%s0 + $0x230] sm:$0xff]
  %v93 = vld [vmem:[%s0 + $0x238] sm:$0x3]
  %v94 = vld [vmem:[%s0 + $0x240] sm:$0xff]
  %v95 = vld [vmem:[%s0 + $0x248] sm:$0xff]
  %v96 = vld [vmem:[%s0 + $0x250] sm:$0x3]
  %v97 = vld [vmem:[%s0 + $0x258] sm:$0xff]
  %v98 = vld [vmem:[%s0 + $0x260] sm:$0xff]
  %v99 = vld [vmem:[%s0 + $0x268] sm:$0x3]
  %v100 = vld [vmem:[%s0 + $0x270] sm:$0xff]
  %v101 = vld [vmem:[%s0 + $0x278] sm:$0xff]
  %v102 = vld [vmem:[%s0 + $0x280] sm:$0x3]
  %v103 = vld [vmem:[%s0 + $0x288] sm:$0xff]
  %v104 = vld [vmem:[%s0 + $0x290] sm:$0xff]
  %v105 = vld [vmem:[%s0 + $0x298] sm:$0x3]
  %v106 = vld [vmem:[%s0 + $0x2a0] sm:$0xff]
  %v107 = vld [vmem:[%s0 + $0x2a8] sm:$0xff]
  %v108 = vld [vmem:[%s0 + $0x2b0] sm:$0x3]
  %v109 = vld [vmem:[%s0 + $0x2b8] sm:$0xff]
  %v110 = vld [vmem:[%s0 + $0x2c0] sm:$0xff]
  %v111 = vld [vmem:[%s0 + $0x2c8] sm:$0x3]
  %v112 = vld [vmem:[%s0 + $0x2d0] sm:$0xff]
  %v113 = vld [vmem:[%s0 + $0x2d8] sm:$0xff]
  %v114 = vld [vmem:[%s0 + $0x2e0] sm:$0x3]
  %v115 = vld [vmem:[%s0 + $0x2e8] sm:$0xff]
  %v116 = vld [vmem:[%s0 + $0x2f0] sm:$0xff]
  %v117 = vld [vmem:[%s0 + $0x2f8] sm:$0x3]
  %v118 = vld [vmem:[%s0 + $0x300] sm:$0xff]
  %v119 = vld [vmem:[%s0 + $0x308] sm:$0xff]
  %v120 = vld [vmem:[%s0 + $0x310] sm:$0x3]
  %v121 = vld [vmem:[%s0 + $0x318] sm:$0xff]
  %v122 = vld [vmem:[%s0 + $0x320] sm:$0xff]
  %v123 = vld [vmem:[%s0 + $0x328] sm:$0x3]
  %v124 = vld [vmem:[%s0 + $0x330] sm:$0xff]
  %v125 = vld [vmem:[%s0 + $0x338] sm:$0xff]
  %v126 = vld [vmem:[%s0 + $0x340] sm:$0x3]
  %v127 = vld [vmem:[%s0 + $0x348] sm:$0xff]
  %v128 = vld [vmem:[%s0 + $0x350] sm:$0xff]
  %v129 = vld [vmem:[%s0 + $0x358] sm:$0x3]
  %v130 = vld [vmem:[%s2] sm:$0x1]
  %v131 = vpack.c.bf16 %v23, %v22
  %v132 = vpack.c.bf16 %v26, %v25
  %v133 = vpack.c.bf16 %v29, %v28
  %v134 = vpack.c.bf16 %v32, %v31
  %v135 = vpack.c.bf16 %v35, %v34
  %v136 = vpack.c.bf16 %v38, %v37
  %v137 = vpack.c.bf16 %v41, %v40
  %v138 = vpack.c.bf16 %v44, %v43
  %v139 = vpack.c.bf16 %v47, %v46
  %v140 = vpack.c.bf16 %v50, %v49
  %v141 = vpack.c.bf16 %v53, %v52
  %v142 = vpack.c.bf16 %v56, %v55
  %v143 = vpack.c.bf16 %v59, %v58
  %v144 = vpack.c.bf16 %v62, %v61
  %v145 = vpack.c.bf16 %v65, %v64
  %v146 = vpack.c.bf16 %v68, %v67
  %v147 = vpack.c.bf16 %v77, %v76
  %v148 = vpack.c.bf16 %v80, %v79
  %v149 = vpack.c.bf16 %v83, %v82
  %v150 = vpack.c.bf16 %v86, %v85
  %v151 = vpack.c.bf16 %v89, %v88
  %v152 = vpack.c.bf16 %v92, %v91
  %v153 = vpack.c.bf16 %v95, %v94
  %v154 = vpack.c.bf16 %v98, %v97
  %v155 = vpack.c.bf16 %v101, %v100
  %v156 = vpack.c.bf16 %v104, %v103
  %v157 = vpack.c.bf16 %v107, %v106
  %v158 = vpack.c.bf16 %v110, %v109
  %v159 = vpack.c.bf16 %v113, %v112
  %v160 = vpack.c.bf16 %v116, %v115
  %v161 = vpack.c.bf16 %v119, %v118
  %v162 = vpack.c.bf16 %v122, %v121
  %v163 = vld [vmem:[%s1] sm:$0xf]
  %v164 = vld [vmem:[%s1 + $0x4] sm:$0xf]
  %v165 = vld [vmem:[%s1 + $0x8] sm:$0xf]
  %v166 = vld [vmem:[%s1 + $0xc] sm:$0xf]
  %v167 = vld [vmem:[%s1 + $0x10] sm:$0xf]
  %v168 = vld [vmem:[%s1 + $0x14] sm:$0xf]
  %v169 = vld [vmem:[%s1 + $0x18] sm:$0xf]
  %v170 = vld [vmem:[%s1 + $0x1c] sm:$0xf]
  %v171 = vld [vmem:[%s1 + $0x20] sm:$0xf]
  %v172 = vld [vmem:[%s1 + $0x24] sm:$0xf]
  %v173 = vld [vmem:[%s1 + $0x28] sm:$0xf]
  %v174 = vld [vmem:[%s1 + $0x2c] sm:$0xf]
  %v175 = vld [vmem:[%s1 + $0x30] sm:$0xf]
  %v176 = vld [vmem:[%s1 + $0x34] sm:$0xf]
  %v177 = vld [vmem:[%s1 + $0x38] sm:$0xf]
  %v178 = vld [vmem:[%s1 + $0x3c] sm:$0xf]
  %vm275 = vcmask 1046528
  %v276 = vrot.slane %v22, 1
  %v277 = vrot.slane %v23, 1
  %v278 = vsel %vm275, %v276, %v277
  %v279 = vrot.slane %v24, 1
  %v280 = vsel %vm275, %v277, %v279
  %v281 = vrot.slane %v25, 1
  %v282 = vrot.slane %v26, 1
  %v283 = vsel %vm275, %v281, %v282
  %v284 = vrot.slane %v27, 1
  %v285 = vsel %vm275, %v282, %v284
  %v286 = vrot.slane %v28, 1
  %v287 = vrot.slane %v29, 1
  %v288 = vsel %vm275, %v286, %v287
  %v289 = vrot.slane %v30, 1
  %v290 = vsel %vm275, %v287, %v289
  %v291 = vrot.slane %v31, 1
  %v292 = vrot.slane %v32, 1
  %v293 = vsel %vm275, %v291, %v292
  %v294 = vrot.slane %v33, 1
  %v295 = vsel %vm275, %v292, %v294
  %v296 = vrot.slane %v34, 1
  %v297 = vrot.slane %v35, 1
  %v298 = vsel %vm275, %v296, %v297
  %v299 = vrot.slane %v36, 1
  %v300 = vsel %vm275, %v297, %v299
  %v301 = vrot.slane %v37, 1
  %v302 = vrot.slane %v38, 1
  %v303 = vsel %vm275, %v301, %v302
  %v304 = vrot.slane %v39, 1
  %v305 = vsel %vm275, %v302, %v304
  %v306 = vrot.slane %v40, 1
  %v307 = vrot.slane %v41, 1
  %v308 = vsel %vm275, %v306, %v307
  %v309 = vrot.slane %v42, 1
  %v310 = vsel %vm275, %v307, %v309
  %v311 = vrot.slane %v43, 1
  %v312 = vrot.slane %v44, 1
  %v313 = vsel %vm275, %v311, %v312
  %v314 = vrot.slane %v45, 1
  %v315 = vsel %vm275, %v312, %v314
  %v316 = vrot.slane %v46, 1
  %v317 = vrot.slane %v47, 1
  %v318 = vsel %vm275, %v316, %v317
  %v319 = vrot.slane %v48, 1
  %v320 = vsel %vm275, %v317, %v319
  %v321 = vrot.slane %v49, 1
  %v322 = vrot.slane %v50, 1
  %v323 = vsel %vm275, %v321, %v322
  %v324 = vrot.slane %v51, 1
  %v325 = vsel %vm275, %v322, %v324
  %v326 = vrot.slane %v52, 1
  %v327 = vrot.slane %v53, 1
  %v328 = vsel %vm275, %v326, %v327
  %v329 = vrot.slane %v54, 1
  %v330 = vsel %vm275, %v327, %v329
  %v331 = vrot.slane %v55, 1
  %v332 = vrot.slane %v56, 1
  %v333 = vsel %vm275, %v331, %v332
  %v334 = vrot.slane %v57, 1
  %v335 = vsel %vm275, %v332, %v334
  %v336 = vrot.slane %v58, 1
  %v337 = vrot.slane %v59, 1
  %v338 = vsel %vm275, %v336, %v337
  %v339 = vrot.slane %v60, 1
  %v340 = vsel %vm275, %v337, %v339
  %v341 = vrot.slane %v61, 1
  %v342 = vrot.slane %v62, 1
  %v343 = vsel %vm275, %v341, %v342
  %v344 = vrot.slane %v63, 1
  %v345 = vsel %vm275, %v342, %v344
  %v346 = vrot.slane %v64, 1
  %v347 = vrot.slane %v65, 1
  %v348 = vsel %vm275, %v346, %v347
  %v349 = vrot.slane %v66, 1
  %v350 = vsel %vm275, %v347, %v349
  %v351 = vrot.slane %v67, 1
  %v352 = vrot.slane %v68, 1
  %v353 = vsel %vm275, %v351, %v352
  %v354 = vrot.slane %v69, 1
  %v355 = vsel %vm275, %v352, %v354
  %v356 = vrot.slane %v76, 1
  %v357 = vrot.slane %v77, 1
  %v358 = vsel %vm275, %v356, %v357
  %v359 = vrot.slane %v78, 1
  %v360 = vsel %vm275, %v357, %v359
  %v361 = vrot.slane %v79, 1
  %v362 = vrot.slane %v80, 1
  %v363 = vsel %vm275, %v361, %v362
  %v364 = vrot.slane %v81, 1
  %v365 = vsel %vm275, %v362, %v364
  %v366 = vrot.slane %v82, 1
  %v367 = vrot.slane %v83, 1
  %v368 = vsel %vm275, %v366, %v367
  %v369 = vrot.slane %v84, 1
  %v370 = vsel %vm275, %v367, %v369
  %v371 = vrot.slane %v85, 1
  %v372 = vrot.slane %v86, 1
  %v373 = vsel %vm275, %v371, %v372
  %v374 = vrot.slane %v87, 1
  %v375 = vsel %vm275, %v372, %v374
  %v376 = vrot.slane %v88, 1
  %v377 = vrot.slane %v89, 1
  %v378 = vsel %vm275, %v376, %v377
  %v379 = vrot.slane %v90, 1
  %v380 = vsel %vm275, %v377, %v379
  %v381 = vrot.slane %v91, 1
  %v382 = vrot.slane %v92, 1
  %v383 = vsel %vm275, %v381, %v382
  %v384 = vrot.slane %v93, 1
  %v385 = vsel %vm275, %v382, %v384
  %v386 = vrot.slane %v94, 1
  %v387 = vrot.slane %v95, 1
  %v388 = vsel %vm275, %v386, %v387
  %v389 = vrot.slane %v96, 1
  %v390 = vsel %vm275, %v387, %v389
  %v391 = vrot.slane %v97, 1
  %v392 = vrot.slane %v98, 1
  %v393 = vsel %vm275, %v391, %v392
  %v394 = vrot.slane %v99, 1
  %v395 = vsel %vm275, %v392, %v394
  %v396 = vrot.slane %v100, 1
  %v397 = vrot.slane %v101, 1
  %v398 = vsel %vm275, %v396, %v397
  %v399 = vrot.slane %v102, 1
  %v400 = vsel %vm275, %v397, %v399
  %v401 = vrot.slane %v103, 1
  %v402 = vrot.slane %v104, 1
  %v403 = vsel %vm275, %v401, %v402
  %v404 = vrot.slane %v105, 1
  %v405 = vsel %vm275, %v402, %v404
  %v406 = vrot.slane %v106, 1
  %v407 = vrot.slane %v107, 1
  %v408 = vsel %vm275, %v406, %v407
  %v409 = vrot.slane %v108, 1
  %v410 = vsel %vm275, %v407, %v409
  %v411 = vrot.slane %v109, 1
  %v412 = vrot.slane %v110, 1
  %v413 = vsel %vm275, %v411, %v412
  %v414 = vrot.slane %v111, 1
  %v415 = vsel %vm275, %v412, %v414
  %v416 = vrot.slane %v112, 1
  %v417 = vrot.slane %v113, 1
  %v418 = vsel %vm275, %v416, %v417
  %v419 = vrot.slane %v114, 1
  %v420 = vsel %vm275, %v417, %v419
  %v421 = vrot.slane %v115, 1
  %v422 = vrot.slane %v116, 1
  %v423 = vsel %vm275, %v421, %v422
  %v424 = vrot.slane %v117, 1
  %v425 = vsel %vm275, %v422, %v424
  %v426 = vrot.slane %v118, 1
  %v427 = vrot.slane %v119, 1
  %v428 = vsel %vm275, %v426, %v427
  %v429 = vrot.slane %v120, 1
  %v430 = vsel %vm275, %v427, %v429
  %v431 = vrot.slane %v121, 1
  %v432 = vrot.slane %v122, 1
  %v433 = vsel %vm275, %v431, %v432
  %v434 = vrot.slane %v123, 1
  %v435 = vsel %vm275, %v432, %v434
  %v500 = vpack.c.bf16 %v280, %v278
  %v501 = vpack.c.bf16 %v285, %v283
  %v502 = vpack.c.bf16 %v290, %v288
  %v503 = vpack.c.bf16 %v295, %v293
  %v504 = vpack.c.bf16 %v300, %v298
  %v505 = vpack.c.bf16 %v305, %v303
  %v506 = vpack.c.bf16 %v310, %v308
  %v507 = vpack.c.bf16 %v315, %v313
  %v508 = vpack.c.bf16 %v320, %v318
  %v509 = vpack.c.bf16 %v325, %v323
  %v510 = vpack.c.bf16 %v330, %v328
  %v511 = vpack.c.bf16 %v335, %v333
  %v512 = vpack.c.bf16 %v340, %v338
  %v513 = vpack.c.bf16 %v345, %v343
  %v514 = vpack.c.bf16 %v350, %v348
  %v515 = vpack.c.bf16 %v355, %v353
  %v516 = vpack.c.bf16 %v360, %v358
  %v517 = vpack.c.bf16 %v365, %v363
  %v518 = vpack.c.bf16 %v370, %v368
  %v519 = vpack.c.bf16 %v375, %v373
  %v520 = vpack.c.bf16 %v380, %v378
  %v521 = vpack.c.bf16 %v385, %v383
  %v522 = vpack.c.bf16 %v390, %v388
  %v523 = vpack.c.bf16 %v395, %v393
  %v524 = vpack.c.bf16 %v400, %v398
  %v525 = vpack.c.bf16 %v405, %v403
  %v526 = vpack.c.bf16 %v410, %v408
  %v527 = vpack.c.bf16 %v415, %v413
  %v528 = vpack.c.bf16 %v420, %v418
  %v529 = vpack.c.bf16 %v425, %v423
  %v530 = vpack.c.bf16 %v430, %v428
  %v531 = vpack.c.bf16 %v435, %v433
  %s532 = scalar_lea.vmem %s1, 64
  %v533 = vld [vmem:[%s532] sm:$0xf]
  %v534 = vld [vmem:[%s532 + $0x4] sm:$0xf]
  %v535 = vld [vmem:[%s532 + $0x8] sm:$0xf]
  %v536 = vld [vmem:[%s532 + $0xc] sm:$0xf]
  %v537 = vld [vmem:[%s532 + $0x10] sm:$0xf]
  %v538 = vld [vmem:[%s532 + $0x14] sm:$0xf]
  %v539 = vld [vmem:[%s532 + $0x18] sm:$0xf]
  %v540 = vld [vmem:[%s532 + $0x1c] sm:$0xf]
  %v541 = vld [vmem:[%s532 + $0x20] sm:$0xf]
  %v542 = vld [vmem:[%s532 + $0x24] sm:$0xf]
  %v543 = vld [vmem:[%s532 + $0x28] sm:$0xf]
  %v544 = vld [vmem:[%s532 + $0x2c] sm:$0xf]
  %v545 = vld [vmem:[%s532 + $0x30] sm:$0xf]
  %v546 = vld [vmem:[%s532 + $0x34] sm:$0xf]
  %v547 = vld [vmem:[%s532 + $0x38] sm:$0xf]
  %v548 = vld [vmem:[%s532 + $0x3c] sm:$0xf]
  %v565 = vunpack.c.l.b16 %v533
  %v566 = vunpack.c.l.b16 %v534
  %v567 = vunpack.c.l.b16 %v535
  %v568 = vunpack.c.l.b16 %v536
  %v569 = vunpack.c.l.b16 %v537
  %v570 = vunpack.c.l.b16 %v538
  %v571 = vunpack.c.l.b16 %v539
  %v572 = vunpack.c.l.b16 %v540
  %v573 = vunpack.c.l.b16 %v541
  %v574 = vunpack.c.l.b16 %v542
  %v575 = vunpack.c.l.b16 %v543
  %v576 = vunpack.c.l.b16 %v544
  %v577 = vunpack.c.l.b16 %v545
  %v578 = vunpack.c.l.b16 %v546
  %v579 = vunpack.c.l.b16 %v547
  %v580 = vunpack.c.l.b16 %v548
  %v581 = vpack.c.b16 %v566, %v565
  %v582 = vpack.c.b16 %v568, %v567
  %v583 = vpack.c.b16 %v570, %v569
  %v584 = vpack.c.b16 %v572, %v571
  %v585 = vpack.c.b16 %v574, %v573
  %v586 = vpack.c.b16 %v576, %v575
  %v587 = vpack.c.b16 %v578, %v577
  %v588 = vpack.c.b16 %v580, %v579
  %597 = vmatpush.bf16.msra.mxu0 %v588
  %598 = vmatpush.bf16.msra.mxu0 %v587
  %599 = vmatpush.bf16.msra.mxu0 %v586
  %600 = vmatpush.bf16.msra.mxu0 %v585
  %601 = vmatpush.bf16.msra.mxu0 %v584
  %602 = vmatpush.bf16.msra.mxu0 %v583
  %603 = vmatpush.bf16.msra.mxu0 %v582
  %604 = vmatpush.bf16.msra.mxu0 %v581
  %605 = vmatmul.bf16.gmra.mxu0 %v500
  %v606 = vpop.f32.mrf.mxu0
  %v607 = vadd.f32 0.0, %v606
  %v608 = vpop.f32.mrf.mxu0
  %v609 = vadd.f32 0.0, %v608
  %610 = vmatmul.bf16.gmra.mxu0 %v501
  %v611 = vpop.f32.mrf.mxu0
  %v612 = vadd.f32 0.0, %v611
  %v613 = vpop.f32.mrf.mxu0
  %v614 = vadd.f32 0.0, %v613
  %615 = vmatmul.bf16.gmra.mxu0 %v502
  %v616 = vpop.f32.mrf.mxu0
  %v617 = vadd.f32 0.0, %v616
  %v618 = vpop.f32.mrf.mxu0
  %v619 = vadd.f32 0.0, %v618
  %620 = vmatmul.bf16.gmra.mxu0 %v503
  %v621 = vpop.f32.mrf.mxu0
  %v622 = vadd.f32 0.0, %v621
  %v623 = vpop.f32.mrf.mxu0
  %v624 = vadd.f32 0.0, %v623
  %625 = vmatmul.bf16.gmra.mxu0 %v504
  %v626 = vpop.f32.mrf.mxu0
  %v627 = vadd.f32 0.0, %v626
  %v628 = vpop.f32.mrf.mxu0
  %v629 = vadd.f32 0.0, %v628
  %630 = vmatmul.bf16.gmra.mxu0 %v505
  %v631 = vpop.f32.mrf.mxu0
  %v632 = vadd.f32 0.0, %v631
  %v633 = vpop.f32.mrf.mxu0
  %v634 = vadd.f32 0.0, %v633
  %635 = vmatmul.bf16.gmra.mxu0 %v506
  %v636 = vpop.f32.mrf.mxu0
  %v637 = vadd.f32 0.0, %v636
  %v638 = vpop.f32.mrf.mxu0
  %v639 = vadd.f32 0.0, %v638
  %640 = vmatmul.bf16.gmra.mxu0 %v507
  %v641 = vpop.f32.mrf.mxu0
  %v642 = vadd.f32 0.0, %v641
  %v643 = vpop.f32.mrf.mxu0
  %v644 = vadd.f32 0.0, %v643
  %645 = vmatmul.bf16.gmra.mxu0 %v508
  %v646 = vpop.f32.mrf.mxu0
  %v647 = vadd.f32 0.0, %v646
  %v648 = vpop.f32.mrf.mxu0
  %v649 = vadd.f32 0.0, %v648
  %650 = vmatmul.bf16.gmra.mxu0 %v509
  %v651 = vpop.f32.mrf.mxu0
  %v652 = vadd.f32 0.0, %v651
  %v653 = vpop.f32.mrf.mxu0
  %v654 = vadd.f32 0.0, %v653
  %655 = vmatmul.bf16.gmra.mxu0 %v510
  %v656 = vpop.f32.mrf.mxu0
  %v657 = vadd.f32 0.0, %v656
  %v658 = vpop.f32.mrf.mxu0
  %v659 = vadd.f32 0.0, %v658
  %660 = vmatmul.bf16.gmra.mxu0 %v511
  %v661 = vpop.f32.mrf.mxu0
  %v662 = vadd.f32 0.0, %v661
  %v663 = vpop.f32.mrf.mxu0
  %v664 = vadd.f32 0.0, %v663
  %665 = vmatmul.bf16.gmra.mxu0 %v512
  %v666 = vpop.f32.mrf.mxu0
  %v667 = vadd.f32 0.0, %v666
  %v668 = vpop.f32.mrf.mxu0
  %v669 = vadd.f32 0.0, %v668
  %670 = vmatmul.bf16.gmra.mxu0 %v513
  %v671 = vpop.f32.mrf.mxu0
  %v672 = vadd.f32 0.0, %v671
  %v673 = vpop.f32.mrf.mxu0
  %v674 = vadd.f32 0.0, %v673
  %675 = vmatmul.bf16.gmra.mxu0 %v514
  %v676 = vpop.f32.mrf.mxu0
  %v677 = vadd.f32 0.0, %v676
  %v678 = vpop.f32.mrf.mxu0
  %v679 = vadd.f32 0.0, %v678
  %680 = vmatmul.bf16.gmra.mxu0 %v515
  %v681 = vpop.f32.mrf.mxu0
  %v682 = vadd.f32 0.0, %v681
  %v683 = vpop.f32.mrf.mxu0
  %v684 = vadd.f32 0.0, %v683
  %685 = vmatmul.bf16.gmra.mxu0 %v516
  %v686 = vpop.f32.mrf.mxu0
  %v687 = vadd.f32 0.0, %v686
  %v688 = vpop.f32.mrf.mxu0
  %v689 = vadd.f32 0.0, %v688
  %690 = vmatmul.bf16.gmra.mxu0 %v517
  %v691 = vpop.f32.mrf.mxu0
  %v692 = vadd.f32 0.0, %v691
  %v693 = vpop.f32.mrf.mxu0
  %v694 = vadd.f32 0.0, %v693
  %695 = vmatmul.bf16.gmra.mxu0 %v518
  %v696 = vpop.f32.mrf.mxu0
  %v697 = vadd.f32 0.0, %v696
  %v698 = vpop.f32.mrf.mxu0
  %v699 = vadd.f32 0.0, %v698
  %700 = vmatmul.bf16.gmra.mxu0 %v519
  %v701 = vpop.f32.mrf.mxu0
  %v702 = vadd.f32 0.0, %v701
  %v703 = vpop.f32.mrf.mxu0
  %v704 = vadd.f32 0.0, %v703
  %705 = vmatmul.bf16.gmra.mxu0 %v520
  %v706 = vpop.f32.mrf.mxu0
  %v707 = vadd.f32 0.0, %v706
  %v708 = vpop.f32.mrf.mxu0
  %v709 = vadd.f32 0.0, %v708
  %710 = vmatmul.bf16.gmra.mxu0 %v521
  %v711 = vpop.f32.mrf.mxu0
  %v712 = vadd.f32 0.0, %v711
  %v713 = vpop.f32.mrf.mxu0
  %v714 = vadd.f32 0.0, %v713
  %715 = vmatmul.bf16.gmra.mxu0 %v522
  %v716 = vpop.f32.mrf.mxu0
  %v717 = vadd.f32 0.0, %v716
  %v718 = vpop.f32.mrf.mxu0
  %v719 = vadd.f32 0.0, %v718
  %720 = vmatmul.bf16.gmra.mxu0 %v523
  %v721 = vpop.f32.mrf.mxu0
  %v722 = vadd.f32 0.0, %v721
  %v723 = vpop.f32.mrf.mxu0
  %v724 = vadd.f32 0.0, %v723
  %725 = vmatmul.bf16.gmra.mxu0 %v524
  %v726 = vpop.f32.mrf.mxu0
  %v727 = vadd.f32 0.0, %v726
  %v728 = vpop.f32.mrf.mxu0
  %v729 = vadd.f32 0.0, %v728
  %730 = vmatmul.bf16.gmra.mxu0 %v525
  %v731 = vpop.f32.mrf.mxu0
  %v732 = vadd.f32 0.0, %v731
  %v733 = vpop.f32.mrf.mxu0
  %v734 = vadd.f32 0.0, %v733
  %735 = vmatmul.bf16.gmra.mxu0 %v526
  %v736 = vpop.f32.mrf.mxu0
  %v737 = vadd.f32 0.0, %v736
  %v738 = vpop.f32.mrf.mxu0
  %v739 = vadd.f32 0.0, %v738
  %740 = vmatmul.bf16.gmra.mxu0 %v527
  %v741 = vpop.f32.mrf.mxu0
  %v742 = vadd.f32 0.0, %v741
  %v743 = vpop.f32.mrf.mxu0
  %v744 = vadd.f32 0.0, %v743
  %745 = vmatmul.bf16.gmra.mxu0 %v528
  %v746 = vpop.f32.mrf.mxu0
  %v747 = vadd.f32 0.0, %v746
  %v748 = vpop.f32.mrf.mxu0
  %v749 = vadd.f32 0.0, %v748
  %750 = vmatmul.bf16.gmra.mxu0 %v529
  %v751 = vpop.f32.mrf.mxu0
  %v752 = vadd.f32 0.0, %v751
  %v753 = vpop.f32.mrf.mxu0
  %v754 = vadd.f32 0.0, %v753
  %755 = vmatmul.bf16.gmra.mxu0 %v530
  %v756 = vpop.f32.mrf.mxu0
  %v757 = vadd.f32 0.0, %v756
  %v758 = vpop.f32.mrf.mxu0
  %v759 = vadd.f32 0.0, %v758
  %760 = vmatmul.bf16.gmra.mxu0 %v531
  %v761 = vpop.f32.mrf.mxu0
  %v762 = vadd.f32 0.0, %v761
  %v763 = vpop.f32.mrf.mxu0
  %v764 = vadd.f32 0.0, %v763
  %765 = vdwg.mxu0
  %v782 = vunpack.c.l.b16 %v163
  %v783 = vunpack.c.l.b16 %v164
  %v784 = vunpack.c.l.b16 %v165
  %v785 = vunpack.c.l.b16 %v166
  %v786 = vunpack.c.l.b16 %v167
  %v787 = vunpack.c.l.b16 %v168
  %v788 = vunpack.c.l.b16 %v169
  %v789 = vunpack.c.l.b16 %v170
  %v790 = vunpack.c.l.b16 %v171
  %v791 = vunpack.c.l.b16 %v172
  %v792 = vunpack.c.l.b16 %v173
  %v793 = vunpack.c.l.b16 %v174
  %v794 = vunpack.c.l.b16 %v175
  %v795 = vunpack.c.l.b16 %v176
  %v796 = vunpack.c.l.b16 %v177
  %v797 = vunpack.c.l.b16 %v178
  %v798 = vpack.c.b16 %v783, %v782
  %v799 = vpack.c.b16 %v785, %v784
  %v800 = vpack.c.b16 %v787, %v786
  %v801 = vpack.c.b16 %v789, %v788
  %v802 = vpack.c.b16 %v791, %v790
  %v803 = vpack.c.b16 %v793, %v792
  %v804 = vpack.c.b16 %v795, %v794
  %v805 = vpack.c.b16 %v797, %v796
  %814 = vmatpush.bf16.msra.mxu0 %v805
  %815 = vmatpush.bf16.msra.mxu0 %v804
  %816 = vmatpush.bf16.msra.mxu0 %v803
  %817 = vmatpush.bf16.msra.mxu0 %v802
  %818 = vmatpush.bf16.msra.mxu0 %v801
  %819 = vmatpush.bf16.msra.mxu0 %v800
  %820 = vmatpush.bf16.msra.mxu0 %v799
  %821 = vmatpush.bf16.msra.mxu0 %v798
  %822 = vmatmul.bf16.gmra.mxu0 %v131
  %v823 = vpop.f32.mrf.mxu0
  %v824 = vadd.f32 %v607, %v823
  %v825 = vpop.f32.mrf.mxu0
  %v826 = vadd.f32 %v609, %v825
  %827 = vmatmul.bf16.gmra.mxu0 %v132
  %v828 = vpop.f32.mrf.mxu0
  %v829 = vadd.f32 %v612, %v828
  %v830 = vpop.f32.mrf.mxu0
  %v831 = vadd.f32 %v614, %v830
  %832 = vmatmul.bf16.gmra.mxu0 %v133
  %v833 = vpop.f32.mrf.mxu0
  %v834 = vadd.f32 %v617, %v833
  %v835 = vpop.f32.mrf.mxu0
  %v836 = vadd.f32 %v619, %v835
  %837 = vmatmul.bf16.gmra.mxu0 %v134
  %v838 = vpop.f32.mrf.mxu0
  %v839 = vadd.f32 %v622, %v838
  %v840 = vpop.f32.mrf.mxu0
  %v841 = vadd.f32 %v624, %v840
  %842 = vmatmul.bf16.gmra.mxu0 %v135
  %v843 = vpop.f32.mrf.mxu0
  %v844 = vadd.f32 %v627, %v843
  %v845 = vpop.f32.mrf.mxu0
  %v846 = vadd.f32 %v629, %v845
  %847 = vmatmul.bf16.gmra.mxu0 %v136
  %v848 = vpop.f32.mrf.mxu0
  %v849 = vadd.f32 %v632, %v848
  %v850 = vpop.f32.mrf.mxu0
  %v851 = vadd.f32 %v634, %v850
  %852 = vmatmul.bf16.gmra.mxu0 %v137
  %v853 = vpop.f32.mrf.mxu0
  %v854 = vadd.f32 %v637, %v853
  %v855 = vpop.f32.mrf.mxu0
  %v856 = vadd.f32 %v639, %v855
  %857 = vmatmul.bf16.gmra.mxu0 %v138
  %v858 = vpop.f32.mrf.mxu0
  %v859 = vadd.f32 %v642, %v858
  %v860 = vpop.f32.mrf.mxu0
  %v861 = vadd.f32 %v644, %v860
  %862 = vmatmul.bf16.gmra.mxu0 %v139
  %v863 = vpop.f32.mrf.mxu0
  %v864 = vadd.f32 %v647, %v863
  %v865 = vpop.f32.mrf.mxu0
  %v866 = vadd.f32 %v649, %v865
  %867 = vmatmul.bf16.gmra.mxu0 %v140
  %v868 = vpop.f32.mrf.mxu0
  %v869 = vadd.f32 %v652, %v868
  %v870 = vpop.f32.mrf.mxu0
  %v871 = vadd.f32 %v654, %v870
  %872 = vmatmul.bf16.gmra.mxu0 %v141
  %v873 = vpop.f32.mrf.mxu0
  %v874 = vadd.f32 %v657, %v873
  %v875 = vpop.f32.mrf.mxu0
  %v876 = vadd.f32 %v659, %v875
  %877 = vmatmul.bf16.gmra.mxu0 %v142
  %v878 = vpop.f32.mrf.mxu0
  %v879 = vadd.f32 %v662, %v878
  %v880 = vpop.f32.mrf.mxu0
  %v881 = vadd.f32 %v664, %v880
  %882 = vmatmul.bf16.gmra.mxu0 %v143
  %v883 = vpop.f32.mrf.mxu0
  %v884 = vadd.f32 %v667, %v883
  %v885 = vpop.f32.mrf.mxu0
  %v886 = vadd.f32 %v669, %v885
  %887 = vmatmul.bf16.gmra.mxu0 %v144
  %v888 = vpop.f32.mrf.mxu0
  %v889 = vadd.f32 %v672, %v888
  %v890 = vpop.f32.mrf.mxu0
  %v891 = vadd.f32 %v674, %v890
  %892 = vmatmul.bf16.gmra.mxu0 %v145
  %v893 = vpop.f32.mrf.mxu0
  %v894 = vadd.f32 %v677, %v893
  %v895 = vpop.f32.mrf.mxu0
  %v896 = vadd.f32 %v679, %v895
  %897 = vmatmul.bf16.gmra.mxu0 %v146
  %v898 = vpop.f32.mrf.mxu0
  %v899 = vadd.f32 %v682, %v898
  %v900 = vpop.f32.mrf.mxu0
  %v901 = vadd.f32 %v684, %v900
  %902 = vmatmul.bf16.gmra.mxu0 %v147
  %v903 = vpop.f32.mrf.mxu0
  %v904 = vadd.f32 %v687, %v903
  %v905 = vpop.f32.mrf.mxu0
  %v906 = vadd.f32 %v689, %v905
  %907 = vmatmul.bf16.gmra.mxu0 %v148
  %v908 = vpop.f32.mrf.mxu0
  %v909 = vadd.f32 %v692, %v908
  %v910 = vpop.f32.mrf.mxu0
  %v911 = vadd.f32 %v694, %v910
  %912 = vmatmul.bf16.gmra.mxu0 %v149
  %v913 = vpop.f32.mrf.mxu0
  %v914 = vadd.f32 %v697, %v913
  %v915 = vpop.f32.mrf.mxu0
  %v916 = vadd.f32 %v699, %v915
  %917 = vmatmul.bf16.gmra.mxu0 %v150
  %v918 = vpop.f32.mrf.mxu0
  %v919 = vadd.f32 %v702, %v918
  %v920 = vpop.f32.mrf.mxu0
  %v921 = vadd.f32 %v704, %v920
  %922 = vmatmul.bf16.gmra.mxu0 %v151
  %v923 = vpop.f32.mrf.mxu0
  %v924 = vadd.f32 %v707, %v923
  %v925 = vpop.f32.mrf.mxu0
  %v926 = vadd.f32 %v709, %v925
  %927 = vmatmul.bf16.gmra.mxu0 %v152
  %v928 = vpop.f32.mrf.mxu0
  %v929 = vadd.f32 %v712, %v928
  %v930 = vpop.f32.mrf.mxu0
  %v931 = vadd.f32 %v714, %v930
  %932 = vmatmul.bf16.gmra.mxu0 %v153
  %v933 = vpop.f32.mrf.mxu0
  %v934 = vadd.f32 %v717, %v933
  %v935 = vpop.f32.mrf.mxu0
  %v936 = vadd.f32 %v719, %v935
  %937 = vmatmul.bf16.gmra.mxu0 %v154
  %v938 = vpop.f32.mrf.mxu0
  %v939 = vadd.f32 %v722, %v938
  %v940 = vpop.f32.mrf.mxu0
  %v941 = vadd.f32 %v724, %v940
  %942 = vmatmul.bf16.gmra.mxu0 %v155
  %v943 = vpop.f32.mrf.mxu0
  %v944 = vadd.f32 %v727, %v943
  %v945 = vpop.f32.mrf.mxu0
  %v946 = vadd.f32 %v729, %v945
  %947 = vmatmul.bf16.gmra.mxu0 %v156
  %v948 = vpop.f32.mrf.mxu0
  %v949 = vadd.f32 %v732, %v948
  %v950 = vpop.f32.mrf.mxu0
  %v951 = vadd.f32 %v734, %v950
  %952 = vmatmul.bf16.gmra.mxu0 %v157
  %v953 = vpop.f32.mrf.mxu0
  %v954 = vadd.f32 %v737, %v953
  %v955 = vpop.f32.mrf.mxu0
  %v956 = vadd.f32 %v739, %v955
  %957 = vmatmul.bf16.gmra.mxu0 %v158
  %v958 = vpop.f32.mrf.mxu0
  %v959 = vadd.f32 %v742, %v958
  %v960 = vpop.f32.mrf.mxu0
  %v961 = vadd.f32 %v744, %v960
  %962 = vmatmul.bf16.gmra.mxu0 %v159
  %v963 = vpop.f32.mrf.mxu0
  %v964 = vadd.f32 %v747, %v963
  %v965 = vpop.f32.mrf.mxu0
  %v966 = vadd.f32 %v749, %v965
  %967 = vmatmul.bf16.gmra.mxu0 %v160
  %v968 = vpop.f32.mrf.mxu0
  %v969 = vadd.f32 %v752, %v968
  %v970 = vpop.f32.mrf.mxu0
  %v971 = vadd.f32 %v754, %v970
  %972 = vmatmul.bf16.gmra.mxu0 %v161
  %v973 = vpop.f32.mrf.mxu0
  %v974 = vadd.f32 %v757, %v973
  %v975 = vpop.f32.mrf.mxu0
  %v976 = vadd.f32 %v759, %v975
  %977 = vmatmul.bf16.gmra.mxu0 %v162
  %v978 = vpop.f32.mrf.mxu0
  %v979 = vadd.f32 %v762, %v978
  %v980 = vpop.f32.mrf.mxu0
  %v981 = vadd.f32 %v764, %v980
  %982 = vdwg.mxu0
  %vm983 = vcmask 1045504
  %v984 = vrot.slane %v22, 2
  %v985 = vrot.slane %v23, 2
  %v986 = vsel %vm983, %v984, %v985
  %v987 = vrot.slane %v24, 2
  %v988 = vsel %vm983, %v985, %v987
  %v989 = vrot.slane %v25, 2
  %v990 = vrot.slane %v26, 2
  %v991 = vsel %vm983, %v989, %v990
  %v992 = vrot.slane %v27, 2
  %v993 = vsel %vm983, %v990, %v992
  %v994 = vrot.slane %v28, 2
  %v995 = vrot.slane %v29, 2
  %v996 = vsel %vm983, %v994, %v995
  %v997 = vrot.slane %v30, 2
  %v998 = vsel %vm983, %v995, %v997
  %v999 = vrot.slane %v31, 2
  %v1000 = vrot.slane %v32, 2
  %v1001 = vsel %vm983, %v999, %v1000
  %v1002 = vrot.slane %v33, 2
  %v1003 = vsel %vm983, %v1000, %v1002
  %v1004 = vrot.slane %v34, 2
  %v1005 = vrot.slane %v35, 2
  %v1006 = vsel %vm983, %v1004, %v1005
  %v1007 = vrot.slane %v36, 2
  %v1008 = vsel %vm983, %v1005, %v1007
  %v1009 = vrot.slane %v37, 2
  %v1010 = vrot.slane %v38, 2
  %v1011 = vsel %vm983, %v1009, %v1010
  %v1012 = vrot.slane %v39, 2
  %v1013 = vsel %vm983, %v1010, %v1012
  %v1014 = vrot.slane %v40, 2
  %v1015 = vrot.slane %v41, 2
  %v1016 = vsel %vm983, %v1014, %v1015
  %v1017 = vrot.slane %v42, 2
  %v1018 = vsel %vm983, %v1015, %v1017
  %v1019 = vrot.slane %v43, 2
  %v1020 = vrot.slane %v44, 2
  %v1021 = vsel %vm983, %v1019, %v1020
  %v1022 = vrot.slane %v45, 2
  %v1023 = vsel %vm983, %v1020, %v1022
  %v1024 = vrot.slane %v46, 2
  %v1025 = vrot.slane %v47, 2
  %v1026 = vsel %vm983, %v1024, %v1025
  %v1027 = vrot.slane %v48, 2
  %v1028 = vsel %vm983, %v1025, %v1027
  %v1029 = vrot.slane %v49, 2
  %v1030 = vrot.slane %v50, 2
  %v1031 = vsel %vm983, %v1029, %v1030
  %v1032 = vrot.slane %v51, 2
  %v1033 = vsel %vm983, %v1030, %v1032
  %v1034 = vrot.slane %v52, 2
  %v1035 = vrot.slane %v53, 2
  %v1036 = vsel %vm983, %v1034, %v1035
  %v1037 = vrot.slane %v54, 2
  %v1038 = vsel %vm983, %v1035, %v1037
  %v1039 = vrot.slane %v55, 2
  %v1040 = vrot.slane %v56, 2
  %v1041 = vsel %vm983, %v1039, %v1040
  %v1042 = vrot.slane %v57, 2
  %v1043 = vsel %vm983, %v1040, %v1042
  %v1044 = vrot.slane %v58, 2
  %v1045 = vrot.slane %v59, 2
  %v1046 = vsel %vm983, %v1044, %v1045
  %v1047 = vrot.slane %v60, 2
  %v1048 = vsel %vm983, %v1045, %v1047
  %v1049 = vrot.slane %v61, 2
  %v1050 = vrot.slane %v62, 2
  %v1051 = vsel %vm983, %v1049, %v1050
  %v1052 = vrot.slane %v63, 2
  %v1053 = vsel %vm983, %v1050, %v1052
  %v1054 = vrot.slane %v64, 2
  %v1055 = vrot.slane %v65, 2
  %v1056 = vsel %vm983, %v1054, %v1055
  %v1057 = vrot.slane %v66, 2
  %v1058 = vsel %vm983, %v1055, %v1057
  %v1059 = vrot.slane %v67, 2
  %v1060 = vrot.slane %v68, 2
  %v1061 = vsel %vm983, %v1059, %v1060
  %v1062 = vrot.slane %v69, 2
  %v1063 = vsel %vm983, %v1060, %v1062
  %v1064 = vrot.slane %v76, 2
  %v1065 = vrot.slane %v77, 2
  %v1066 = vsel %vm983, %v1064, %v1065
  %v1067 = vrot.slane %v78, 2
  %v1068 = vsel %vm983, %v1065, %v1067
  %v1069 = vrot.slane %v79, 2
  %v1070 = vrot.slane %v80, 2
  %v1071 = vsel %vm983, %v1069, %v1070
  %v1072 = vrot.slane %v81, 2
  %v1073 = vsel %vm983, %v1070, %v1072
  %v1074 = vrot.slane %v82, 2
  %v1075 = vrot.slane %v83, 2
  %v1076 = vsel %vm983, %v1074, %v1075
  %v1077 = vrot.slane %v84, 2
  %v1078 = vsel %vm983, %v1075, %v1077
  %v1079 = vrot.slane %v85, 2
  %v1080 = vrot.slane %v86, 2
  %v1081 = vsel %vm983, %v1079, %v1080
  %v1082 = vrot.slane %v87, 2
  %v1083 = vsel %vm983, %v1080, %v1082
  %v1084 = vrot.slane %v88, 2
  %v1085 = vrot.slane %v89, 2
  %v1086 = vsel %vm983, %v1084, %v1085
  %v1087 = vrot.slane %v90, 2
  %v1088 = vsel %vm983, %v1085, %v1087
  %v1089 = vrot.slane %v91, 2
  %v1090 = vrot.slane %v92, 2
  %v1091 = vsel %vm983, %v1089, %v1090
  %v1092 = vrot.slane %v93, 2
  %v1093 = vsel %vm983, %v1090, %v1092
  %v1094 = vrot.slane %v94, 2
  %v1095 = vrot.slane %v95, 2
  %v1096 = vsel %vm983, %v1094, %v1095
  %v1097 = vrot.slane %v96, 2
  %v1098 = vsel %vm983, %v1095, %v1097
  %v1099 = vrot.slane %v97, 2
  %v1100 = vrot.slane %v98, 2
  %v1101 = vsel %vm983, %v1099, %v1100
  %v1102 = vrot.slane %v99, 2
  %v1103 = vsel %vm983, %v1100, %v1102
  %v1104 = vrot.slane %v100, 2
  %v1105 = vrot.slane %v101, 2
  %v1106 = vsel %vm983, %v1104, %v1105
  %v1107 = vrot.slane %v102, 2
  %v1108 = vsel %vm983, %v1105, %v1107
  %v1109 = vrot.slane %v103, 2
  %v1110 = vrot.slane %v104, 2
  %v1111 = vsel %vm983, %v1109, %v1110
  %v1112 = vrot.slane %v105, 2
  %v1113 = vsel %vm983, %v1110, %v1112
  %v1114 = vrot.slane %v106, 2
  %v1115 = vrot.slane %v107, 2
  %v1116 = vsel %vm983, %v1114, %v1115
  %v1117 = vrot.slane %v108, 2
  %v1118 = vsel %vm983, %v1115, %v1117
  %v1119 = vrot.slane %v109, 2
  %v1120 = vrot.slane %v110, 2
  %v1121 = vsel %vm983, %v1119, %v1120
  %v1122 = vrot.slane %v111, 2
  %v1123 = vsel %vm983, %v1120, %v1122
  %v1124 = vrot.slane %v112, 2
  %v1125 = vrot.slane %v113, 2
  %v1126 = vsel %vm983, %v1124, %v1125
  %v1127 = vrot.slane %v114, 2
  %v1128 = vsel %vm983, %v1125, %v1127
  %v1129 = vrot.slane %v115, 2
  %v1130 = vrot.slane %v116, 2
  %v1131 = vsel %vm983, %v1129, %v1130
  %v1132 = vrot.slane %v117, 2
  %v1133 = vsel %vm983, %v1130, %v1132
  %v1134 = vrot.slane %v118, 2
  %v1135 = vrot.slane %v119, 2
  %v1136 = vsel %vm983, %v1134, %v1135
  %v1137 = vrot.slane %v120, 2
  %v1138 = vsel %vm983, %v1135, %v1137
  %v1139 = vrot.slane %v121, 2
  %v1140 = vrot.slane %v122, 2
  %v1141 = vsel %vm983, %v1139, %v1140
  %v1142 = vrot.slane %v123, 2
  %v1143 = vsel %vm983, %v1140, %v1142
  %v1208 = vpack.c.bf16 %v988, %v986
  %v1209 = vpack.c.bf16 %v993, %v991
  %v1210 = vpack.c.bf16 %v998, %v996
  %v1211 = vpack.c.bf16 %v1003, %v1001
  %v1212 = vpack.c.bf16 %v1008, %v1006
  %v1213 = vpack.c.bf16 %v1013, %v1011
  %v1214 = vpack.c.bf16 %v1018, %v1016
  %v1215 = vpack.c.bf16 %v1023, %v1021
  %v1216 = vpack.c.bf16 %v1028, %v1026
  %v1217 = vpack.c.bf16 %v1033, %v1031
  %v1218 = vpack.c.bf16 %v1038, %v1036
  %v1219 = vpack.c.bf16 %v1043, %v1041
  %v1220 = vpack.c.bf16 %v1048, %v1046
  %v1221 = vpack.c.bf16 %v1053, %v1051
  %v1222 = vpack.c.bf16 %v1058, %v1056
  %v1223 = vpack.c.bf16 %v1063, %v1061
  %v1224 = vpack.c.bf16 %v1068, %v1066
  %v1225 = vpack.c.bf16 %v1073, %v1071
  %v1226 = vpack.c.bf16 %v1078, %v1076
  %v1227 = vpack.c.bf16 %v1083, %v1081
  %v1228 = vpack.c.bf16 %v1088, %v1086
  %v1229 = vpack.c.bf16 %v1093, %v1091
  %v1230 = vpack.c.bf16 %v1098, %v1096
  %v1231 = vpack.c.bf16 %v1103, %v1101
  %v1232 = vpack.c.bf16 %v1108, %v1106
  %v1233 = vpack.c.bf16 %v1113, %v1111
  %v1234 = vpack.c.bf16 %v1118, %v1116
  %v1235 = vpack.c.bf16 %v1123, %v1121
  %v1236 = vpack.c.bf16 %v1128, %v1126
  %v1237 = vpack.c.bf16 %v1133, %v1131
  %v1238 = vpack.c.bf16 %v1138, %v1136
  %v1239 = vpack.c.bf16 %v1143, %v1141
  %s1240 = scalar_lea.vmem %s1, 128
  %v1241 = vld [vmem:[%s1240] sm:$0xf]
  %v1242 = vld [vmem:[%s1240 + $0x4] sm:$0xf]
  %v1243 = vld [vmem:[%s1240 + $0x8] sm:$0xf]
  %v1244 = vld [vmem:[%s1240 + $0xc] sm:$0xf]
  %v1245 = vld [vmem:[%s1240 + $0x10] sm:$0xf]
  %v1246 = vld [vmem:[%s1240 + $0x14] sm:$0xf]
  %v1247 = vld [vmem:[%s1240 + $0x18] sm:$0xf]
  %v1248 = vld [vmem:[%s1240 + $0x1c] sm:$0xf]
  %v1249 = vld [vmem:[%s1240 + $0x20] sm:$0xf]
  %v1250 = vld [vmem:[%s1240 + $0x24] sm:$0xf]
  %v1251 = vld [vmem:[%s1240 + $0x28] sm:$0xf]
  %v1252 = vld [vmem:[%s1240 + $0x2c] sm:$0xf]
  %v1253 = vld [vmem:[%s1240 + $0x30] sm:$0xf]
  %v1254 = vld [vmem:[%s1240 + $0x34] sm:$0xf]
  %v1255 = vld [vmem:[%s1240 + $0x38] sm:$0xf]
  %v1256 = vld [vmem:[%s1240 + $0x3c] sm:$0xf]
  %v1273 = vunpack.c.l.b16 %v1241
  %v1274 = vunpack.c.l.b16 %v1242
  %v1275 = vunpack.c.l.b16 %v1243
  %v1276 = vunpack.c.l.b16 %v1244
  %v1277 = vunpack.c.l.b16 %v1245
  %v1278 = vunpack.c.l.b16 %v1246
  %v1279 = vunpack.c.l.b16 %v1247
  %v1280 = vunpack.c.l.b16 %v1248
  %v1281 = vunpack.c.l.b16 %v1249
  %v1282 = vunpack.c.l.b16 %v1250
  %v1283 = vunpack.c.l.b16 %v1251
  %v1284 = vunpack.c.l.b16 %v1252
  %v1285 = vunpack.c.l.b16 %v1253
  %v1286 = vunpack.c.l.b16 %v1254
  %v1287 = vunpack.c.l.b16 %v1255
  %v1288 = vunpack.c.l.b16 %v1256
  %v1289 = vpack.c.b16 %v1274, %v1273
  %v1290 = vpack.c.b16 %v1276, %v1275
  %v1291 = vpack.c.b16 %v1278, %v1277
  %v1292 = vpack.c.b16 %v1280, %v1279
  %v1293 = vpack.c.b16 %v1282, %v1281
  %v1294 = vpack.c.b16 %v1284, %v1283
  %v1295 = vpack.c.b16 %v1286, %v1285
  %v1296 = vpack.c.b16 %v1288, %v1287
  %1305 = vmatpush.bf16.msra.mxu0 %v1296
  %1306 = vmatpush.bf16.msra.mxu0 %v1295
  %1307 = vmatpush.bf16.msra.mxu0 %v1294
  %1308 = vmatpush.bf16.msra.mxu0 %v1293
  %1309 = vmatpush.bf16.msra.mxu0 %v1292
  %1310 = vmatpush.bf16.msra.mxu0 %v1291
  %1311 = vmatpush.bf16.msra.mxu0 %v1290
  %1312 = vmatpush.bf16.msra.mxu0 %v1289
  %1313 = vmatmul.bf16.gmra.mxu0 %v1208
  %v1314 = vpop.f32.mrf.mxu0
  %v1315 = vadd.f32 0.0, %v1314
  %v1316 = vpop.f32.mrf.mxu0
  %v1317 = vadd.f32 0.0, %v1316
  %1318 = vmatmul.bf16.gmra.mxu0 %v1209
  %v1319 = vpop.f32.mrf.mxu0
  %v1320 = vadd.f32 0.0, %v1319
  %v1321 = vpop.f32.mrf.mxu0
  %v1322 = vadd.f32 0.0, %v1321
  %1323 = vmatmul.bf16.gmra.mxu0 %v1210
  %v1324 = vpop.f32.mrf.mxu0
  %v1325 = vadd.f32 0.0, %v1324
  %v1326 = vpop.f32.mrf.mxu0
  %v1327 = vadd.f32 0.0, %v1326
  %1328 = vmatmul.bf16.gmra.mxu0 %v1211
  %v1329 = vpop.f32.mrf.mxu0
  %v1330 = vadd.f32 0.0, %v1329
  %v1331 = vpop.f32.mrf.mxu0
  %v1332 = vadd.f32 0.0, %v1331
  %1333 = vmatmul.bf16.gmra.mxu0 %v1212
  %v1334 = vpop.f32.mrf.mxu0
  %v1335 = vadd.f32 0.0, %v1334
  %v1336 = vpop.f32.mrf.mxu0
  %v1337 = vadd.f32 0.0, %v1336
  %1338 = vmatmul.bf16.gmra.mxu0 %v1213
  %v1339 = vpop.f32.mrf.mxu0
  %v1340 = vadd.f32 0.0, %v1339
  %v1341 = vpop.f32.mrf.mxu0
  %v1342 = vadd.f32 0.0, %v1341
  %1343 = vmatmul.bf16.gmra.mxu0 %v1214
  %v1344 = vpop.f32.mrf.mxu0
  %v1345 = vadd.f32 0.0, %v1344
  %v1346 = vpop.f32.mrf.mxu0
  %v1347 = vadd.f32 0.0, %v1346
  %1348 = vmatmul.bf16.gmra.mxu0 %v1215
  %v1349 = vpop.f32.mrf.mxu0
  %v1350 = vadd.f32 0.0, %v1349
  %v1351 = vpop.f32.mrf.mxu0
  %v1352 = vadd.f32 0.0, %v1351
  %1353 = vmatmul.bf16.gmra.mxu0 %v1216
  %v1354 = vpop.f32.mrf.mxu0
  %v1355 = vadd.f32 0.0, %v1354
  %v1356 = vpop.f32.mrf.mxu0
  %v1357 = vadd.f32 0.0, %v1356
  %1358 = vmatmul.bf16.gmra.mxu0 %v1217
  %v1359 = vpop.f32.mrf.mxu0
  %v1360 = vadd.f32 0.0, %v1359
  %v1361 = vpop.f32.mrf.mxu0
  %v1362 = vadd.f32 0.0, %v1361
  %1363 = vmatmul.bf16.gmra.mxu0 %v1218
  %v1364 = vpop.f32.mrf.mxu0
  %v1365 = vadd.f32 0.0, %v1364
  %v1366 = vpop.f32.mrf.mxu0
  %v1367 = vadd.f32 0.0, %v1366
  %1368 = vmatmul.bf16.gmra.mxu0 %v1219
  %v1369 = vpop.f32.mrf.mxu0
  %v1370 = vadd.f32 0.0, %v1369
  %v1371 = vpop.f32.mrf.mxu0
  %v1372 = vadd.f32 0.0, %v1371
  %1373 = vmatmul.bf16.gmra.mxu0 %v1220
  %v1374 = vpop.f32.mrf.mxu0
  %v1375 = vadd.f32 0.0, %v1374
  %v1376 = vpop.f32.mrf.mxu0
  %v1377 = vadd.f32 0.0, %v1376
  %1378 = vmatmul.bf16.gmra.mxu0 %v1221
  %v1379 = vpop.f32.mrf.mxu0
  %v1380 = vadd.f32 0.0, %v1379
  %v1381 = vpop.f32.mrf.mxu0
  %v1382 = vadd.f32 0.0, %v1381
  %1383 = vmatmul.bf16.gmra.mxu0 %v1222
  %v1384 = vpop.f32.mrf.mxu0
  %v1385 = vadd.f32 0.0, %v1384
  %v1386 = vpop.f32.mrf.mxu0
  %v1387 = vadd.f32 0.0, %v1386
  %1388 = vmatmul.bf16.gmra.mxu0 %v1223
  %v1389 = vpop.f32.mrf.mxu0
  %v1390 = vadd.f32 0.0, %v1389
  %v1391 = vpop.f32.mrf.mxu0
  %v1392 = vadd.f32 0.0, %v1391
  %1393 = vmatmul.bf16.gmra.mxu0 %v1224
  %v1394 = vpop.f32.mrf.mxu0
  %v1395 = vadd.f32 0.0, %v1394
  %v1396 = vpop.f32.mrf.mxu0
  %v1397 = vadd.f32 0.0, %v1396
  %1398 = vmatmul.bf16.gmra.mxu0 %v1225
  %v1399 = vpop.f32.mrf.mxu0
  %v1400 = vadd.f32 0.0, %v1399
  %v1401 = vpop.f32.mrf.mxu0
  %v1402 = vadd.f32 0.0, %v1401
  %1403 = vmatmul.bf16.gmra.mxu0 %v1226
  %v1404 = vpop.f32.mrf.mxu0
  %v1405 = vadd.f32 0.0, %v1404
  %v1406 = vpop.f32.mrf.mxu0
  %v1407 = vadd.f32 0.0, %v1406
  %1408 = vmatmul.bf16.gmra.mxu0 %v1227
  %v1409 = vpop.f32.mrf.mxu0
  %v1410 = vadd.f32 0.0, %v1409
  %v1411 = vpop.f32.mrf.mxu0
  %v1412 = vadd.f32 0.0, %v1411
  %1413 = vmatmul.bf16.gmra.mxu0 %v1228
  %v1414 = vpop.f32.mrf.mxu0
  %v1415 = vadd.f32 0.0, %v1414
  %v1416 = vpop.f32.mrf.mxu0
  %v1417 = vadd.f32 0.0, %v1416
  %1418 = vmatmul.bf16.gmra.mxu0 %v1229
  %v1419 = vpop.f32.mrf.mxu0
  %v1420 = vadd.f32 0.0, %v1419
  %v1421 = vpop.f32.mrf.mxu0
  %v1422 = vadd.f32 0.0, %v1421
  %1423 = vmatmul.bf16.gmra.mxu0 %v1230
  %v1424 = vpop.f32.mrf.mxu0
  %v1425 = vadd.f32 0.0, %v1424
  %v1426 = vpop.f32.mrf.mxu0
  %v1427 = vadd.f32 0.0, %v1426
  %1428 = vmatmul.bf16.gmra.mxu0 %v1231
  %v1429 = vpop.f32.mrf.mxu0
  %v1430 = vadd.f32 0.0, %v1429
  %v1431 = vpop.f32.mrf.mxu0
  %v1432 = vadd.f32 0.0, %v1431
  %1433 = vmatmul.bf16.gmra.mxu0 %v1232
  %v1434 = vpop.f32.mrf.mxu0
  %v1435 = vadd.f32 0.0, %v1434
  %v1436 = vpop.f32.mrf.mxu0
  %v1437 = vadd.f32 0.0, %v1436
  %1438 = vmatmul.bf16.gmra.mxu0 %v1233
  %v1439 = vpop.f32.mrf.mxu0
  %v1440 = vadd.f32 0.0, %v1439
  %v1441 = vpop.f32.mrf.mxu0
  %v1442 = vadd.f32 0.0, %v1441
  %1443 = vmatmul.bf16.gmra.mxu0 %v1234
  %v1444 = vpop.f32.mrf.mxu0
  %v1445 = vadd.f32 0.0, %v1444
  %v1446 = vpop.f32.mrf.mxu0
  %v1447 = vadd.f32 0.0, %v1446
  %1448 = vmatmul.bf16.gmra.mxu0 %v1235
  %v1449 = vpop.f32.mrf.mxu0
  %v1450 = vadd.f32 0.0, %v1449
  %v1451 = vpop.f32.mrf.mxu0
  %v1452 = vadd.f32 0.0, %v1451
  %1453 = vmatmul.bf16.gmra.mxu0 %v1236
  %v1454 = vpop.f32.mrf.mxu0
  %v1455 = vadd.f32 0.0, %v1454
  %v1456 = vpop.f32.mrf.mxu0
  %v1457 = vadd.f32 0.0, %v1456
  %1458 = vmatmul.bf16.gmra.mxu0 %v1237
  %v1459 = vpop.f32.mrf.mxu0
  %v1460 = vadd.f32 0.0, %v1459
  %v1461 = vpop.f32.mrf.mxu0
  %v1462 = vadd.f32 0.0, %v1461
  %1463 = vmatmul.bf16.gmra.mxu0 %v1238
  %v1464 = vpop.f32.mrf.mxu0
  %v1465 = vadd.f32 0.0, %v1464
  %v1466 = vpop.f32.mrf.mxu0
  %v1467 = vadd.f32 0.0, %v1466
  %1468 = vmatmul.bf16.gmra.mxu0 %v1239
  %v1469 = vpop.f32.mrf.mxu0
  %v1470 = vadd.f32 0.0, %v1469
  %v1471 = vpop.f32.mrf.mxu0
  %v1472 = vadd.f32 0.0, %v1471
  %1473 = vdwg.mxu0
  %v1474 = vadd.f32 %v824, %v1315
  %v1475 = vadd.f32 %v826, %v1317
  %v1476 = vadd.f32 %v829, %v1320
  %v1477 = vadd.f32 %v831, %v1322
  %v1478 = vadd.f32 %v834, %v1325
  %v1479 = vadd.f32 %v836, %v1327
  %v1480 = vadd.f32 %v839, %v1330
  %v1481 = vadd.f32 %v841, %v1332
  %v1482 = vadd.f32 %v844, %v1335
  %v1483 = vadd.f32 %v846, %v1337
  %v1484 = vadd.f32 %v849, %v1340
  %v1485 = vadd.f32 %v851, %v1342
  %v1486 = vadd.f32 %v854, %v1345
  %v1487 = vadd.f32 %v856, %v1347
  %v1488 = vadd.f32 %v859, %v1350
  %v1489 = vadd.f32 %v861, %v1352
  %v1490 = vadd.f32 %v864, %v1355
  %v1491 = vadd.f32 %v866, %v1357
  %v1492 = vadd.f32 %v869, %v1360
  %v1493 = vadd.f32 %v871, %v1362
  %v1494 = vadd.f32 %v874, %v1365
  %v1495 = vadd.f32 %v876, %v1367
  %v1496 = vadd.f32 %v879, %v1370
  %v1497 = vadd.f32 %v881, %v1372
  %v1498 = vadd.f32 %v884, %v1375
  %v1499 = vadd.f32 %v886, %v1377
  %v1500 = vadd.f32 %v889, %v1380
  %v1501 = vadd.f32 %v891, %v1382
  %v1502 = vadd.f32 %v894, %v1385
  %v1503 = vadd.f32 %v896, %v1387
  %v1504 = vadd.f32 %v899, %v1390
  %v1505 = vadd.f32 %v901, %v1392
  %v1506 = vadd.f32 %v904, %v1395
  %v1507 = vadd.f32 %v906, %v1397
  %v1508 = vadd.f32 %v909, %v1400
  %v1509 = vadd.f32 %v911, %v1402
  %v1510 = vadd.f32 %v914, %v1405
  %v1511 = vadd.f32 %v916, %v1407
  %v1512 = vadd.f32 %v919, %v1410
  %v1513 = vadd.f32 %v921, %v1412
  %v1514 = vadd.f32 %v924, %v1415
  %v1515 = vadd.f32 %v926, %v1417
  %v1516 = vadd.f32 %v929, %v1420
  %v1517 = vadd.f32 %v931, %v1422
  %v1518 = vadd.f32 %v934, %v1425
  %v1519 = vadd.f32 %v936, %v1427
  %v1520 = vadd.f32 %v939, %v1430
  %v1521 = vadd.f32 %v941, %v1432
  %v1522 = vadd.f32 %v944, %v1435
  %v1523 = vadd.f32 %v946, %v1437
  %v1524 = vadd.f32 %v949, %v1440
  %v1525 = vadd.f32 %v951, %v1442
  %v1526 = vadd.f32 %v954, %v1445
  %v1527 = vadd.f32 %v956, %v1447
  %v1528 = vadd.f32 %v959, %v1450
  %v1529 = vadd.f32 %v961, %v1452
  %v1530 = vadd.f32 %v964, %v1455
  %v1531 = vadd.f32 %v966, %v1457
  %v1532 = vadd.f32 %v969, %v1460
  %v1533 = vadd.f32 %v971, %v1462
  %v1534 = vadd.f32 %v974, %v1465
  %v1535 = vadd.f32 %v976, %v1467
  %v1536 = vadd.f32 %v979, %v1470
  %v1537 = vadd.f32 %v981, %v1472
  %v1538 = vpack.c.bf16 %v71, %v70
  %v1539 = vpack.c.bf16 %v125, %v124
  %s1540 = scalar_lea.vmem %s1, 192
  %v1541 = vld [vmem:[%s1540] sm:$0xf]
  %v1542 = vld [vmem:[%s1540 + $0x4] sm:$0xf]
  %v1543 = vld [vmem:[%s1540 + $0x8] sm:$0xf]
  %v1544 = vld [vmem:[%s1540 + $0xc] sm:$0xf]
  %v1545 = vld [vmem:[%s1540 + $0x10] sm:$0xf]
  %v1546 = vld [vmem:[%s1540 + $0x14] sm:$0xf]
  %v1547 = vld [vmem:[%s1540 + $0x18] sm:$0xf]
  %v1548 = vld [vmem:[%s1540 + $0x1c] sm:$0xf]
  %v1549 = vld [vmem:[%s1540 + $0x20] sm:$0xf]
  %v1550 = vld [vmem:[%s1540 + $0x24] sm:$0xf]
  %v1551 = vld [vmem:[%s1540 + $0x28] sm:$0xf]
  %v1552 = vld [vmem:[%s1540 + $0x2c] sm:$0xf]
  %v1553 = vld [vmem:[%s1540 + $0x30] sm:$0xf]
  %v1554 = vld [vmem:[%s1540 + $0x34] sm:$0xf]
  %v1555 = vld [vmem:[%s1540 + $0x38] sm:$0xf]
  %v1556 = vld [vmem:[%s1540 + $0x3c] sm:$0xf]
  %v1573 = vunpack.c.l.b16 %v1541
  %v1574 = vunpack.c.l.b16 %v1542
  %v1575 = vunpack.c.l.b16 %v1543
  %v1576 = vunpack.c.l.b16 %v1544
  %v1577 = vunpack.c.l.b16 %v1545
  %v1578 = vunpack.c.l.b16 %v1546
  %v1579 = vunpack.c.l.b16 %v1547
  %v1580 = vunpack.c.l.b16 %v1548
  %v1581 = vunpack.c.l.b16 %v1549
  %v1582 = vunpack.c.l.b16 %v1550
  %v1583 = vunpack.c.l.b16 %v1551
  %v1584 = vunpack.c.l.b16 %v1552
  %v1585 = vunpack.c.l.b16 %v1553
  %v1586 = vunpack.c.l.b16 %v1554
  %v1587 = vunpack.c.l.b16 %v1555
  %v1588 = vunpack.c.l.b16 %v1556
  %v1589 = vpack.c.b16 %v1574, %v1573
  %v1590 = vpack.c.b16 %v1576, %v1575
  %v1591 = vpack.c.b16 %v1578, %v1577
  %v1592 = vpack.c.b16 %v1580, %v1579
  %v1593 = vpack.c.b16 %v1582, %v1581
  %v1594 = vpack.c.b16 %v1584, %v1583
  %v1595 = vpack.c.b16 %v1586, %v1585
  %v1596 = vpack.c.b16 %v1588, %v1587
  %1605 = vmatpush.bf16.msra.mxu0 %v1596
  %1606 = vmatpush.bf16.msra.mxu0 %v1595
  %1607 = vmatpush.bf16.msra.mxu0 %v1594
  %1608 = vmatpush.bf16.msra.mxu0 %v1593
  %1609 = vmatpush.bf16.msra.mxu0 %v1592
  %1610 = vmatpush.bf16.msra.mxu0 %v1591
  %1611 = vmatpush.bf16.msra.mxu0 %v1590
  %1612 = vmatpush.bf16.msra.mxu0 %v1589
  %1613 = vmatmul.bf16.gmra.mxu0 %v132
  %v1614 = vpop.f32.mrf.mxu0
  %v1615 = vadd.f32 0.0, %v1614
  %v1616 = vpop.f32.mrf.mxu0
  %v1617 = vadd.f32 0.0, %v1616
  %1618 = vmatmul.bf16.gmra.mxu0 %v133
  %v1619 = vpop.f32.mrf.mxu0
  %v1620 = vadd.f32 0.0, %v1619
  %v1621 = vpop.f32.mrf.mxu0
  %v1622 = vadd.f32 0.0, %v1621
  %1623 = vmatmul.bf16.gmra.mxu0 %v134
  %v1624 = vpop.f32.mrf.mxu0
  %v1625 = vadd.f32 0.0, %v1624
  %v1626 = vpop.f32.mrf.mxu0
  %v1627 = vadd.f32 0.0, %v1626
  %1628 = vmatmul.bf16.gmra.mxu0 %v135
  %v1629 = vpop.f32.mrf.mxu0
  %v1630 = vadd.f32 0.0, %v1629
  %v1631 = vpop.f32.mrf.mxu0
  %v1632 = vadd.f32 0.0, %v1631
  %1633 = vmatmul.bf16.gmra.mxu0 %v136
  %v1634 = vpop.f32.mrf.mxu0
  %v1635 = vadd.f32 0.0, %v1634
  %v1636 = vpop.f32.mrf.mxu0
  %v1637 = vadd.f32 0.0, %v1636
  %1638 = vmatmul.bf16.gmra.mxu0 %v137
  %v1639 = vpop.f32.mrf.mxu0
  %v1640 = vadd.f32 0.0, %v1639
  %v1641 = vpop.f32.mrf.mxu0
  %v1642 = vadd.f32 0.0, %v1641
  %1643 = vmatmul.bf16.gmra.mxu0 %v138
  %v1644 = vpop.f32.mrf.mxu0
  %v1645 = vadd.f32 0.0, %v1644
  %v1646 = vpop.f32.mrf.mxu0
  %v1647 = vadd.f32 0.0, %v1646
  %1648 = vmatmul.bf16.gmra.mxu0 %v139
  %v1649 = vpop.f32.mrf.mxu0
  %v1650 = vadd.f32 0.0, %v1649
  %v1651 = vpop.f32.mrf.mxu0
  %v1652 = vadd.f32 0.0, %v1651
  %1653 = vmatmul.bf16.gmra.mxu0 %v140
  %v1654 = vpop.f32.mrf.mxu0
  %v1655 = vadd.f32 0.0, %v1654
  %v1656 = vpop.f32.mrf.mxu0
  %v1657 = vadd.f32 0.0, %v1656
  %1658 = vmatmul.bf16.gmra.mxu0 %v141
  %v1659 = vpop.f32.mrf.mxu0
  %v1660 = vadd.f32 0.0, %v1659
  %v1661 = vpop.f32.mrf.mxu0
  %v1662 = vadd.f32 0.0, %v1661
  %1663 = vmatmul.bf16.gmra.mxu0 %v142
  %v1664 = vpop.f32.mrf.mxu0
  %v1665 = vadd.f32 0.0, %v1664
  %v1666 = vpop.f32.mrf.mxu0
  %v1667 = vadd.f32 0.0, %v1666
  %1668 = vmatmul.bf16.gmra.mxu0 %v143
  %v1669 = vpop.f32.mrf.mxu0
  %v1670 = vadd.f32 0.0, %v1669
  %v1671 = vpop.f32.mrf.mxu0
  %v1672 = vadd.f32 0.0, %v1671
  %1673 = vmatmul.bf16.gmra.mxu0 %v144
  %v1674 = vpop.f32.mrf.mxu0
  %v1675 = vadd.f32 0.0, %v1674
  %v1676 = vpop.f32.mrf.mxu0
  %v1677 = vadd.f32 0.0, %v1676
  %1678 = vmatmul.bf16.gmra.mxu0 %v145
  %v1679 = vpop.f32.mrf.mxu0
  %v1680 = vadd.f32 0.0, %v1679
  %v1681 = vpop.f32.mrf.mxu0
  %v1682 = vadd.f32 0.0, %v1681
  %1683 = vmatmul.bf16.gmra.mxu0 %v146
  %v1684 = vpop.f32.mrf.mxu0
  %v1685 = vadd.f32 0.0, %v1684
  %v1686 = vpop.f32.mrf.mxu0
  %v1687 = vadd.f32 0.0, %v1686
  %1688 = vmatmul.bf16.gmra.mxu0 %v1538
  %v1689 = vpop.f32.mrf.mxu0
  %v1690 = vadd.f32 0.0, %v1689
  %v1691 = vpop.f32.mrf.mxu0
  %v1692 = vadd.f32 0.0, %v1691
  %1693 = vmatmul.bf16.gmra.mxu0 %v148
  %v1694 = vpop.f32.mrf.mxu0
  %v1695 = vadd.f32 0.0, %v1694
  %v1696 = vpop.f32.mrf.mxu0
  %v1697 = vadd.f32 0.0, %v1696
  %1698 = vmatmul.bf16.gmra.mxu0 %v149
  %v1699 = vpop.f32.mrf.mxu0
  %v1700 = vadd.f32 0.0, %v1699
  %v1701 = vpop.f32.mrf.mxu0
  %v1702 = vadd.f32 0.0, %v1701
  %1703 = vmatmul.bf16.gmra.mxu0 %v150
  %v1704 = vpop.f32.mrf.mxu0
  %v1705 = vadd.f32 0.0, %v1704
  %v1706 = vpop.f32.mrf.mxu0
  %v1707 = vadd.f32 0.0, %v1706
  %1708 = vmatmul.bf16.gmra.mxu0 %v151
  %v1709 = vpop.f32.mrf.mxu0
  %v1710 = vadd.f32 0.0, %v1709
  %v1711 = vpop.f32.mrf.mxu0
  %v1712 = vadd.f32 0.0, %v1711
  %1713 = vmatmul.bf16.gmra.mxu0 %v152
  %v1714 = vpop.f32.mrf.mxu0
  %v1715 = vadd.f32 0.0, %v1714
  %v1716 = vpop.f32.mrf.mxu0
  %v1717 = vadd.f32 0.0, %v1716
  %1718 = vmatmul.bf16.gmra.mxu0 %v153
  %v1719 = vpop.f32.mrf.mxu0
  %v1720 = vadd.f32 0.0, %v1719
  %v1721 = vpop.f32.mrf.mxu0
  %v1722 = vadd.f32 0.0, %v1721
  %1723 = vmatmul.bf16.gmra.mxu0 %v154
  %v1724 = vpop.f32.mrf.mxu0
  %v1725 = vadd.f32 0.0, %v1724
  %v1726 = vpop.f32.mrf.mxu0
  %v1727 = vadd.f32 0.0, %v1726
  %1728 = vmatmul.bf16.gmra.mxu0 %v155
  %v1729 = vpop.f32.mrf.mxu0
  %v1730 = vadd.f32 0.0, %v1729
  %v1731 = vpop.f32.mrf.mxu0
  %v1732 = vadd.f32 0.0, %v1731
  %1733 = vmatmul.bf16.gmra.mxu0 %v156
  %v1734 = vpop.f32.mrf.mxu0
  %v1735 = vadd.f32 0.0, %v1734
  %v1736 = vpop.f32.mrf.mxu0
  %v1737 = vadd.f32 0.0, %v1736
  %1738 = vmatmul.bf16.gmra.mxu0 %v157
  %v1739 = vpop.f32.mrf.mxu0
  %v1740 = vadd.f32 0.0, %v1739
  %v1741 = vpop.f32.mrf.mxu0
  %v1742 = vadd.f32 0.0, %v1741
  %1743 = vmatmul.bf16.gmra.mxu0 %v158
  %v1744 = vpop.f32.mrf.mxu0
  %v1745 = vadd.f32 0.0, %v1744
  %v1746 = vpop.f32.mrf.mxu0
  %v1747 = vadd.f32 0.0, %v1746
  %1748 = vmatmul.bf16.gmra.mxu0 %v159
  %v1749 = vpop.f32.mrf.mxu0
  %v1750 = vadd.f32 0.0, %v1749
  %v1751 = vpop.f32.mrf.mxu0
  %v1752 = vadd.f32 0.0, %v1751
  %1753 = vmatmul.bf16.gmra.mxu0 %v160
  %v1754 = vpop.f32.mrf.mxu0
  %v1755 = vadd.f32 0.0, %v1754
  %v1756 = vpop.f32.mrf.mxu0
  %v1757 = vadd.f32 0.0, %v1756
  %1758 = vmatmul.bf16.gmra.mxu0 %v161
  %v1759 = vpop.f32.mrf.mxu0
  %v1760 = vadd.f32 0.0, %v1759
  %v1761 = vpop.f32.mrf.mxu0
  %v1762 = vadd.f32 0.0, %v1761
  %1763 = vmatmul.bf16.gmra.mxu0 %v162
  %v1764 = vpop.f32.mrf.mxu0
  %v1765 = vadd.f32 0.0, %v1764
  %v1766 = vpop.f32.mrf.mxu0
  %v1767 = vadd.f32 0.0, %v1766
  %1768 = vmatmul.bf16.gmra.mxu0 %v1539
  %v1769 = vpop.f32.mrf.mxu0
  %v1770 = vadd.f32 0.0, %v1769
  %v1771 = vpop.f32.mrf.mxu0
  %v1772 = vadd.f32 0.0, %v1771
  %1773 = vdwg.mxu0
  %v1774 = vadd.f32 %v1474, %v1615
  %v1775 = vadd.f32 %v1475, %v1617
  %v1776 = vadd.f32 %v1476, %v1620
  %v1777 = vadd.f32 %v1477, %v1622
  %v1778 = vadd.f32 %v1478, %v1625
  %v1779 = vadd.f32 %v1479, %v1627
  %v1780 = vadd.f32 %v1480, %v1630
  %v1781 = vadd.f32 %v1481, %v1632
  %v1782 = vadd.f32 %v1482, %v1635
  %v1783 = vadd.f32 %v1483, %v1637
  %v1784 = vadd.f32 %v1484, %v1640
  %v1785 = vadd.f32 %v1485, %v1642
  %v1786 = vadd.f32 %v1486, %v1645
  %v1787 = vadd.f32 %v1487, %v1647
  %v1788 = vadd.f32 %v1488, %v1650
  %v1789 = vadd.f32 %v1489, %v1652
  %v1790 = vadd.f32 %v1490, %v1655
  %v1791 = vadd.f32 %v1491, %v1657
  %v1792 = vadd.f32 %v1492, %v1660
  %v1793 = vadd.f32 %v1493, %v1662
  %v1794 = vadd.f32 %v1494, %v1665
  %v1795 = vadd.f32 %v1495, %v1667
  %v1796 = vadd.f32 %v1496, %v1670
  %v1797 = vadd.f32 %v1497, %v1672
  %v1798 = vadd.f32 %v1498, %v1675
  %v1799 = vadd.f32 %v1499, %v1677
  %v1800 = vadd.f32 %v1500, %v1680
  %v1801 = vadd.f32 %v1501, %v1682
  %v1802 = vadd.f32 %v1502, %v1685
  %v1803 = vadd.f32 %v1503, %v1687
  %v1804 = vadd.f32 %v1504, %v1690
  %v1805 = vadd.f32 %v1505, %v1692
  %v1806 = vadd.f32 %v1506, %v1695
  %v1807 = vadd.f32 %v1507, %v1697
  %v1808 = vadd.f32 %v1508, %v1700
  %v1809 = vadd.f32 %v1509, %v1702
  %v1810 = vadd.f32 %v1510, %v1705
  %v1811 = vadd.f32 %v1511, %v1707
  %v1812 = vadd.f32 %v1512, %v1710
  %v1813 = vadd.f32 %v1513, %v1712
  %v1814 = vadd.f32 %v1514, %v1715
  %v1815 = vadd.f32 %v1515, %v1717
  %v1816 = vadd.f32 %v1516, %v1720
  %v1817 = vadd.f32 %v1517, %v1722
  %v1818 = vadd.f32 %v1518, %v1725
  %v1819 = vadd.f32 %v1519, %v1727
  %v1820 = vadd.f32 %v1520, %v1730
  %v1821 = vadd.f32 %v1521, %v1732
  %v1822 = vadd.f32 %v1522, %v1735
  %v1823 = vadd.f32 %v1523, %v1737
  %v1824 = vadd.f32 %v1524, %v1740
  %v1825 = vadd.f32 %v1525, %v1742
  %v1826 = vadd.f32 %v1526, %v1745
  %v1827 = vadd.f32 %v1527, %v1747
  %v1828 = vadd.f32 %v1528, %v1750
  %v1829 = vadd.f32 %v1529, %v1752
  %v1830 = vadd.f32 %v1530, %v1755
  %v1831 = vadd.f32 %v1531, %v1757
  %v1832 = vadd.f32 %v1532, %v1760
  %v1833 = vadd.f32 %v1533, %v1762
  %v1834 = vadd.f32 %v1534, %v1765
  %v1835 = vadd.f32 %v1535, %v1767
  %v1836 = vadd.f32 %v1536, %v1770
  %v1837 = vadd.f32 %v1537, %v1772
  %v1844 = vrot.slane %v70, 1
  %v1845 = vrot.slane %v71, 1
  %v1846 = vsel %vm275, %v1844, %v1845
  %v1847 = vrot.slane %v72, 1
  %v1848 = vsel %vm275, %v1845, %v1847
  %v1849 = vrot.slane %v124, 1
  %v1850 = vrot.slane %v125, 1
  %v1851 = vsel %vm275, %v1849, %v1850
  %v1852 = vrot.slane %v126, 1
  %v1853 = vsel %vm275, %v1850, %v1852
  %v1858 = vpack.c.bf16 %v1848, %v1846
  %v1859 = vpack.c.bf16 %v1853, %v1851
  %s1860 = scalar_lea.vmem %s1, 256
  %v1861 = vld [vmem:[%s1860] sm:$0xf]
  %v1862 = vld [vmem:[%s1860 + $0x4] sm:$0xf]
  %v1863 = vld [vmem:[%s1860 + $0x8] sm:$0xf]
  %v1864 = vld [vmem:[%s1860 + $0xc] sm:$0xf]
  %v1865 = vld [vmem:[%s1860 + $0x10] sm:$0xf]
  %v1866 = vld [vmem:[%s1860 + $0x14] sm:$0xf]
  %v1867 = vld [vmem:[%s1860 + $0x18] sm:$0xf]
  %v1868 = vld [vmem:[%s1860 + $0x1c] sm:$0xf]
  %v1869 = vld [vmem:[%s1860 + $0x20] sm:$0xf]
  %v1870 = vld [vmem:[%s1860 + $0x24] sm:$0xf]
  %v1871 = vld [vmem:[%s1860 + $0x28] sm:$0xf]
  %v1872 = vld [vmem:[%s1860 + $0x2c] sm:$0xf]
  %v1873 = vld [vmem:[%s1860 + $0x30] sm:$0xf]
  %v1874 = vld [vmem:[%s1860 + $0x34] sm:$0xf]
  %v1875 = vld [vmem:[%s1860 + $0x38] sm:$0xf]
  %v1876 = vld [vmem:[%s1860 + $0x3c] sm:$0xf]
  %v1893 = vunpack.c.l.b16 %v1861
  %v1894 = vunpack.c.l.b16 %v1862
  %v1895 = vunpack.c.l.b16 %v1863
  %v1896 = vunpack.c.l.b16 %v1864
  %v1897 = vunpack.c.l.b16 %v1865
  %v1898 = vunpack.c.l.b16 %v1866
  %v1899 = vunpack.c.l.b16 %v1867
  %v1900 = vunpack.c.l.b16 %v1868
  %v1901 = vunpack.c.l.b16 %v1869
  %v1902 = vunpack.c.l.b16 %v1870
  %v1903 = vunpack.c.l.b16 %v1871
  %v1904 = vunpack.c.l.b16 %v1872
  %v1905 = vunpack.c.l.b16 %v1873
  %v1906 = vunpack.c.l.b16 %v1874
  %v1907 = vunpack.c.l.b16 %v1875
  %v1908 = vunpack.c.l.b16 %v1876
  %v1909 = vpack.c.b16 %v1894, %v1893
  %v1910 = vpack.c.b16 %v1896, %v1895
  %v1911 = vpack.c.b16 %v1898, %v1897
  %v1912 = vpack.c.b16 %v1900, %v1899
  %v1913 = vpack.c.b16 %v1902, %v1901
  %v1914 = vpack.c.b16 %v1904, %v1903
  %v1915 = vpack.c.b16 %v1906, %v1905
  %v1916 = vpack.c.b16 %v1908, %v1907
  %1925 = vmatpush.bf16.msra.mxu0 %v1916
  %1926 = vmatpush.bf16.msra.mxu0 %v1915
  %1927 = vmatpush.bf16.msra.mxu0 %v1914
  %1928 = vmatpush.bf16.msra.mxu0 %v1913
  %1929 = vmatpush.bf16.msra.mxu0 %v1912
  %1930 = vmatpush.bf16.msra.mxu0 %v1911
  %1931 = vmatpush.bf16.msra.mxu0 %v1910
  %1932 = vmatpush.bf16.msra.mxu0 %v1909
  %1933 = vmatmul.bf16.gmra.mxu0 %v501
  %v1934 = vpop.f32.mrf.mxu0
  %v1935 = vadd.f32 0.0, %v1934
  %v1936 = vpop.f32.mrf.mxu0
  %v1937 = vadd.f32 0.0, %v1936
  %1938 = vmatmul.bf16.gmra.mxu0 %v502
  %v1939 = vpop.f32.mrf.mxu0
  %v1940 = vadd.f32 0.0, %v1939
  %v1941 = vpop.f32.mrf.mxu0
  %v1942 = vadd.f32 0.0, %v1941
  %1943 = vmatmul.bf16.gmra.mxu0 %v503
  %v1944 = vpop.f32.mrf.mxu0
  %v1945 = vadd.f32 0.0, %v1944
  %v1946 = vpop.f32.mrf.mxu0
  %v1947 = vadd.f32 0.0, %v1946
  %1948 = vmatmul.bf16.gmra.mxu0 %v504
  %v1949 = vpop.f32.mrf.mxu0
  %v1950 = vadd.f32 0.0, %v1949
  %v1951 = vpop.f32.mrf.mxu0
  %v1952 = vadd.f32 0.0, %v1951
  %1953 = vmatmul.bf16.gmra.mxu0 %v505
  %v1954 = vpop.f32.mrf.mxu0
  %v1955 = vadd.f32 0.0, %v1954
  %v1956 = vpop.f32.mrf.mxu0
  %v1957 = vadd.f32 0.0, %v1956
  %1958 = vmatmul.bf16.gmra.mxu0 %v506
  %v1959 = vpop.f32.mrf.mxu0
  %v1960 = vadd.f32 0.0, %v1959
  %v1961 = vpop.f32.mrf.mxu0
  %v1962 = vadd.f32 0.0, %v1961
  %1963 = vmatmul.bf16.gmra.mxu0 %v507
  %v1964 = vpop.f32.mrf.mxu0
  %v1965 = vadd.f32 0.0, %v1964
  %v1966 = vpop.f32.mrf.mxu0
  %v1967 = vadd.f32 0.0, %v1966
  %1968 = vmatmul.bf16.gmra.mxu0 %v508
  %v1969 = vpop.f32.mrf.mxu0
  %v1970 = vadd.f32 0.0, %v1969
  %v1971 = vpop.f32.mrf.mxu0
  %v1972 = vadd.f32 0.0, %v1971
  %1973 = vmatmul.bf16.gmra.mxu0 %v509
  %v1974 = vpop.f32.mrf.mxu0
  %v1975 = vadd.f32 0.0, %v1974
  %v1976 = vpop.f32.mrf.mxu0
  %v1977 = vadd.f32 0.0, %v1976
  %1978 = vmatmul.bf16.gmra.mxu0 %v510
  %v1979 = vpop.f32.mrf.mxu0
  %v1980 = vadd.f32 0.0, %v1979
  %v1981 = vpop.f32.mrf.mxu0
  %v1982 = vadd.f32 0.0, %v1981
  %1983 = vmatmul.bf16.gmra.mxu0 %v511
  %v1984 = vpop.f32.mrf.mxu0
  %v1985 = vadd.f32 0.0, %v1984
  %v1986 = vpop.f32.mrf.mxu0
  %v1987 = vadd.f32 0.0, %v1986
  %1988 = vmatmul.bf16.gmra.mxu0 %v512
  %v1989 = vpop.f32.mrf.mxu0
  %v1990 = vadd.f32 0.0, %v1989
  %v1991 = vpop.f32.mrf.mxu0
  %v1992 = vadd.f32 0.0, %v1991
  %1993 = vmatmul.bf16.gmra.mxu0 %v513
  %v1994 = vpop.f32.mrf.mxu0
  %v1995 = vadd.f32 0.0, %v1994
  %v1996 = vpop.f32.mrf.mxu0
  %v1997 = vadd.f32 0.0, %v1996
  %1998 = vmatmul.bf16.gmra.mxu0 %v514
  %v1999 = vpop.f32.mrf.mxu0
  %v2000 = vadd.f32 0.0, %v1999
  %v2001 = vpop.f32.mrf.mxu0
  %v2002 = vadd.f32 0.0, %v2001
  %2003 = vmatmul.bf16.gmra.mxu0 %v515
  %v2004 = vpop.f32.mrf.mxu0
  %v2005 = vadd.f32 0.0, %v2004
  %v2006 = vpop.f32.mrf.mxu0
  %v2007 = vadd.f32 0.0, %v2006
  %2008 = vmatmul.bf16.gmra.mxu0 %v1858
  %v2009 = vpop.f32.mrf.mxu0
  %v2010 = vadd.f32 0.0, %v2009
  %v2011 = vpop.f32.mrf.mxu0
  %v2012 = vadd.f32 0.0, %v2011
  %2013 = vmatmul.bf16.gmra.mxu0 %v517
  %v2014 = vpop.f32.mrf.mxu0
  %v2015 = vadd.f32 0.0, %v2014
  %v2016 = vpop.f32.mrf.mxu0
  %v2017 = vadd.f32 0.0, %v2016
  %2018 = vmatmul.bf16.gmra.mxu0 %v518
  %v2019 = vpop.f32.mrf.mxu0
  %v2020 = vadd.f32 0.0, %v2019
  %v2021 = vpop.f32.mrf.mxu0
  %v2022 = vadd.f32 0.0, %v2021
  %2023 = vmatmul.bf16.gmra.mxu0 %v519
  %v2024 = vpop.f32.mrf.mxu0
  %v2025 = vadd.f32 0.0, %v2024
  %v2026 = vpop.f32.mrf.mxu0
  %v2027 = vadd.f32 0.0, %v2026
  %2028 = vmatmul.bf16.gmra.mxu0 %v520
  %v2029 = vpop.f32.mrf.mxu0
  %v2030 = vadd.f32 0.0, %v2029
  %v2031 = vpop.f32.mrf.mxu0
  %v2032 = vadd.f32 0.0, %v2031
  %2033 = vmatmul.bf16.gmra.mxu0 %v521
  %v2034 = vpop.f32.mrf.mxu0
  %v2035 = vadd.f32 0.0, %v2034
  %v2036 = vpop.f32.mrf.mxu0
  %v2037 = vadd.f32 0.0, %v2036
  %2038 = vmatmul.bf16.gmra.mxu0 %v522
  %v2039 = vpop.f32.mrf.mxu0
  %v2040 = vadd.f32 0.0, %v2039
  %v2041 = vpop.f32.mrf.mxu0
  %v2042 = vadd.f32 0.0, %v2041
  %2043 = vmatmul.bf16.gmra.mxu0 %v523
  %v2044 = vpop.f32.mrf.mxu0
  %v2045 = vadd.f32 0.0, %v2044
  %v2046 = vpop.f32.mrf.mxu0
  %v2047 = vadd.f32 0.0, %v2046
  %2048 = vmatmul.bf16.gmra.mxu0 %v524
  %v2049 = vpop.f32.mrf.mxu0
  %v2050 = vadd.f32 0.0, %v2049
  %v2051 = vpop.f32.mrf.mxu0
  %v2052 = vadd.f32 0.0, %v2051
  %2053 = vmatmul.bf16.gmra.mxu0 %v525
  %v2054 = vpop.f32.mrf.mxu0
  %v2055 = vadd.f32 0.0, %v2054
  %v2056 = vpop.f32.mrf.mxu0
  %v2057 = vadd.f32 0.0, %v2056
  %2058 = vmatmul.bf16.gmra.mxu0 %v526
  %v2059 = vpop.f32.mrf.mxu0
  %v2060 = vadd.f32 0.0, %v2059
  %v2061 = vpop.f32.mrf.mxu0
  %v2062 = vadd.f32 0.0, %v2061
  %2063 = vmatmul.bf16.gmra.mxu0 %v527
  %v2064 = vpop.f32.mrf.mxu0
  %v2065 = vadd.f32 0.0, %v2064
  %v2066 = vpop.f32.mrf.mxu0
  %v2067 = vadd.f32 0.0, %v2066
  %2068 = vmatmul.bf16.gmra.mxu0 %v528
  %v2069 = vpop.f32.mrf.mxu0
  %v2070 = vadd.f32 0.0, %v2069
  %v2071 = vpop.f32.mrf.mxu0
  %v2072 = vadd.f32 0.0, %v2071
  %2073 = vmatmul.bf16.gmra.mxu0 %v529
  %v2074 = vpop.f32.mrf.mxu0
  %v2075 = vadd.f32 0.0, %v2074
  %v2076 = vpop.f32.mrf.mxu0
  %v2077 = vadd.f32 0.0, %v2076
  %2078 = vmatmul.bf16.gmra.mxu0 %v530
  %v2079 = vpop.f32.mrf.mxu0
  %v2080 = vadd.f32 0.0, %v2079
  %v2081 = vpop.f32.mrf.mxu0
  %v2082 = vadd.f32 0.0, %v2081
  %2083 = vmatmul.bf16.gmra.mxu0 %v531
  %v2084 = vpop.f32.mrf.mxu0
  %v2085 = vadd.f32 0.0, %v2084
  %v2086 = vpop.f32.mrf.mxu0
  %v2087 = vadd.f32 0.0, %v2086
  %2088 = vmatmul.bf16.gmra.mxu0 %v1859
  %v2089 = vpop.f32.mrf.mxu0
  %v2090 = vadd.f32 0.0, %v2089
  %v2091 = vpop.f32.mrf.mxu0
  %v2092 = vadd.f32 0.0, %v2091
  %2093 = vdwg.mxu0
  %v2094 = vadd.f32 %v1774, %v1935
  %v2095 = vadd.f32 %v1775, %v1937
  %v2096 = vadd.f32 %v1776, %v1940
  %v2097 = vadd.f32 %v1777, %v1942
  %v2098 = vadd.f32 %v1778, %v1945
  %v2099 = vadd.f32 %v1779, %v1947
  %v2100 = vadd.f32 %v1780, %v1950
  %v2101 = vadd.f32 %v1781, %v1952
  %v2102 = vadd.f32 %v1782, %v1955
  %v2103 = vadd.f32 %v1783, %v1957
  %v2104 = vadd.f32 %v1784, %v1960
  %v2105 = vadd.f32 %v1785, %v1962
  %v2106 = vadd.f32 %v1786, %v1965
  %v2107 = vadd.f32 %v1787, %v1967
  %v2108 = vadd.f32 %v1788, %v1970
  %v2109 = vadd.f32 %v1789, %v1972
  %v2110 = vadd.f32 %v1790, %v1975
  %v2111 = vadd.f32 %v1791, %v1977
  %v2112 = vadd.f32 %v1792, %v1980
  %v2113 = vadd.f32 %v1793, %v1982
  %v2114 = vadd.f32 %v1794, %v1985
  %v2115 = vadd.f32 %v1795, %v1987
  %v2116 = vadd.f32 %v1796, %v1990
  %v2117 = vadd.f32 %v1797, %v1992
  %v2118 = vadd.f32 %v1798, %v1995
  %v2119 = vadd.f32 %v1799, %v1997
  %v2120 = vadd.f32 %v1800, %v2000
  %v2121 = vadd.f32 %v1801, %v2002
  %v2122 = vadd.f32 %v1802, %v2005
  %v2123 = vadd.f32 %v1803, %v2007
  %v2124 = vadd.f32 %v1804, %v2010
  %v2125 = vadd.f32 %v1805, %v2012
  %v2126 = vadd.f32 %v1806, %v2015
  %v2127 = vadd.f32 %v1807, %v2017
  %v2128 = vadd.f32 %v1808, %v2020
  %v2129 = vadd.f32 %v1809, %v2022
  %v2130 = vadd.f32 %v1810, %v2025
  %v2131 = vadd.f32 %v1811, %v2027
  %v2132 = vadd.f32 %v1812, %v2030
  %v2133 = vadd.f32 %v1813, %v2032
  %v2134 = vadd.f32 %v1814, %v2035
  %v2135 = vadd.f32 %v1815, %v2037
  %v2136 = vadd.f32 %v1816, %v2040
  %v2137 = vadd.f32 %v1817, %v2042
  %v2138 = vadd.f32 %v1818, %v2045
  %v2139 = vadd.f32 %v1819, %v2047
  %v2140 = vadd.f32 %v1820, %v2050
  %v2141 = vadd.f32 %v1821, %v2052
  %v2142 = vadd.f32 %v1822, %v2055
  %v2143 = vadd.f32 %v1823, %v2057
  %v2144 = vadd.f32 %v1824, %v2060
  %v2145 = vadd.f32 %v1825, %v2062
  %v2146 = vadd.f32 %v1826, %v2065
  %v2147 = vadd.f32 %v1827, %v2067
  %v2148 = vadd.f32 %v1828, %v2070
  %v2149 = vadd.f32 %v1829, %v2072
  %v2150 = vadd.f32 %v1830, %v2075
  %v2151 = vadd.f32 %v1831, %v2077
  %v2152 = vadd.f32 %v1832, %v2080
  %v2153 = vadd.f32 %v1833, %v2082
  %v2154 = vadd.f32 %v1834, %v2085
  %v2155 = vadd.f32 %v1835, %v2087
  %v2156 = vadd.f32 %v1836, %v2090
  %v2157 = vadd.f32 %v1837, %v2092
  %v2158 = vrot.slane %v70, 2
  %v2159 = vrot.slane %v71, 2
  %v2160 = vsel %vm983, %v2158, %v2159
  %v2161 = vrot.slane %v72, 2
  %v2162 = vsel %vm983, %v2159, %v2161
  %v2163 = vrot.slane %v124, 2
  %v2164 = vrot.slane %v125, 2
  %v2165 = vsel %vm983, %v2163, %v2164
  %v2166 = vrot.slane %v126, 2
  %v2167 = vsel %vm983, %v2164, %v2166
  %v2172 = vpack.c.bf16 %v2162, %v2160
  %v2173 = vpack.c.bf16 %v2167, %v2165
  %s2174 = scalar_lea.vmem %s1, 320
  %v2175 = vld [vmem:[%s2174] sm:$0xf]
  %v2176 = vld [vmem:[%s2174 + $0x4] sm:$0xf]
  %v2177 = vld [vmem:[%s2174 + $0x8] sm:$0xf]
  %v2178 = vld [vmem:[%s2174 + $0xc] sm:$0xf]
  %v2179 = vld [vmem:[%s2174 + $0x10] sm:$0xf]
  %v2180 = vld [vmem:[%s2174 + $0x14] sm:$0xf]
  %v2181 = vld [vmem:[%s2174 + $0x18] sm:$0xf]
  %v2182 = vld [vmem:[%s2174 + $0x1c] sm:$0xf]
  %v2183 = vld [vmem:[%s2174 + $0x20] sm:$0xf]
  %v2184 = vld [vmem:[%s2174 + $0x24] sm:$0xf]
  %v2185 = vld [vmem:[%s2174 + $0x28] sm:$0xf]
  %v2186 = vld [vmem:[%s2174 + $0x2c] sm:$0xf]
  %v2187 = vld [vmem:[%s2174 + $0x30] sm:$0xf]
  %v2188 = vld [vmem:[%s2174 + $0x34] sm:$0xf]
  %v2189 = vld [vmem:[%s2174 + $0x38] sm:$0xf]
  %v2190 = vld [vmem:[%s2174 + $0x3c] sm:$0xf]
  %v2207 = vunpack.c.l.b16 %v2175
  %v2208 = vunpack.c.l.b16 %v2176
  %v2209 = vunpack.c.l.b16 %v2177
  %v2210 = vunpack.c.l.b16 %v2178
  %v2211 = vunpack.c.l.b16 %v2179
  %v2212 = vunpack.c.l.b16 %v2180
  %v2213 = vunpack.c.l.b16 %v2181
  %v2214 = vunpack.c.l.b16 %v2182
  %v2215 = vunpack.c.l.b16 %v2183
  %v2216 = vunpack.c.l.b16 %v2184
  %v2217 = vunpack.c.l.b16 %v2185
  %v2218 = vunpack.c.l.b16 %v2186
  %v2219 = vunpack.c.l.b16 %v2187
  %v2220 = vunpack.c.l.b16 %v2188
  %v2221 = vunpack.c.l.b16 %v2189
  %v2222 = vunpack.c.l.b16 %v2190
  %v2223 = vpack.c.b16 %v2208, %v2207
  %v2224 = vpack.c.b16 %v2210, %v2209
  %v2225 = vpack.c.b16 %v2212, %v2211
  %v2226 = vpack.c.b16 %v2214, %v2213
  %v2227 = vpack.c.b16 %v2216, %v2215
  %v2228 = vpack.c.b16 %v2218, %v2217
  %v2229 = vpack.c.b16 %v2220, %v2219
  %v2230 = vpack.c.b16 %v2222, %v2221
  %2239 = vmatpush.bf16.msra.mxu0 %v2230
  %2240 = vmatpush.bf16.msra.mxu0 %v2229
  %2241 = vmatpush.bf16.msra.mxu0 %v2228
  %2242 = vmatpush.bf16.msra.mxu0 %v2227
  %2243 = vmatpush.bf16.msra.mxu0 %v2226
  %2244 = vmatpush.bf16.msra.mxu0 %v2225
  %2245 = vmatpush.bf16.msra.mxu0 %v2224
  %2246 = vmatpush.bf16.msra.mxu0 %v2223
  %2247 = vmatmul.bf16.gmra.mxu0 %v1209
  %v2248 = vpop.f32.mrf.mxu0
  %v2249 = vadd.f32 0.0, %v2248
  %v2250 = vpop.f32.mrf.mxu0
  %v2251 = vadd.f32 0.0, %v2250
  %2252 = vmatmul.bf16.gmra.mxu0 %v1210
  %v2253 = vpop.f32.mrf.mxu0
  %v2254 = vadd.f32 0.0, %v2253
  %v2255 = vpop.f32.mrf.mxu0
  %v2256 = vadd.f32 0.0, %v2255
  %2257 = vmatmul.bf16.gmra.mxu0 %v1211
  %v2258 = vpop.f32.mrf.mxu0
  %v2259 = vadd.f32 0.0, %v2258
  %v2260 = vpop.f32.mrf.mxu0
  %v2261 = vadd.f32 0.0, %v2260
  %2262 = vmatmul.bf16.gmra.mxu0 %v1212
  %v2263 = vpop.f32.mrf.mxu0
  %v2264 = vadd.f32 0.0, %v2263
  %v2265 = vpop.f32.mrf.mxu0
  %v2266 = vadd.f32 0.0, %v2265
  %2267 = vmatmul.bf16.gmra.mxu0 %v1213
  %v2268 = vpop.f32.mrf.mxu0
  %v2269 = vadd.f32 0.0, %v2268
  %v2270 = vpop.f32.mrf.mxu0
  %v2271 = vadd.f32 0.0, %v2270
  %2272 = vmatmul.bf16.gmra.mxu0 %v1214
  %v2273 = vpop.f32.mrf.mxu0
  %v2274 = vadd.f32 0.0, %v2273
  %v2275 = vpop.f32.mrf.mxu0
  %v2276 = vadd.f32 0.0, %v2275
  %2277 = vmatmul.bf16.gmra.mxu0 %v1215
  %v2278 = vpop.f32.mrf.mxu0
  %v2279 = vadd.f32 0.0, %v2278
  %v2280 = vpop.f32.mrf.mxu0
  %v2281 = vadd.f32 0.0, %v2280
  %2282 = vmatmul.bf16.gmra.mxu0 %v1216
  %v2283 = vpop.f32.mrf.mxu0
  %v2284 = vadd.f32 0.0, %v2283
  %v2285 = vpop.f32.mrf.mxu0
  %v2286 = vadd.f32 0.0, %v2285
  %2287 = vmatmul.bf16.gmra.mxu0 %v1217
  %v2288 = vpop.f32.mrf.mxu0
  %v2289 = vadd.f32 0.0, %v2288
  %v2290 = vpop.f32.mrf.mxu0
  %v2291 = vadd.f32 0.0, %v2290
  %2292 = vmatmul.bf16.gmra.mxu0 %v1218
  %v2293 = vpop.f32.mrf.mxu0
  %v2294 = vadd.f32 0.0, %v2293
  %v2295 = vpop.f32.mrf.mxu0
  %v2296 = vadd.f32 0.0, %v2295
  %2297 = vmatmul.bf16.gmra.mxu0 %v1219
  %v2298 = vpop.f32.mrf.mxu0
  %v2299 = vadd.f32 0.0, %v2298
  %v2300 = vpop.f32.mrf.mxu0
  %v2301 = vadd.f32 0.0, %v2300
  %2302 = vmatmul.bf16.gmra.mxu0 %v1220
  %v2303 = vpop.f32.mrf.mxu0
  %v2304 = vadd.f32 0.0, %v2303
  %v2305 = vpop.f32.mrf.mxu0
  %v2306 = vadd.f32 0.0, %v2305
  %2307 = vmatmul.bf16.gmra.mxu0 %v1221
  %v2308 = vpop.f32.mrf.mxu0
  %v2309 = vadd.f32 0.0, %v2308
  %v2310 = vpop.f32.mrf.mxu0
  %v2311 = vadd.f32 0.0, %v2310
  %2312 = vmatmul.bf16.gmra.mxu0 %v1222
  %v2313 = vpop.f32.mrf.mxu0
  %v2314 = vadd.f32 0.0, %v2313
  %v2315 = vpop.f32.mrf.mxu0
  %v2316 = vadd.f32 0.0, %v2315
  %2317 = vmatmul.bf16.gmra.mxu0 %v1223
  %v2318 = vpop.f32.mrf.mxu0
  %v2319 = vadd.f32 0.0, %v2318
  %v2320 = vpop.f32.mrf.mxu0
  %v2321 = vadd.f32 0.0, %v2320
  %2322 = vmatmul.bf16.gmra.mxu0 %v2172
  %v2323 = vpop.f32.mrf.mxu0
  %v2324 = vadd.f32 0.0, %v2323
  %v2325 = vpop.f32.mrf.mxu0
  %v2326 = vadd.f32 0.0, %v2325
  %2327 = vmatmul.bf16.gmra.mxu0 %v1225
  %v2328 = vpop.f32.mrf.mxu0
  %v2329 = vadd.f32 0.0, %v2328
  %v2330 = vpop.f32.mrf.mxu0
  %v2331 = vadd.f32 0.0, %v2330
  %2332 = vmatmul.bf16.gmra.mxu0 %v1226
  %v2333 = vpop.f32.mrf.mxu0
  %v2334 = vadd.f32 0.0, %v2333
  %v2335 = vpop.f32.mrf.mxu0
  %v2336 = vadd.f32 0.0, %v2335
  %2337 = vmatmul.bf16.gmra.mxu0 %v1227
  %v2338 = vpop.f32.mrf.mxu0
  %v2339 = vadd.f32 0.0, %v2338
  %v2340 = vpop.f32.mrf.mxu0
  %v2341 = vadd.f32 0.0, %v2340
  %2342 = vmatmul.bf16.gmra.mxu0 %v1228
  %v2343 = vpop.f32.mrf.mxu0
  %v2344 = vadd.f32 0.0, %v2343
  %v2345 = vpop.f32.mrf.mxu0
  %v2346 = vadd.f32 0.0, %v2345
  %2347 = vmatmul.bf16.gmra.mxu0 %v1229
  %v2348 = vpop.f32.mrf.mxu0
  %v2349 = vadd.f32 0.0, %v2348
  %v2350 = vpop.f32.mrf.mxu0
  %v2351 = vadd.f32 0.0, %v2350
  %2352 = vmatmul.bf16.gmra.mxu0 %v1230
  %v2353 = vpop.f32.mrf.mxu0
  %v2354 = vadd.f32 0.0, %v2353
  %v2355 = vpop.f32.mrf.mxu0
  %v2356 = vadd.f32 0.0, %v2355
  %2357 = vmatmul.bf16.gmra.mxu0 %v1231
  %v2358 = vpop.f32.mrf.mxu0
  %v2359 = vadd.f32 0.0, %v2358
  %v2360 = vpop.f32.mrf.mxu0
  %v2361 = vadd.f32 0.0, %v2360
  %2362 = vmatmul.bf16.gmra.mxu0 %v1232
  %v2363 = vpop.f32.mrf.mxu0
  %v2364 = vadd.f32 0.0, %v2363
  %v2365 = vpop.f32.mrf.mxu0
  %v2366 = vadd.f32 0.0, %v2365
  %2367 = vmatmul.bf16.gmra.mxu0 %v1233
  %v2368 = vpop.f32.mrf.mxu0
  %v2369 = vadd.f32 0.0, %v2368
  %v2370 = vpop.f32.mrf.mxu0
  %v2371 = vadd.f32 0.0, %v2370
  %2372 = vmatmul.bf16.gmra.mxu0 %v1234
  %v2373 = vpop.f32.mrf.mxu0
  %v2374 = vadd.f32 0.0, %v2373
  %v2375 = vpop.f32.mrf.mxu0
  %v2376 = vadd.f32 0.0, %v2375
  %2377 = vmatmul.bf16.gmra.mxu0 %v1235
  %v2378 = vpop.f32.mrf.mxu0
  %v2379 = vadd.f32 0.0, %v2378
  %v2380 = vpop.f32.mrf.mxu0
  %v2381 = vadd.f32 0.0, %v2380
  %2382 = vmatmul.bf16.gmra.mxu0 %v1236
  %v2383 = vpop.f32.mrf.mxu0
  %v2384 = vadd.f32 0.0, %v2383
  %v2385 = vpop.f32.mrf.mxu0
  %v2386 = vadd.f32 0.0, %v2385
  %2387 = vmatmul.bf16.gmra.mxu0 %v1237
  %v2388 = vpop.f32.mrf.mxu0
  %v2389 = vadd.f32 0.0, %v2388
  %v2390 = vpop.f32.mrf.mxu0
  %v2391 = vadd.f32 0.0, %v2390
  %2392 = vmatmul.bf16.gmra.mxu0 %v1238
  %v2393 = vpop.f32.mrf.mxu0
  %v2394 = vadd.f32 0.0, %v2393
  %v2395 = vpop.f32.mrf.mxu0
  %v2396 = vadd.f32 0.0, %v2395
  %2397 = vmatmul.bf16.gmra.mxu0 %v1239
  %v2398 = vpop.f32.mrf.mxu0
  %v2399 = vadd.f32 0.0, %v2398
  %v2400 = vpop.f32.mrf.mxu0
  %v2401 = vadd.f32 0.0, %v2400
  %2402 = vmatmul.bf16.gmra.mxu0 %v2173
  %v2403 = vpop.f32.mrf.mxu0
  %v2404 = vadd.f32 0.0, %v2403
  %v2405 = vpop.f32.mrf.mxu0
  %v2406 = vadd.f32 0.0, %v2405
  %2407 = vdwg.mxu0
  %v2408 = vadd.f32 %v2094, %v2249
  %v2409 = vadd.f32 %v2095, %v2251
  %v2410 = vadd.f32 %v2096, %v2254
  %v2411 = vadd.f32 %v2097, %v2256
  %v2412 = vadd.f32 %v2098, %v2259
  %v2413 = vadd.f32 %v2099, %v2261
  %v2414 = vadd.f32 %v2100, %v2264
  %v2415 = vadd.f32 %v2101, %v2266
  %v2416 = vadd.f32 %v2102, %v2269
  %v2417 = vadd.f32 %v2103, %v2271
  %v2418 = vadd.f32 %v2104, %v2274
  %v2419 = vadd.f32 %v2105, %v2276
  %v2420 = vadd.f32 %v2106, %v2279
  %v2421 = vadd.f32 %v2107, %v2281
  %v2422 = vadd.f32 %v2108, %v2284
  %v2423 = vadd.f32 %v2109, %v2286
  %v2424 = vadd.f32 %v2110, %v2289
  %v2425 = vadd.f32 %v2111, %v2291
  %v2426 = vadd.f32 %v2112, %v2294
  %v2427 = vadd.f32 %v2113, %v2296
  %v2428 = vadd.f32 %v2114, %v2299
  %v2429 = vadd.f32 %v2115, %v2301
  %v2430 = vadd.f32 %v2116, %v2304
  %v2431 = vadd.f32 %v2117, %v2306
  %v2432 = vadd.f32 %v2118, %v2309
  %v2433 = vadd.f32 %v2119, %v2311
  %v2434 = vadd.f32 %v2120, %v2314
  %v2435 = vadd.f32 %v2121, %v2316
  %v2436 = vadd.f32 %v2122, %v2319
  %v2437 = vadd.f32 %v2123, %v2321
  %v2438 = vadd.f32 %v2124, %v2324
  %v2439 = vadd.f32 %v2125, %v2326
  %v2440 = vadd.f32 %v2126, %v2329
  %v2441 = vadd.f32 %v2127, %v2331
  %v2442 = vadd.f32 %v2128, %v2334
  %v2443 = vadd.f32 %v2129, %v2336
  %v2444 = vadd.f32 %v2130, %v2339
  %v2445 = vadd.f32 %v2131, %v2341
  %v2446 = vadd.f32 %v2132, %v2344
  %v2447 = vadd.f32 %v2133, %v2346
  %v2448 = vadd.f32 %v2134, %v2349
  %v2449 = vadd.f32 %v2135, %v2351
  %v2450 = vadd.f32 %v2136, %v2354
  %v2451 = vadd.f32 %v2137, %v2356
  %v2452 = vadd.f32 %v2138, %v2359
  %v2453 = vadd.f32 %v2139, %v2361
  %v2454 = vadd.f32 %v2140, %v2364
  %v2455 = vadd.f32 %v2141, %v2366
  %v2456 = vadd.f32 %v2142, %v2369
  %v2457 = vadd.f32 %v2143, %v2371
  %v2458 = vadd.f32 %v2144, %v2374
  %v2459 = vadd.f32 %v2145, %v2376
  %v2460 = vadd.f32 %v2146, %v2379
  %v2461 = vadd.f32 %v2147, %v2381
  %v2462 = vadd.f32 %v2148, %v2384
  %v2463 = vadd.f32 %v2149, %v2386
  %v2464 = vadd.f32 %v2150, %v2389
  %v2465 = vadd.f32 %v2151, %v2391
  %v2466 = vadd.f32 %v2152, %v2394
  %v2467 = vadd.f32 %v2153, %v2396
  %v2468 = vadd.f32 %v2154, %v2399
  %v2469 = vadd.f32 %v2155, %v2401
  %v2470 = vadd.f32 %v2156, %v2404
  %v2471 = vadd.f32 %v2157, %v2406
  %v2472 = vpack.c.bf16 %v74, %v73
  %v2473 = vpack.c.bf16 %v128, %v127
  %s2474 = scalar_lea.vmem %s1, 384
  %v2475 = vld [vmem:[%s2474] sm:$0xf]
  %v2476 = vld [vmem:[%s2474 + $0x4] sm:$0xf]
  %v2477 = vld [vmem:[%s2474 + $0x8] sm:$0xf]
  %v2478 = vld [vmem:[%s2474 + $0xc] sm:$0xf]
  %v2479 = vld [vmem:[%s2474 + $0x10] sm:$0xf]
  %v2480 = vld [vmem:[%s2474 + $0x14] sm:$0xf]
  %v2481 = vld [vmem:[%s2474 + $0x18] sm:$0xf]
  %v2482 = vld [vmem:[%s2474 + $0x1c] sm:$0xf]
  %v2483 = vld [vmem:[%s2474 + $0x20] sm:$0xf]
  %v2484 = vld [vmem:[%s2474 + $0x24] sm:$0xf]
  %v2485 = vld [vmem:[%s2474 + $0x28] sm:$0xf]
  %v2486 = vld [vmem:[%s2474 + $0x2c] sm:$0xf]
  %v2487 = vld [vmem:[%s2474 + $0x30] sm:$0xf]
  %v2488 = vld [vmem:[%s2474 + $0x34] sm:$0xf]
  %v2489 = vld [vmem:[%s2474 + $0x38] sm:$0xf]
  %v2490 = vld [vmem:[%s2474 + $0x3c] sm:$0xf]
  %v2507 = vunpack.c.l.b16 %v2475
  %v2508 = vunpack.c.l.b16 %v2476
  %v2509 = vunpack.c.l.b16 %v2477
  %v2510 = vunpack.c.l.b16 %v2478
  %v2511 = vunpack.c.l.b16 %v2479
  %v2512 = vunpack.c.l.b16 %v2480
  %v2513 = vunpack.c.l.b16 %v2481
  %v2514 = vunpack.c.l.b16 %v2482
  %v2515 = vunpack.c.l.b16 %v2483
  %v2516 = vunpack.c.l.b16 %v2484
  %v2517 = vunpack.c.l.b16 %v2485
  %v2518 = vunpack.c.l.b16 %v2486
  %v2519 = vunpack.c.l.b16 %v2487
  %v2520 = vunpack.c.l.b16 %v2488
  %v2521 = vunpack.c.l.b16 %v2489
  %v2522 = vunpack.c.l.b16 %v2490
  %v2523 = vpack.c.b16 %v2508, %v2507
  %v2524 = vpack.c.b16 %v2510, %v2509
  %v2525 = vpack.c.b16 %v2512, %v2511
  %v2526 = vpack.c.b16 %v2514, %v2513
  %v2527 = vpack.c.b16 %v2516, %v2515
  %v2528 = vpack.c.b16 %v2518, %v2517
  %v2529 = vpack.c.b16 %v2520, %v2519
  %v2530 = vpack.c.b16 %v2522, %v2521
  %2539 = vmatpush.bf16.msra.mxu0 %v2530
  %2540 = vmatpush.bf16.msra.mxu0 %v2529
  %2541 = vmatpush.bf16.msra.mxu0 %v2528
  %2542 = vmatpush.bf16.msra.mxu0 %v2527
  %2543 = vmatpush.bf16.msra.mxu0 %v2526
  %2544 = vmatpush.bf16.msra.mxu0 %v2525
  %2545 = vmatpush.bf16.msra.mxu0 %v2524
  %2546 = vmatpush.bf16.msra.mxu0 %v2523
  %2547 = vmatmul.bf16.gmra.mxu0 %v133
  %v2548 = vpop.f32.mrf.mxu0
  %v2549 = vadd.f32 0.0, %v2548
  %v2550 = vpop.f32.mrf.mxu0
  %v2551 = vadd.f32 0.0, %v2550
  %2552 = vmatmul.bf16.gmra.mxu0 %v134
  %v2553 = vpop.f32.mrf.mxu0
  %v2554 = vadd.f32 0.0, %v2553
  %v2555 = vpop.f32.mrf.mxu0
  %v2556 = vadd.f32 0.0, %v2555
  %2557 = vmatmul.bf16.gmra.mxu0 %v135
  %v2558 = vpop.f32.mrf.mxu0
  %v2559 = vadd.f32 0.0, %v2558
  %v2560 = vpop.f32.mrf.mxu0
  %v2561 = vadd.f32 0.0, %v2560
  %2562 = vmatmul.bf16.gmra.mxu0 %v136
  %v2563 = vpop.f32.mrf.mxu0
  %v2564 = vadd.f32 0.0, %v2563
  %v2565 = vpop.f32.mrf.mxu0
  %v2566 = vadd.f32 0.0, %v2565
  %2567 = vmatmul.bf16.gmra.mxu0 %v137
  %v2568 = vpop.f32.mrf.mxu0
  %v2569 = vadd.f32 0.0, %v2568
  %v2570 = vpop.f32.mrf.mxu0
  %v2571 = vadd.f32 0.0, %v2570
  %2572 = vmatmul.bf16.gmra.mxu0 %v138
  %v2573 = vpop.f32.mrf.mxu0
  %v2574 = vadd.f32 0.0, %v2573
  %v2575 = vpop.f32.mrf.mxu0
  %v2576 = vadd.f32 0.0, %v2575
  %2577 = vmatmul.bf16.gmra.mxu0 %v139
  %v2578 = vpop.f32.mrf.mxu0
  %v2579 = vadd.f32 0.0, %v2578
  %v2580 = vpop.f32.mrf.mxu0
  %v2581 = vadd.f32 0.0, %v2580
  %2582 = vmatmul.bf16.gmra.mxu0 %v140
  %v2583 = vpop.f32.mrf.mxu0
  %v2584 = vadd.f32 0.0, %v2583
  %v2585 = vpop.f32.mrf.mxu0
  %v2586 = vadd.f32 0.0, %v2585
  %2587 = vmatmul.bf16.gmra.mxu0 %v141
  %v2588 = vpop.f32.mrf.mxu0
  %v2589 = vadd.f32 0.0, %v2588
  %v2590 = vpop.f32.mrf.mxu0
  %v2591 = vadd.f32 0.0, %v2590
  %2592 = vmatmul.bf16.gmra.mxu0 %v142
  %v2593 = vpop.f32.mrf.mxu0
  %v2594 = vadd.f32 0.0, %v2593
  %v2595 = vpop.f32.mrf.mxu0
  %v2596 = vadd.f32 0.0, %v2595
  %2597 = vmatmul.bf16.gmra.mxu0 %v143
  %v2598 = vpop.f32.mrf.mxu0
  %v2599 = vadd.f32 0.0, %v2598
  %v2600 = vpop.f32.mrf.mxu0
  %v2601 = vadd.f32 0.0, %v2600
  %2602 = vmatmul.bf16.gmra.mxu0 %v144
  %v2603 = vpop.f32.mrf.mxu0
  %v2604 = vadd.f32 0.0, %v2603
  %v2605 = vpop.f32.mrf.mxu0
  %v2606 = vadd.f32 0.0, %v2605
  %2607 = vmatmul.bf16.gmra.mxu0 %v145
  %v2608 = vpop.f32.mrf.mxu0
  %v2609 = vadd.f32 0.0, %v2608
  %v2610 = vpop.f32.mrf.mxu0
  %v2611 = vadd.f32 0.0, %v2610
  %2612 = vmatmul.bf16.gmra.mxu0 %v146
  %v2613 = vpop.f32.mrf.mxu0
  %v2614 = vadd.f32 0.0, %v2613
  %v2615 = vpop.f32.mrf.mxu0
  %v2616 = vadd.f32 0.0, %v2615
  %2617 = vmatmul.bf16.gmra.mxu0 %v1538
  %v2618 = vpop.f32.mrf.mxu0
  %v2619 = vadd.f32 0.0, %v2618
  %v2620 = vpop.f32.mrf.mxu0
  %v2621 = vadd.f32 0.0, %v2620
  %2622 = vmatmul.bf16.gmra.mxu0 %v2472
  %v2623 = vpop.f32.mrf.mxu0
  %v2624 = vadd.f32 0.0, %v2623
  %v2625 = vpop.f32.mrf.mxu0
  %v2626 = vadd.f32 0.0, %v2625
  %2627 = vmatmul.bf16.gmra.mxu0 %v149
  %v2628 = vpop.f32.mrf.mxu0
  %v2629 = vadd.f32 0.0, %v2628
  %v2630 = vpop.f32.mrf.mxu0
  %v2631 = vadd.f32 0.0, %v2630
  %2632 = vmatmul.bf16.gmra.mxu0 %v150
  %v2633 = vpop.f32.mrf.mxu0
  %v2634 = vadd.f32 0.0, %v2633
  %v2635 = vpop.f32.mrf.mxu0
  %v2636 = vadd.f32 0.0, %v2635
  %2637 = vmatmul.bf16.gmra.mxu0 %v151
  %v2638 = vpop.f32.mrf.mxu0
  %v2639 = vadd.f32 0.0, %v2638
  %v2640 = vpop.f32.mrf.mxu0
  %v2641 = vadd.f32 0.0, %v2640
  %2642 = vmatmul.bf16.gmra.mxu0 %v152
  %v2643 = vpop.f32.mrf.mxu0
  %v2644 = vadd.f32 0.0, %v2643
  %v2645 = vpop.f32.mrf.mxu0
  %v2646 = vadd.f32 0.0, %v2645
  %2647 = vmatmul.bf16.gmra.mxu0 %v153
  %v2648 = vpop.f32.mrf.mxu0
  %v2649 = vadd.f32 0.0, %v2648
  %v2650 = vpop.f32.mrf.mxu0
  %v2651 = vadd.f32 0.0, %v2650
  %2652 = vmatmul.bf16.gmra.mxu0 %v154
  %v2653 = vpop.f32.mrf.mxu0
  %v2654 = vadd.f32 0.0, %v2653
  %v2655 = vpop.f32.mrf.mxu0
  %v2656 = vadd.f32 0.0, %v2655
  %2657 = vmatmul.bf16.gmra.mxu0 %v155
  %v2658 = vpop.f32.mrf.mxu0
  %v2659 = vadd.f32 0.0, %v2658
  %v2660 = vpop.f32.mrf.mxu0
  %v2661 = vadd.f32 0.0, %v2660
  %2662 = vmatmul.bf16.gmra.mxu0 %v156
  %v2663 = vpop.f32.mrf.mxu0
  %v2664 = vadd.f32 0.0, %v2663
  %v2665 = vpop.f32.mrf.mxu0
  %v2666 = vadd.f32 0.0, %v2665
  %2667 = vmatmul.bf16.gmra.mxu0 %v157
  %v2668 = vpop.f32.mrf.mxu0
  %v2669 = vadd.f32 0.0, %v2668
  %v2670 = vpop.f32.mrf.mxu0
  %v2671 = vadd.f32 0.0, %v2670
  %2672 = vmatmul.bf16.gmra.mxu0 %v158
  %v2673 = vpop.f32.mrf.mxu0
  %v2674 = vadd.f32 0.0, %v2673
  %v2675 = vpop.f32.mrf.mxu0
  %v2676 = vadd.f32 0.0, %v2675
  %2677 = vmatmul.bf16.gmra.mxu0 %v159
  %v2678 = vpop.f32.mrf.mxu0
  %v2679 = vadd.f32 0.0, %v2678
  %v2680 = vpop.f32.mrf.mxu0
  %v2681 = vadd.f32 0.0, %v2680
  %2682 = vmatmul.bf16.gmra.mxu0 %v160
  %v2683 = vpop.f32.mrf.mxu0
  %v2684 = vadd.f32 0.0, %v2683
  %v2685 = vpop.f32.mrf.mxu0
  %v2686 = vadd.f32 0.0, %v2685
  %2687 = vmatmul.bf16.gmra.mxu0 %v161
  %v2688 = vpop.f32.mrf.mxu0
  %v2689 = vadd.f32 0.0, %v2688
  %v2690 = vpop.f32.mrf.mxu0
  %v2691 = vadd.f32 0.0, %v2690
  %2692 = vmatmul.bf16.gmra.mxu0 %v162
  %v2693 = vpop.f32.mrf.mxu0
  %v2694 = vadd.f32 0.0, %v2693
  %v2695 = vpop.f32.mrf.mxu0
  %v2696 = vadd.f32 0.0, %v2695
  %2697 = vmatmul.bf16.gmra.mxu0 %v1539
  %v2698 = vpop.f32.mrf.mxu0
  %v2699 = vadd.f32 0.0, %v2698
  %v2700 = vpop.f32.mrf.mxu0
  %v2701 = vadd.f32 0.0, %v2700
  %2702 = vmatmul.bf16.gmra.mxu0 %v2473
  %v2703 = vpop.f32.mrf.mxu0
  %v2704 = vadd.f32 0.0, %v2703
  %v2705 = vpop.f32.mrf.mxu0
  %v2706 = vadd.f32 0.0, %v2705
  %2707 = vdwg.mxu0
  %v2708 = vadd.f32 %v2408, %v2549
  %v2709 = vadd.f32 %v2409, %v2551
  %v2710 = vadd.f32 %v2410, %v2554
  %v2711 = vadd.f32 %v2411, %v2556
  %v2712 = vadd.f32 %v2412, %v2559
  %v2713 = vadd.f32 %v2413, %v2561
  %v2714 = vadd.f32 %v2414, %v2564
  %v2715 = vadd.f32 %v2415, %v2566
  %v2716 = vadd.f32 %v2416, %v2569
  %v2717 = vadd.f32 %v2417, %v2571
  %v2718 = vadd.f32 %v2418, %v2574
  %v2719 = vadd.f32 %v2419, %v2576
  %v2720 = vadd.f32 %v2420, %v2579
  %v2721 = vadd.f32 %v2421, %v2581
  %v2722 = vadd.f32 %v2422, %v2584
  %v2723 = vadd.f32 %v2423, %v2586
  %v2724 = vadd.f32 %v2424, %v2589
  %v2725 = vadd.f32 %v2425, %v2591
  %v2726 = vadd.f32 %v2426, %v2594
  %v2727 = vadd.f32 %v2427, %v2596
  %v2728 = vadd.f32 %v2428, %v2599
  %v2729 = vadd.f32 %v2429, %v2601
  %v2730 = vadd.f32 %v2430, %v2604
  %v2731 = vadd.f32 %v2431, %v2606
  %v2732 = vadd.f32 %v2432, %v2609
  %v2733 = vadd.f32 %v2433, %v2611
  %v2734 = vadd.f32 %v2434, %v2614
  %v2735 = vadd.f32 %v2435, %v2616
  %v2736 = vadd.f32 %v2436, %v2619
  %v2737 = vadd.f32 %v2437, %v2621
  %v2738 = vadd.f32 %v2438, %v2624
  %v2739 = vadd.f32 %v2439, %v2626
  %v2740 = vadd.f32 %v2440, %v2629
  %v2741 = vadd.f32 %v2441, %v2631
  %v2742 = vadd.f32 %v2442, %v2634
  %v2743 = vadd.f32 %v2443, %v2636
  %v2744 = vadd.f32 %v2444, %v2639
  %v2745 = vadd.f32 %v2445, %v2641
  %v2746 = vadd.f32 %v2446, %v2644
  %v2747 = vadd.f32 %v2447, %v2646
  %v2748 = vadd.f32 %v2448, %v2649
  %v2749 = vadd.f32 %v2449, %v2651
  %v2750 = vadd.f32 %v2450, %v2654
  %v2751 = vadd.f32 %v2451, %v2656
  %v2752 = vadd.f32 %v2452, %v2659
  %v2753 = vadd.f32 %v2453, %v2661
  %v2754 = vadd.f32 %v2454, %v2664
  %v2755 = vadd.f32 %v2455, %v2666
  %v2756 = vadd.f32 %v2456, %v2669
  %v2757 = vadd.f32 %v2457, %v2671
  %v2758 = vadd.f32 %v2458, %v2674
  %v2759 = vadd.f32 %v2459, %v2676
  %v2760 = vadd.f32 %v2460, %v2679
  %v2761 = vadd.f32 %v2461, %v2681
  %v2762 = vadd.f32 %v2462, %v2684
  %v2763 = vadd.f32 %v2463, %v2686
  %v2764 = vadd.f32 %v2464, %v2689
  %v2765 = vadd.f32 %v2465, %v2691
  %v2766 = vadd.f32 %v2466, %v2694
  %v2767 = vadd.f32 %v2467, %v2696
  %v2768 = vadd.f32 %v2468, %v2699
  %v2769 = vadd.f32 %v2469, %v2701
  %v2770 = vadd.f32 %v2470, %v2704
  %v2771 = vadd.f32 %v2471, %v2706
  %v2778 = vrot.slane %v73, 1
  %v2779 = vrot.slane %v74, 1
  %v2780 = vsel %vm275, %v2778, %v2779
  %v2781 = vrot.slane %v75, 1
  %v2782 = vsel %vm275, %v2779, %v2781
  %v2783 = vrot.slane %v127, 1
  %v2784 = vrot.slane %v128, 1
  %v2785 = vsel %vm275, %v2783, %v2784
  %v2786 = vrot.slane %v129, 1
  %v2787 = vsel %vm275, %v2784, %v2786
  %v2792 = vpack.c.bf16 %v2782, %v2780
  %v2793 = vpack.c.bf16 %v2787, %v2785
  %s2794 = scalar_lea.vmem %s1, 448
  %v2795 = vld [vmem:[%s2794] sm:$0xf]
  %v2796 = vld [vmem:[%s2794 + $0x4] sm:$0xf]
  %v2797 = vld [vmem:[%s2794 + $0x8] sm:$0xf]
  %v2798 = vld [vmem:[%s2794 + $0xc] sm:$0xf]
  %v2799 = vld [vmem:[%s2794 + $0x10] sm:$0xf]
  %v2800 = vld [vmem:[%s2794 + $0x14] sm:$0xf]
  %v2801 = vld [vmem:[%s2794 + $0x18] sm:$0xf]
  %v2802 = vld [vmem:[%s2794 + $0x1c] sm:$0xf]
  %v2803 = vld [vmem:[%s2794 + $0x20] sm:$0xf]
  %v2804 = vld [vmem:[%s2794 + $0x24] sm:$0xf]
  %v2805 = vld [vmem:[%s2794 + $0x28] sm:$0xf]
  %v2806 = vld [vmem:[%s2794 + $0x2c] sm:$0xf]
  %v2807 = vld [vmem:[%s2794 + $0x30] sm:$0xf]
  %v2808 = vld [vmem:[%s2794 + $0x34] sm:$0xf]
  %v2809 = vld [vmem:[%s2794 + $0x38] sm:$0xf]
  %v2810 = vld [vmem:[%s2794 + $0x3c] sm:$0xf]
  %v2827 = vunpack.c.l.b16 %v2795
  %v2828 = vunpack.c.l.b16 %v2796
  %v2829 = vunpack.c.l.b16 %v2797
  %v2830 = vunpack.c.l.b16 %v2798
  %v2831 = vunpack.c.l.b16 %v2799
  %v2832 = vunpack.c.l.b16 %v2800
  %v2833 = vunpack.c.l.b16 %v2801
  %v2834 = vunpack.c.l.b16 %v2802
  %v2835 = vunpack.c.l.b16 %v2803
  %v2836 = vunpack.c.l.b16 %v2804
  %v2837 = vunpack.c.l.b16 %v2805
  %v2838 = vunpack.c.l.b16 %v2806
  %v2839 = vunpack.c.l.b16 %v2807
  %v2840 = vunpack.c.l.b16 %v2808
  %v2841 = vunpack.c.l.b16 %v2809
  %v2842 = vunpack.c.l.b16 %v2810
  %v2843 = vpack.c.b16 %v2828, %v2827
  %v2844 = vpack.c.b16 %v2830, %v2829
  %v2845 = vpack.c.b16 %v2832, %v2831
  %v2846 = vpack.c.b16 %v2834, %v2833
  %v2847 = vpack.c.b16 %v2836, %v2835
  %v2848 = vpack.c.b16 %v2838, %v2837
  %v2849 = vpack.c.b16 %v2840, %v2839
  %v2850 = vpack.c.b16 %v2842, %v2841
  %2859 = vmatpush.bf16.msra.mxu0 %v2850
  %2860 = vmatpush.bf16.msra.mxu0 %v2849
  %2861 = vmatpush.bf16.msra.mxu0 %v2848
  %2862 = vmatpush.bf16.msra.mxu0 %v2847
  %2863 = vmatpush.bf16.msra.mxu0 %v2846
  %2864 = vmatpush.bf16.msra.mxu0 %v2845
  %2865 = vmatpush.bf16.msra.mxu0 %v2844
  %2866 = vmatpush.bf16.msra.mxu0 %v2843
  %2867 = vmatmul.bf16.gmra.mxu0 %v502
  %v2868 = vpop.f32.mrf.mxu0
  %v2869 = vadd.f32 0.0, %v2868
  %v2870 = vpop.f32.mrf.mxu0
  %v2871 = vadd.f32 0.0, %v2870
  %2872 = vmatmul.bf16.gmra.mxu0 %v503
  %v2873 = vpop.f32.mrf.mxu0
  %v2874 = vadd.f32 0.0, %v2873
  %v2875 = vpop.f32.mrf.mxu0
  %v2876 = vadd.f32 0.0, %v2875
  %2877 = vmatmul.bf16.gmra.mxu0 %v504
  %v2878 = vpop.f32.mrf.mxu0
  %v2879 = vadd.f32 0.0, %v2878
  %v2880 = vpop.f32.mrf.mxu0
  %v2881 = vadd.f32 0.0, %v2880
  %2882 = vmatmul.bf16.gmra.mxu0 %v505
  %v2883 = vpop.f32.mrf.mxu0
  %v2884 = vadd.f32 0.0, %v2883
  %v2885 = vpop.f32.mrf.mxu0
  %v2886 = vadd.f32 0.0, %v2885
  %2887 = vmatmul.bf16.gmra.mxu0 %v506
  %v2888 = vpop.f32.mrf.mxu0
  %v2889 = vadd.f32 0.0, %v2888
  %v2890 = vpop.f32.mrf.mxu0
  %v2891 = vadd.f32 0.0, %v2890
  %2892 = vmatmul.bf16.gmra.mxu0 %v507
  %v2893 = vpop.f32.mrf.mxu0
  %v2894 = vadd.f32 0.0, %v2893
  %v2895 = vpop.f32.mrf.mxu0
  %v2896 = vadd.f32 0.0, %v2895
  %2897 = vmatmul.bf16.gmra.mxu0 %v508
  %v2898 = vpop.f32.mrf.mxu0
  %v2899 = vadd.f32 0.0, %v2898
  %v2900 = vpop.f32.mrf.mxu0
  %v2901 = vadd.f32 0.0, %v2900
  %2902 = vmatmul.bf16.gmra.mxu0 %v509
  %v2903 = vpop.f32.mrf.mxu0
  %v2904 = vadd.f32 0.0, %v2903
  %v2905 = vpop.f32.mrf.mxu0
  %v2906 = vadd.f32 0.0, %v2905
  %2907 = vmatmul.bf16.gmra.mxu0 %v510
  %v2908 = vpop.f32.mrf.mxu0
  %v2909 = vadd.f32 0.0, %v2908
  %v2910 = vpop.f32.mrf.mxu0
  %v2911 = vadd.f32 0.0, %v2910
  %2912 = vmatmul.bf16.gmra.mxu0 %v511
  %v2913 = vpop.f32.mrf.mxu0
  %v2914 = vadd.f32 0.0, %v2913
  %v2915 = vpop.f32.mrf.mxu0
  %v2916 = vadd.f32 0.0, %v2915
  %2917 = vmatmul.bf16.gmra.mxu0 %v512
  %v2918 = vpop.f32.mrf.mxu0
  %v2919 = vadd.f32 0.0, %v2918
  %v2920 = vpop.f32.mrf.mxu0
  %v2921 = vadd.f32 0.0, %v2920
  %2922 = vmatmul.bf16.gmra.mxu0 %v513
  %v2923 = vpop.f32.mrf.mxu0
  %v2924 = vadd.f32 0.0, %v2923
  %v2925 = vpop.f32.mrf.mxu0
  %v2926 = vadd.f32 0.0, %v2925
  %2927 = vmatmul.bf16.gmra.mxu0 %v514
  %v2928 = vpop.f32.mrf.mxu0
  %v2929 = vadd.f32 0.0, %v2928
  %v2930 = vpop.f32.mrf.mxu0
  %v2931 = vadd.f32 0.0, %v2930
  %2932 = vmatmul.bf16.gmra.mxu0 %v515
  %v2933 = vpop.f32.mrf.mxu0
  %v2934 = vadd.f32 0.0, %v2933
  %v2935 = vpop.f32.mrf.mxu0
  %v2936 = vadd.f32 0.0, %v2935
  %2937 = vmatmul.bf16.gmra.mxu0 %v1858
  %v2938 = vpop.f32.mrf.mxu0
  %v2939 = vadd.f32 0.0, %v2938
  %v2940 = vpop.f32.mrf.mxu0
  %v2941 = vadd.f32 0.0, %v2940
  %2942 = vmatmul.bf16.gmra.mxu0 %v2792
  %v2943 = vpop.f32.mrf.mxu0
  %v2944 = vadd.f32 0.0, %v2943
  %v2945 = vpop.f32.mrf.mxu0
  %v2946 = vadd.f32 0.0, %v2945
  %2947 = vmatmul.bf16.gmra.mxu0 %v518
  %v2948 = vpop.f32.mrf.mxu0
  %v2949 = vadd.f32 0.0, %v2948
  %v2950 = vpop.f32.mrf.mxu0
  %v2951 = vadd.f32 0.0, %v2950
  %2952 = vmatmul.bf16.gmra.mxu0 %v519
  %v2953 = vpop.f32.mrf.mxu0
  %v2954 = vadd.f32 0.0, %v2953
  %v2955 = vpop.f32.mrf.mxu0
  %v2956 = vadd.f32 0.0, %v2955
  %2957 = vmatmul.bf16.gmra.mxu0 %v520
  %v2958 = vpop.f32.mrf.mxu0
  %v2959 = vadd.f32 0.0, %v2958
  %v2960 = vpop.f32.mrf.mxu0
  %v2961 = vadd.f32 0.0, %v2960
  %2962 = vmatmul.bf16.gmra.mxu0 %v521
  %v2963 = vpop.f32.mrf.mxu0
  %v2964 = vadd.f32 0.0, %v2963
  %v2965 = vpop.f32.mrf.mxu0
  %v2966 = vadd.f32 0.0, %v2965
  %2967 = vmatmul.bf16.gmra.mxu0 %v522
  %v2968 = vpop.f32.mrf.mxu0
  %v2969 = vadd.f32 0.0, %v2968
  %v2970 = vpop.f32.mrf.mxu0
  %v2971 = vadd.f32 0.0, %v2970
  %2972 = vmatmul.bf16.gmra.mxu0 %v523
  %v2973 = vpop.f32.mrf.mxu0
  %v2974 = vadd.f32 0.0, %v2973
  %v2975 = vpop.f32.mrf.mxu0
  %v2976 = vadd.f32 0.0, %v2975
  %2977 = vmatmul.bf16.gmra.mxu0 %v524
  %v2978 = vpop.f32.mrf.mxu0
  %v2979 = vadd.f32 0.0, %v2978
  %v2980 = vpop.f32.mrf.mxu0
  %v2981 = vadd.f32 0.0, %v2980
  %2982 = vmatmul.bf16.gmra.mxu0 %v525
  %v2983 = vpop.f32.mrf.mxu0
  %v2984 = vadd.f32 0.0, %v2983
  %v2985 = vpop.f32.mrf.mxu0
  %v2986 = vadd.f32 0.0, %v2985
  %2987 = vmatmul.bf16.gmra.mxu0 %v526
  %v2988 = vpop.f32.mrf.mxu0
  %v2989 = vadd.f32 0.0, %v2988
  %v2990 = vpop.f32.mrf.mxu0
  %v2991 = vadd.f32 0.0, %v2990
  %2992 = vmatmul.bf16.gmra.mxu0 %v527
  %v2993 = vpop.f32.mrf.mxu0
  %v2994 = vadd.f32 0.0, %v2993
  %v2995 = vpop.f32.mrf.mxu0
  %v2996 = vadd.f32 0.0, %v2995
  %2997 = vmatmul.bf16.gmra.mxu0 %v528
  %v2998 = vpop.f32.mrf.mxu0
  %v2999 = vadd.f32 0.0, %v2998
  %v3000 = vpop.f32.mrf.mxu0
  %v3001 = vadd.f32 0.0, %v3000
  %3002 = vmatmul.bf16.gmra.mxu0 %v529
  %v3003 = vpop.f32.mrf.mxu0
  %v3004 = vadd.f32 0.0, %v3003
  %v3005 = vpop.f32.mrf.mxu0
  %v3006 = vadd.f32 0.0, %v3005
  %3007 = vmatmul.bf16.gmra.mxu0 %v530
  %v3008 = vpop.f32.mrf.mxu0
  %v3009 = vadd.f32 0.0, %v3008
  %v3010 = vpop.f32.mrf.mxu0
  %v3011 = vadd.f32 0.0, %v3010
  %3012 = vmatmul.bf16.gmra.mxu0 %v531
  %v3013 = vpop.f32.mrf.mxu0
  %v3014 = vadd.f32 0.0, %v3013
  %v3015 = vpop.f32.mrf.mxu0
  %v3016 = vadd.f32 0.0, %v3015
  %3017 = vmatmul.bf16.gmra.mxu0 %v1859
  %v3018 = vpop.f32.mrf.mxu0
  %v3019 = vadd.f32 0.0, %v3018
  %v3020 = vpop.f32.mrf.mxu0
  %v3021 = vadd.f32 0.0, %v3020
  %3022 = vmatmul.bf16.gmra.mxu0 %v2793
  %v3023 = vpop.f32.mrf.mxu0
  %v3024 = vadd.f32 0.0, %v3023
  %v3025 = vpop.f32.mrf.mxu0
  %v3026 = vadd.f32 0.0, %v3025
  %3027 = vdwg.mxu0
  %v3028 = vadd.f32 %v2708, %v2869
  %v3029 = vadd.f32 %v2709, %v2871
  %v3030 = vadd.f32 %v2710, %v2874
  %v3031 = vadd.f32 %v2711, %v2876
  %v3032 = vadd.f32 %v2712, %v2879
  %v3033 = vadd.f32 %v2713, %v2881
  %v3034 = vadd.f32 %v2714, %v2884
  %v3035 = vadd.f32 %v2715, %v2886
  %v3036 = vadd.f32 %v2716, %v2889
  %v3037 = vadd.f32 %v2717, %v2891
  %v3038 = vadd.f32 %v2718, %v2894
  %v3039 = vadd.f32 %v2719, %v2896
  %v3040 = vadd.f32 %v2720, %v2899
  %v3041 = vadd.f32 %v2721, %v2901
  %v3042 = vadd.f32 %v2722, %v2904
  %v3043 = vadd.f32 %v2723, %v2906
  %v3044 = vadd.f32 %v2724, %v2909
  %v3045 = vadd.f32 %v2725, %v2911
  %v3046 = vadd.f32 %v2726, %v2914
  %v3047 = vadd.f32 %v2727, %v2916
  %v3048 = vadd.f32 %v2728, %v2919
  %v3049 = vadd.f32 %v2729, %v2921
  %v3050 = vadd.f32 %v2730, %v2924
  %v3051 = vadd.f32 %v2731, %v2926
  %v3052 = vadd.f32 %v2732, %v2929
  %v3053 = vadd.f32 %v2733, %v2931
  %v3054 = vadd.f32 %v2734, %v2934
  %v3055 = vadd.f32 %v2735, %v2936
  %v3056 = vadd.f32 %v2736, %v2939
  %v3057 = vadd.f32 %v2737, %v2941
  %v3058 = vadd.f32 %v2738, %v2944
  %v3059 = vadd.f32 %v2739, %v2946
  %v3060 = vadd.f32 %v2740, %v2949
  %v3061 = vadd.f32 %v2741, %v2951
  %v3062 = vadd.f32 %v2742, %v2954
  %v3063 = vadd.f32 %v2743, %v2956
  %v3064 = vadd.f32 %v2744, %v2959
  %v3065 = vadd.f32 %v2745, %v2961
  %v3066 = vadd.f32 %v2746, %v2964
  %v3067 = vadd.f32 %v2747, %v2966
  %v3068 = vadd.f32 %v2748, %v2969
  %v3069 = vadd.f32 %v2749, %v2971
  %v3070 = vadd.f32 %v2750, %v2974
  %v3071 = vadd.f32 %v2751, %v2976
  %v3072 = vadd.f32 %v2752, %v2979
  %v3073 = vadd.f32 %v2753, %v2981
  %v3074 = vadd.f32 %v2754, %v2984
  %v3075 = vadd.f32 %v2755, %v2986
  %v3076 = vadd.f32 %v2756, %v2989
  %v3077 = vadd.f32 %v2757, %v2991
  %v3078 = vadd.f32 %v2758, %v2994
  %v3079 = vadd.f32 %v2759, %v2996
  %v3080 = vadd.f32 %v2760, %v2999
  %v3081 = vadd.f32 %v2761, %v3001
  %v3082 = vadd.f32 %v2762, %v3004
  %v3083 = vadd.f32 %v2763, %v3006
  %v3084 = vadd.f32 %v2764, %v3009
  %v3085 = vadd.f32 %v2765, %v3011
  %v3086 = vadd.f32 %v2766, %v3014
  %v3087 = vadd.f32 %v2767, %v3016
  %v3088 = vadd.f32 %v2768, %v3019
  %v3089 = vadd.f32 %v2769, %v3021
  %v3090 = vadd.f32 %v2770, %v3024
  %v3091 = vadd.f32 %v2771, %v3026
  %v3092 = vrot.slane %v73, 2
  %v3093 = vrot.slane %v74, 2
  %v3094 = vsel %vm983, %v3092, %v3093
  %v3095 = vrot.slane %v75, 2
  %v3096 = vsel %vm983, %v3093, %v3095
  %v3097 = vrot.slane %v127, 2
  %v3098 = vrot.slane %v128, 2
  %v3099 = vsel %vm983, %v3097, %v3098
  %v3100 = vrot.slane %v129, 2
  %v3101 = vsel %vm983, %v3098, %v3100
  %v3106 = vpack.c.bf16 %v3096, %v3094
  %v3107 = vpack.c.bf16 %v3101, %v3099
  %s3108 = scalar_lea.vmem %s1, 512
  %v3109 = vld [vmem:[%s3108] sm:$0xf]
  %v3110 = vld [vmem:[%s3108 + $0x4] sm:$0xf]
  %v3111 = vld [vmem:[%s3108 + $0x8] sm:$0xf]
  %v3112 = vld [vmem:[%s3108 + $0xc] sm:$0xf]
  %v3113 = vld [vmem:[%s3108 + $0x10] sm:$0xf]
  %v3114 = vld [vmem:[%s3108 + $0x14] sm:$0xf]
  %v3115 = vld [vmem:[%s3108 + $0x18] sm:$0xf]
  %v3116 = vld [vmem:[%s3108 + $0x1c] sm:$0xf]
  %v3117 = vld [vmem:[%s3108 + $0x20] sm:$0xf]
  %v3118 = vld [vmem:[%s3108 + $0x24] sm:$0xf]
  %v3119 = vld [vmem:[%s3108 + $0x28] sm:$0xf]
  %v3120 = vld [vmem:[%s3108 + $0x2c] sm:$0xf]
  %v3121 = vld [vmem:[%s3108 + $0x30] sm:$0xf]
  %v3122 = vld [vmem:[%s3108 + $0x34] sm:$0xf]
  %v3123 = vld [vmem:[%s3108 + $0x38] sm:$0xf]
  %v3124 = vld [vmem:[%s3108 + $0x3c] sm:$0xf]
  %v3141 = vunpack.c.l.b16 %v3109
  %v3142 = vunpack.c.l.b16 %v3110
  %v3143 = vunpack.c.l.b16 %v3111
  %v3144 = vunpack.c.l.b16 %v3112
  %v3145 = vunpack.c.l.b16 %v3113
  %v3146 = vunpack.c.l.b16 %v3114
  %v3147 = vunpack.c.l.b16 %v3115
  %v3148 = vunpack.c.l.b16 %v3116
  %v3149 = vunpack.c.l.b16 %v3117
  %v3150 = vunpack.c.l.b16 %v3118
  %v3151 = vunpack.c.l.b16 %v3119
  %v3152 = vunpack.c.l.b16 %v3120
  %v3153 = vunpack.c.l.b16 %v3121
  %v3154 = vunpack.c.l.b16 %v3122
  %v3155 = vunpack.c.l.b16 %v3123
  %v3156 = vunpack.c.l.b16 %v3124
  %v3157 = vpack.c.b16 %v3142, %v3141
  %v3158 = vpack.c.b16 %v3144, %v3143
  %v3159 = vpack.c.b16 %v3146, %v3145
  %v3160 = vpack.c.b16 %v3148, %v3147
  %v3161 = vpack.c.b16 %v3150, %v3149
  %v3162 = vpack.c.b16 %v3152, %v3151
  %v3163 = vpack.c.b16 %v3154, %v3153
  %v3164 = vpack.c.b16 %v3156, %v3155
  %3173 = vmatpush.bf16.msra.mxu0 %v3164
  %3174 = vmatpush.bf16.msra.mxu0 %v3163
  %3175 = vmatpush.bf16.msra.mxu0 %v3162
  %3176 = vmatpush.bf16.msra.mxu0 %v3161
  %3177 = vmatpush.bf16.msra.mxu0 %v3160
  %3178 = vmatpush.bf16.msra.mxu0 %v3159
  %3179 = vmatpush.bf16.msra.mxu0 %v3158
  %3180 = vmatpush.bf16.msra.mxu0 %v3157
  %3181 = vmatmul.bf16.gmra.mxu0 %v1210
  %v3182 = vpop.f32.mrf.mxu0
  %v3183 = vadd.f32 0.0, %v3182
  %v3184 = vpop.f32.mrf.mxu0
  %v3185 = vadd.f32 0.0, %v3184
  %3186 = vmatmul.bf16.gmra.mxu0 %v1211
  %v3187 = vpop.f32.mrf.mxu0
  %v3188 = vadd.f32 0.0, %v3187
  %v3189 = vpop.f32.mrf.mxu0
  %v3190 = vadd.f32 0.0, %v3189
  %3191 = vmatmul.bf16.gmra.mxu0 %v1212
  %v3192 = vpop.f32.mrf.mxu0
  %v3193 = vadd.f32 0.0, %v3192
  %v3194 = vpop.f32.mrf.mxu0
  %v3195 = vadd.f32 0.0, %v3194
  %3196 = vmatmul.bf16.gmra.mxu0 %v1213
  %v3197 = vpop.f32.mrf.mxu0
  %v3198 = vadd.f32 0.0, %v3197
  %v3199 = vpop.f32.mrf.mxu0
  %v3200 = vadd.f32 0.0, %v3199
  %3201 = vmatmul.bf16.gmra.mxu0 %v1214
  %v3202 = vpop.f32.mrf.mxu0
  %v3203 = vadd.f32 0.0, %v3202
  %v3204 = vpop.f32.mrf.mxu0
  %v3205 = vadd.f32 0.0, %v3204
  %3206 = vmatmul.bf16.gmra.mxu0 %v1215
  %v3207 = vpop.f32.mrf.mxu0
  %v3208 = vadd.f32 0.0, %v3207
  %v3209 = vpop.f32.mrf.mxu0
  %v3210 = vadd.f32 0.0, %v3209
  %3211 = vmatmul.bf16.gmra.mxu0 %v1216
  %v3212 = vpop.f32.mrf.mxu0
  %v3213 = vadd.f32 0.0, %v3212
  %v3214 = vpop.f32.mrf.mxu0
  %v3215 = vadd.f32 0.0, %v3214
  %3216 = vmatmul.bf16.gmra.mxu0 %v1217
  %v3217 = vpop.f32.mrf.mxu0
  %v3218 = vadd.f32 0.0, %v3217
  %v3219 = vpop.f32.mrf.mxu0
  %v3220 = vadd.f32 0.0, %v3219
  %3221 = vmatmul.bf16.gmra.mxu0 %v1218
  %v3222 = vpop.f32.mrf.mxu0
  %v3223 = vadd.f32 0.0, %v3222
  %v3224 = vpop.f32.mrf.mxu0
  %v3225 = vadd.f32 0.0, %v3224
  %3226 = vmatmul.bf16.gmra.mxu0 %v1219
  %v3227 = vpop.f32.mrf.mxu0
  %v3228 = vadd.f32 0.0, %v3227
  %v3229 = vpop.f32.mrf.mxu0
  %v3230 = vadd.f32 0.0, %v3229
  %3231 = vmatmul.bf16.gmra.mxu0 %v1220
  %v3232 = vpop.f32.mrf.mxu0
  %v3233 = vadd.f32 0.0, %v3232
  %v3234 = vpop.f32.mrf.mxu0
  %v3235 = vadd.f32 0.0, %v3234
  %3236 = vmatmul.bf16.gmra.mxu0 %v1221
  %v3237 = vpop.f32.mrf.mxu0
  %v3238 = vadd.f32 0.0, %v3237
  %v3239 = vpop.f32.mrf.mxu0
  %v3240 = vadd.f32 0.0, %v3239
  %3241 = vmatmul.bf16.gmra.mxu0 %v1222
  %v3242 = vpop.f32.mrf.mxu0
  %v3243 = vadd.f32 0.0, %v3242
  %v3244 = vpop.f32.mrf.mxu0
  %v3245 = vadd.f32 0.0, %v3244
  %3246 = vmatmul.bf16.gmra.mxu0 %v1223
  %v3247 = vpop.f32.mrf.mxu0
  %v3248 = vadd.f32 0.0, %v3247
  %v3249 = vpop.f32.mrf.mxu0
  %v3250 = vadd.f32 0.0, %v3249
  %3251 = vmatmul.bf16.gmra.mxu0 %v2172
  %v3252 = vpop.f32.mrf.mxu0
  %v3253 = vadd.f32 0.0, %v3252
  %v3254 = vpop.f32.mrf.mxu0
  %v3255 = vadd.f32 0.0, %v3254
  %3256 = vmatmul.bf16.gmra.mxu0 %v3106
  %v3257 = vpop.f32.mrf.mxu0
  %v3258 = vadd.f32 0.0, %v3257
  %v3259 = vpop.f32.mrf.mxu0
  %v3260 = vadd.f32 0.0, %v3259
  %3261 = vmatmul.bf16.gmra.mxu0 %v1226
  %v3262 = vpop.f32.mrf.mxu0
  %v3263 = vadd.f32 0.0, %v3262
  %v3264 = vpop.f32.mrf.mxu0
  %v3265 = vadd.f32 0.0, %v3264
  %3266 = vmatmul.bf16.gmra.mxu0 %v1227
  %v3267 = vpop.f32.mrf.mxu0
  %v3268 = vadd.f32 0.0, %v3267
  %v3269 = vpop.f32.mrf.mxu0
  %v3270 = vadd.f32 0.0, %v3269
  %3271 = vmatmul.bf16.gmra.mxu0 %v1228
  %v3272 = vpop.f32.mrf.mxu0
  %v3273 = vadd.f32 0.0, %v3272
  %v3274 = vpop.f32.mrf.mxu0
  %v3275 = vadd.f32 0.0, %v3274
  %3276 = vmatmul.bf16.gmra.mxu0 %v1229
  %v3277 = vpop.f32.mrf.mxu0
  %v3278 = vadd.f32 0.0, %v3277
  %v3279 = vpop.f32.mrf.mxu0
  %v3280 = vadd.f32 0.0, %v3279
  %3281 = vmatmul.bf16.gmra.mxu0 %v1230
  %v3282 = vpop.f32.mrf.mxu0
  %v3283 = vadd.f32 0.0, %v3282
  %v3284 = vpop.f32.mrf.mxu0
  %v3285 = vadd.f32 0.0, %v3284
  %3286 = vmatmul.bf16.gmra.mxu0 %v1231
  %v3287 = vpop.f32.mrf.mxu0
  %v3288 = vadd.f32 0.0, %v3287
  %v3289 = vpop.f32.mrf.mxu0
  %v3290 = vadd.f32 0.0, %v3289
  %3291 = vmatmul.bf16.gmra.mxu0 %v1232
  %v3292 = vpop.f32.mrf.mxu0
  %v3293 = vadd.f32 0.0, %v3292
  %v3294 = vpop.f32.mrf.mxu0
  %v3295 = vadd.f32 0.0, %v3294
  %3296 = vmatmul.bf16.gmra.mxu0 %v1233
  %v3297 = vpop.f32.mrf.mxu0
  %v3298 = vadd.f32 0.0, %v3297
  %v3299 = vpop.f32.mrf.mxu0
  %v3300 = vadd.f32 0.0, %v3299
  %3301 = vmatmul.bf16.gmra.mxu0 %v1234
  %v3302 = vpop.f32.mrf.mxu0
  %v3303 = vadd.f32 0.0, %v3302
  %v3304 = vpop.f32.mrf.mxu0
  %v3305 = vadd.f32 0.0, %v3304
  %3306 = vmatmul.bf16.gmra.mxu0 %v1235
  %v3307 = vpop.f32.mrf.mxu0
  %v3308 = vadd.f32 0.0, %v3307
  %v3309 = vpop.f32.mrf.mxu0
  %v3310 = vadd.f32 0.0, %v3309
  %3311 = vmatmul.bf16.gmra.mxu0 %v1236
  %v3312 = vpop.f32.mrf.mxu0
  %v3313 = vadd.f32 0.0, %v3312
  %v3314 = vpop.f32.mrf.mxu0
  %v3315 = vadd.f32 0.0, %v3314
  %3316 = vmatmul.bf16.gmra.mxu0 %v1237
  %v3317 = vpop.f32.mrf.mxu0
  %v3318 = vadd.f32 0.0, %v3317
  %v3319 = vpop.f32.mrf.mxu0
  %v3320 = vadd.f32 0.0, %v3319
  %3321 = vmatmul.bf16.gmra.mxu0 %v1238
  %v3322 = vpop.f32.mrf.mxu0
  %v3323 = vadd.f32 0.0, %v3322
  %v3324 = vpop.f32.mrf.mxu0
  %v3325 = vadd.f32 0.0, %v3324
  %3326 = vmatmul.bf16.gmra.mxu0 %v1239
  %v3327 = vpop.f32.mrf.mxu0
  %v3328 = vadd.f32 0.0, %v3327
  %v3329 = vpop.f32.mrf.mxu0
  %v3330 = vadd.f32 0.0, %v3329
  %3331 = vmatmul.bf16.gmra.mxu0 %v2173
  %v3332 = vpop.f32.mrf.mxu0
  %v3333 = vadd.f32 0.0, %v3332
  %v3334 = vpop.f32.mrf.mxu0
  %v3335 = vadd.f32 0.0, %v3334
  %3336 = vmatmul.bf16.gmra.mxu0 %v3107
  %v3337 = vpop.f32.mrf.mxu0
  %v3338 = vadd.f32 0.0, %v3337
  %v3339 = vpop.f32.mrf.mxu0
  %v3340 = vadd.f32 0.0, %v3339
  %3341 = vdwg.mxu0
  %v3342 = vadd.f32 %v3028, %v3183
  %v3343 = vadd.f32 %v3029, %v3185
  %v3344 = vadd.f32 %v3030, %v3188
  %v3345 = vadd.f32 %v3031, %v3190
  %v3346 = vadd.f32 %v3032, %v3193
  %v3347 = vadd.f32 %v3033, %v3195
  %v3348 = vadd.f32 %v3034, %v3198
  %v3349 = vadd.f32 %v3035, %v3200
  %v3350 = vadd.f32 %v3036, %v3203
  %v3351 = vadd.f32 %v3037, %v3205
  %v3352 = vadd.f32 %v3038, %v3208
  %v3353 = vadd.f32 %v3039, %v3210
  %v3354 = vadd.f32 %v3040, %v3213
  %v3355 = vadd.f32 %v3041, %v3215
  %v3356 = vadd.f32 %v3042, %v3218
  %v3357 = vadd.f32 %v3043, %v3220
  %v3358 = vadd.f32 %v3044, %v3223
  %v3359 = vadd.f32 %v3045, %v3225
  %v3360 = vadd.f32 %v3046, %v3228
  %v3361 = vadd.f32 %v3047, %v3230
  %v3362 = vadd.f32 %v3048, %v3233
  %v3363 = vadd.f32 %v3049, %v3235
  %v3364 = vadd.f32 %v3050, %v3238
  %v3365 = vadd.f32 %v3051, %v3240
  %v3366 = vadd.f32 %v3052, %v3243
  %v3367 = vadd.f32 %v3053, %v3245
  %v3368 = vadd.f32 %v3054, %v3248
  %v3369 = vadd.f32 %v3055, %v3250
  %v3370 = vadd.f32 %v3056, %v3253
  %v3371 = vadd.f32 %v3057, %v3255
  %v3372 = vadd.f32 %v3058, %v3258
  %v3373 = vadd.f32 %v3059, %v3260
  %v3374 = vadd.f32 %v3060, %v3263
  %v3375 = vadd.f32 %v3061, %v3265
  %v3376 = vadd.f32 %v3062, %v3268
  %v3377 = vadd.f32 %v3063, %v3270
  %v3378 = vadd.f32 %v3064, %v3273
  %v3379 = vadd.f32 %v3065, %v3275
  %v3380 = vadd.f32 %v3066, %v3278
  %v3381 = vadd.f32 %v3067, %v3280
  %v3382 = vadd.f32 %v3068, %v3283
  %v3383 = vadd.f32 %v3069, %v3285
  %v3384 = vadd.f32 %v3070, %v3288
  %v3385 = vadd.f32 %v3071, %v3290
  %v3386 = vadd.f32 %v3072, %v3293
  %v3387 = vadd.f32 %v3073, %v3295
  %v3388 = vadd.f32 %v3074, %v3298
  %v3389 = vadd.f32 %v3075, %v3300
  %v3390 = vadd.f32 %v3076, %v3303
  %v3391 = vadd.f32 %v3077, %v3305
  %v3392 = vadd.f32 %v3078, %v3308
  %v3393 = vadd.f32 %v3079, %v3310
  %v3394 = vadd.f32 %v3080, %v3313
  %v3395 = vadd.f32 %v3081, %v3315
  %v3396 = vadd.f32 %v3082, %v3318
  %v3397 = vadd.f32 %v3083, %v3320
  %v3398 = vadd.f32 %v3084, %v3323
  %v3399 = vadd.f32 %v3085, %v3325
  %v3400 = vadd.f32 %v3086, %v3328
  %v3401 = vadd.f32 %v3087, %v3330
  %v3402 = vadd.f32 %v3088, %v3333
  %v3403 = vadd.f32 %v3089, %v3335
  %v3404 = vadd.f32 %v3090, %v3338
  %v3405 = vadd.f32 %v3091, %v3340
  %v3407 = vperm.slane %v130, 0
  %v3409 = vadd.f32 %v3342, %v3407
  %v3410 = vadd.f32 %v3343, %v3407
  %v3411 = vadd.f32 %v3344, %v3407
  %v3412 = vadd.f32 %v3345, %v3407
  %v3413 = vadd.f32 %v3346, %v3407
  %v3414 = vadd.f32 %v3347, %v3407
  %v3415 = vadd.f32 %v3348, %v3407
  %v3416 = vadd.f32 %v3349, %v3407
  %v3417 = vadd.f32 %v3350, %v3407
  %v3418 = vadd.f32 %v3351, %v3407
  %v3419 = vadd.f32 %v3352, %v3407
  %v3420 = vadd.f32 %v3353, %v3407
  %v3421 = vadd.f32 %v3354, %v3407
  %v3422 = vadd.f32 %v3355, %v3407
  %v3423 = vadd.f32 %v3356, %v3407
  %v3424 = vadd.f32 %v3357, %v3407
  %v3425 = vadd.f32 %v3358, %v3407
  %v3426 = vadd.f32 %v3359, %v3407
  %v3427 = vadd.f32 %v3360, %v3407
  %v3428 = vadd.f32 %v3361, %v3407
  %v3429 = vadd.f32 %v3362, %v3407
  %v3430 = vadd.f32 %v3363, %v3407
  %v3431 = vadd.f32 %v3364, %v3407
  %v3432 = vadd.f32 %v3365, %v3407
  %v3433 = vadd.f32 %v3366, %v3407
  %v3434 = vadd.f32 %v3367, %v3407
  %v3435 = vadd.f32 %v3368, %v3407
  %v3436 = vadd.f32 %v3369, %v3407
  %v3437 = vadd.f32 %v3370, %v3407
  %v3438 = vadd.f32 %v3371, %v3407
  %v3439 = vadd.f32 %v3372, %v3407
  %v3440 = vadd.f32 %v3373, %v3407
  %v3441 = vadd.f32 %v3374, %v3407
  %v3442 = vadd.f32 %v3375, %v3407
  %v3443 = vadd.f32 %v3376, %v3407
  %v3444 = vadd.f32 %v3377, %v3407
  %v3445 = vadd.f32 %v3378, %v3407
  %v3446 = vadd.f32 %v3379, %v3407
  %v3447 = vadd.f32 %v3380, %v3407
  %v3448 = vadd.f32 %v3381, %v3407
  %v3449 = vadd.f32 %v3382, %v3407
  %v3450 = vadd.f32 %v3383, %v3407
  %v3451 = vadd.f32 %v3384, %v3407
  %v3452 = vadd.f32 %v3385, %v3407
  %v3453 = vadd.f32 %v3386, %v3407
  %v3454 = vadd.f32 %v3387, %v3407
  %v3455 = vadd.f32 %v3388, %v3407
  %v3456 = vadd.f32 %v3389, %v3407
  %v3457 = vadd.f32 %v3390, %v3407
  %v3458 = vadd.f32 %v3391, %v3407
  %v3459 = vadd.f32 %v3392, %v3407
  %v3460 = vadd.f32 %v3393, %v3407
  %v3461 = vadd.f32 %v3394, %v3407
  %v3462 = vadd.f32 %v3395, %v3407
  %v3463 = vadd.f32 %v3396, %v3407
  %v3464 = vadd.f32 %v3397, %v3407
  %v3465 = vadd.f32 %v3398, %v3407
  %v3466 = vadd.f32 %v3399, %v3407
  %v3467 = vadd.f32 %v3400, %v3407
  %v3468 = vadd.f32 %v3401, %v3407
  %v3469 = vadd.f32 %v3402, %v3407
  %v3470 = vadd.f32 %v3403, %v3407
  %v3471 = vadd.f32 %v3404, %v3407
  %v3472 = vadd.f32 %v3405, %v3407
  %3473 = vst [vmem:[#allocation2] sm:$0xff] 0.0
  %3474 = vst [vmem:[#allocation2 + $0x8] sm:$0xff] 0.0
  %3475 = vst [vmem:[#allocation2 + $0x10] sm:$0x3] 0.0
  %3476 = vst [vmem:[#allocation2 + $0x1b0] sm:$0xff] 0.0
  %3477 = vst [vmem:[#allocation2 + $0x1b8] sm:$0xff] 0.0
  %3478 = vst [vmem:[#allocation2 + $0x1c0] sm:$0x3] 0.0
  %s3479 = scalar_lea.vmem [#allocation2], 408
  %3480 = vst [vmem:[%s3479] sm:$0xff] 0.0
  %3481 = vst [vmem:[%s3479 + $0x8] sm:$0xff] 0.0
  %3482 = vst [vmem:[%s3479 + $0x10] sm:$0x3] 0.0
  %3483 = vst [vmem:[%s3479 + $0x1b0] sm:$0xff] 0.0
  %3484 = vst [vmem:[%s3479 + $0x1b8] sm:$0xff] 0.0
  %3485 = vst [vmem:[%s3479 + $0x1c0] sm:$0x3] 0.0
  %3486 = vst [vmem:[#allocation2] sm:$0x1] 0.0
  %3487 = vst [vmem:[#allocation2 + $0x18] sm:$0x1] 0.0
  %3488 = vst [vmem:[#allocation2 + $0x30] sm:$0x1] 0.0
  %3489 = vst [vmem:[#allocation2 + $0x48] sm:$0x1] 0.0
  %3490 = vst [vmem:[#allocation2 + $0x60] sm:$0x1] 0.0
  %3491 = vst [vmem:[#allocation2 + $0x78] sm:$0x1] 0.0
  %3492 = vst [vmem:[#allocation2 + $0x90] sm:$0x1] 0.0
  %3493 = vst [vmem:[#allocation2 + $0xa8] sm:$0x1] 0.0
  %3494 = vst [vmem:[#allocation2 + $0xc0] sm:$0x1] 0.0
  %3495 = vst [vmem:[#allocation2 + $0xd8] sm:$0x1] 0.0
  %3496 = vst [vmem:[#allocation2 + $0xf0] sm:$0x1] 0.0
  %3497 = vst [vmem:[#allocation2 + $0x108] sm:$0x1] 0.0
  %3498 = vst [vmem:[#allocation2 + $0x120] sm:$0x1] 0.0
  %3499 = vst [vmem:[#allocation2 + $0x138] sm:$0x1] 0.0
  %3500 = vst [vmem:[#allocation2 + $0x150] sm:$0x1] 0.0
  %3501 = vst [vmem:[#allocation2 + $0x168] sm:$0x1] 0.0
  %3502 = vst [vmem:[#allocation2 + $0x180] sm:$0x1] 0.0
  %3503 = vst [vmem:[#allocation2 + $0x198] sm:$0x1] 0.0
  %3504 = vst [vmem:[#allocation2 + $0x1b0] sm:$0x1] 0.0
  %3505 = vst [vmem:[#allocation2 + $0x1c8] sm:$0x1] 0.0
  %3506 = vst [vmem:[#allocation2 + $0x1e0] sm:$0x1] 0.0
  %3507 = vst [vmem:[#allocation2 + $0x1f8] sm:$0x1] 0.0
  %3508 = vst [vmem:[#allocation2 + $0x210] sm:$0x1] 0.0
  %3509 = vst [vmem:[#allocation2 + $0x228] sm:$0x1] 0.0
  %3510 = vst [vmem:[#allocation2 + $0x240] sm:$0x1] 0.0
  %3511 = vst [vmem:[#allocation2 + $0x258] sm:$0x1] 0.0
  %3512 = vst [vmem:[#allocation2 + $0x270] sm:$0x1] 0.0
  %3513 = vst [vmem:[#allocation2 + $0x288] sm:$0x1] 0.0
  %3514 = vst [vmem:[#allocation2 + $0x2a0] sm:$0x1] 0.0
  %3515 = vst [vmem:[#allocation2 + $0x2b8] sm:$0x1] 0.0
  %3516 = vst [vmem:[#allocation2 + $0x2d0] sm:$0x1] 0.0
  %3517 = vst [vmem:[#allocation2 + $0x2e8] sm:$0x1] 0.0
  %3518 = vst [vmem:[#allocation2 + $0x300] sm:$0x1] 0.0
  %3519 = vst [vmem:[#allocation2 + $0x318] sm:$0x1] 0.0
  %3520 = vst [vmem:[#allocation2 + $0x330] sm:$0x1] 0.0
  %3521 = vst [vmem:[#allocation2 + $0x348] sm:$0x1] 0.0
  %3522 = vst [vmem:[#allocation2 + $0x11] sm:$0x1] 0.0
  %3523 = vst [vmem:[#allocation2 + $0x29] sm:$0x1] 0.0
  %3524 = vst [vmem:[#allocation2 + $0x41] sm:$0x1] 0.0
  %3525 = vst [vmem:[#allocation2 + $0x59] sm:$0x1] 0.0
  %3526 = vst [vmem:[#allocation2 + $0x71] sm:$0x1] 0.0
  %3527 = vst [vmem:[#allocation2 + $0x89] sm:$0x1] 0.0
  %3528 = vst [vmem:[#allocation2 + $0xa1] sm:$0x1] 0.0
  %3529 = vst [vmem:[#allocation2 + $0xb9] sm:$0x1] 0.0
  %3530 = vst [vmem:[#allocation2 + $0xd1] sm:$0x1] 0.0
  %3531 = vst [vmem:[#allocation2 + $0xe9] sm:$0x1] 0.0
  %3532 = vst [vmem:[#allocation2 + $0x101] sm:$0x1] 0.0
  %3533 = vst [vmem:[#allocation2 + $0x119] sm:$0x1] 0.0
  %3534 = vst [vmem:[#allocation2 + $0x131] sm:$0x1] 0.0
  %3535 = vst [vmem:[#allocation2 + $0x149] sm:$0x1] 0.0
  %3536 = vst [vmem:[#allocation2 + $0x161] sm:$0x1] 0.0
  %3537 = vst [vmem:[#allocation2 + $0x179] sm:$0x1] 0.0
  %3538 = vst [vmem:[#allocation2 + $0x191] sm:$0x1] 0.0
  %3539 = vst [vmem:[#allocation2 + $0x1a9] sm:$0x1] 0.0
  %3540 = vst [vmem:[#allocation2 + $0x1c1] sm:$0x1] 0.0
  %3541 = vst [vmem:[#allocation2 + $0x1d9] sm:$0x1] 0.0
  %3542 = vst [vmem:[#allocation2 + $0x1f1] sm:$0x1] 0.0
  %3543 = vst [vmem:[#allocation2 + $0x209] sm:$0x1] 0.0
  %3544 = vst [vmem:[#allocation2 + $0x221] sm:$0x1] 0.0
  %3545 = vst [vmem:[#allocation2 + $0x239] sm:$0x1] 0.0
  %3546 = vst [vmem:[#allocation2 + $0x251] sm:$0x1] 0.0
  %3547 = vst [vmem:[#allocation2 + $0x269] sm:$0x1] 0.0
  %3548 = vst [vmem:[#allocation2 + $0x281] sm:$0x1] 0.0
  %3549 = vst [vmem:[#allocation2 + $0x299] sm:$0x1] 0.0
  %3550 = vst [vmem:[#allocation2 + $0x2b1] sm:$0x1] 0.0
  %3551 = vst [vmem:[#allocation2 + $0x2c9] sm:$0x1] 0.0
  %3552 = vst [vmem:[#allocation2 + $0x2e1] sm:$0x1] 0.0
  %3553 = vst [vmem:[#allocation2 + $0x2f9] sm:$0x1] 0.0
  %3554 = vst [vmem:[#allocation2 + $0x311] sm:$0x1] 0.0
  %3555 = vst [vmem:[#allocation2 + $0x329] sm:$0x1] 0.0
  %3556 = vst [vmem:[#allocation2 + $0x341] sm:$0x1] 0.0
  %3557 = vst [vmem:[#allocation2 + $0x359] sm:$0x1] 0.0
  %s3558 = scalar_lea.vmem [#allocation2], 24
  %3559 = vst [vmem:[%s3558 + $0x1] sm:$0xff] %v3409
  %3560 = vst [vmem:[%s3558 + $0x9] sm:$0xff] %v3410
  %3561 = vst [vmem:[%s3558 + $0x19] sm:$0xff] %v3411
  %3562 = vst [vmem:[%s3558 + $0x21] sm:$0xff] %v3412
  %3563 = vst [vmem:[%s3558 + $0x31] sm:$0xff] %v3413
  %3564 = vst [vmem:[%s3558 + $0x39] sm:$0xff] %v3414
  %3565 = vst [vmem:[%s3558 + $0x49] sm:$0xff] %v3415
  %3566 = vst [vmem:[%s3558 + $0x51] sm:$0xff] %v3416
  %3567 = vst [vmem:[%s3558 + $0x61] sm:$0xff] %v3417
  %3568 = vst [vmem:[%s3558 + $0x69] sm:$0xff] %v3418
  %3569 = vst [vmem:[%s3558 + $0x79] sm:$0xff] %v3419
  %3570 = vst [vmem:[%s3558 + $0x81] sm:$0xff] %v3420
  %3571 = vst [vmem:[%s3558 + $0x91] sm:$0xff] %v3421
  %3572 = vst [vmem:[%s3558 + $0x99] sm:$0xff] %v3422
  %3573 = vst [vmem:[%s3558 + $0xa9] sm:$0xff] %v3423
  %3574 = vst [vmem:[%s3558 + $0xb1] sm:$0xff] %v3424
  %3575 = vst [vmem:[%s3558 + $0xc1] sm:$0xff] %v3425
  %3576 = vst [vmem:[%s3558 + $0xc9] sm:$0xff] %v3426
  %3577 = vst [vmem:[%s3558 + $0xd9] sm:$0xff] %v3427
  %3578 = vst [vmem:[%s3558 + $0xe1] sm:$0xff] %v3428
  %3579 = vst [vmem:[%s3558 + $0xf1] sm:$0xff] %v3429
  %3580 = vst [vmem:[%s3558 + $0xf9] sm:$0xff] %v3430
  %3581 = vst [vmem:[%s3558 + $0x109] sm:$0xff] %v3431
  %3582 = vst [vmem:[%s3558 + $0x111] sm:$0xff] %v3432
  %3583 = vst [vmem:[%s3558 + $0x121] sm:$0xff] %v3433
  %3584 = vst [vmem:[%s3558 + $0x129] sm:$0xff] %v3434
  %3585 = vst [vmem:[%s3558 + $0x139] sm:$0xff] %v3435
  %3586 = vst [vmem:[%s3558 + $0x141] sm:$0xff] %v3436
  %3587 = vst [vmem:[%s3558 + $0x151] sm:$0xff] %v3437
  %3588 = vst [vmem:[%s3558 + $0x159] sm:$0xff] %v3438
  %3589 = vst [vmem:[%s3558 + $0x169] sm:$0xff] %v3439
  %3590 = vst [vmem:[%s3558 + $0x171] sm:$0xff] %v3440
  %3591 = vst [vmem:[%s3558 + $0x1b1] sm:$0xff] %v3441
  %3592 = vst [vmem:[%s3558 + $0x1b9] sm:$0xff] %v3442
  %3593 = vst [vmem:[%s3558 + $0x1c9] sm:$0xff] %v3443
  %3594 = vst [vmem:[%s3558 + $0x1d1] sm:$0xff] %v3444
  %3595 = vst [vmem:[%s3558 + $0x1e1] sm:$0xff] %v3445
  %3596 = vst [vmem:[%s3558 + $0x1e9] sm:$0xff] %v3446
  %3597 = vst [vmem:[%s3558 + $0x1f9] sm:$0xff] %v3447
  %3598 = vst [vmem:[%s3558 + $0x201] sm:$0xff] %v3448
  %3599 = vst [vmem:[%s3558 + $0x211] sm:$0xff] %v3449
  %3600 = vst [vmem:[%s3558 + $0x219] sm:$0xff] %v3450
  %3601 = vst [vmem:[%s3558 + $0x229] sm:$0xff] %v3451
  %3602 = vst [vmem:[%s3558 + $0x231] sm:$0xff] %v3452
  %3603 = vst [vmem:[%s3558 + $0x241] sm:$0xff] %v3453
  %3604 = vst [vmem:[%s3558 + $0x249] sm:$0xff] %v3454
  %3605 = vst [vmem:[%s3558 + $0x259] sm:$0xff] %v3455
  %3606 = vst [vmem:[%s3558 + $0x261] sm:$0xff] %v3456
  %3607 = vst [vmem:[%s3558 + $0x271] sm:$0xff] %v3457
  %3608 = vst [vmem:[%s3558 + $0x279] sm:$0xff] %v3458
  %3609 = vst [vmem:[%s3558 + $0x289] sm:$0xff] %v3459
  %3610 = vst [vmem:[%s3558 + $0x291] sm:$0xff] %v3460
  %3611 = vst [vmem:[%s3558 + $0x2a1] sm:$0xff] %v3461
  %3612 = vst [vmem:[%s3558 + $0x2a9] sm:$0xff] %v3462
  %3613 = vst [vmem:[%s3558 + $0x2b9] sm:$0xff] %v3463
  %3614 = vst [vmem:[%s3558 + $0x2c1] sm:$0xff] %v3464
  %3615 = vst [vmem:[%s3558 + $0x2d1] sm:$0xff] %v3465
  %3616 = vst [vmem:[%s3558 + $0x2d9] sm:$0xff] %v3466
  %3617 = vst [vmem:[%s3558 + $0x2e9] sm:$0xff] %v3467
  %3618 = vst [vmem:[%s3558 + $0x2f1] sm:$0xff] %v3468
  %3619 = vst [vmem:[%s3558 + $0x301] sm:$0xff] %v3469
  %3620 = vst [vmem:[%s3558 + $0x309] sm:$0xff] %v3470
  %3621 = vst [vmem:[%s3558 + $0x319] sm:$0xff] %v3471
  %3622 = vst [vmem:[%s3558 + $0x321] sm:$0xff] %v3472
  %v3623 = vld [vmem:[#allocation2] sm:$0xff]
  %v3624 = vld [vmem:[#allocation2 + $0x8] sm:$0xff]
  %v3625 = vld [vmem:[#allocation2 + $0x10] sm:$0x3]
  %v3626 = vld [vmem:[#allocation2 + $0x18] sm:$0xff]
  %v3627 = vld [vmem:[#allocation2 + $0x20] sm:$0xff]
  %v3628 = vld [vmem:[#allocation2 + $0x28] sm:$0x3]
  %v3629 = vld [vmem:[#allocation2 + $0x30] sm:$0xff]
  %v3630 = vld [vmem:[#allocation2 + $0x38] sm:$0xff]
  %v3631 = vld [vmem:[#allocation2 + $0x40] sm:$0x3]
  %v3632 = vld [vmem:[#allocation2 + $0x48] sm:$0xff]
  %v3633 = vld [vmem:[#allocation2 + $0x50] sm:$0xff]
  %v3634 = vld [vmem:[#allocation2 + $0x58] sm:$0x3]
  %v3635 = vld [vmem:[#allocation2 + $0x60] sm:$0xff]
  %v3636 = vld [vmem:[#allocation2 + $0x68] sm:$0xff]
  %v3637 = vld [vmem:[#allocation2 + $0x70] sm:$0x3]
  %v3638 = vld [vmem:[#allocation2 + $0x78] sm:$0xff]
  %v3639 = vld [vmem:[#allocation2 + $0x80] sm:$0xff]
  %v3640 = vld [vmem:[#allocation2 + $0x88] sm:$0x3]
  %v3641 = vld [vmem:[#allocation2 + $0x90] sm:$0xff]
  %v3642 = vld [vmem:[#allocation2 + $0x98] sm:$0xff]
  %v3643 = vld [vmem:[#allocation2 + $0xa0] sm:$0x3]
  %v3644 = vld [vmem:[#allocation2 + $0xa8] sm:$0xff]
  %v3645 = vld [vmem:[#allocation2 + $0xb0] sm:$0xff]
  %v3646 = vld [vmem:[#allocation2 + $0xb8] sm:$0x3]
  %v3647 = vld [vmem:[#allocation2 + $0xc0] sm:$0xff]
  %v3648 = vld [vmem:[#allocation2 + $0xc8] sm:$0xff]
  %v3649 = vld [vmem:[#allocation2 + $0xd0] sm:$0x3]
  %v3650 = vld [vmem:[#allocation2 + $0xd8] sm:$0xff]
  %v3651 = vld [vmem:[#allocation2 + $0xe0] sm:$0xff]
  %v3652 = vld [vmem:[#allocation2 + $0xe8] sm:$0x3]
  %v3653 = vld [vmem:[#allocation2 + $0xf0] sm:$0xff]
  %v3654 = vld [vmem:[#allocation2 + $0xf8] sm:$0xff]
  %v3655 = vld [vmem:[#allocation2 + $0x100] sm:$0x3]
  %v3656 = vld [vmem:[#allocation2 + $0x108] sm:$0xff]
  %v3657 = vld [vmem:[#allocation2 + $0x110] sm:$0xff]
  %v3658 = vld [vmem:[#allocation2 + $0x118] sm:$0x3]
  %v3659 = vld [vmem:[#allocation2 + $0x120] sm:$0xff]
  %v3660 = vld [vmem:[#allocation2 + $0x128] sm:$0xff]
  %v3661 = vld [vmem:[#allocation2 + $0x130] sm:$0x3]
  %v3662 = vld [vmem:[#allocation2 + $0x138] sm:$0xff]
  %v3663 = vld [vmem:[#allocation2 + $0x140] sm:$0xff]
  %v3664 = vld [vmem:[#allocation2 + $0x148] sm:$0x3]
  %v3665 = vld [vmem:[#allocation2 + $0x150] sm:$0xff]
  %v3666 = vld [vmem:[#allocation2 + $0x158] sm:$0xff]
  %v3667 = vld [vmem:[#allocation2 + $0x160] sm:$0x3]
  %v3668 = vld [vmem:[#allocation2 + $0x168] sm:$0xff]
  %v3669 = vld [vmem:[#allocation2 + $0x170] sm:$0xff]
  %v3670 = vld [vmem:[#allocation2 + $0x178] sm:$0x3]
  %v3671 = vld [vmem:[#allocation2 + $0x180] sm:$0xff]
  %v3672 = vld [vmem:[#allocation2 + $0x188] sm:$0xff]
  %v3673 = vld [vmem:[#allocation2 + $0x190] sm:$0x3]
  %v3674 = vld [vmem:[#allocation2 + $0x198] sm:$0xff]
  %v3675 = vld [vmem:[#allocation2 + $0x1a0] sm:$0xff]
  %v3676 = vld [vmem:[#allocation2 + $0x1a8] sm:$0x3]
  %v3677 = vld [vmem:[#allocation2 + $0x1b0] sm:$0xff]
  %v3678 = vld [vmem:[#allocation2 + $0x1b8] sm:$0xff]
  %v3679 = vld [vmem:[#allocation2 + $0x1c0] sm:$0x3]
  %v3680 = vld [vmem:[#allocation2 + $0x1c8] sm:$0xff]
  %v3681 = vld [vmem:[#allocation2 + $0x1d0] sm:$0xff]
  %v3682 = vld [vmem:[#allocation2 + $0x1d8] sm:$0x3]
  %v3683 = vld [vmem:[#allocation2 + $0x1e0] sm:$0xff]
  %v3684 = vld [vmem:[#allocation2 + $0x1e8] sm:$0xff]
  %v3685 = vld [vmem:[#allocation2 + $0x1f0] sm:$0x3]
  %v3686 = vld [vmem:[#allocation2 + $0x1f8] sm:$0xff]
  %v3687 = vld [vmem:[#allocation2 + $0x200] sm:$0xff]
  %v3688 = vld [vmem:[#allocation2 + $0x208] sm:$0x3]
  %v3689 = vld [vmem:[#allocation2 + $0x210] sm:$0xff]
  %v3690 = vld [vmem:[#allocation2 + $0x218] sm:$0xff]
  %v3691 = vld [vmem:[#allocation2 + $0x220] sm:$0x3]
  %v3692 = vld [vmem:[#allocation2 + $0x228] sm:$0xff]
  %v3693 = vld [vmem:[#allocation2 + $0x230] sm:$0xff]
  %v3694 = vld [vmem:[#allocation2 + $0x238] sm:$0x3]
  %v3695 = vld [vmem:[#allocation2 + $0x240] sm:$0xff]
  %v3696 = vld [vmem:[#allocation2 + $0x248] sm:$0xff]
  %v3697 = vld [vmem:[#allocation2 + $0x250] sm:$0x3]
  %v3698 = vld [vmem:[#allocation2 + $0x258] sm:$0xff]
  %v3699 = vld [vmem:[#allocation2 + $0x260] sm:$0xff]
  %v3700 = vld [vmem:[#allocation2 + $0x268] sm:$0x3]
  %v3701 = vld [vmem:[#allocation2 + $0x270] sm:$0xff]
  %v3702 = vld [vmem:[#allocation2 + $0x278] sm:$0xff]
  %v3703 = vld [vmem:[#allocation2 + $0x280] sm:$0x3]
  %v3704 = vld [vmem:[#allocation2 + $0x288] sm:$0xff]
  %v3705 = vld [vmem:[#allocation2 + $0x290] sm:$0xff]
  %v3706 = vld [vmem:[#allocation2 + $0x298] sm:$0x3]
  %v3707 = vld [vmem:[#allocation2 + $0x2a0] sm:$0xff]
  %v3708 = vld [vmem:[#allocation2 + $0x2a8] sm:$0xff]
  %v3709 = vld [vmem:[#allocation2 + $0x2b0] sm:$0x3]
  %v3710 = vld [vmem:[#allocation2 + $0x2b8] sm:$0xff]
  %v3711 = vld [vmem:[#allocation2 + $0x2c0] sm:$0xff]
  %v3712 = vld [vmem:[#allocation2 + $0x2c8] sm:$0x3]
  %v3713 = vld [vmem:[#allocation2 + $0x2d0] sm:$0xff]
  %v3714 = vld [vmem:[#allocation2 + $0x2d8] sm:$0xff]
  %v3715 = vld [vmem:[#allocation2 + $0x2e0] sm:$0x3]
  %v3716 = vld [vmem:[#allocation2 + $0x2e8] sm:$0xff]
  %v3717 = vld [vmem:[#allocation2 + $0x2f0] sm:$0xff]
  %v3718 = vld [vmem:[#allocation2 + $0x2f8] sm:$0x3]
  %v3719 = vld [vmem:[#allocation2 + $0x300] sm:$0xff]
  %v3720 = vld [vmem:[#allocation2 + $0x308] sm:$0xff]
  %v3721 = vld [vmem:[#allocation2 + $0x310] sm:$0x3]
  %v3722 = vld [vmem:[#allocation2 + $0x318] sm:$0xff]
  %v3723 = vld [vmem:[#allocation2 + $0x320] sm:$0xff]
  %v3724 = vld [vmem:[#allocation2 + $0x328] sm:$0x3]
  %v3725 = vld [vmem:[#allocation2 + $0x330] sm:$0xff]
  %v3726 = vld [vmem:[#allocation2 + $0x338] sm:$0xff]
  %v3727 = vld [vmem:[#allocation2 + $0x340] sm:$0x3]
  %v3728 = vld [vmem:[#allocation2 + $0x348] sm:$0xff]
  %v3729 = vld [vmem:[#allocation2 + $0x350] sm:$0xff]
  %v3730 = vld [vmem:[#allocation2 + $0x358] sm:$0x3]
  %v3731 = vld [vmem:[%s4] sm:$0x1]
  %v3732 = vpack.c.bf16 %v3624, %v3623
  %v3733 = vpack.c.bf16 %v3627, %v3626
  %v3734 = vpack.c.bf16 %v3630, %v3629
  %v3735 = vpack.c.bf16 %v3633, %v3632
  %v3736 = vpack.c.bf16 %v3636, %v3635
  %v3737 = vpack.c.bf16 %v3639, %v3638
  %v3738 = vpack.c.bf16 %v3642, %v3641
  %v3739 = vpack.c.bf16 %v3645, %v3644
  %v3740 = vpack.c.bf16 %v3648, %v3647
  %v3741 = vpack.c.bf16 %v3651, %v3650
  %v3742 = vpack.c.bf16 %v3654, %v3653
  %v3743 = vpack.c.bf16 %v3657, %v3656
  %v3744 = vpack.c.bf16 %v3660, %v3659
  %v3745 = vpack.c.bf16 %v3663, %v3662
  %v3746 = vpack.c.bf16 %v3666, %v3665
  %v3747 = vpack.c.bf16 %v3669, %v3668
  %v3748 = vpack.c.bf16 %v3678, %v3677
  %v3749 = vpack.c.bf16 %v3681, %v3680
  %v3750 = vpack.c.bf16 %v3684, %v3683
  %v3751 = vpack.c.bf16 %v3687, %v3686
  %v3752 = vpack.c.bf16 %v3690, %v3689
  %v3753 = vpack.c.bf16 %v3693, %v3692
  %v3754 = vpack.c.bf16 %v3696, %v3695
  %v3755 = vpack.c.bf16 %v3699, %v3698
  %v3756 = vpack.c.bf16 %v3702, %v3701
  %v3757 = vpack.c.bf16 %v3705, %v3704
  %v3758 = vpack.c.bf16 %v3708, %v3707
  %v3759 = vpack.c.bf16 %v3711, %v3710
  %v3760 = vpack.c.bf16 %v3714, %v3713
  %v3761 = vpack.c.bf16 %v3717, %v3716
  %v3762 = vpack.c.bf16 %v3720, %v3719
  %v3763 = vpack.c.bf16 %v3723, %v3722
  %v3764 = vld [vmem:[%s3] sm:$0xf]
  %v3765 = vld [vmem:[%s3 + $0x4] sm:$0xf]
  %v3766 = vld [vmem:[%s3 + $0x8] sm:$0xf]
  %v3767 = vld [vmem:[%s3 + $0xc] sm:$0xf]
  %v3768 = vld [vmem:[%s3 + $0x10] sm:$0xf]
  %v3769 = vld [vmem:[%s3 + $0x14] sm:$0xf]
  %v3770 = vld [vmem:[%s3 + $0x18] sm:$0xf]
  %v3771 = vld [vmem:[%s3 + $0x1c] sm:$0xf]
  %v3772 = vld [vmem:[%s3 + $0x20] sm:$0xf]
  %v3773 = vld [vmem:[%s3 + $0x24] sm:$0xf]
  %v3774 = vld [vmem:[%s3 + $0x28] sm:$0xf]
  %v3775 = vld [vmem:[%s3 + $0x2c] sm:$0xf]
  %v3776 = vld [vmem:[%s3 + $0x30] sm:$0xf]
  %v3777 = vld [vmem:[%s3 + $0x34] sm:$0xf]
  %v3778 = vld [vmem:[%s3 + $0x38] sm:$0xf]
  %v3779 = vld [vmem:[%s3 + $0x3c] sm:$0xf]
  %v3876 = vrot.slane %v3623, 1
  %v3877 = vrot.slane %v3624, 1
  %v3878 = vsel %vm275, %v3876, %v3877
  %v3879 = vrot.slane %v3625, 1
  %v3880 = vsel %vm275, %v3877, %v3879
  %v3881 = vrot.slane %v3626, 1
  %v3882 = vrot.slane %v3627, 1
  %v3883 = vsel %vm275, %v3881, %v3882
  %v3884 = vrot.slane %v3628, 1
  %v3885 = vsel %vm275, %v3882, %v3884
  %v3886 = vrot.slane %v3629, 1
  %v3887 = vrot.slane %v3630, 1
  %v3888 = vsel %vm275, %v3886, %v3887
  %v3889 = vrot.slane %v3631, 1
  %v3890 = vsel %vm275, %v3887, %v3889
  %v3891 = vrot.slane %v3632, 1
  %v3892 = vrot.slane %v3633, 1
  %v3893 = vsel %vm275, %v3891, %v3892
  %v3894 = vrot.slane %v3634, 1
  %v3895 = vsel %vm275, %v3892, %v3894
  %v3896 = vrot.slane %v3635, 1
  %v3897 = vrot.slane %v3636, 1
  %v3898 = vsel %vm275, %v3896, %v3897
  %v3899 = vrot.slane %v3637, 1
  %v3900 = vsel %vm275, %v3897, %v3899
  %v3901 = vrot.slane %v3638, 1
  %v3902 = vrot.slane %v3639, 1
  %v3903 = vsel %vm275, %v3901, %v3902
  %v3904 = vrot.slane %v3640, 1
  %v3905 = vsel %vm275, %v3902, %v3904
  %v3906 = vrot.slane %v3641, 1
  %v3907 = vrot.slane %v3642, 1
  %v3908 = vsel %vm275, %v3906, %v3907
  %v3909 = vrot.slane %v3643, 1
  %v3910 = vsel %vm275, %v3907, %v3909
  %v3911 = vrot.slane %v3644, 1
  %v3912 = vrot.slane %v3645, 1
  %v3913 = vsel %vm275, %v3911, %v3912
  %v3914 = vrot.slane %v3646, 1
  %v3915 = vsel %vm275, %v3912, %v3914
  %v3916 = vrot.slane %v3647, 1
  %v3917 = vrot.slane %v3648, 1
  %v3918 = vsel %vm275, %v3916, %v3917
  %v3919 = vrot.slane %v3649, 1
  %v3920 = vsel %vm275, %v3917, %v3919
  %v3921 = vrot.slane %v3650, 1
  %v3922 = vrot.slane %v3651, 1
  %v3923 = vsel %vm275, %v3921, %v3922
  %v3924 = vrot.slane %v3652, 1
  %v3925 = vsel %vm275, %v3922, %v3924
  %v3926 = vrot.slane %v3653, 1
  %v3927 = vrot.slane %v3654, 1
  %v3928 = vsel %vm275, %v3926, %v3927
  %v3929 = vrot.slane %v3655, 1
  %v3930 = vsel %vm275, %v3927, %v3929
  %v3931 = vrot.slane %v3656, 1
  %v3932 = vrot.slane %v3657, 1
  %v3933 = vsel %vm275, %v3931, %v3932
  %v3934 = vrot.slane %v3658, 1
  %v3935 = vsel %vm275, %v3932, %v3934
  %v3936 = vrot.slane %v3659, 1
  %v3937 = vrot.slane %v3660, 1
  %v3938 = vsel %vm275, %v3936, %v3937
  %v3939 = vrot.slane %v3661, 1
  %v3940 = vsel %vm275, %v3937, %v3939
  %v3941 = vrot.slane %v3662, 1
  %v3942 = vrot.slane %v3663, 1
  %v3943 = vsel %vm275, %v3941, %v3942
  %v3944 = vrot.slane %v3664, 1
  %v3945 = vsel %vm275, %v3942, %v3944
  %v3946 = vrot.slane %v3665, 1
  %v3947 = vrot.slane %v3666, 1
  %v3948 = vsel %vm275, %v3946, %v3947
  %v3949 = vrot.slane %v3667, 1
  %v3950 = vsel %vm275, %v3947, %v3949
  %v3951 = vrot.slane %v3668, 1
  %v3952 = vrot.slane %v3669, 1
  %v3953 = vsel %vm275, %v3951, %v3952
  %v3954 = vrot.slane %v3670, 1
  %v3955 = vsel %vm275, %v3952, %v3954
  %v3956 = vrot.slane %v3677, 1
  %v3957 = vrot.slane %v3678, 1
  %v3958 = vsel %vm275, %v3956, %v3957
  %v3959 = vrot.slane %v3679, 1
  %v3960 = vsel %vm275, %v3957, %v3959
  %v3961 = vrot.slane %v3680, 1
  %v3962 = vrot.slane %v3681, 1
  %v3963 = vsel %vm275, %v3961, %v3962
  %v3964 = vrot.slane %v3682, 1
  %v3965 = vsel %vm275, %v3962, %v3964
  %v3966 = vrot.slane %v3683, 1
  %v3967 = vrot.slane %v3684, 1
  %v3968 = vsel %vm275, %v3966, %v3967
  %v3969 = vrot.slane %v3685, 1
  %v3970 = vsel %vm275, %v3967, %v3969
  %v3971 = vrot.slane %v3686, 1
  %v3972 = vrot.slane %v3687, 1
  %v3973 = vsel %vm275, %v3971, %v3972
  %v3974 = vrot.slane %v3688, 1
  %v3975 = vsel %vm275, %v3972, %v3974
  %v3976 = vrot.slane %v3689, 1
  %v3977 = vrot.slane %v3690, 1
  %v3978 = vsel %vm275, %v3976, %v3977
  %v3979 = vrot.slane %v3691, 1
  %v3980 = vsel %vm275, %v3977, %v3979
  %v3981 = vrot.slane %v3692, 1
  %v3982 = vrot.slane %v3693, 1
  %v3983 = vsel %vm275, %v3981, %v3982
  %v3984 = vrot.slane %v3694, 1
  %v3985 = vsel %vm275, %v3982, %v3984
  %v3986 = vrot.slane %v3695, 1
  %v3987 = vrot.slane %v3696, 1
  %v3988 = vsel %vm275, %v3986, %v3987
  %v3989 = vrot.slane %v3697, 1
  %v3990 = vsel %vm275, %v3987, %v3989
  %v3991 = vrot.slane %v3698, 1
  %v3992 = vrot.slane %v3699, 1
  %v3993 = vsel %vm275, %v3991, %v3992
  %v3994 = vrot.slane %v3700, 1
  %v3995 = vsel %vm275, %v3992, %v3994
  %v3996 = vrot.slane %v3701, 1
  %v3997 = vrot.slane %v3702, 1
  %v3998 = vsel %vm275, %v3996, %v3997
  %v3999 = vrot.slane %v3703, 1
  %v4000 = vsel %vm275, %v3997, %v3999
  %v4001 = vrot.slane %v3704, 1
  %v4002 = vrot.slane %v3705, 1
  %v4003 = vsel %vm275, %v4001, %v4002
  %v4004 = vrot.slane %v3706, 1
  %v4005 = vsel %vm275, %v4002, %v4004
  %v4006 = vrot.slane %v3707, 1
  %v4007 = vrot.slane %v3708, 1
  %v4008 = vsel %vm275, %v4006, %v4007
  %v4009 = vrot.slane %v3709, 1
  %v4010 = vsel %vm275, %v4007, %v4009
  %v4011 = vrot.slane %v3710, 1
  %v4012 = vrot.slane %v3711, 1
  %v4013 = vsel %vm275, %v4011, %v4012
  %v4014 = vrot.slane %v3712, 1
  %v4015 = vsel %vm275, %v4012, %v4014
  %v4016 = vrot.slane %v3713, 1
  %v4017 = vrot.slane %v3714, 1
  %v4018 = vsel %vm275, %v4016, %v4017
  %v4019 = vrot.slane %v3715, 1
  %v4020 = vsel %vm275, %v4017, %v4019
  %v4021 = vrot.slane %v3716, 1
  %v4022 = vrot.slane %v3717, 1
  %v4023 = vsel %vm275, %v4021, %v4022
  %v4024 = vrot.slane %v3718, 1
  %v4025 = vsel %vm275, %v4022, %v4024
  %v4026 = vrot.slane %v3719, 1
  %v4027 = vrot.slane %v3720, 1
  %v4028 = vsel %vm275, %v4026, %v4027
  %v4029 = vrot.slane %v3721, 1
  %v4030 = vsel %vm275, %v4027, %v4029
  %v4031 = vrot.slane %v3722, 1
  %v4032 = vrot.slane %v3723, 1
  %v4033 = vsel %vm275, %v4031, %v4032
  %v4034 = vrot.slane %v3724, 1
  %v4035 = vsel %vm275, %v4032, %v4034
  %v4100 = vpack.c.bf16 %v3880, %v3878
  %v4101 = vpack.c.bf16 %v3885, %v3883
  %v4102 = vpack.c.bf16 %v3890, %v3888
  %v4103 = vpack.c.bf16 %v3895, %v3893
  %v4104 = vpack.c.bf16 %v3900, %v3898
  %v4105 = vpack.c.bf16 %v3905, %v3903
  %v4106 = vpack.c.bf16 %v3910, %v3908
  %v4107 = vpack.c.bf16 %v3915, %v3913
  %v4108 = vpack.c.bf16 %v3920, %v3918
  %v4109 = vpack.c.bf16 %v3925, %v3923
  %v4110 = vpack.c.bf16 %v3930, %v3928
  %v4111 = vpack.c.bf16 %v3935, %v3933
  %v4112 = vpack.c.bf16 %v3940, %v3938
  %v4113 = vpack.c.bf16 %v3945, %v3943
  %v4114 = vpack.c.bf16 %v3950, %v3948
  %v4115 = vpack.c.bf16 %v3955, %v3953
  %v4116 = vpack.c.bf16 %v3960, %v3958
  %v4117 = vpack.c.bf16 %v3965, %v3963
  %v4118 = vpack.c.bf16 %v3970, %v3968
  %v4119 = vpack.c.bf16 %v3975, %v3973
  %v4120 = vpack.c.bf16 %v3980, %v3978
  %v4121 = vpack.c.bf16 %v3985, %v3983
  %v4122 = vpack.c.bf16 %v3990, %v3988
  %v4123 = vpack.c.bf16 %v3995, %v3993
  %v4124 = vpack.c.bf16 %v4000, %v3998
  %v4125 = vpack.c.bf16 %v4005, %v4003
  %v4126 = vpack.c.bf16 %v4010, %v4008
  %v4127 = vpack.c.bf16 %v4015, %v4013
  %v4128 = vpack.c.bf16 %v4020, %v4018
  %v4129 = vpack.c.bf16 %v4025, %v4023
  %v4130 = vpack.c.bf16 %v4030, %v4028
  %v4131 = vpack.c.bf16 %v4035, %v4033
  %s4132 = scalar_lea.vmem %s3, 64
  %v4133 = vld [vmem:[%s4132] sm:$0xf]
  %v4134 = vld [vmem:[%s4132 + $0x4] sm:$0xf]
  %v4135 = vld [vmem:[%s4132 + $0x8] sm:$0xf]
  %v4136 = vld [vmem:[%s4132 + $0xc] sm:$0xf]
  %v4137 = vld [vmem:[%s4132 + $0x10] sm:$0xf]
  %v4138 = vld [vmem:[%s4132 + $0x14] sm:$0xf]
  %v4139 = vld [vmem:[%s4132 + $0x18] sm:$0xf]
  %v4140 = vld [vmem:[%s4132 + $0x1c] sm:$0xf]
  %v4141 = vld [vmem:[%s4132 + $0x20] sm:$0xf]
  %v4142 = vld [vmem:[%s4132 + $0x24] sm:$0xf]
  %v4143 = vld [vmem:[%s4132 + $0x28] sm:$0xf]
  %v4144 = vld [vmem:[%s4132 + $0x2c] sm:$0xf]
  %v4145 = vld [vmem:[%s4132 + $0x30] sm:$0xf]
  %v4146 = vld [vmem:[%s4132 + $0x34] sm:$0xf]
  %v4147 = vld [vmem:[%s4132 + $0x38] sm:$0xf]
  %v4148 = vld [vmem:[%s4132 + $0x3c] sm:$0xf]
  %v4165 = vunpack.c.l.b16 %v4133
  %v4166 = vunpack.c.l.b16 %v4134
  %v4167 = vunpack.c.l.b16 %v4135
  %v4168 = vunpack.c.l.b16 %v4136
  %v4169 = vunpack.c.l.b16 %v4137
  %v4170 = vunpack.c.l.b16 %v4138
  %v4171 = vunpack.c.l.b16 %v4139
  %v4172 = vunpack.c.l.b16 %v4140
  %v4173 = vunpack.c.l.b16 %v4141
  %v4174 = vunpack.c.l.b16 %v4142
  %v4175 = vunpack.c.l.b16 %v4143
  %v4176 = vunpack.c.l.b16 %v4144
  %v4177 = vunpack.c.l.b16 %v4145
  %v4178 = vunpack.c.l.b16 %v4146
  %v4179 = vunpack.c.l.b16 %v4147
  %v4180 = vunpack.c.l.b16 %v4148
  %v4181 = vpack.c.b16 %v4166, %v4165
  %v4182 = vpack.c.b16 %v4168, %v4167
  %v4183 = vpack.c.b16 %v4170, %v4169
  %v4184 = vpack.c.b16 %v4172, %v4171
  %v4185 = vpack.c.b16 %v4174, %v4173
  %v4186 = vpack.c.b16 %v4176, %v4175
  %v4187 = vpack.c.b16 %v4178, %v4177
  %v4188 = vpack.c.b16 %v4180, %v4179
  %4197 = vmatpush.bf16.msra.mxu0 %v4188
  %4198 = vmatpush.bf16.msra.mxu0 %v4187
  %4199 = vmatpush.bf16.msra.mxu0 %v4186
  %4200 = vmatpush.bf16.msra.mxu0 %v4185
  %4201 = vmatpush.bf16.msra.mxu0 %v4184
  %4202 = vmatpush.bf16.msra.mxu0 %v4183
  %4203 = vmatpush.bf16.msra.mxu0 %v4182
  %4204 = vmatpush.bf16.msra.mxu0 %v4181
  %4205 = vmatmul.bf16.gmra.mxu0 %v4100
  %v4206 = vpop.f32.mrf.mxu0
  %v4207 = vadd.f32 0.0, %v4206
  %v4208 = vpop.f32.mrf.mxu0
  %v4209 = vadd.f32 0.0, %v4208
  %4210 = vmatmul.bf16.gmra.mxu0 %v4101
  %v4211 = vpop.f32.mrf.mxu0
  %v4212 = vadd.f32 0.0, %v4211
  %v4213 = vpop.f32.mrf.mxu0
  %v4214 = vadd.f32 0.0, %v4213
  %4215 = vmatmul.bf16.gmra.mxu0 %v4102
  %v4216 = vpop.f32.mrf.mxu0
  %v4217 = vadd.f32 0.0, %v4216
  %v4218 = vpop.f32.mrf.mxu0
  %v4219 = vadd.f32 0.0, %v4218
  %4220 = vmatmul.bf16.gmra.mxu0 %v4103
  %v4221 = vpop.f32.mrf.mxu0
  %v4222 = vadd.f32 0.0, %v4221
  %v4223 = vpop.f32.mrf.mxu0
  %v4224 = vadd.f32 0.0, %v4223
  %4225 = vmatmul.bf16.gmra.mxu0 %v4104
  %v4226 = vpop.f32.mrf.mxu0
  %v4227 = vadd.f32 0.0, %v4226
  %v4228 = vpop.f32.mrf.mxu0
  %v4229 = vadd.f32 0.0, %v4228
  %4230 = vmatmul.bf16.gmra.mxu0 %v4105
  %v4231 = vpop.f32.mrf.mxu0
  %v4232 = vadd.f32 0.0, %v4231
  %v4233 = vpop.f32.mrf.mxu0
  %v4234 = vadd.f32 0.0, %v4233
  %4235 = vmatmul.bf16.gmra.mxu0 %v4106
  %v4236 = vpop.f32.mrf.mxu0
  %v4237 = vadd.f32 0.0, %v4236
  %v4238 = vpop.f32.mrf.mxu0
  %v4239 = vadd.f32 0.0, %v4238
  %4240 = vmatmul.bf16.gmra.mxu0 %v4107
  %v4241 = vpop.f32.mrf.mxu0
  %v4242 = vadd.f32 0.0, %v4241
  %v4243 = vpop.f32.mrf.mxu0
  %v4244 = vadd.f32 0.0, %v4243
  %4245 = vmatmul.bf16.gmra.mxu0 %v4108
  %v4246 = vpop.f32.mrf.mxu0
  %v4247 = vadd.f32 0.0, %v4246
  %v4248 = vpop.f32.mrf.mxu0
  %v4249 = vadd.f32 0.0, %v4248
  %4250 = vmatmul.bf16.gmra.mxu0 %v4109
  %v4251 = vpop.f32.mrf.mxu0
  %v4252 = vadd.f32 0.0, %v4251
  %v4253 = vpop.f32.mrf.mxu0
  %v4254 = vadd.f32 0.0, %v4253
  %4255 = vmatmul.bf16.gmra.mxu0 %v4110
  %v4256 = vpop.f32.mrf.mxu0
  %v4257 = vadd.f32 0.0, %v4256
  %v4258 = vpop.f32.mrf.mxu0
  %v4259 = vadd.f32 0.0, %v4258
  %4260 = vmatmul.bf16.gmra.mxu0 %v4111
  %v4261 = vpop.f32.mrf.mxu0
  %v4262 = vadd.f32 0.0, %v4261
  %v4263 = vpop.f32.mrf.mxu0
  %v4264 = vadd.f32 0.0, %v4263
  %4265 = vmatmul.bf16.gmra.mxu0 %v4112
  %v4266 = vpop.f32.mrf.mxu0
  %v4267 = vadd.f32 0.0, %v4266
  %v4268 = vpop.f32.mrf.mxu0
  %v4269 = vadd.f32 0.0, %v4268
  %4270 = vmatmul.bf16.gmra.mxu0 %v4113
  %v4271 = vpop.f32.mrf.mxu0
  %v4272 = vadd.f32 0.0, %v4271
  %v4273 = vpop.f32.mrf.mxu0
  %v4274 = vadd.f32 0.0, %v4273
  %4275 = vmatmul.bf16.gmra.mxu0 %v4114
  %v4276 = vpop.f32.mrf.mxu0
  %v4277 = vadd.f32 0.0, %v4276
  %v4278 = vpop.f32.mrf.mxu0
  %v4279 = vadd.f32 0.0, %v4278
  %4280 = vmatmul.bf16.gmra.mxu0 %v4115
  %v4281 = vpop.f32.mrf.mxu0
  %v4282 = vadd.f32 0.0, %v4281
  %v4283 = vpop.f32.mrf.mxu0
  %v4284 = vadd.f32 0.0, %v4283
  %4285 = vmatmul.bf16.gmra.mxu0 %v4116
  %v4286 = vpop.f32.mrf.mxu0
  %v4287 = vadd.f32 0.0, %v4286
  %v4288 = vpop.f32.mrf.mxu0
  %v4289 = vadd.f32 0.0, %v4288
  %4290 = vmatmul.bf16.gmra.mxu0 %v4117
  %v4291 = vpop.f32.mrf.mxu0
  %v4292 = vadd.f32 0.0, %v4291
  %v4293 = vpop.f32.mrf.mxu0
  %v4294 = vadd.f32 0.0, %v4293
  %4295 = vmatmul.bf16.gmra.mxu0 %v4118
  %v4296 = vpop.f32.mrf.mxu0
  %v4297 = vadd.f32 0.0, %v4296
  %v4298 = vpop.f32.mrf.mxu0
  %v4299 = vadd.f32 0.0, %v4298
  %4300 = vmatmul.bf16.gmra.mxu0 %v4119
  %v4301 = vpop.f32.mrf.mxu0
  %v4302 = vadd.f32 0.0, %v4301
  %v4303 = vpop.f32.mrf.mxu0
  %v4304 = vadd.f32 0.0, %v4303
  %4305 = vmatmul.bf16.gmra.mxu0 %v4120
  %v4306 = vpop.f32.mrf.mxu0
  %v4307 = vadd.f32 0.0, %v4306
  %v4308 = vpop.f32.mrf.mxu0
  %v4309 = vadd.f32 0.0, %v4308
  %4310 = vmatmul.bf16.gmra.mxu0 %v4121
  %v4311 = vpop.f32.mrf.mxu0
  %v4312 = vadd.f32 0.0, %v4311
  %v4313 = vpop.f32.mrf.mxu0
  %v4314 = vadd.f32 0.0, %v4313
  %4315 = vmatmul.bf16.gmra.mxu0 %v4122
  %v4316 = vpop.f32.mrf.mxu0
  %v4317 = vadd.f32 0.0, %v4316
  %v4318 = vpop.f32.mrf.mxu0
  %v4319 = vadd.f32 0.0, %v4318
  %4320 = vmatmul.bf16.gmra.mxu0 %v4123
  %v4321 = vpop.f32.mrf.mxu0
  %v4322 = vadd.f32 0.0, %v4321
  %v4323 = vpop.f32.mrf.mxu0
  %v4324 = vadd.f32 0.0, %v4323
  %4325 = vmatmul.bf16.gmra.mxu0 %v4124
  %v4326 = vpop.f32.mrf.mxu0
  %v4327 = vadd.f32 0.0, %v4326
  %v4328 = vpop.f32.mrf.mxu0
  %v4329 = vadd.f32 0.0, %v4328
  %4330 = vmatmul.bf16.gmra.mxu0 %v4125
  %v4331 = vpop.f32.mrf.mxu0
  %v4332 = vadd.f32 0.0, %v4331
  %v4333 = vpop.f32.mrf.mxu0
  %v4334 = vadd.f32 0.0, %v4333
  %4335 = vmatmul.bf16.gmra.mxu0 %v4126
  %v4336 = vpop.f32.mrf.mxu0
  %v4337 = vadd.f32 0.0, %v4336
  %v4338 = vpop.f32.mrf.mxu0
  %v4339 = vadd.f32 0.0, %v4338
  %4340 = vmatmul.bf16.gmra.mxu0 %v4127
  %v4341 = vpop.f32.mrf.mxu0
  %v4342 = vadd.f32 0.0, %v4341
  %v4343 = vpop.f32.mrf.mxu0
  %v4344 = vadd.f32 0.0, %v4343
  %4345 = vmatmul.bf16.gmra.mxu0 %v4128
  %v4346 = vpop.f32.mrf.mxu0
  %v4347 = vadd.f32 0.0, %v4346
  %v4348 = vpop.f32.mrf.mxu0
  %v4349 = vadd.f32 0.0, %v4348
  %4350 = vmatmul.bf16.gmra.mxu0 %v4129
  %v4351 = vpop.f32.mrf.mxu0
  %v4352 = vadd.f32 0.0, %v4351
  %v4353 = vpop.f32.mrf.mxu0
  %v4354 = vadd.f32 0.0, %v4353
  %4355 = vmatmul.bf16.gmra.mxu0 %v4130
  %v4356 = vpop.f32.mrf.mxu0
  %v4357 = vadd.f32 0.0, %v4356
  %v4358 = vpop.f32.mrf.mxu0
  %v4359 = vadd.f32 0.0, %v4358
  %4360 = vmatmul.bf16.gmra.mxu0 %v4131
  %v4361 = vpop.f32.mrf.mxu0
  %v4362 = vadd.f32 0.0, %v4361
  %v4363 = vpop.f32.mrf.mxu0
  %v4364 = vadd.f32 0.0, %v4363
  %4365 = vdwg.mxu0
  %v4382 = vunpack.c.l.b16 %v3764
  %v4383 = vunpack.c.l.b16 %v3765
  %v4384 = vunpack.c.l.b16 %v3766
  %v4385 = vunpack.c.l.b16 %v3767
  %v4386 = vunpack.c.l.b16 %v3768
  %v4387 = vunpack.c.l.b16 %v3769
  %v4388 = vunpack.c.l.b16 %v3770
  %v4389 = vunpack.c.l.b16 %v3771
  %v4390 = vunpack.c.l.b16 %v3772
  %v4391 = vunpack.c.l.b16 %v3773
  %v4392 = vunpack.c.l.b16 %v3774
  %v4393 = vunpack.c.l.b16 %v3775
  %v4394 = vunpack.c.l.b16 %v3776
  %v4395 = vunpack.c.l.b16 %v3777
  %v4396 = vunpack.c.l.b16 %v3778
  %v4397 = vunpack.c.l.b16 %v3779
  %v4398 = vpack.c.b16 %v4383, %v4382
  %v4399 = vpack.c.b16 %v4385, %v4384
  %v4400 = vpack.c.b16 %v4387, %v4386
  %v4401 = vpack.c.b16 %v4389, %v4388
  %v4402 = vpack.c.b16 %v4391, %v4390
  %v4403 = vpack.c.b16 %v4393, %v4392
  %v4404 = vpack.c.b16 %v4395, %v4394
  %v4405 = vpack.c.b16 %v4397, %v4396
  %4414 = vmatpush.bf16.msra.mxu0 %v4405
  %4415 = vmatpush.bf16.msra.mxu0 %v4404
  %4416 = vmatpush.bf16.msra.mxu0 %v4403
  %4417 = vmatpush.bf16.msra.mxu0 %v4402
  %4418 = vmatpush.bf16.msra.mxu0 %v4401
  %4419 = vmatpush.bf16.msra.mxu0 %v4400
  %4420 = vmatpush.bf16.msra.mxu0 %v4399
  %4421 = vmatpush.bf16.msra.mxu0 %v4398
  %4422 = vmatmul.bf16.gmra.mxu0 %v3732
  %v4423 = vpop.f32.mrf.mxu0
  %v4424 = vadd.f32 %v4207, %v4423
  %v4425 = vpop.f32.mrf.mxu0
  %v4426 = vadd.f32 %v4209, %v4425
  %4427 = vmatmul.bf16.gmra.mxu0 %v3733
  %v4428 = vpop.f32.mrf.mxu0
  %v4429 = vadd.f32 %v4212, %v4428
  %v4430 = vpop.f32.mrf.mxu0
  %v4431 = vadd.f32 %v4214, %v4430
  %4432 = vmatmul.bf16.gmra.mxu0 %v3734
  %v4433 = vpop.f32.mrf.mxu0
  %v4434 = vadd.f32 %v4217, %v4433
  %v4435 = vpop.f32.mrf.mxu0
  %v4436 = vadd.f32 %v4219, %v4435
  %4437 = vmatmul.bf16.gmra.mxu0 %v3735
  %v4438 = vpop.f32.mrf.mxu0
  %v4439 = vadd.f32 %v4222, %v4438
  %v4440 = vpop.f32.mrf.mxu0
  %v4441 = vadd.f32 %v4224, %v4440
  %4442 = vmatmul.bf16.gmra.mxu0 %v3736
  %v4443 = vpop.f32.mrf.mxu0
  %v4444 = vadd.f32 %v4227, %v4443
  %v4445 = vpop.f32.mrf.mxu0
  %v4446 = vadd.f32 %v4229, %v4445
  %4447 = vmatmul.bf16.gmra.mxu0 %v3737
  %v4448 = vpop.f32.mrf.mxu0
  %v4449 = vadd.f32 %v4232, %v4448
  %v4450 = vpop.f32.mrf.mxu0
  %v4451 = vadd.f32 %v4234, %v4450
  %4452 = vmatmul.bf16.gmra.mxu0 %v3738
  %v4453 = vpop.f32.mrf.mxu0
  %v4454 = vadd.f32 %v4237, %v4453
  %v4455 = vpop.f32.mrf.mxu0
  %v4456 = vadd.f32 %v4239, %v4455
  %4457 = vmatmul.bf16.gmra.mxu0 %v3739
  %v4458 = vpop.f32.mrf.mxu0
  %v4459 = vadd.f32 %v4242, %v4458
  %v4460 = vpop.f32.mrf.mxu0
  %v4461 = vadd.f32 %v4244, %v4460
  %4462 = vmatmul.bf16.gmra.mxu0 %v3740
  %v4463 = vpop.f32.mrf.mxu0
  %v4464 = vadd.f32 %v4247, %v4463
  %v4465 = vpop.f32.mrf.mxu0
  %v4466 = vadd.f32 %v4249, %v4465
  %4467 = vmatmul.bf16.gmra.mxu0 %v3741
  %v4468 = vpop.f32.mrf.mxu0
  %v4469 = vadd.f32 %v4252, %v4468
  %v4470 = vpop.f32.mrf.mxu0
  %v4471 = vadd.f32 %v4254, %v4470
  %4472 = vmatmul.bf16.gmra.mxu0 %v3742
  %v4473 = vpop.f32.mrf.mxu0
  %v4474 = vadd.f32 %v4257, %v4473
  %v4475 = vpop.f32.mrf.mxu0
  %v4476 = vadd.f32 %v4259, %v4475
  %4477 = vmatmul.bf16.gmra.mxu0 %v3743
  %v4478 = vpop.f32.mrf.mxu0
  %v4479 = vadd.f32 %v4262, %v4478
  %v4480 = vpop.f32.mrf.mxu0
  %v4481 = vadd.f32 %v4264, %v4480
  %4482 = vmatmul.bf16.gmra.mxu0 %v3744
  %v4483 = vpop.f32.mrf.mxu0
  %v4484 = vadd.f32 %v4267, %v4483
  %v4485 = vpop.f32.mrf.mxu0
  %v4486 = vadd.f32 %v4269, %v4485
  %4487 = vmatmul.bf16.gmra.mxu0 %v3745
  %v4488 = vpop.f32.mrf.mxu0
  %v4489 = vadd.f32 %v4272, %v4488
  %v4490 = vpop.f32.mrf.mxu0
  %v4491 = vadd.f32 %v4274, %v4490
  %4492 = vmatmul.bf16.gmra.mxu0 %v3746
  %v4493 = vpop.f32.mrf.mxu0
  %v4494 = vadd.f32 %v4277, %v4493
  %v4495 = vpop.f32.mrf.mxu0
  %v4496 = vadd.f32 %v4279, %v4495
  %4497 = vmatmul.bf16.gmra.mxu0 %v3747
  %v4498 = vpop.f32.mrf.mxu0
  %v4499 = vadd.f32 %v4282, %v4498
  %v4500 = vpop.f32.mrf.mxu0
  %v4501 = vadd.f32 %v4284, %v4500
  %4502 = vmatmul.bf16.gmra.mxu0 %v3748
  %v4503 = vpop.f32.mrf.mxu0
  %v4504 = vadd.f32 %v4287, %v4503
  %v4505 = vpop.f32.mrf.mxu0
  %v4506 = vadd.f32 %v4289, %v4505
  %4507 = vmatmul.bf16.gmra.mxu0 %v3749
  %v4508 = vpop.f32.mrf.mxu0
  %v4509 = vadd.f32 %v4292, %v4508
  %v4510 = vpop.f32.mrf.mxu0
  %v4511 = vadd.f32 %v4294, %v4510
  %4512 = vmatmul.bf16.gmra.mxu0 %v3750
  %v4513 = vpop.f32.mrf.mxu0
  %v4514 = vadd.f32 %v4297, %v4513
  %v4515 = vpop.f32.mrf.mxu0
  %v4516 = vadd.f32 %v4299, %v4515
  %4517 = vmatmul.bf16.gmra.mxu0 %v3751
  %v4518 = vpop.f32.mrf.mxu0
  %v4519 = vadd.f32 %v4302, %v4518
  %v4520 = vpop.f32.mrf.mxu0
  %v4521 = vadd.f32 %v4304, %v4520
  %4522 = vmatmul.bf16.gmra.mxu0 %v3752
  %v4523 = vpop.f32.mrf.mxu0
  %v4524 = vadd.f32 %v4307, %v4523
  %v4525 = vpop.f32.mrf.mxu0
  %v4526 = vadd.f32 %v4309, %v4525
  %4527 = vmatmul.bf16.gmra.mxu0 %v3753
  %v4528 = vpop.f32.mrf.mxu0
  %v4529 = vadd.f32 %v4312, %v4528
  %v4530 = vpop.f32.mrf.mxu0
  %v4531 = vadd.f32 %v4314, %v4530
  %4532 = vmatmul.bf16.gmra.mxu0 %v3754
  %v4533 = vpop.f32.mrf.mxu0
  %v4534 = vadd.f32 %v4317, %v4533
  %v4535 = vpop.f32.mrf.mxu0
  %v4536 = vadd.f32 %v4319, %v4535
  %4537 = vmatmul.bf16.gmra.mxu0 %v3755
  %v4538 = vpop.f32.mrf.mxu0
  %v4539 = vadd.f32 %v4322, %v4538
  %v4540 = vpop.f32.mrf.mxu0
  %v4541 = vadd.f32 %v4324, %v4540
  %4542 = vmatmul.bf16.gmra.mxu0 %v3756
  %v4543 = vpop.f32.mrf.mxu0
  %v4544 = vadd.f32 %v4327, %v4543
  %v4545 = vpop.f32.mrf.mxu0
  %v4546 = vadd.f32 %v4329, %v4545
  %4547 = vmatmul.bf16.gmra.mxu0 %v3757
  %v4548 = vpop.f32.mrf.mxu0
  %v4549 = vadd.f32 %v4332, %v4548
  %v4550 = vpop.f32.mrf.mxu0
  %v4551 = vadd.f32 %v4334, %v4550
  %4552 = vmatmul.bf16.gmra.mxu0 %v3758
  %v4553 = vpop.f32.mrf.mxu0
  %v4554 = vadd.f32 %v4337, %v4553
  %v4555 = vpop.f32.mrf.mxu0
  %v4556 = vadd.f32 %v4339, %v4555
  %4557 = vmatmul.bf16.gmra.mxu0 %v3759
  %v4558 = vpop.f32.mrf.mxu0
  %v4559 = vadd.f32 %v4342, %v4558
  %v4560 = vpop.f32.mrf.mxu0
  %v4561 = vadd.f32 %v4344, %v4560
  %4562 = vmatmul.bf16.gmra.mxu0 %v3760
  %v4563 = vpop.f32.mrf.mxu0
  %v4564 = vadd.f32 %v4347, %v4563
  %v4565 = vpop.f32.mrf.mxu0
  %v4566 = vadd.f32 %v4349, %v4565
  %4567 = vmatmul.bf16.gmra.mxu0 %v3761
  %v4568 = vpop.f32.mrf.mxu0
  %v4569 = vadd.f32 %v4352, %v4568
  %v4570 = vpop.f32.mrf.mxu0
  %v4571 = vadd.f32 %v4354, %v4570
  %4572 = vmatmul.bf16.gmra.mxu0 %v3762
  %v4573 = vpop.f32.mrf.mxu0
  %v4574 = vadd.f32 %v4357, %v4573
  %v4575 = vpop.f32.mrf.mxu0
  %v4576 = vadd.f32 %v4359, %v4575
  %4577 = vmatmul.bf16.gmra.mxu0 %v3763
  %v4578 = vpop.f32.mrf.mxu0
  %v4579 = vadd.f32 %v4362, %v4578
  %v4580 = vpop.f32.mrf.mxu0
  %v4581 = vadd.f32 %v4364, %v4580
  %4582 = vdwg.mxu0
  %v4583 = vrot.slane %v3623, 2
  %v4584 = vrot.slane %v3624, 2
  %v4585 = vsel %vm983, %v4583, %v4584
  %v4586 = vrot.slane %v3625, 2
  %v4587 = vsel %vm983, %v4584, %v4586
  %v4588 = vrot.slane %v3626, 2
  %v4589 = vrot.slane %v3627, 2
  %v4590 = vsel %vm983, %v4588, %v4589
  %v4591 = vrot.slane %v3628, 2
  %v4592 = vsel %vm983, %v4589, %v4591
  %v4593 = vrot.slane %v3629, 2
  %v4594 = vrot.slane %v3630, 2
  %v4595 = vsel %vm983, %v4593, %v4594
  %v4596 = vrot.slane %v3631, 2
  %v4597 = vsel %vm983, %v4594, %v4596
  %v4598 = vrot.slane %v3632, 2
  %v4599 = vrot.slane %v3633, 2
  %v4600 = vsel %vm983, %v4598, %v4599
  %v4601 = vrot.slane %v3634, 2
  %v4602 = vsel %vm983, %v4599, %v4601
  %v4603 = vrot.slane %v3635, 2
  %v4604 = vrot.slane %v3636, 2
  %v4605 = vsel %vm983, %v4603, %v4604
  %v4606 = vrot.slane %v3637, 2
  %v4607 = vsel %vm983, %v4604, %v4606
  %v4608 = vrot.slane %v3638, 2
  %v4609 = vrot.slane %v3639, 2
  %v4610 = vsel %vm983, %v4608, %v4609
  %v4611 = vrot.slane %v3640, 2
  %v4612 = vsel %vm983, %v4609, %v4611
  %v4613 = vrot.slane %v3641, 2
  %v4614 = vrot.slane %v3642, 2
  %v4615 = vsel %vm983, %v4613, %v4614
  %v4616 = vrot.slane %v3643, 2
  %v4617 = vsel %vm983, %v4614, %v4616
  %v4618 = vrot.slane %v3644, 2
  %v4619 = vrot.slane %v3645, 2
  %v4620 = vsel %vm983, %v4618, %v4619
  %v4621 = vrot.slane %v3646, 2
  %v4622 = vsel %vm983, %v4619, %v4621
  %v4623 = vrot.slane %v3647, 2
  %v4624 = vrot.slane %v3648, 2
  %v4625 = vsel %vm983, %v4623, %v4624
  %v4626 = vrot.slane %v3649, 2
  %v4627 = vsel %vm983, %v4624, %v4626
  %v4628 = vrot.slane %v3650, 2
  %v4629 = vrot.slane %v3651, 2
  %v4630 = vsel %vm983, %v4628, %v4629
  %v4631 = vrot.slane %v3652, 2
  %v4632 = vsel %vm983, %v4629, %v4631
  %v4633 = vrot.slane %v3653, 2
  %v4634 = vrot.slane %v3654, 2
  %v4635 = vsel %vm983, %v4633, %v4634
  %v4636 = vrot.slane %v3655, 2
  %v4637 = vsel %vm983, %v4634, %v4636
  %v4638 = vrot.slane %v3656, 2
  %v4639 = vrot.slane %v3657, 2
  %v4640 = vsel %vm983, %v4638, %v4639
  %v4641 = vrot.slane %v3658, 2
  %v4642 = vsel %vm983, %v4639, %v4641
  %v4643 = vrot.slane %v3659, 2
  %v4644 = vrot.slane %v3660, 2
  %v4645 = vsel %vm983, %v4643, %v4644
  %v4646 = vrot.slane %v3661, 2
  %v4647 = vsel %vm983, %v4644, %v4646
  %v4648 = vrot.slane %v3662, 2
  %v4649 = vrot.slane %v3663, 2
  %v4650 = vsel %vm983, %v4648, %v4649
  %v4651 = vrot.slane %v3664, 2
  %v4652 = vsel %vm983, %v4649, %v4651
  %v4653 = vrot.slane %v3665, 2
  %v4654 = vrot.slane %v3666, 2
  %v4655 = vsel %vm983, %v4653, %v4654
  %v4656 = vrot.slane %v3667, 2
  %v4657 = vsel %vm983, %v4654, %v4656
  %v4658 = vrot.slane %v3668, 2
  %v4659 = vrot.slane %v3669, 2
  %v4660 = vsel %vm983, %v4658, %v4659
  %v4661 = vrot.slane %v3670, 2
  %v4662 = vsel %vm983, %v4659, %v4661
  %v4663 = vrot.slane %v3677, 2
  %v4664 = vrot.slane %v3678, 2
  %v4665 = vsel %vm983, %v4663, %v4664
  %v4666 = vrot.slane %v3679, 2
  %v4667 = vsel %vm983, %v4664, %v4666
  %v4668 = vrot.slane %v3680, 2
  %v4669 = vrot.slane %v3681, 2
  %v4670 = vsel %vm983, %v4668, %v4669
  %v4671 = vrot.slane %v3682, 2
  %v4672 = vsel %vm983, %v4669, %v4671
  %v4673 = vrot.slane %v3683, 2
  %v4674 = vrot.slane %v3684, 2
  %v4675 = vsel %vm983, %v4673, %v4674
  %v4676 = vrot.slane %v3685, 2
  %v4677 = vsel %vm983, %v4674, %v4676
  %v4678 = vrot.slane %v3686, 2
  %v4679 = vrot.slane %v3687, 2
  %v4680 = vsel %vm983, %v4678, %v4679
  %v4681 = vrot.slane %v3688, 2
  %v4682 = vsel %vm983, %v4679, %v4681
  %v4683 = vrot.slane %v3689, 2
  %v4684 = vrot.slane %v3690, 2
  %v4685 = vsel %vm983, %v4683, %v4684
  %v4686 = vrot.slane %v3691, 2
  %v4687 = vsel %vm983, %v4684, %v4686
  %v4688 = vrot.slane %v3692, 2
  %v4689 = vrot.slane %v3693, 2
  %v4690 = vsel %vm983, %v4688, %v4689
  %v4691 = vrot.slane %v3694, 2
  %v4692 = vsel %vm983, %v4689, %v4691
  %v4693 = vrot.slane %v3695, 2
  %v4694 = vrot.slane %v3696, 2
  %v4695 = vsel %vm983, %v4693, %v4694
  %v4696 = vrot.slane %v3697, 2
  %v4697 = vsel %vm983, %v4694, %v4696
  %v4698 = vrot.slane %v3698, 2
  %v4699 = vrot.slane %v3699, 2
  %v4700 = vsel %vm983, %v4698, %v4699
  %v4701 = vrot.slane %v3700, 2
  %v4702 = vsel %vm983, %v4699, %v4701
  %v4703 = vrot.slane %v3701, 2
  %v4704 = vrot.slane %v3702, 2
  %v4705 = vsel %vm983, %v4703, %v4704
  %v4706 = vrot.slane %v3703, 2
  %v4707 = vsel %vm983, %v4704, %v4706
  %v4708 = vrot.slane %v3704, 2
  %v4709 = vrot.slane %v3705, 2
  %v4710 = vsel %vm983, %v4708, %v4709
  %v4711 = vrot.slane %v3706, 2
  %v4712 = vsel %vm983, %v4709, %v4711
  %v4713 = vrot.slane %v3707, 2
  %v4714 = vrot.slane %v3708, 2
  %v4715 = vsel %vm983, %v4713, %v4714
  %v4716 = vrot.slane %v3709, 2
  %v4717 = vsel %vm983, %v4714, %v4716
  %v4718 = vrot.slane %v3710, 2
  %v4719 = vrot.slane %v3711, 2
  %v4720 = vsel %vm983, %v4718, %v4719
  %v4721 = vrot.slane %v3712, 2
  %v4722 = vsel %vm983, %v4719, %v4721
  %v4723 = vrot.slane %v3713, 2
  %v4724 = vrot.slane %v3714, 2
  %v4725 = vsel %vm983, %v4723, %v4724
  %v4726 = vrot.slane %v3715, 2
  %v4727 = vsel %vm983, %v4724, %v4726
  %v4728 = vrot.slane %v3716, 2
  %v4729 = vrot.slane %v3717, 2
  %v4730 = vsel %vm983, %v4728, %v4729
  %v4731 = vrot.slane %v3718, 2
  %v4732 = vsel %vm983, %v4729, %v4731
  %v4733 = vrot.slane %v3719, 2
  %v4734 = vrot.slane %v3720, 2
  %v4735 = vsel %vm983, %v4733, %v4734
  %v4736 = vrot.slane %v3721, 2
  %v4737 = vsel %vm983, %v4734, %v4736
  %v4738 = vrot.slane %v3722, 2
  %v4739 = vrot.slane %v3723, 2
  %v4740 = vsel %vm983, %v4738, %v4739
  %v4741 = vrot.slane %v3724, 2
  %v4742 = vsel %vm983, %v4739, %v4741
  %v4807 = vpack.c.bf16 %v4587, %v4585
  %v4808 = vpack.c.bf16 %v4592, %v4590
  %v4809 = vpack.c.bf16 %v4597, %v4595
  %v4810 = vpack.c.bf16 %v4602, %v4600
  %v4811 = vpack.c.bf16 %v4607, %v4605
  %v4812 = vpack.c.bf16 %v4612, %v4610
  %v4813 = vpack.c.bf16 %v4617, %v4615
  %v4814 = vpack.c.bf16 %v4622, %v4620
  %v4815 = vpack.c.bf16 %v4627, %v4625
  %v4816 = vpack.c.bf16 %v4632, %v4630
  %v4817 = vpack.c.bf16 %v4637, %v4635
  %v4818 = vpack.c.bf16 %v4642, %v4640
  %v4819 = vpack.c.bf16 %v4647, %v4645
  %v4820 = vpack.c.bf16 %v4652, %v4650
  %v4821 = vpack.c.bf16 %v4657, %v4655
  %v4822 = vpack.c.bf16 %v4662, %v4660
  %v4823 = vpack.c.bf16 %v4667, %v4665
  %v4824 = vpack.c.bf16 %v4672, %v4670
  %v4825 = vpack.c.bf16 %v4677, %v4675
  %v4826 = vpack.c.bf16 %v4682, %v4680
  %v4827 = vpack.c.bf16 %v4687, %v4685
  %v4828 = vpack.c.bf16 %v4692, %v4690
  %v4829 = vpack.c.bf16 %v4697, %v4695
  %v4830 = vpack.c.bf16 %v4702, %v4700
  %v4831 = vpack.c.bf16 %v4707, %v4705
  %v4832 = vpack.c.bf16 %v4712, %v4710
  %v4833 = vpack.c.bf16 %v4717, %v4715
  %v4834 = vpack.c.bf16 %v4722, %v4720
  %v4835 = vpack.c.bf16 %v4727, %v4725
  %v4836 = vpack.c.bf16 %v4732, %v4730
  %v4837 = vpack.c.bf16 %v4737, %v4735
  %v4838 = vpack.c.bf16 %v4742, %v4740
  %s4839 = scalar_lea.vmem %s3, 128
  %v4840 = vld [vmem:[%s4839] sm:$0xf]
  %v4841 = vld [vmem:[%s4839 + $0x4] sm:$0xf]
  %v4842 = vld [vmem:[%s4839 + $0x8] sm:$0xf]
  %v4843 = vld [vmem:[%s4839 + $0xc] sm:$0xf]
  %v4844 = vld [vmem:[%s4839 + $0x10] sm:$0xf]
  %v4845 = vld [vmem:[%s4839 + $0x14] sm:$0xf]
  %v4846 = vld [vmem:[%s4839 + $0x18] sm:$0xf]
  %v4847 = vld [vmem:[%s4839 + $0x1c] sm:$0xf]
  %v4848 = vld [vmem:[%s4839 + $0x20] sm:$0xf]
  %v4849 = vld [vmem:[%s4839 + $0x24] sm:$0xf]
  %v4850 = vld [vmem:[%s4839 + $0x28] sm:$0xf]
  %v4851 = vld [vmem:[%s4839 + $0x2c] sm:$0xf]
  %v4852 = vld [vmem:[%s4839 + $0x30] sm:$0xf]
  %v4853 = vld [vmem:[%s4839 + $0x34] sm:$0xf]
  %v4854 = vld [vmem:[%s4839 + $0x38] sm:$0xf]
  %v4855 = vld [vmem:[%s4839 + $0x3c] sm:$0xf]
  %v4872 = vunpack.c.l.b16 %v4840
  %v4873 = vunpack.c.l.b16 %v4841
  %v4874 = vunpack.c.l.b16 %v4842
  %v4875 = vunpack.c.l.b16 %v4843
  %v4876 = vunpack.c.l.b16 %v4844
  %v4877 = vunpack.c.l.b16 %v4845
  %v4878 = vunpack.c.l.b16 %v4846
  %v4879 = vunpack.c.l.b16 %v4847
  %v4880 = vunpack.c.l.b16 %v4848
  %v4881 = vunpack.c.l.b16 %v4849
  %v4882 = vunpack.c.l.b16 %v4850
  %v4883 = vunpack.c.l.b16 %v4851
  %v4884 = vunpack.c.l.b16 %v4852
  %v4885 = vunpack.c.l.b16 %v4853
  %v4886 = vunpack.c.l.b16 %v4854
  %v4887 = vunpack.c.l.b16 %v4855
  %v4888 = vpack.c.b16 %v4873, %v4872
  %v4889 = vpack.c.b16 %v4875, %v4874
  %v4890 = vpack.c.b16 %v4877, %v4876
  %v4891 = vpack.c.b16 %v4879, %v4878
  %v4892 = vpack.c.b16 %v4881, %v4880
  %v4893 = vpack.c.b16 %v4883, %v4882
  %v4894 = vpack.c.b16 %v4885, %v4884
  %v4895 = vpack.c.b16 %v4887, %v4886
  %4904 = vmatpush.bf16.msra.mxu0 %v4895
  %4905 = vmatpush.bf16.msra.mxu0 %v4894
  %4906 = vmatpush.bf16.msra.mxu0 %v4893
  %4907 = vmatpush.bf16.msra.mxu0 %v4892
  %4908 = vmatpush.bf16.msra.mxu0 %v4891
  %4909 = vmatpush.bf16.msra.mxu0 %v4890
  %4910 = vmatpush.bf16.msra.mxu0 %v4889
  %4911 = vmatpush.bf16.msra.mxu0 %v4888
  %4912 = vmatmul.bf16.gmra.mxu0 %v4807
  %v4913 = vpop.f32.mrf.mxu0
  %v4914 = vadd.f32 0.0, %v4913
  %v4915 = vpop.f32.mrf.mxu0
  %v4916 = vadd.f32 0.0, %v4915
  %4917 = vmatmul.bf16.gmra.mxu0 %v4808
  %v4918 = vpop.f32.mrf.mxu0
  %v4919 = vadd.f32 0.0, %v4918
  %v4920 = vpop.f32.mrf.mxu0
  %v4921 = vadd.f32 0.0, %v4920
  %4922 = vmatmul.bf16.gmra.mxu0 %v4809
  %v4923 = vpop.f32.mrf.mxu0
  %v4924 = vadd.f32 0.0, %v4923
  %v4925 = vpop.f32.mrf.mxu0
  %v4926 = vadd.f32 0.0, %v4925
  %4927 = vmatmul.bf16.gmra.mxu0 %v4810
  %v4928 = vpop.f32.mrf.mxu0
  %v4929 = vadd.f32 0.0, %v4928
  %v4930 = vpop.f32.mrf.mxu0
  %v4931 = vadd.f32 0.0, %v4930
  %4932 = vmatmul.bf16.gmra.mxu0 %v4811
  %v4933 = vpop.f32.mrf.mxu0
  %v4934 = vadd.f32 0.0, %v4933
  %v4935 = vpop.f32.mrf.mxu0
  %v4936 = vadd.f32 0.0, %v4935
  %4937 = vmatmul.bf16.gmra.mxu0 %v4812
  %v4938 = vpop.f32.mrf.mxu0
  %v4939 = vadd.f32 0.0, %v4938
  %v4940 = vpop.f32.mrf.mxu0
  %v4941 = vadd.f32 0.0, %v4940
  %4942 = vmatmul.bf16.gmra.mxu0 %v4813
  %v4943 = vpop.f32.mrf.mxu0
  %v4944 = vadd.f32 0.0, %v4943
  %v4945 = vpop.f32.mrf.mxu0
  %v4946 = vadd.f32 0.0, %v4945
  %4947 = vmatmul.bf16.gmra.mxu0 %v4814
  %v4948 = vpop.f32.mrf.mxu0
  %v4949 = vadd.f32 0.0, %v4948
  %v4950 = vpop.f32.mrf.mxu0
  %v4951 = vadd.f32 0.0, %v4950
  %4952 = vmatmul.bf16.gmra.mxu0 %v4815
  %v4953 = vpop.f32.mrf.mxu0
  %v4954 = vadd.f32 0.0, %v4953
  %v4955 = vpop.f32.mrf.mxu0
  %v4956 = vadd.f32 0.0, %v4955
  %4957 = vmatmul.bf16.gmra.mxu0 %v4816
  %v4958 = vpop.f32.mrf.mxu0
  %v4959 = vadd.f32 0.0, %v4958
  %v4960 = vpop.f32.mrf.mxu0
  %v4961 = vadd.f32 0.0, %v4960
  %4962 = vmatmul.bf16.gmra.mxu0 %v4817
  %v4963 = vpop.f32.mrf.mxu0
  %v4964 = vadd.f32 0.0, %v4963
  %v4965 = vpop.f32.mrf.mxu0
  %v4966 = vadd.f32 0.0, %v4965
  %4967 = vmatmul.bf16.gmra.mxu0 %v4818
  %v4968 = vpop.f32.mrf.mxu0
  %v4969 = vadd.f32 0.0, %v4968
  %v4970 = vpop.f32.mrf.mxu0
  %v4971 = vadd.f32 0.0, %v4970
  %4972 = vmatmul.bf16.gmra.mxu0 %v4819
  %v4973 = vpop.f32.mrf.mxu0
  %v4974 = vadd.f32 0.0, %v4973
  %v4975 = vpop.f32.mrf.mxu0
  %v4976 = vadd.f32 0.0, %v4975
  %4977 = vmatmul.bf16.gmra.mxu0 %v4820
  %v4978 = vpop.f32.mrf.mxu0
  %v4979 = vadd.f32 0.0, %v4978
  %v4980 = vpop.f32.mrf.mxu0
  %v4981 = vadd.f32 0.0, %v4980
  %4982 = vmatmul.bf16.gmra.mxu0 %v4821
  %v4983 = vpop.f32.mrf.mxu0
  %v4984 = vadd.f32 0.0, %v4983
  %v4985 = vpop.f32.mrf.mxu0
  %v4986 = vadd.f32 0.0, %v4985
  %4987 = vmatmul.bf16.gmra.mxu0 %v4822
  %v4988 = vpop.f32.mrf.mxu0
  %v4989 = vadd.f32 0.0, %v4988
  %v4990 = vpop.f32.mrf.mxu0
  %v4991 = vadd.f32 0.0, %v4990
  %4992 = vmatmul.bf16.gmra.mxu0 %v4823
  %v4993 = vpop.f32.mrf.mxu0
  %v4994 = vadd.f32 0.0, %v4993
  %v4995 = vpop.f32.mrf.mxu0
  %v4996 = vadd.f32 0.0, %v4995
  %4997 = vmatmul.bf16.gmra.mxu0 %v4824
  %v4998 = vpop.f32.mrf.mxu0
  %v4999 = vadd.f32 0.0, %v4998
  %v5000 = vpop.f32.mrf.mxu0
  %v5001 = vadd.f32 0.0, %v5000
  %5002 = vmatmul.bf16.gmra.mxu0 %v4825
  %v5003 = vpop.f32.mrf.mxu0
  %v5004 = vadd.f32 0.0, %v5003
  %v5005 = vpop.f32.mrf.mxu0
  %v5006 = vadd.f32 0.0, %v5005
  %5007 = vmatmul.bf16.gmra.mxu0 %v4826
  %v5008 = vpop.f32.mrf.mxu0
  %v5009 = vadd.f32 0.0, %v5008
  %v5010 = vpop.f32.mrf.mxu0
  %v5011 = vadd.f32 0.0, %v5010
  %5012 = vmatmul.bf16.gmra.mxu0 %v4827
  %v5013 = vpop.f32.mrf.mxu0
  %v5014 = vadd.f32 0.0, %v5013
  %v5015 = vpop.f32.mrf.mxu0
  %v5016 = vadd.f32 0.0, %v5015
  %5017 = vmatmul.bf16.gmra.mxu0 %v4828
  %v5018 = vpop.f32.mrf.mxu0
  %v5019 = vadd.f32 0.0, %v5018
  %v5020 = vpop.f32.mrf.mxu0
  %v5021 = vadd.f32 0.0, %v5020
  %5022 = vmatmul.bf16.gmra.mxu0 %v4829
  %v5023 = vpop.f32.mrf.mxu0
  %v5024 = vadd.f32 0.0, %v5023
  %v5025 = vpop.f32.mrf.mxu0
  %v5026 = vadd.f32 0.0, %v5025
  %5027 = vmatmul.bf16.gmra.mxu0 %v4830
  %v5028 = vpop.f32.mrf.mxu0
  %v5029 = vadd.f32 0.0, %v5028
  %v5030 = vpop.f32.mrf.mxu0
  %v5031 = vadd.f32 0.0, %v5030
  %5032 = vmatmul.bf16.gmra.mxu0 %v4831
  %v5033 = vpop.f32.mrf.mxu0
  %v5034 = vadd.f32 0.0, %v5033
  %v5035 = vpop.f32.mrf.mxu0
  %v5036 = vadd.f32 0.0, %v5035
  %5037 = vmatmul.bf16.gmra.mxu0 %v4832
  %v5038 = vpop.f32.mrf.mxu0
  %v5039 = vadd.f32 0.0, %v5038
  %v5040 = vpop.f32.mrf.mxu0
  %v5041 = vadd.f32 0.0, %v5040
  %5042 = vmatmul.bf16.gmra.mxu0 %v4833
  %v5043 = vpop.f32.mrf.mxu0
  %v5044 = vadd.f32 0.0, %v5043
  %v5045 = vpop.f32.mrf.mxu0
  %v5046 = vadd.f32 0.0, %v5045
  %5047 = vmatmul.bf16.gmra.mxu0 %v4834
  %v5048 = vpop.f32.mrf.mxu0
  %v5049 = vadd.f32 0.0, %v5048
  %v5050 = vpop.f32.mrf.mxu0
  %v5051 = vadd.f32 0.0, %v5050
  %5052 = vmatmul.bf16.gmra.mxu0 %v4835
  %v5053 = vpop.f32.mrf.mxu0
  %v5054 = vadd.f32 0.0, %v5053
  %v5055 = vpop.f32.mrf.mxu0
  %v5056 = vadd.f32 0.0, %v5055
  %5057 = vmatmul.bf16.gmra.mxu0 %v4836
  %v5058 = vpop.f32.mrf.mxu0
  %v5059 = vadd.f32 0.0, %v5058
  %v5060 = vpop.f32.mrf.mxu0
  %v5061 = vadd.f32 0.0, %v5060
  %5062 = vmatmul.bf16.gmra.mxu0 %v4837
  %v5063 = vpop.f32.mrf.mxu0
  %v5064 = vadd.f32 0.0, %v5063
  %v5065 = vpop.f32.mrf.mxu0
  %v5066 = vadd.f32 0.0, %v5065
  %5067 = vmatmul.bf16.gmra.mxu0 %v4838
  %v5068 = vpop.f32.mrf.mxu0
  %v5069 = vadd.f32 0.0, %v5068
  %v5070 = vpop.f32.mrf.mxu0
  %v5071 = vadd.f32 0.0, %v5070
  %5072 = vdwg.mxu0
  %v5073 = vadd.f32 %v4424, %v4914
  %v5074 = vadd.f32 %v4426, %v4916
  %v5075 = vadd.f32 %v4429, %v4919
  %v5076 = vadd.f32 %v4431, %v4921
  %v5077 = vadd.f32 %v4434, %v4924
  %v5078 = vadd.f32 %v4436, %v4926
  %v5079 = vadd.f32 %v4439, %v4929
  %v5080 = vadd.f32 %v4441, %v4931
  %v5081 = vadd.f32 %v4444, %v4934
  %v5082 = vadd.f32 %v4446, %v4936
  %v5083 = vadd.f32 %v4449, %v4939
  %v5084 = vadd.f32 %v4451, %v4941
  %v5085 = vadd.f32 %v4454, %v4944
  %v5086 = vadd.f32 %v4456, %v4946
  %v5087 = vadd.f32 %v4459, %v4949
  %v5088 = vadd.f32 %v4461, %v4951
  %v5089 = vadd.f32 %v4464, %v4954
  %v5090 = vadd.f32 %v4466, %v4956
  %v5091 = vadd.f32 %v4469, %v4959
  %v5092 = vadd.f32 %v4471, %v4961
  %v5093 = vadd.f32 %v4474, %v4964
  %v5094 = vadd.f32 %v4476, %v4966
  %v5095 = vadd.f32 %v4479, %v4969
  %v5096 = vadd.f32 %v4481, %v4971
  %v5097 = vadd.f32 %v4484, %v4974
  %v5098 = vadd.f32 %v4486, %v4976
  %v5099 = vadd.f32 %v4489, %v4979
  %v5100 = vadd.f32 %v4491, %v4981
  %v5101 = vadd.f32 %v4494, %v4984
  %v5102 = vadd.f32 %v4496, %v4986
  %v5103 = vadd.f32 %v4499, %v4989
  %v5104 = vadd.f32 %v4501, %v4991
  %v5105 = vadd.f32 %v4504, %v4994
  %v5106 = vadd.f32 %v4506, %v4996
  %v5107 = vadd.f32 %v4509, %v4999
  %v5108 = vadd.f32 %v4511, %v5001
  %v5109 = vadd.f32 %v4514, %v5004
  %v5110 = vadd.f32 %v4516, %v5006
  %v5111 = vadd.f32 %v4519, %v5009
  %v5112 = vadd.f32 %v4521, %v5011
  %v5113 = vadd.f32 %v4524, %v5014
  %v5114 = vadd.f32 %v4526, %v5016
  %v5115 = vadd.f32 %v4529, %v5019
  %v5116 = vadd.f32 %v4531, %v5021
  %v5117 = vadd.f32 %v4534, %v5024
  %v5118 = vadd.f32 %v4536, %v5026
  %v5119 = vadd.f32 %v4539, %v5029
  %v5120 = vadd.f32 %v4541, %v5031
  %v5121 = vadd.f32 %v4544, %v5034
  %v5122 = vadd.f32 %v4546, %v5036
  %v5123 = vadd.f32 %v4549, %v5039
  %v5124 = vadd.f32 %v4551, %v5041
  %v5125 = vadd.f32 %v4554, %v5044
  %v5126 = vadd.f32 %v4556, %v5046
  %v5127 = vadd.f32 %v4559, %v5049
  %v5128 = vadd.f32 %v4561, %v5051
  %v5129 = vadd.f32 %v4564, %v5054
  %v5130 = vadd.f32 %v4566, %v5056
  %v5131 = vadd.f32 %v4569, %v5059
  %v5132 = vadd.f32 %v4571, %v5061
  %v5133 = vadd.f32 %v4574, %v5064
  %v5134 = vadd.f32 %v4576, %v5066
  %v5135 = vadd.f32 %v4579, %v5069
  %v5136 = vadd.f32 %v4581, %v5071
  %v5137 = vpack.c.bf16 %v3672, %v3671
  %v5138 = vpack.c.bf16 %v3726, %v3725
  %s5139 = scalar_lea.vmem %s3, 192
  %v5140 = vld [vmem:[%s5139] sm:$0xf]
  %v5141 = vld [vmem:[%s5139 + $0x4] sm:$0xf]
  %v5142 = vld [vmem:[%s5139 + $0x8] sm:$0xf]
  %v5143 = vld [vmem:[%s5139 + $0xc] sm:$0xf]
  %v5144 = vld [vmem:[%s5139 + $0x10] sm:$0xf]
  %v5145 = vld [vmem:[%s5139 + $0x14] sm:$0xf]
  %v5146 = vld [vmem:[%s5139 + $0x18] sm:$0xf]
  %v5147 = vld [vmem:[%s5139 + $0x1c] sm:$0xf]
  %v5148 = vld [vmem:[%s5139 + $0x20] sm:$0xf]
  %v5149 = vld [vmem:[%s5139 + $0x24] sm:$0xf]
  %v5150 = vld [vmem:[%s5139 + $0x28] sm:$0xf]
  %v5151 = vld [vmem:[%s5139 + $0x2c] sm:$0xf]
  %v5152 = vld [vmem:[%s5139 + $0x30] sm:$0xf]
  %v5153 = vld [vmem:[%s5139 + $0x34] sm:$0xf]
  %v5154 = vld [vmem:[%s5139 + $0x38] sm:$0xf]
  %v5155 = vld [vmem:[%s5139 + $0x3c] sm:$0xf]
  %v5172 = vunpack.c.l.b16 %v5140
  %v5173 = vunpack.c.l.b16 %v5141
  %v5174 = vunpack.c.l.b16 %v5142
  %v5175 = vunpack.c.l.b16 %v5143
  %v5176 = vunpack.c.l.b16 %v5144
  %v5177 = vunpack.c.l.b16 %v5145
  %v5178 = vunpack.c.l.b16 %v5146
  %v5179 = vunpack.c.l.b16 %v5147
  %v5180 = vunpack.c.l.b16 %v5148
  %v5181 = vunpack.c.l.b16 %v5149
  %v5182 = vunpack.c.l.b16 %v5150
  %v5183 = vunpack.c.l.b16 %v5151
  %v5184 = vunpack.c.l.b16 %v5152
  %v5185 = vunpack.c.l.b16 %v5153
  %v5186 = vunpack.c.l.b16 %v5154
  %v5187 = vunpack.c.l.b16 %v5155
  %v5188 = vpack.c.b16 %v5173, %v5172
  %v5189 = vpack.c.b16 %v5175, %v5174
  %v5190 = vpack.c.b16 %v5177, %v5176
  %v5191 = vpack.c.b16 %v5179, %v5178
  %v5192 = vpack.c.b16 %v5181, %v5180
  %v5193 = vpack.c.b16 %v5183, %v5182
  %v5194 = vpack.c.b16 %v5185, %v5184
  %v5195 = vpack.c.b16 %v5187, %v5186
  %5204 = vmatpush.bf16.msra.mxu0 %v5195
  %5205 = vmatpush.bf16.msra.mxu0 %v5194
  %5206 = vmatpush.bf16.msra.mxu0 %v5193
  %5207 = vmatpush.bf16.msra.mxu0 %v5192
  %5208 = vmatpush.bf16.msra.mxu0 %v5191
  %5209 = vmatpush.bf16.msra.mxu0 %v5190
  %5210 = vmatpush.bf16.msra.mxu0 %v5189
  %5211 = vmatpush.bf16.msra.mxu0 %v5188
  %5212 = vmatmul.bf16.gmra.mxu0 %v3733
  %v5213 = vpop.f32.mrf.mxu0
  %v5214 = vadd.f32 0.0, %v5213
  %v5215 = vpop.f32.mrf.mxu0
  %v5216 = vadd.f32 0.0, %v5215
  %5217 = vmatmul.bf16.gmra.mxu0 %v3734
  %v5218 = vpop.f32.mrf.mxu0
  %v5219 = vadd.f32 0.0, %v5218
  %v5220 = vpop.f32.mrf.mxu0
  %v5221 = vadd.f32 0.0, %v5220
  %5222 = vmatmul.bf16.gmra.mxu0 %v3735
  %v5223 = vpop.f32.mrf.mxu0
  %v5224 = vadd.f32 0.0, %v5223
  %v5225 = vpop.f32.mrf.mxu0
  %v5226 = vadd.f32 0.0, %v5225
  %5227 = vmatmul.bf16.gmra.mxu0 %v3736
  %v5228 = vpop.f32.mrf.mxu0
  %v5229 = vadd.f32 0.0, %v5228
  %v5230 = vpop.f32.mrf.mxu0
  %v5231 = vadd.f32 0.0, %v5230
  %5232 = vmatmul.bf16.gmra.mxu0 %v3737
  %v5233 = vpop.f32.mrf.mxu0
  %v5234 = vadd.f32 0.0, %v5233
  %v5235 = vpop.f32.mrf.mxu0
  %v5236 = vadd.f32 0.0, %v5235
  %5237 = vmatmul.bf16.gmra.mxu0 %v3738
  %v5238 = vpop.f32.mrf.mxu0
  %v5239 = vadd.f32 0.0, %v5238
  %v5240 = vpop.f32.mrf.mxu0
  %v5241 = vadd.f32 0.0, %v5240
  %5242 = vmatmul.bf16.gmra.mxu0 %v3739
  %v5243 = vpop.f32.mrf.mxu0
  %v5244 = vadd.f32 0.0, %v5243
  %v5245 = vpop.f32.mrf.mxu0
  %v5246 = vadd.f32 0.0, %v5245
  %5247 = vmatmul.bf16.gmra.mxu0 %v3740
  %v5248 = vpop.f32.mrf.mxu0
  %v5249 = vadd.f32 0.0, %v5248
  %v5250 = vpop.f32.mrf.mxu0
  %v5251 = vadd.f32 0.0, %v5250
  %5252 = vmatmul.bf16.gmra.mxu0 %v3741
  %v5253 = vpop.f32.mrf.mxu0
  %v5254 = vadd.f32 0.0, %v5253
  %v5255 = vpop.f32.mrf.mxu0
  %v5256 = vadd.f32 0.0, %v5255
  %5257 = vmatmul.bf16.gmra.mxu0 %v3742
  %v5258 = vpop.f32.mrf.mxu0
  %v5259 = vadd.f32 0.0, %v5258
  %v5260 = vpop.f32.mrf.mxu0
  %v5261 = vadd.f32 0.0, %v5260
  %5262 = vmatmul.bf16.gmra.mxu0 %v3743
  %v5263 = vpop.f32.mrf.mxu0
  %v5264 = vadd.f32 0.0, %v5263
  %v5265 = vpop.f32.mrf.mxu0
  %v5266 = vadd.f32 0.0, %v5265
  %5267 = vmatmul.bf16.gmra.mxu0 %v3744
  %v5268 = vpop.f32.mrf.mxu0
  %v5269 = vadd.f32 0.0, %v5268
  %v5270 = vpop.f32.mrf.mxu0
  %v5271 = vadd.f32 0.0, %v5270
  %5272 = vmatmul.bf16.gmra.mxu0 %v3745
  %v5273 = vpop.f32.mrf.mxu0
  %v5274 = vadd.f32 0.0, %v5273
  %v5275 = vpop.f32.mrf.mxu0
  %v5276 = vadd.f32 0.0, %v5275
  %5277 = vmatmul.bf16.gmra.mxu0 %v3746
  %v5278 = vpop.f32.mrf.mxu0
  %v5279 = vadd.f32 0.0, %v5278
  %v5280 = vpop.f32.mrf.mxu0
  %v5281 = vadd.f32 0.0, %v5280
  %5282 = vmatmul.bf16.gmra.mxu0 %v3747
  %v5283 = vpop.f32.mrf.mxu0
  %v5284 = vadd.f32 0.0, %v5283
  %v5285 = vpop.f32.mrf.mxu0
  %v5286 = vadd.f32 0.0, %v5285
  %5287 = vmatmul.bf16.gmra.mxu0 %v5137
  %v5288 = vpop.f32.mrf.mxu0
  %v5289 = vadd.f32 0.0, %v5288
  %v5290 = vpop.f32.mrf.mxu0
  %v5291 = vadd.f32 0.0, %v5290
  %5292 = vmatmul.bf16.gmra.mxu0 %v3749
  %v5293 = vpop.f32.mrf.mxu0
  %v5294 = vadd.f32 0.0, %v5293
  %v5295 = vpop.f32.mrf.mxu0
  %v5296 = vadd.f32 0.0, %v5295
  %5297 = vmatmul.bf16.gmra.mxu0 %v3750
  %v5298 = vpop.f32.mrf.mxu0
  %v5299 = vadd.f32 0.0, %v5298
  %v5300 = vpop.f32.mrf.mxu0
  %v5301 = vadd.f32 0.0, %v5300
  %5302 = vmatmul.bf16.gmra.mxu0 %v3751
  %v5303 = vpop.f32.mrf.mxu0
  %v5304 = vadd.f32 0.0, %v5303
  %v5305 = vpop.f32.mrf.mxu0
  %v5306 = vadd.f32 0.0, %v5305
  %5307 = vmatmul.bf16.gmra.mxu0 %v3752
  %v5308 = vpop.f32.mrf.mxu0
  %v5309 = vadd.f32 0.0, %v5308
  %v5310 = vpop.f32.mrf.mxu0
  %v5311 = vadd.f32 0.0, %v5310
  %5312 = vmatmul.bf16.gmra.mxu0 %v3753
  %v5313 = vpop.f32.mrf.mxu0
  %v5314 = vadd.f32 0.0, %v5313
  %v5315 = vpop.f32.mrf.mxu0
  %v5316 = vadd.f32 0.0, %v5315
  %5317 = vmatmul.bf16.gmra.mxu0 %v3754
  %v5318 = vpop.f32.mrf.mxu0
  %v5319 = vadd.f32 0.0, %v5318
  %v5320 = vpop.f32.mrf.mxu0
  %v5321 = vadd.f32 0.0, %v5320
  %5322 = vmatmul.bf16.gmra.mxu0 %v3755
  %v5323 = vpop.f32.mrf.mxu0
  %v5324 = vadd.f32 0.0, %v5323
  %v5325 = vpop.f32.mrf.mxu0
  %v5326 = vadd.f32 0.0, %v5325
  %5327 = vmatmul.bf16.gmra.mxu0 %v3756
  %v5328 = vpop.f32.mrf.mxu0
  %v5329 = vadd.f32 0.0, %v5328
  %v5330 = vpop.f32.mrf.mxu0
  %v5331 = vadd.f32 0.0, %v5330
  %5332 = vmatmul.bf16.gmra.mxu0 %v3757
  %v5333 = vpop.f32.mrf.mxu0
  %v5334 = vadd.f32 0.0, %v5333
  %v5335 = vpop.f32.mrf.mxu0
  %v5336 = vadd.f32 0.0, %v5335
  %5337 = vmatmul.bf16.gmra.mxu0 %v3758
  %v5338 = vpop.f32.mrf.mxu0
  %v5339 = vadd.f32 0.0, %v5338
  %v5340 = vpop.f32.mrf.mxu0
  %v5341 = vadd.f32 0.0, %v5340
  %5342 = vmatmul.bf16.gmra.mxu0 %v3759
  %v5343 = vpop.f32.mrf.mxu0
  %v5344 = vadd.f32 0.0, %v5343
  %v5345 = vpop.f32.mrf.mxu0
  %v5346 = vadd.f32 0.0, %v5345
  %5347 = vmatmul.bf16.gmra.mxu0 %v3760
  %v5348 = vpop.f32.mrf.mxu0
  %v5349 = vadd.f32 0.0, %v5348
  %v5350 = vpop.f32.mrf.mxu0
  %v5351 = vadd.f32 0.0, %v5350
  %5352 = vmatmul.bf16.gmra.mxu0 %v3761
  %v5353 = vpop.f32.mrf.mxu0
  %v5354 = vadd.f32 0.0, %v5353
  %v5355 = vpop.f32.mrf.mxu0
  %v5356 = vadd.f32 0.0, %v5355
  %5357 = vmatmul.bf16.gmra.mxu0 %v3762
  %v5358 = vpop.f32.mrf.mxu0
  %v5359 = vadd.f32 0.0, %v5358
  %v5360 = vpop.f32.mrf.mxu0
  %v5361 = vadd.f32 0.0, %v5360
  %5362 = vmatmul.bf16.gmra.mxu0 %v3763
  %v5363 = vpop.f32.mrf.mxu0
  %v5364 = vadd.f32 0.0, %v5363
  %v5365 = vpop.f32.mrf.mxu0
  %v5366 = vadd.f32 0.0, %v5365
  %5367 = vmatmul.bf16.gmra.mxu0 %v5138
  %v5368 = vpop.f32.mrf.mxu0
  %v5369 = vadd.f32 0.0, %v5368
  %v5370 = vpop.f32.mrf.mxu0
  %v5371 = vadd.f32 0.0, %v5370
  %5372 = vdwg.mxu0
  %v5373 = vadd.f32 %v5073, %v5214
  %v5374 = vadd.f32 %v5074, %v5216
  %v5375 = vadd.f32 %v5075, %v5219
  %v5376 = vadd.f32 %v5076, %v5221
  %v5377 = vadd.f32 %v5077, %v5224
  %v5378 = vadd.f32 %v5078, %v5226
  %v5379 = vadd.f32 %v5079, %v5229
  %v5380 = vadd.f32 %v5080, %v5231
  %v5381 = vadd.f32 %v5081, %v5234
  %v5382 = vadd.f32 %v5082, %v5236
  %v5383 = vadd.f32 %v5083, %v5239
  %v5384 = vadd.f32 %v5084, %v5241
  %v5385 = vadd.f32 %v5085, %v5244
  %v5386 = vadd.f32 %v5086, %v5246
  %v5387 = vadd.f32 %v5087, %v5249
  %v5388 = vadd.f32 %v5088, %v5251
  %v5389 = vadd.f32 %v5089, %v5254
  %v5390 = vadd.f32 %v5090, %v5256
  %v5391 = vadd.f32 %v5091, %v5259
  %v5392 = vadd.f32 %v5092, %v5261
  %v5393 = vadd.f32 %v5093, %v5264
  %v5394 = vadd.f32 %v5094, %v5266
  %v5395 = vadd.f32 %v5095, %v5269
  %v5396 = vadd.f32 %v5096, %v5271
  %v5397 = vadd.f32 %v5097, %v5274
  %v5398 = vadd.f32 %v5098, %v5276
  %v5399 = vadd.f32 %v5099, %v5279
  %v5400 = vadd.f32 %v5100, %v5281
  %v5401 = vadd.f32 %v5101, %v5284
  %v5402 = vadd.f32 %v5102, %v5286
  %v5403 = vadd.f32 %v5103, %v5289
  %v5404 = vadd.f32 %v5104, %v5291
  %v5405 = vadd.f32 %v5105, %v5294
  %v5406 = vadd.f32 %v5106, %v5296
  %v5407 = vadd.f32 %v5107, %v5299
  %v5408 = vadd.f32 %v5108, %v5301
  %v5409 = vadd.f32 %v5109, %v5304
  %v5410 = vadd.f32 %v5110, %v5306
  %v5411 = vadd.f32 %v5111, %v5309
  %v5412 = vadd.f32 %v5112, %v5311
  %v5413 = vadd.f32 %v5113, %v5314
  %v5414 = vadd.f32 %v5114, %v5316
  %v5415 = vadd.f32 %v5115, %v5319
  %v5416 = vadd.f32 %v5116, %v5321
  %v5417 = vadd.f32 %v5117, %v5324
  %v5418 = vadd.f32 %v5118, %v5326
  %v5419 = vadd.f32 %v5119, %v5329
  %v5420 = vadd.f32 %v5120, %v5331
  %v5421 = vadd.f32 %v5121, %v5334
  %v5422 = vadd.f32 %v5122, %v5336
  %v5423 = vadd.f32 %v5123, %v5339
  %v5424 = vadd.f32 %v5124, %v5341
  %v5425 = vadd.f32 %v5125, %v5344
  %v5426 = vadd.f32 %v5126, %v5346
  %v5427 = vadd.f32 %v5127, %v5349
  %v5428 = vadd.f32 %v5128, %v5351
  %v5429 = vadd.f32 %v5129, %v5354
  %v5430 = vadd.f32 %v5130, %v5356
  %v5431 = vadd.f32 %v5131, %v5359
  %v5432 = vadd.f32 %v5132, %v5361
  %v5433 = vadd.f32 %v5133, %v5364
  %v5434 = vadd.f32 %v5134, %v5366
  %v5435 = vadd.f32 %v5135, %v5369
  %v5436 = vadd.f32 %v5136, %v5371
  %v5443 = vrot.slane %v3671, 1
  %v5444 = vrot.slane %v3672, 1
  %v5445 = vsel %vm275, %v5443, %v5444
  %v5446 = vrot.slane %v3673, 1
  %v5447 = vsel %vm275, %v5444, %v5446
  %v5448 = vrot.slane %v3725, 1
  %v5449 = vrot.slane %v3726, 1
  %v5450 = vsel %vm275, %v5448, %v5449
  %v5451 = vrot.slane %v3727, 1
  %v5452 = vsel %vm275, %v5449, %v5451
  %v5457 = vpack.c.bf16 %v5447, %v5445
  %v5458 = vpack.c.bf16 %v5452, %v5450
  %s5459 = scalar_lea.vmem %s3, 256
  %v5460 = vld [vmem:[%s5459] sm:$0xf]
  %v5461 = vld [vmem:[%s5459 + $0x4] sm:$0xf]
  %v5462 = vld [vmem:[%s5459 + $0x8] sm:$0xf]
  %v5463 = vld [vmem:[%s5459 + $0xc] sm:$0xf]
  %v5464 = vld [vmem:[%s5459 + $0x10] sm:$0xf]
  %v5465 = vld [vmem:[%s5459 + $0x14] sm:$0xf]
  %v5466 = vld [vmem:[%s5459 + $0x18] sm:$0xf]
  %v5467 = vld [vmem:[%s5459 + $0x1c] sm:$0xf]
  %v5468 = vld [vmem:[%s5459 + $0x20] sm:$0xf]
  %v5469 = vld [vmem:[%s5459 + $0x24] sm:$0xf]
  %v5470 = vld [vmem:[%s5459 + $0x28] sm:$0xf]
  %v5471 = vld [vmem:[%s5459 + $0x2c] sm:$0xf]
  %v5472 = vld [vmem:[%s5459 + $0x30] sm:$0xf]
  %v5473 = vld [vmem:[%s5459 + $0x34] sm:$0xf]
  %v5474 = vld [vmem:[%s5459 + $0x38] sm:$0xf]
  %v5475 = vld [vmem:[%s5459 + $0x3c] sm:$0xf]
  %v5492 = vunpack.c.l.b16 %v5460
  %v5493 = vunpack.c.l.b16 %v5461
  %v5494 = vunpack.c.l.b16 %v5462
  %v5495 = vunpack.c.l.b16 %v5463
  %v5496 = vunpack.c.l.b16 %v5464
  %v5497 = vunpack.c.l.b16 %v5465
  %v5498 = vunpack.c.l.b16 %v5466
  %v5499 = vunpack.c.l.b16 %v5467
  %v5500 = vunpack.c.l.b16 %v5468
  %v5501 = vunpack.c.l.b16 %v5469
  %v5502 = vunpack.c.l.b16 %v5470
  %v5503 = vunpack.c.l.b16 %v5471
  %v5504 = vunpack.c.l.b16 %v5472
  %v5505 = vunpack.c.l.b16 %v5473
  %v5506 = vunpack.c.l.b16 %v5474
  %v5507 = vunpack.c.l.b16 %v5475
  %v5508 = vpack.c.b16 %v5493, %v5492
  %v5509 = vpack.c.b16 %v5495, %v5494
  %v5510 = vpack.c.b16 %v5497, %v5496
  %v5511 = vpack.c.b16 %v5499, %v5498
  %v5512 = vpack.c.b16 %v5501, %v5500
  %v5513 = vpack.c.b16 %v5503, %v5502
  %v5514 = vpack.c.b16 %v5505, %v5504
  %v5515 = vpack.c.b16 %v5507, %v5506
  %5524 = vmatpush.bf16.msra.mxu0 %v5515
  %5525 = vmatpush.bf16.msra.mxu0 %v5514
  %5526 = vmatpush.bf16.msra.mxu0 %v5513
  %5527 = vmatpush.bf16.msra.mxu0 %v5512
  %5528 = vmatpush.bf16.msra.mxu0 %v5511
  %5529 = vmatpush.bf16.msra.mxu0 %v5510
  %5530 = vmatpush.bf16.msra.mxu0 %v5509
  %5531 = vmatpush.bf16.msra.mxu0 %v5508
  %5532 = vmatmul.bf16.gmra.mxu0 %v4101
  %v5533 = vpop.f32.mrf.mxu0
  %v5534 = vadd.f32 0.0, %v5533
  %v5535 = vpop.f32.mrf.mxu0
  %v5536 = vadd.f32 0.0, %v5535
  %5537 = vmatmul.bf16.gmra.mxu0 %v4102
  %v5538 = vpop.f32.mrf.mxu0
  %v5539 = vadd.f32 0.0, %v5538
  %v5540 = vpop.f32.mrf.mxu0
  %v5541 = vadd.f32 0.0, %v5540
  %5542 = vmatmul.bf16.gmra.mxu0 %v4103
  %v5543 = vpop.f32.mrf.mxu0
  %v5544 = vadd.f32 0.0, %v5543
  %v5545 = vpop.f32.mrf.mxu0
  %v5546 = vadd.f32 0.0, %v5545
  %5547 = vmatmul.bf16.gmra.mxu0 %v4104
  %v5548 = vpop.f32.mrf.mxu0
  %v5549 = vadd.f32 0.0, %v5548
  %v5550 = vpop.f32.mrf.mxu0
  %v5551 = vadd.f32 0.0, %v5550
  %5552 = vmatmul.bf16.gmra.mxu0 %v4105
  %v5553 = vpop.f32.mrf.mxu0
  %v5554 = vadd.f32 0.0, %v5553
  %v5555 = vpop.f32.mrf.mxu0
  %v5556 = vadd.f32 0.0, %v5555
  %5557 = vmatmul.bf16.gmra.mxu0 %v4106
  %v5558 = vpop.f32.mrf.mxu0
  %v5559 = vadd.f32 0.0, %v5558
  %v5560 = vpop.f32.mrf.mxu0
  %v5561 = vadd.f32 0.0, %v5560
  %5562 = vmatmul.bf16.gmra.mxu0 %v4107
  %v5563 = vpop.f32.mrf.mxu0
  %v5564 = vadd.f32 0.0, %v5563
  %v5565 = vpop.f32.mrf.mxu0
  %v5566 = vadd.f32 0.0, %v5565
  %5567 = vmatmul.bf16.gmra.mxu0 %v4108
  %v5568 = vpop.f32.mrf.mxu0
  %v5569 = vadd.f32 0.0, %v5568
  %v5570 = vpop.f32.mrf.mxu0
  %v5571 = vadd.f32 0.0, %v5570
  %5572 = vmatmul.bf16.gmra.mxu0 %v4109
  %v5573 = vpop.f32.mrf.mxu0
  %v5574 = vadd.f32 0.0, %v5573
  %v5575 = vpop.f32.mrf.mxu0
  %v5576 = vadd.f32 0.0, %v5575
  %5577 = vmatmul.bf16.gmra.mxu0 %v4110
  %v5578 = vpop.f32.mrf.mxu0
  %v5579 = vadd.f32 0.0, %v5578
  %v5580 = vpop.f32.mrf.mxu0
  %v5581 = vadd.f32 0.0, %v5580
  %5582 = vmatmul.bf16.gmra.mxu0 %v4111
  %v5583 = vpop.f32.mrf.mxu0
  %v5584 = vadd.f32 0.0, %v5583
  %v5585 = vpop.f32.mrf.mxu0
  %v5586 = vadd.f32 0.0, %v5585
  %5587 = vmatmul.bf16.gmra.mxu0 %v4112
  %v5588 = vpop.f32.mrf.mxu0
  %v5589 = vadd.f32 0.0, %v5588
  %v5590 = vpop.f32.mrf.mxu0
  %v5591 = vadd.f32 0.0, %v5590
  %5592 = vmatmul.bf16.gmra.mxu0 %v4113
  %v5593 = vpop.f32.mrf.mxu0
  %v5594 = vadd.f32 0.0, %v5593
  %v5595 = vpop.f32.mrf.mxu0
  %v5596 = vadd.f32 0.0, %v5595
  %5597 = vmatmul.bf16.gmra.mxu0 %v4114
  %v5598 = vpop.f32.mrf.mxu0
  %v5599 = vadd.f32 0.0, %v5598
  %v5600 = vpop.f32.mrf.mxu0
  %v5601 = vadd.f32 0.0, %v5600
  %5602 = vmatmul.bf16.gmra.mxu0 %v4115
  %v5603 = vpop.f32.mrf.mxu0
  %v5604 = vadd.f32 0.0, %v5603
  %v5605 = vpop.f32.mrf.mxu0
  %v5606 = vadd.f32 0.0, %v5605
  %5607 = vmatmul.bf16.gmra.mxu0 %v5457
  %v5608 = vpop.f32.mrf.mxu0
  %v5609 = vadd.f32 0.0, %v5608
  %v5610 = vpop.f32.mrf.mxu0
  %v5611 = vadd.f32 0.0, %v5610
  %5612 = vmatmul.bf16.gmra.mxu0 %v4117
  %v5613 = vpop.f32.mrf.mxu0
  %v5614 = vadd.f32 0.0, %v5613
  %v5615 = vpop.f32.mrf.mxu0
  %v5616 = vadd.f32 0.0, %v5615
  %5617 = vmatmul.bf16.gmra.mxu0 %v4118
  %v5618 = vpop.f32.mrf.mxu0
  %v5619 = vadd.f32 0.0, %v5618
  %v5620 = vpop.f32.mrf.mxu0
  %v5621 = vadd.f32 0.0, %v5620
  %5622 = vmatmul.bf16.gmra.mxu0 %v4119
  %v5623 = vpop.f32.mrf.mxu0
  %v5624 = vadd.f32 0.0, %v5623
  %v5625 = vpop.f32.mrf.mxu0
  %v5626 = vadd.f32 0.0, %v5625
  %5627 = vmatmul.bf16.gmra.mxu0 %v4120
  %v5628 = vpop.f32.mrf.mxu0
  %v5629 = vadd.f32 0.0, %v5628
  %v5630 = vpop.f32.mrf.mxu0
  %v5631 = vadd.f32 0.0, %v5630
  %5632 = vmatmul.bf16.gmra.mxu0 %v4121
  %v5633 = vpop.f32.mrf.mxu0
  %v5634 = vadd.f32 0.0, %v5633
  %v5635 = vpop.f32.mrf.mxu0
  %v5636 = vadd.f32 0.0, %v5635
  %5637 = vmatmul.bf16.gmra.mxu0 %v4122
  %v5638 = vpop.f32.mrf.mxu0
  %v5639 = vadd.f32 0.0, %v5638
  %v5640 = vpop.f32.mrf.mxu0
  %v5641 = vadd.f32 0.0, %v5640
  %5642 = vmatmul.bf16.gmra.mxu0 %v4123
  %v5643 = vpop.f32.mrf.mxu0
  %v5644 = vadd.f32 0.0, %v5643
  %v5645 = vpop.f32.mrf.mxu0
  %v5646 = vadd.f32 0.0, %v5645
  %5647 = vmatmul.bf16.gmra.mxu0 %v4124
  %v5648 = vpop.f32.mrf.mxu0
  %v5649 = vadd.f32 0.0, %v5648
  %v5650 = vpop.f32.mrf.mxu0
  %v5651 = vadd.f32 0.0, %v5650
  %5652 = vmatmul.bf16.gmra.mxu0 %v4125
  %v5653 = vpop.f32.mrf.mxu0
  %v5654 = vadd.f32 0.0, %v5653
  %v5655 = vpop.f32.mrf.mxu0
  %v5656 = vadd.f32 0.0, %v5655
  %5657 = vmatmul.bf16.gmra.mxu0 %v4126
  %v5658 = vpop.f32.mrf.mxu0
  %v5659 = vadd.f32 0.0, %v5658
  %v5660 = vpop.f32.mrf.mxu0
  %v5661 = vadd.f32 0.0, %v5660
  %5662 = vmatmul.bf16.gmra.mxu0 %v4127
  %v5663 = vpop.f32.mrf.mxu0
  %v5664 = vadd.f32 0.0, %v5663
  %v5665 = vpop.f32.mrf.mxu0
  %v5666 = vadd.f32 0.0, %v5665
  %5667 = vmatmul.bf16.gmra.mxu0 %v4128
  %v5668 = vpop.f32.mrf.mxu0
  %v5669 = vadd.f32 0.0, %v5668
  %v5670 = vpop.f32.mrf.mxu0
  %v5671 = vadd.f32 0.0, %v5670
  %5672 = vmatmul.bf16.gmra.mxu0 %v4129
  %v5673 = vpop.f32.mrf.mxu0
  %v5674 = vadd.f32 0.0, %v5673
  %v5675 = vpop.f32.mrf.mxu0
  %v5676 = vadd.f32 0.0, %v5675
  %5677 = vmatmul.bf16.gmra.mxu0 %v4130
  %v5678 = vpop.f32.mrf.mxu0
  %v5679 = vadd.f32 0.0, %v5678
  %v5680 = vpop.f32.mrf.mxu0
  %v5681 = vadd.f32 0.0, %v5680
  %5682 = vmatmul.bf16.gmra.mxu0 %v4131
  %v5683 = vpop.f32.mrf.mxu0
  %v5684 = vadd.f32 0.0, %v5683
  %v5685 = vpop.f32.mrf.mxu0
  %v5686 = vadd.f32 0.0, %v5685
  %5687 = vmatmul.bf16.gmra.mxu0 %v5458
  %v5688 = vpop.f32.mrf.mxu0
  %v5689 = vadd.f32 0.0, %v5688
  %v5690 = vpop.f32.mrf.mxu0
  %v5691 = vadd.f32 0.0, %v5690
  %5692 = vdwg.mxu0
  %v5693 = vadd.f32 %v5373, %v5534
  %v5694 = vadd.f32 %v5374, %v5536
  %v5695 = vadd.f32 %v5375, %v5539
  %v5696 = vadd.f32 %v5376, %v5541
  %v5697 = vadd.f32 %v5377, %v5544
  %v5698 = vadd.f32 %v5378, %v5546
  %v5699 = vadd.f32 %v5379, %v5549
  %v5700 = vadd.f32 %v5380, %v5551
  %v5701 = vadd.f32 %v5381, %v5554
  %v5702 = vadd.f32 %v5382, %v5556
  %v5703 = vadd.f32 %v5383, %v5559
  %v5704 = vadd.f32 %v5384, %v5561
  %v5705 = vadd.f32 %v5385, %v5564
  %v5706 = vadd.f32 %v5386, %v5566
  %v5707 = vadd.f32 %v5387, %v5569
  %v5708 = vadd.f32 %v5388, %v5571
  %v5709 = vadd.f32 %v5389, %v5574
  %v5710 = vadd.f32 %v5390, %v5576
  %v5711 = vadd.f32 %v5391, %v5579
  %v5712 = vadd.f32 %v5392, %v5581
  %v5713 = vadd.f32 %v5393, %v5584
  %v5714 = vadd.f32 %v5394, %v5586
  %v5715 = vadd.f32 %v5395, %v5589
  %v5716 = vadd.f32 %v5396, %v5591
  %v5717 = vadd.f32 %v5397, %v5594
  %v5718 = vadd.f32 %v5398, %v5596
  %v5719 = vadd.f32 %v5399, %v5599
  %v5720 = vadd.f32 %v5400, %v5601
  %v5721 = vadd.f32 %v5401, %v5604
  %v5722 = vadd.f32 %v5402, %v5606
  %v5723 = vadd.f32 %v5403, %v5609
  %v5724 = vadd.f32 %v5404, %v5611
  %v5725 = vadd.f32 %v5405, %v5614
  %v5726 = vadd.f32 %v5406, %v5616
  %v5727 = vadd.f32 %v5407, %v5619
  %v5728 = vadd.f32 %v5408, %v5621
  %v5729 = vadd.f32 %v5409, %v5624
  %v5730 = vadd.f32 %v5410, %v5626
  %v5731 = vadd.f32 %v5411, %v5629
  %v5732 = vadd.f32 %v5412, %v5631
  %v5733 = vadd.f32 %v5413, %v5634
  %v5734 = vadd.f32 %v5414, %v5636
  %v5735 = vadd.f32 %v5415, %v5639
  %v5736 = vadd.f32 %v5416, %v5641
  %v5737 = vadd.f32 %v5417, %v5644
  %v5738 = vadd.f32 %v5418, %v5646
  %v5739 = vadd.f32 %v5419, %v5649
  %v5740 = vadd.f32 %v5420, %v5651
  %v5741 = vadd.f32 %v5421, %v5654
  %v5742 = vadd.f32 %v5422, %v5656
  %v5743 = vadd.f32 %v5423, %v5659
  %v5744 = vadd.f32 %v5424, %v5661
  %v5745 = vadd.f32 %v5425, %v5664
  %v5746 = vadd.f32 %v5426, %v5666
  %v5747 = vadd.f32 %v5427, %v5669
  %v5748 = vadd.f32 %v5428, %v5671
  %v5749 = vadd.f32 %v5429, %v5674
  %v5750 = vadd.f32 %v5430, %v5676
  %v5751 = vadd.f32 %v5431, %v5679
  %v5752 = vadd.f32 %v5432, %v5681
  %v5753 = vadd.f32 %v5433, %v5684
  %v5754 = vadd.f32 %v5434, %v5686
  %v5755 = vadd.f32 %v5435, %v5689
  %v5756 = vadd.f32 %v5436, %v5691
  %v5757 = vrot.slane %v3671, 2
  %v5758 = vrot.slane %v3672, 2
  %v5759 = vsel %vm983, %v5757, %v5758
  %v5760 = vrot.slane %v3673, 2
  %v5761 = vsel %vm983, %v5758, %v5760
  %v5762 = vrot.slane %v3725, 2
  %v5763 = vrot.slane %v3726, 2
  %v5764 = vsel %vm983, %v5762, %v5763
  %v5765 = vrot.slane %v3727, 2
  %v5766 = vsel %vm983, %v5763, %v5765
  %v5771 = vpack.c.bf16 %v5761, %v5759
  %v5772 = vpack.c.bf16 %v5766, %v5764
  %s5773 = scalar_lea.vmem %s3, 320
  %v5774 = vld [vmem:[%s5773] sm:$0xf]
  %v5775 = vld [vmem:[%s5773 + $0x4] sm:$0xf]
  %v5776 = vld [vmem:[%s5773 + $0x8] sm:$0xf]
  %v5777 = vld [vmem:[%s5773 + $0xc] sm:$0xf]
  %v5778 = vld [vmem:[%s5773 + $0x10] sm:$0xf]
  %v5779 = vld [vmem:[%s5773 + $0x14] sm:$0xf]
  %v5780 = vld [vmem:[%s5773 + $0x18] sm:$0xf]
  %v5781 = vld [vmem:[%s5773 + $0x1c] sm:$0xf]
  %v5782 = vld [vmem:[%s5773 + $0x20] sm:$0xf]
  %v5783 = vld [vmem:[%s5773 + $0x24] sm:$0xf]
  %v5784 = vld [vmem:[%s5773 + $0x28] sm:$0xf]
  %v5785 = vld [vmem:[%s5773 + $0x2c] sm:$0xf]
  %v5786 = vld [vmem:[%s5773 + $0x30] sm:$0xf]
  %v5787 = vld [vmem:[%s5773 + $0x34] sm:$0xf]
  %v5788 = vld [vmem:[%s5773 + $0x38] sm:$0xf]
  %v5789 = vld [vmem:[%s5773 + $0x3c] sm:$0xf]
  %v5806 = vunpack.c.l.b16 %v5774
  %v5807 = vunpack.c.l.b16 %v5775
  %v5808 = vunpack.c.l.b16 %v5776
  %v5809 = vunpack.c.l.b16 %v5777
  %v5810 = vunpack.c.l.b16 %v5778
  %v5811 = vunpack.c.l.b16 %v5779
  %v5812 = vunpack.c.l.b16 %v5780
  %v5813 = vunpack.c.l.b16 %v5781
  %v5814 = vunpack.c.l.b16 %v5782
  %v5815 = vunpack.c.l.b16 %v5783
  %v5816 = vunpack.c.l.b16 %v5784
  %v5817 = vunpack.c.l.b16 %v5785
  %v5818 = vunpack.c.l.b16 %v5786
  %v5819 = vunpack.c.l.b16 %v5787
  %v5820 = vunpack.c.l.b16 %v5788
  %v5821 = vunpack.c.l.b16 %v5789
  %v5822 = vpack.c.b16 %v5807, %v5806
  %v5823 = vpack.c.b16 %v5809, %v5808
  %v5824 = vpack.c.b16 %v5811, %v5810
  %v5825 = vpack.c.b16 %v5813, %v5812
  %v5826 = vpack.c.b16 %v5815, %v5814
  %v5827 = vpack.c.b16 %v5817, %v5816
  %v5828 = vpack.c.b16 %v5819, %v5818
  %v5829 = vpack.c.b16 %v5821, %v5820
  %5838 = vmatpush.bf16.msra.mxu0 %v5829
  %5839 = vmatpush.bf16.msra.mxu0 %v5828
  %5840 = vmatpush.bf16.msra.mxu0 %v5827
  %5841 = vmatpush.bf16.msra.mxu0 %v5826
  %5842 = vmatpush.bf16.msra.mxu0 %v5825
  %5843 = vmatpush.bf16.msra.mxu0 %v5824
  %5844 = vmatpush.bf16.msra.mxu0 %v5823
  %5845 = vmatpush.bf16.msra.mxu0 %v5822
  %5846 = vmatmul.bf16.gmra.mxu0 %v4808
  %v5847 = vpop.f32.mrf.mxu0
  %v5848 = vadd.f32 0.0, %v5847
  %v5849 = vpop.f32.mrf.mxu0
  %v5850 = vadd.f32 0.0, %v5849
  %5851 = vmatmul.bf16.gmra.mxu0 %v4809
  %v5852 = vpop.f32.mrf.mxu0
  %v5853 = vadd.f32 0.0, %v5852
  %v5854 = vpop.f32.mrf.mxu0
  %v5855 = vadd.f32 0.0, %v5854
  %5856 = vmatmul.bf16.gmra.mxu0 %v4810
  %v5857 = vpop.f32.mrf.mxu0
  %v5858 = vadd.f32 0.0, %v5857
  %v5859 = vpop.f32.mrf.mxu0
  %v5860 = vadd.f32 0.0, %v5859
  %5861 = vmatmul.bf16.gmra.mxu0 %v4811
  %v5862 = vpop.f32.mrf.mxu0
  %v5863 = vadd.f32 0.0, %v5862
  %v5864 = vpop.f32.mrf.mxu0
  %v5865 = vadd.f32 0.0, %v5864
  %5866 = vmatmul.bf16.gmra.mxu0 %v4812
  %v5867 = vpop.f32.mrf.mxu0
  %v5868 = vadd.f32 0.0, %v5867
  %v5869 = vpop.f32.mrf.mxu0
  %v5870 = vadd.f32 0.0, %v5869
  %5871 = vmatmul.bf16.gmra.mxu0 %v4813
  %v5872 = vpop.f32.mrf.mxu0
  %v5873 = vadd.f32 0.0, %v5872
  %v5874 = vpop.f32.mrf.mxu0
  %v5875 = vadd.f32 0.0, %v5874
  %5876 = vmatmul.bf16.gmra.mxu0 %v4814
  %v5877 = vpop.f32.mrf.mxu0
  %v5878 = vadd.f32 0.0, %v5877
  %v5879 = vpop.f32.mrf.mxu0
  %v5880 = vadd.f32 0.0, %v5879
  %5881 = vmatmul.bf16.gmra.mxu0 %v4815
  %v5882 = vpop.f32.mrf.mxu0
  %v5883 = vadd.f32 0.0, %v5882
  %v5884 = vpop.f32.mrf.mxu0
  %v5885 = vadd.f32 0.0, %v5884
  %5886 = vmatmul.bf16.gmra.mxu0 %v4816
  %v5887 = vpop.f32.mrf.mxu0
  %v5888 = vadd.f32 0.0, %v5887
  %v5889 = vpop.f32.mrf.mxu0
  %v5890 = vadd.f32 0.0, %v5889
  %5891 = vmatmul.bf16.gmra.mxu0 %v4817
  %v5892 = vpop.f32.mrf.mxu0
  %v5893 = vadd.f32 0.0, %v5892
  %v5894 = vpop.f32.mrf.mxu0
  %v5895 = vadd.f32 0.0, %v5894
  %5896 = vmatmul.bf16.gmra.mxu0 %v4818
  %v5897 = vpop.f32.mrf.mxu0
  %v5898 = vadd.f32 0.0, %v5897
  %v5899 = vpop.f32.mrf.mxu0
  %v5900 = vadd.f32 0.0, %v5899
  %5901 = vmatmul.bf16.gmra.mxu0 %v4819
  %v5902 = vpop.f32.mrf.mxu0
  %v5903 = vadd.f32 0.0, %v5902
  %v5904 = vpop.f32.mrf.mxu0
  %v5905 = vadd.f32 0.0, %v5904
  %5906 = vmatmul.bf16.gmra.mxu0 %v4820
  %v5907 = vpop.f32.mrf.mxu0
  %v5908 = vadd.f32 0.0, %v5907
  %v5909 = vpop.f32.mrf.mxu0
  %v5910 = vadd.f32 0.0, %v5909
  %5911 = vmatmul.bf16.gmra.mxu0 %v4821
  %v5912 = vpop.f32.mrf.mxu0
  %v5913 = vadd.f32 0.0, %v5912
  %v5914 = vpop.f32.mrf.mxu0
  %v5915 = vadd.f32 0.0, %v5914
  %5916 = vmatmul.bf16.gmra.mxu0 %v4822
  %v5917 = vpop.f32.mrf.mxu0
  %v5918 = vadd.f32 0.0, %v5917
  %v5919 = vpop.f32.mrf.mxu0
  %v5920 = vadd.f32 0.0, %v5919
  %5921 = vmatmul.bf16.gmra.mxu0 %v5771
  %v5922 = vpop.f32.mrf.mxu0
  %v5923 = vadd.f32 0.0, %v5922
  %v5924 = vpop.f32.mrf.mxu0
  %v5925 = vadd.f32 0.0, %v5924
  %5926 = vmatmul.bf16.gmra.mxu0 %v4824
  %v5927 = vpop.f32.mrf.mxu0
  %v5928 = vadd.f32 0.0, %v5927
  %v5929 = vpop.f32.mrf.mxu0
  %v5930 = vadd.f32 0.0, %v5929
  %5931 = vmatmul.bf16.gmra.mxu0 %v4825
  %v5932 = vpop.f32.mrf.mxu0
  %v5933 = vadd.f32 0.0, %v5932
  %v5934 = vpop.f32.mrf.mxu0
  %v5935 = vadd.f32 0.0, %v5934
  %5936 = vmatmul.bf16.gmra.mxu0 %v4826
  %v5937 = vpop.f32.mrf.mxu0
  %v5938 = vadd.f32 0.0, %v5937
  %v5939 = vpop.f32.mrf.mxu0
  %v5940 = vadd.f32 0.0, %v5939
  %5941 = vmatmul.bf16.gmra.mxu0 %v4827
  %v5942 = vpop.f32.mrf.mxu0
  %v5943 = vadd.f32 0.0, %v5942
  %v5944 = vpop.f32.mrf.mxu0
  %v5945 = vadd.f32 0.0, %v5944
  %5946 = vmatmul.bf16.gmra.mxu0 %v4828
  %v5947 = vpop.f32.mrf.mxu0
  %v5948 = vadd.f32 0.0, %v5947
  %v5949 = vpop.f32.mrf.mxu0
  %v5950 = vadd.f32 0.0, %v5949
  %5951 = vmatmul.bf16.gmra.mxu0 %v4829
  %v5952 = vpop.f32.mrf.mxu0
  %v5953 = vadd.f32 0.0, %v5952
  %v5954 = vpop.f32.mrf.mxu0
  %v5955 = vadd.f32 0.0, %v5954
  %5956 = vmatmul.bf16.gmra.mxu0 %v4830
  %v5957 = vpop.f32.mrf.mxu0
  %v5958 = vadd.f32 0.0, %v5957
  %v5959 = vpop.f32.mrf.mxu0
  %v5960 = vadd.f32 0.0, %v5959
  %5961 = vmatmul.bf16.gmra.mxu0 %v4831
  %v5962 = vpop.f32.mrf.mxu0
  %v5963 = vadd.f32 0.0, %v5962
  %v5964 = vpop.f32.mrf.mxu0
  %v5965 = vadd.f32 0.0, %v5964
  %5966 = vmatmul.bf16.gmra.mxu0 %v4832
  %v5967 = vpop.f32.mrf.mxu0
  %v5968 = vadd.f32 0.0, %v5967
  %v5969 = vpop.f32.mrf.mxu0
  %v5970 = vadd.f32 0.0, %v5969
  %5971 = vmatmul.bf16.gmra.mxu0 %v4833
  %v5972 = vpop.f32.mrf.mxu0
  %v5973 = vadd.f32 0.0, %v5972
  %v5974 = vpop.f32.mrf.mxu0
  %v5975 = vadd.f32 0.0, %v5974
  %5976 = vmatmul.bf16.gmra.mxu0 %v4834
  %v5977 = vpop.f32.mrf.mxu0
  %v5978 = vadd.f32 0.0, %v5977
  %v5979 = vpop.f32.mrf.mxu0
  %v5980 = vadd.f32 0.0, %v5979
  %5981 = vmatmul.bf16.gmra.mxu0 %v4835
  %v5982 = vpop.f32.mrf.mxu0
  %v5983 = vadd.f32 0.0, %v5982
  %v5984 = vpop.f32.mrf.mxu0
  %v5985 = vadd.f32 0.0, %v5984
  %5986 = vmatmul.bf16.gmra.mxu0 %v4836
  %v5987 = vpop.f32.mrf.mxu0
  %v5988 = vadd.f32 0.0, %v5987
  %v5989 = vpop.f32.mrf.mxu0
  %v5990 = vadd.f32 0.0, %v5989
  %5991 = vmatmul.bf16.gmra.mxu0 %v4837
  %v5992 = vpop.f32.mrf.mxu0
  %v5993 = vadd.f32 0.0, %v5992
  %v5994 = vpop.f32.mrf.mxu0
  %v5995 = vadd.f32 0.0, %v5994
  %5996 = vmatmul.bf16.gmra.mxu0 %v4838
  %v5997 = vpop.f32.mrf.mxu0
  %v5998 = vadd.f32 0.0, %v5997
  %v5999 = vpop.f32.mrf.mxu0
  %v6000 = vadd.f32 0.0, %v5999
  %6001 = vmatmul.bf16.gmra.mxu0 %v5772
  %v6002 = vpop.f32.mrf.mxu0
  %v6003 = vadd.f32 0.0, %v6002
  %v6004 = vpop.f32.mrf.mxu0
  %v6005 = vadd.f32 0.0, %v6004
  %6006 = vdwg.mxu0
  %v6007 = vadd.f32 %v5693, %v5848
  %v6008 = vadd.f32 %v5694, %v5850
  %v6009 = vadd.f32 %v5695, %v5853
  %v6010 = vadd.f32 %v5696, %v5855
  %v6011 = vadd.f32 %v5697, %v5858
  %v6012 = vadd.f32 %v5698, %v5860
  %v6013 = vadd.f32 %v5699, %v5863
  %v6014 = vadd.f32 %v5700, %v5865
  %v6015 = vadd.f32 %v5701, %v5868
  %v6016 = vadd.f32 %v5702, %v5870
  %v6017 = vadd.f32 %v5703, %v5873
  %v6018 = vadd.f32 %v5704, %v5875
  %v6019 = vadd.f32 %v5705, %v5878
  %v6020 = vadd.f32 %v5706, %v5880
  %v6021 = vadd.f32 %v5707, %v5883
  %v6022 = vadd.f32 %v5708, %v5885
  %v6023 = vadd.f32 %v5709, %v5888
  %v6024 = vadd.f32 %v5710, %v5890
  %v6025 = vadd.f32 %v5711, %v5893
  %v6026 = vadd.f32 %v5712, %v5895
  %v6027 = vadd.f32 %v5713, %v5898
  %v6028 = vadd.f32 %v5714, %v5900
  %v6029 = vadd.f32 %v5715, %v5903
  %v6030 = vadd.f32 %v5716, %v5905
  %v6031 = vadd.f32 %v5717, %v5908
  %v6032 = vadd.f32 %v5718, %v5910
  %v6033 = vadd.f32 %v5719, %v5913
  %v6034 = vadd.f32 %v5720, %v5915
  %v6035 = vadd.f32 %v5721, %v5918
  %v6036 = vadd.f32 %v5722, %v5920
  %v6037 = vadd.f32 %v5723, %v5923
  %v6038 = vadd.f32 %v5724, %v5925
  %v6039 = vadd.f32 %v5725, %v5928
  %v6040 = vadd.f32 %v5726, %v5930
  %v6041 = vadd.f32 %v5727, %v5933
  %v6042 = vadd.f32 %v5728, %v5935
  %v6043 = vadd.f32 %v5729, %v5938
  %v6044 = vadd.f32 %v5730, %v5940
  %v6045 = vadd.f32 %v5731, %v5943
  %v6046 = vadd.f32 %v5732, %v5945
  %v6047 = vadd.f32 %v5733, %v5948
  %v6048 = vadd.f32 %v5734, %v5950
  %v6049 = vadd.f32 %v5735, %v5953
  %v6050 = vadd.f32 %v5736, %v5955
  %v6051 = vadd.f32 %v5737, %v5958
  %v6052 = vadd.f32 %v5738, %v5960
  %v6053 = vadd.f32 %v5739, %v5963
  %v6054 = vadd.f32 %v5740, %v5965
  %v6055 = vadd.f32 %v5741, %v5968
  %v6056 = vadd.f32 %v5742, %v5970
  %v6057 = vadd.f32 %v5743, %v5973
  %v6058 = vadd.f32 %v5744, %v5975
  %v6059 = vadd.f32 %v5745, %v5978
  %v6060 = vadd.f32 %v5746, %v5980
  %v6061 = vadd.f32 %v5747, %v5983
  %v6062 = vadd.f32 %v5748, %v5985
  %v6063 = vadd.f32 %v5749, %v5988
  %v6064 = vadd.f32 %v5750, %v5990
  %v6065 = vadd.f32 %v5751, %v5993
  %v6066 = vadd.f32 %v5752, %v5995
  %v6067 = vadd.f32 %v5753, %v5998
  %v6068 = vadd.f32 %v5754, %v6000
  %v6069 = vadd.f32 %v5755, %v6003
  %v6070 = vadd.f32 %v5756, %v6005
  %v6071 = vpack.c.bf16 %v3675, %v3674
  %v6072 = vpack.c.bf16 %v3729, %v3728
  %s6073 = scalar_lea.vmem %s3, 384
  %v6074 = vld [vmem:[%s6073] sm:$0xf]
  %v6075 = vld [vmem:[%s6073 + $0x4] sm:$0xf]
  %v6076 = vld [vmem:[%s6073 + $0x8] sm:$0xf]
  %v6077 = vld [vmem:[%s6073 + $0xc] sm:$0xf]
  %v6078 = vld [vmem:[%s6073 + $0x10] sm:$0xf]
  %v6079 = vld [vmem:[%s6073 + $0x14] sm:$0xf]
  %v6080 = vld [vmem:[%s6073 + $0x18] sm:$0xf]
  %v6081 = vld [vmem:[%s6073 + $0x1c] sm:$0xf]
  %v6082 = vld [vmem:[%s6073 + $0x20] sm:$0xf]
  %v6083 = vld [vmem:[%s6073 + $0x24] sm:$0xf]
  %v6084 = vld [vmem:[%s6073 + $0x28] sm:$0xf]
  %v6085 = vld [vmem:[%s6073 + $0x2c] sm:$0xf]
  %v6086 = vld [vmem:[%s6073 + $0x30] sm:$0xf]
  %v6087 = vld [vmem:[%s6073 + $0x34] sm:$0xf]
  %v6088 = vld [vmem:[%s6073 + $0x38] sm:$0xf]
  %v6089 = vld [vmem:[%s6073 + $0x3c] sm:$0xf]
  %v6106 = vunpack.c.l.b16 %v6074
  %v6107 = vunpack.c.l.b16 %v6075
  %v6108 = vunpack.c.l.b16 %v6076
  %v6109 = vunpack.c.l.b16 %v6077
  %v6110 = vunpack.c.l.b16 %v6078
  %v6111 = vunpack.c.l.b16 %v6079
  %v6112 = vunpack.c.l.b16 %v6080
  %v6113 = vunpack.c.l.b16 %v6081
  %v6114 = vunpack.c.l.b16 %v6082
  %v6115 = vunpack.c.l.b16 %v6083
  %v6116 = vunpack.c.l.b16 %v6084
  %v6117 = vunpack.c.l.b16 %v6085
  %v6118 = vunpack.c.l.b16 %v6086
  %v6119 = vunpack.c.l.b16 %v6087
  %v6120 = vunpack.c.l.b16 %v6088
  %v6121 = vunpack.c.l.b16 %v6089
  %v6122 = vpack.c.b16 %v6107, %v6106
  %v6123 = vpack.c.b16 %v6109, %v6108
  %v6124 = vpack.c.b16 %v6111, %v6110
  %v6125 = vpack.c.b16 %v6113, %v6112
  %v6126 = vpack.c.b16 %v6115, %v6114
  %v6127 = vpack.c.b16 %v6117, %v6116
  %v6128 = vpack.c.b16 %v6119, %v6118
  %v6129 = vpack.c.b16 %v6121, %v6120
  %6138 = vmatpush.bf16.msra.mxu0 %v6129
  %6139 = vmatpush.bf16.msra.mxu0 %v6128
  %6140 = vmatpush.bf16.msra.mxu0 %v6127
  %6141 = vmatpush.bf16.msra.mxu0 %v6126
  %6142 = vmatpush.bf16.msra.mxu0 %v6125
  %6143 = vmatpush.bf16.msra.mxu0 %v6124
  %6144 = vmatpush.bf16.msra.mxu0 %v6123
  %6145 = vmatpush.bf16.msra.mxu0 %v6122
  %6146 = vmatmul.bf16.gmra.mxu0 %v3734
  %v6147 = vpop.f32.mrf.mxu0
  %v6148 = vadd.f32 0.0, %v6147
  %v6149 = vpop.f32.mrf.mxu0
  %v6150 = vadd.f32 0.0, %v6149
  %6151 = vmatmul.bf16.gmra.mxu0 %v3735
  %v6152 = vpop.f32.mrf.mxu0
  %v6153 = vadd.f32 0.0, %v6152
  %v6154 = vpop.f32.mrf.mxu0
  %v6155 = vadd.f32 0.0, %v6154
  %6156 = vmatmul.bf16.gmra.mxu0 %v3736
  %v6157 = vpop.f32.mrf.mxu0
  %v6158 = vadd.f32 0.0, %v6157
  %v6159 = vpop.f32.mrf.mxu0
  %v6160 = vadd.f32 0.0, %v6159
  %6161 = vmatmul.bf16.gmra.mxu0 %v3737
  %v6162 = vpop.f32.mrf.mxu0
  %v6163 = vadd.f32 0.0, %v6162
  %v6164 = vpop.f32.mrf.mxu0
  %v6165 = vadd.f32 0.0, %v6164
  %6166 = vmatmul.bf16.gmra.mxu0 %v3738
  %v6167 = vpop.f32.mrf.mxu0
  %v6168 = vadd.f32 0.0, %v6167
  %v6169 = vpop.f32.mrf.mxu0
  %v6170 = vadd.f32 0.0, %v6169
  %6171 = vmatmul.bf16.gmra.mxu0 %v3739
  %v6172 = vpop.f32.mrf.mxu0
  %v6173 = vadd.f32 0.0, %v6172
  %v6174 = vpop.f32.mrf.mxu0
  %v6175 = vadd.f32 0.0, %v6174
  %6176 = vmatmul.bf16.gmra.mxu0 %v3740
  %v6177 = vpop.f32.mrf.mxu0
  %v6178 = vadd.f32 0.0, %v6177
  %v6179 = vpop.f32.mrf.mxu0
  %v6180 = vadd.f32 0.0, %v6179
  %6181 = vmatmul.bf16.gmra.mxu0 %v3741
  %v6182 = vpop.f32.mrf.mxu0
  %v6183 = vadd.f32 0.0, %v6182
  %v6184 = vpop.f32.mrf.mxu0
  %v6185 = vadd.f32 0.0, %v6184
  %6186 = vmatmul.bf16.gmra.mxu0 %v3742
  %v6187 = vpop.f32.mrf.mxu0
  %v6188 = vadd.f32 0.0, %v6187
  %v6189 = vpop.f32.mrf.mxu0
  %v6190 = vadd.f32 0.0, %v6189
  %6191 = vmatmul.bf16.gmra.mxu0 %v3743
  %v6192 = vpop.f32.mrf.mxu0
  %v6193 = vadd.f32 0.0, %v6192
  %v6194 = vpop.f32.mrf.mxu0
  %v6195 = vadd.f32 0.0, %v6194
  %6196 = vmatmul.bf16.gmra.mxu0 %v3744
  %v6197 = vpop.f32.mrf.mxu0
  %v6198 = vadd.f32 0.0, %v6197
  %v6199 = vpop.f32.mrf.mxu0
  %v6200 = vadd.f32 0.0, %v6199
  %6201 = vmatmul.bf16.gmra.mxu0 %v3745
  %v6202 = vpop.f32.mrf.mxu0
  %v6203 = vadd.f32 0.0, %v6202
  %v6204 = vpop.f32.mrf.mxu0
  %v6205 = vadd.f32 0.0, %v6204
  %6206 = vmatmul.bf16.gmra.mxu0 %v3746
  %v6207 = vpop.f32.mrf.mxu0
  %v6208 = vadd.f32 0.0, %v6207
  %v6209 = vpop.f32.mrf.mxu0
  %v6210 = vadd.f32 0.0, %v6209
  %6211 = vmatmul.bf16.gmra.mxu0 %v3747
  %v6212 = vpop.f32.mrf.mxu0
  %v6213 = vadd.f32 0.0, %v6212
  %v6214 = vpop.f32.mrf.mxu0
  %v6215 = vadd.f32 0.0, %v6214
  %6216 = vmatmul.bf16.gmra.mxu0 %v5137
  %v6217 = vpop.f32.mrf.mxu0
  %v6218 = vadd.f32 0.0, %v6217
  %v6219 = vpop.f32.mrf.mxu0
  %v6220 = vadd.f32 0.0, %v6219
  %6221 = vmatmul.bf16.gmra.mxu0 %v6071
  %v6222 = vpop.f32.mrf.mxu0
  %v6223 = vadd.f32 0.0, %v6222
  %v6224 = vpop.f32.mrf.mxu0
  %v6225 = vadd.f32 0.0, %v6224
  %6226 = vmatmul.bf16.gmra.mxu0 %v3750
  %v6227 = vpop.f32.mrf.mxu0
  %v6228 = vadd.f32 0.0, %v6227
  %v6229 = vpop.f32.mrf.mxu0
  %v6230 = vadd.f32 0.0, %v6229
  %6231 = vmatmul.bf16.gmra.mxu0 %v3751
  %v6232 = vpop.f32.mrf.mxu0
  %v6233 = vadd.f32 0.0, %v6232
  %v6234 = vpop.f32.mrf.mxu0
  %v6235 = vadd.f32 0.0, %v6234
  %6236 = vmatmul.bf16.gmra.mxu0 %v3752
  %v6237 = vpop.f32.mrf.mxu0
  %v6238 = vadd.f32 0.0, %v6237
  %v6239 = vpop.f32.mrf.mxu0
  %v6240 = vadd.f32 0.0, %v6239
  %6241 = vmatmul.bf16.gmra.mxu0 %v3753
  %v6242 = vpop.f32.mrf.mxu0
  %v6243 = vadd.f32 0.0, %v6242
  %v6244 = vpop.f32.mrf.mxu0
  %v6245 = vadd.f32 0.0, %v6244
  %6246 = vmatmul.bf16.gmra.mxu0 %v3754
  %v6247 = vpop.f32.mrf.mxu0
  %v6248 = vadd.f32 0.0, %v6247
  %v6249 = vpop.f32.mrf.mxu0
  %v6250 = vadd.f32 0.0, %v6249
  %6251 = vmatmul.bf16.gmra.mxu0 %v3755
  %v6252 = vpop.f32.mrf.mxu0
  %v6253 = vadd.f32 0.0, %v6252
  %v6254 = vpop.f32.mrf.mxu0
  %v6255 = vadd.f32 0.0, %v6254
  %6256 = vmatmul.bf16.gmra.mxu0 %v3756
  %v6257 = vpop.f32.mrf.mxu0
  %v6258 = vadd.f32 0.0, %v6257
  %v6259 = vpop.f32.mrf.mxu0
  %v6260 = vadd.f32 0.0, %v6259
  %6261 = vmatmul.bf16.gmra.mxu0 %v3757
  %v6262 = vpop.f32.mrf.mxu0
  %v6263 = vadd.f32 0.0, %v6262
  %v6264 = vpop.f32.mrf.mxu0
  %v6265 = vadd.f32 0.0, %v6264
  %6266 = vmatmul.bf16.gmra.mxu0 %v3758
  %v6267 = vpop.f32.mrf.mxu0
  %v6268 = vadd.f32 0.0, %v6267
  %v6269 = vpop.f32.mrf.mxu0
  %v6270 = vadd.f32 0.0, %v6269
  %6271 = vmatmul.bf16.gmra.mxu0 %v3759
  %v6272 = vpop.f32.mrf.mxu0
  %v6273 = vadd.f32 0.0, %v6272
  %v6274 = vpop.f32.mrf.mxu0
  %v6275 = vadd.f32 0.0, %v6274
  %6276 = vmatmul.bf16.gmra.mxu0 %v3760
  %v6277 = vpop.f32.mrf.mxu0
  %v6278 = vadd.f32 0.0, %v6277
  %v6279 = vpop.f32.mrf.mxu0
  %v6280 = vadd.f32 0.0, %v6279
  %6281 = vmatmul.bf16.gmra.mxu0 %v3761
  %v6282 = vpop.f32.mrf.mxu0
  %v6283 = vadd.f32 0.0, %v6282
  %v6284 = vpop.f32.mrf.mxu0
  %v6285 = vadd.f32 0.0, %v6284
  %6286 = vmatmul.bf16.gmra.mxu0 %v3762
  %v6287 = vpop.f32.mrf.mxu0
  %v6288 = vadd.f32 0.0, %v6287
  %v6289 = vpop.f32.mrf.mxu0
  %v6290 = vadd.f32 0.0, %v6289
  %6291 = vmatmul.bf16.gmra.mxu0 %v3763
  %v6292 = vpop.f32.mrf.mxu0
  %v6293 = vadd.f32 0.0, %v6292
  %v6294 = vpop.f32.mrf.mxu0
  %v6295 = vadd.f32 0.0, %v6294
  %6296 = vmatmul.bf16.gmra.mxu0 %v5138
  %v6297 = vpop.f32.mrf.mxu0
  %v6298 = vadd.f32 0.0, %v6297
  %v6299 = vpop.f32.mrf.mxu0
  %v6300 = vadd.f32 0.0, %v6299
  %6301 = vmatmul.bf16.gmra.mxu0 %v6072
  %v6302 = vpop.f32.mrf.mxu0
  %v6303 = vadd.f32 0.0, %v6302
  %v6304 = vpop.f32.mrf.mxu0
  %v6305 = vadd.f32 0.0, %v6304
  %6306 = vdwg.mxu0
  %v6307 = vadd.f32 %v6007, %v6148
  %v6308 = vadd.f32 %v6008, %v6150
  %v6309 = vadd.f32 %v6009, %v6153
  %v6310 = vadd.f32 %v6010, %v6155
  %v6311 = vadd.f32 %v6011, %v6158
  %v6312 = vadd.f32 %v6012, %v6160
  %v6313 = vadd.f32 %v6013, %v6163
  %v6314 = vadd.f32 %v6014, %v6165
  %v6315 = vadd.f32 %v6015, %v6168
  %v6316 = vadd.f32 %v6016, %v6170
  %v6317 = vadd.f32 %v6017, %v6173
  %v6318 = vadd.f32 %v6018, %v6175
  %v6319 = vadd.f32 %v6019, %v6178
  %v6320 = vadd.f32 %v6020, %v6180
  %v6321 = vadd.f32 %v6021, %v6183
  %v6322 = vadd.f32 %v6022, %v6185
  %v6323 = vadd.f32 %v6023, %v6188
  %v6324 = vadd.f32 %v6024, %v6190
  %v6325 = vadd.f32 %v6025, %v6193
  %v6326 = vadd.f32 %v6026, %v6195
  %v6327 = vadd.f32 %v6027, %v6198
  %v6328 = vadd.f32 %v6028, %v6200
  %v6329 = vadd.f32 %v6029, %v6203
  %v6330 = vadd.f32 %v6030, %v6205
  %v6331 = vadd.f32 %v6031, %v6208
  %v6332 = vadd.f32 %v6032, %v6210
  %v6333 = vadd.f32 %v6033, %v6213
  %v6334 = vadd.f32 %v6034, %v6215
  %v6335 = vadd.f32 %v6035, %v6218
  %v6336 = vadd.f32 %v6036, %v6220
  %v6337 = vadd.f32 %v6037, %v6223
  %v6338 = vadd.f32 %v6038, %v6225
  %v6339 = vadd.f32 %v6039, %v6228
  %v6340 = vadd.f32 %v6040, %v6230
  %v6341 = vadd.f32 %v6041, %v6233
  %v6342 = vadd.f32 %v6042, %v6235
  %v6343 = vadd.f32 %v6043, %v6238
  %v6344 = vadd.f32 %v6044, %v6240
  %v6345 = vadd.f32 %v6045, %v6243
  %v6346 = vadd.f32 %v6046, %v6245
  %v6347 = vadd.f32 %v6047, %v6248
  %v6348 = vadd.f32 %v6048, %v6250
  %v6349 = vadd.f32 %v6049, %v6253
  %v6350 = vadd.f32 %v6050, %v6255
  %v6351 = vadd.f32 %v6051, %v6258
  %v6352 = vadd.f32 %v6052, %v6260
  %v6353 = vadd.f32 %v6053, %v6263
  %v6354 = vadd.f32 %v6054, %v6265
  %v6355 = vadd.f32 %v6055, %v6268
  %v6356 = vadd.f32 %v6056, %v6270
  %v6357 = vadd.f32 %v6057, %v6273
  %v6358 = vadd.f32 %v6058, %v6275
  %v6359 = vadd.f32 %v6059, %v6278
  %v6360 = vadd.f32 %v6060, %v6280
  %v6361 = vadd.f32 %v6061, %v6283
  %v6362 = vadd.f32 %v6062, %v6285
  %v6363 = vadd.f32 %v6063, %v6288
  %v6364 = vadd.f32 %v6064, %v6290
  %v6365 = vadd.f32 %v6065, %v6293
  %v6366 = vadd.f32 %v6066, %v6295
  %v6367 = vadd.f32 %v6067, %v6298
  %v6368 = vadd.f32 %v6068, %v6300
  %v6369 = vadd.f32 %v6069, %v6303
  %v6370 = vadd.f32 %v6070, %v6305
  %v6377 = vrot.slane %v3674, 1
  %v6378 = vrot.slane %v3675, 1
  %v6379 = vsel %vm275, %v6377, %v6378
  %v6380 = vrot.slane %v3676, 1
  %v6381 = vsel %vm275, %v6378, %v6380
  %v6382 = vrot.slane %v3728, 1
  %v6383 = vrot.slane %v3729, 1
  %v6384 = vsel %vm275, %v6382, %v6383
  %v6385 = vrot.slane %v3730, 1
  %v6386 = vsel %vm275, %v6383, %v6385
  %v6391 = vpack.c.bf16 %v6381, %v6379
  %v6392 = vpack.c.bf16 %v6386, %v6384
  %s6393 = scalar_lea.vmem %s3, 448
  %v6394 = vld [vmem:[%s6393] sm:$0xf]
  %v6395 = vld [vmem:[%s6393 + $0x4] sm:$0xf]
  %v6396 = vld [vmem:[%s6393 + $0x8] sm:$0xf]
  %v6397 = vld [vmem:[%s6393 + $0xc] sm:$0xf]
  %v6398 = vld [vmem:[%s6393 + $0x10] sm:$0xf]
  %v6399 = vld [vmem:[%s6393 + $0x14] sm:$0xf]
  %v6400 = vld [vmem:[%s6393 + $0x18] sm:$0xf]
  %v6401 = vld [vmem:[%s6393 + $0x1c] sm:$0xf]
  %v6402 = vld [vmem:[%s6393 + $0x20] sm:$0xf]
  %v6403 = vld [vmem:[%s6393 + $0x24] sm:$0xf]
  %v6404 = vld [vmem:[%s6393 + $0x28] sm:$0xf]
  %v6405 = vld [vmem:[%s6393 + $0x2c] sm:$0xf]
  %v6406 = vld [vmem:[%s6393 + $0x30] sm:$0xf]
  %v6407 = vld [vmem:[%s6393 + $0x34] sm:$0xf]
  %v6408 = vld [vmem:[%s6393 + $0x38] sm:$0xf]
  %v6409 = vld [vmem:[%s6393 + $0x3c] sm:$0xf]
  %v6426 = vunpack.c.l.b16 %v6394
  %v6427 = vunpack.c.l.b16 %v6395
  %v6428 = vunpack.c.l.b16 %v6396
  %v6429 = vunpack.c.l.b16 %v6397
  %v6430 = vunpack.c.l.b16 %v6398
  %v6431 = vunpack.c.l.b16 %v6399
  %v6432 = vunpack.c.l.b16 %v6400
  %v6433 = vunpack.c.l.b16 %v6401
  %v6434 = vunpack.c.l.b16 %v6402
  %v6435 = vunpack.c.l.b16 %v6403
  %v6436 = vunpack.c.l.b16 %v6404
  %v6437 = vunpack.c.l.b16 %v6405
  %v6438 = vunpack.c.l.b16 %v6406
  %v6439 = vunpack.c.l.b16 %v6407
  %v6440 = vunpack.c.l.b16 %v6408
  %v6441 = vunpack.c.l.b16 %v6409
  %v6442 = vpack.c.b16 %v6427, %v6426
  %v6443 = vpack.c.b16 %v6429, %v6428
  %v6444 = vpack.c.b16 %v6431, %v6430
  %v6445 = vpack.c.b16 %v6433, %v6432
  %v6446 = vpack.c.b16 %v6435, %v6434
  %v6447 = vpack.c.b16 %v6437, %v6436
  %v6448 = vpack.c.b16 %v6439, %v6438
  %v6449 = vpack.c.b16 %v6441, %v6440
  %6458 = vmatpush.bf16.msra.mxu0 %v6449
  %6459 = vmatpush.bf16.msra.mxu0 %v6448
  %6460 = vmatpush.bf16.msra.mxu0 %v6447
  %6461 = vmatpush.bf16.msra.mxu0 %v6446
  %6462 = vmatpush.bf16.msra.mxu0 %v6445
  %6463 = vmatpush.bf16.msra.mxu0 %v6444
  %6464 = vmatpush.bf16.msra.mxu0 %v6443
  %6465 = vmatpush.bf16.msra.mxu0 %v6442
  %6466 = vmatmul.bf16.gmra.mxu0 %v4102
  %v6467 = vpop.f32.mrf.mxu0
  %v6468 = vadd.f32 0.0, %v6467
  %v6469 = vpop.f32.mrf.mxu0
  %v6470 = vadd.f32 0.0, %v6469
  %6471 = vmatmul.bf16.gmra.mxu0 %v4103
  %v6472 = vpop.f32.mrf.mxu0
  %v6473 = vadd.f32 0.0, %v6472
  %v6474 = vpop.f32.mrf.mxu0
  %v6475 = vadd.f32 0.0, %v6474
  %6476 = vmatmul.bf16.gmra.mxu0 %v4104
  %v6477 = vpop.f32.mrf.mxu0
  %v6478 = vadd.f32 0.0, %v6477
  %v6479 = vpop.f32.mrf.mxu0
  %v6480 = vadd.f32 0.0, %v6479
  %6481 = vmatmul.bf16.gmra.mxu0 %v4105
  %v6482 = vpop.f32.mrf.mxu0
  %v6483 = vadd.f32 0.0, %v6482
  %v6484 = vpop.f32.mrf.mxu0
  %v6485 = vadd.f32 0.0, %v6484
  %6486 = vmatmul.bf16.gmra.mxu0 %v4106
  %v6487 = vpop.f32.mrf.mxu0
  %v6488 = vadd.f32 0.0, %v6487
  %v6489 = vpop.f32.mrf.mxu0
  %v6490 = vadd.f32 0.0, %v6489
  %6491 = vmatmul.bf16.gmra.mxu0 %v4107
  %v6492 = vpop.f32.mrf.mxu0
  %v6493 = vadd.f32 0.0, %v6492
  %v6494 = vpop.f32.mrf.mxu0
  %v6495 = vadd.f32 0.0, %v6494
  %6496 = vmatmul.bf16.gmra.mxu0 %v4108
  %v6497 = vpop.f32.mrf.mxu0
  %v6498 = vadd.f32 0.0, %v6497
  %v6499 = vpop.f32.mrf.mxu0
  %v6500 = vadd.f32 0.0, %v6499
  %6501 = vmatmul.bf16.gmra.mxu0 %v4109
  %v6502 = vpop.f32.mrf.mxu0
  %v6503 = vadd.f32 0.0, %v6502
  %v6504 = vpop.f32.mrf.mxu0
  %v6505 = vadd.f32 0.0, %v6504
  %6506 = vmatmul.bf16.gmra.mxu0 %v4110
  %v6507 = vpop.f32.mrf.mxu0
  %v6508 = vadd.f32 0.0, %v6507
  %v6509 = vpop.f32.mrf.mxu0
  %v6510 = vadd.f32 0.0, %v6509
  %6511 = vmatmul.bf16.gmra.mxu0 %v4111
  %v6512 = vpop.f32.mrf.mxu0
  %v6513 = vadd.f32 0.0, %v6512
  %v6514 = vpop.f32.mrf.mxu0
  %v6515 = vadd.f32 0.0, %v6514
  %6516 = vmatmul.bf16.gmra.mxu0 %v4112
  %v6517 = vpop.f32.mrf.mxu0
  %v6518 = vadd.f32 0.0, %v6517
  %v6519 = vpop.f32.mrf.mxu0
  %v6520 = vadd.f32 0.0, %v6519
  %6521 = vmatmul.bf16.gmra.mxu0 %v4113
  %v6522 = vpop.f32.mrf.mxu0
  %v6523 = vadd.f32 0.0, %v6522
  %v6524 = vpop.f32.mrf.mxu0
  %v6525 = vadd.f32 0.0, %v6524
  %6526 = vmatmul.bf16.gmra.mxu0 %v4114
  %v6527 = vpop.f32.mrf.mxu0
  %v6528 = vadd.f32 0.0, %v6527
  %v6529 = vpop.f32.mrf.mxu0
  %v6530 = vadd.f32 0.0, %v6529
  %6531 = vmatmul.bf16.gmra.mxu0 %v4115
  %v6532 = vpop.f32.mrf.mxu0
  %v6533 = vadd.f32 0.0, %v6532
  %v6534 = vpop.f32.mrf.mxu0
  %v6535 = vadd.f32 0.0, %v6534
  %6536 = vmatmul.bf16.gmra.mxu0 %v5457
  %v6537 = vpop.f32.mrf.mxu0
  %v6538 = vadd.f32 0.0, %v6537
  %v6539 = vpop.f32.mrf.mxu0
  %v6540 = vadd.f32 0.0, %v6539
  %6541 = vmatmul.bf16.gmra.mxu0 %v6391
  %v6542 = vpop.f32.mrf.mxu0
  %v6543 = vadd.f32 0.0, %v6542
  %v6544 = vpop.f32.mrf.mxu0
  %v6545 = vadd.f32 0.0, %v6544
  %6546 = vmatmul.bf16.gmra.mxu0 %v4118
  %v6547 = vpop.f32.mrf.mxu0
  %v6548 = vadd.f32 0.0, %v6547
  %v6549 = vpop.f32.mrf.mxu0
  %v6550 = vadd.f32 0.0, %v6549
  %6551 = vmatmul.bf16.gmra.mxu0 %v4119
  %v6552 = vpop.f32.mrf.mxu0
  %v6553 = vadd.f32 0.0, %v6552
  %v6554 = vpop.f32.mrf.mxu0
  %v6555 = vadd.f32 0.0, %v6554
  %6556 = vmatmul.bf16.gmra.mxu0 %v4120
  %v6557 = vpop.f32.mrf.mxu0
  %v6558 = vadd.f32 0.0, %v6557
  %v6559 = vpop.f32.mrf.mxu0
  %v6560 = vadd.f32 0.0, %v6559
  %6561 = vmatmul.bf16.gmra.mxu0 %v4121
  %v6562 = vpop.f32.mrf.mxu0
  %v6563 = vadd.f32 0.0, %v6562
  %v6564 = vpop.f32.mrf.mxu0
  %v6565 = vadd.f32 0.0, %v6564
  %6566 = vmatmul.bf16.gmra.mxu0 %v4122
  %v6567 = vpop.f32.mrf.mxu0
  %v6568 = vadd.f32 0.0, %v6567
  %v6569 = vpop.f32.mrf.mxu0
  %v6570 = vadd.f32 0.0, %v6569
  %6571 = vmatmul.bf16.gmra.mxu0 %v4123
  %v6572 = vpop.f32.mrf.mxu0
  %v6573 = vadd.f32 0.0, %v6572
  %v6574 = vpop.f32.mrf.mxu0
  %v6575 = vadd.f32 0.0, %v6574
  %6576 = vmatmul.bf16.gmra.mxu0 %v4124
  %v6577 = vpop.f32.mrf.mxu0
  %v6578 = vadd.f32 0.0, %v6577
  %v6579 = vpop.f32.mrf.mxu0
  %v6580 = vadd.f32 0.0, %v6579
  %6581 = vmatmul.bf16.gmra.mxu0 %v4125
  %v6582 = vpop.f32.mrf.mxu0
  %v6583 = vadd.f32 0.0, %v6582
  %v6584 = vpop.f32.mrf.mxu0
  %v6585 = vadd.f32 0.0, %v6584
  %6586 = vmatmul.bf16.gmra.mxu0 %v4126
  %v6587 = vpop.f32.mrf.mxu0
  %v6588 = vadd.f32 0.0, %v6587
  %v6589 = vpop.f32.mrf.mxu0
  %v6590 = vadd.f32 0.0, %v6589
  %6591 = vmatmul.bf16.gmra.mxu0 %v4127
  %v6592 = vpop.f32.mrf.mxu0
  %v6593 = vadd.f32 0.0, %v6592
  %v6594 = vpop.f32.mrf.mxu0
  %v6595 = vadd.f32 0.0, %v6594
  %6596 = vmatmul.bf16.gmra.mxu0 %v4128
  %v6597 = vpop.f32.mrf.mxu0
  %v6598 = vadd.f32 0.0, %v6597
  %v6599 = vpop.f32.mrf.mxu0
  %v6600 = vadd.f32 0.0, %v6599
  %6601 = vmatmul.bf16.gmra.mxu0 %v4129
  %v6602 = vpop.f32.mrf.mxu0
  %v6603 = vadd.f32 0.0, %v6602
  %v6604 = vpop.f32.mrf.mxu0
  %v6605 = vadd.f32 0.0, %v6604
  %6606 = vmatmul.bf16.gmra.mxu0 %v4130
  %v6607 = vpop.f32.mrf.mxu0
  %v6608 = vadd.f32 0.0, %v6607
  %v6609 = vpop.f32.mrf.mxu0
  %v6610 = vadd.f32 0.0, %v6609
  %6611 = vmatmul.bf16.gmra.mxu0 %v4131
  %v6612 = vpop.f32.mrf.mxu0
  %v6613 = vadd.f32 0.0, %v6612
  %v6614 = vpop.f32.mrf.mxu0
  %v6615 = vadd.f32 0.0, %v6614
  %6616 = vmatmul.bf16.gmra.mxu0 %v5458
  %v6617 = vpop.f32.mrf.mxu0
  %v6618 = vadd.f32 0.0, %v6617
  %v6619 = vpop.f32.mrf.mxu0
  %v6620 = vadd.f32 0.0, %v6619
  %6621 = vmatmul.bf16.gmra.mxu0 %v6392
  %v6622 = vpop.f32.mrf.mxu0
  %v6623 = vadd.f32 0.0, %v6622
  %v6624 = vpop.f32.mrf.mxu0
  %v6625 = vadd.f32 0.0, %v6624
  %6626 = vdwg.mxu0
  %v6627 = vadd.f32 %v6307, %v6468
  %v6628 = vadd.f32 %v6308, %v6470
  %v6629 = vadd.f32 %v6309, %v6473
  %v6630 = vadd.f32 %v6310, %v6475
  %v6631 = vadd.f32 %v6311, %v6478
  %v6632 = vadd.f32 %v6312, %v6480
  %v6633 = vadd.f32 %v6313, %v6483
  %v6634 = vadd.f32 %v6314, %v6485
  %v6635 = vadd.f32 %v6315, %v6488
  %v6636 = vadd.f32 %v6316, %v6490
  %v6637 = vadd.f32 %v6317, %v6493
  %v6638 = vadd.f32 %v6318, %v6495
  %v6639 = vadd.f32 %v6319, %v6498
  %v6640 = vadd.f32 %v6320, %v6500
  %v6641 = vadd.f32 %v6321, %v6503
  %v6642 = vadd.f32 %v6322, %v6505
  %v6643 = vadd.f32 %v6323, %v6508
  %v6644 = vadd.f32 %v6324, %v6510
  %v6645 = vadd.f32 %v6325, %v6513
  %v6646 = vadd.f32 %v6326, %v6515
  %v6647 = vadd.f32 %v6327, %v6518
  %v6648 = vadd.f32 %v6328, %v6520
  %v6649 = vadd.f32 %v6329, %v6523
  %v6650 = vadd.f32 %v6330, %v6525
  %v6651 = vadd.f32 %v6331, %v6528
  %v6652 = vadd.f32 %v6332, %v6530
  %v6653 = vadd.f32 %v6333, %v6533
  %v6654 = vadd.f32 %v6334, %v6535
  %v6655 = vadd.f32 %v6335, %v6538
  %v6656 = vadd.f32 %v6336, %v6540
  %v6657 = vadd.f32 %v6337, %v6543
  %v6658 = vadd.f32 %v6338, %v6545
  %v6659 = vadd.f32 %v6339, %v6548
  %v6660 = vadd.f32 %v6340, %v6550
  %v6661 = vadd.f32 %v6341, %v6553
  %v6662 = vadd.f32 %v6342, %v6555
  %v6663 = vadd.f32 %v6343, %v6558
  %v6664 = vadd.f32 %v6344, %v6560
  %v6665 = vadd.f32 %v6345, %v6563
  %v6666 = vadd.f32 %v6346, %v6565
  %v6667 = vadd.f32 %v6347, %v6568
  %v6668 = vadd.f32 %v6348, %v6570
  %v6669 = vadd.f32 %v6349, %v6573
  %v6670 = vadd.f32 %v6350, %v6575
  %v6671 = vadd.f32 %v6351, %v6578
  %v6672 = vadd.f32 %v6352, %v6580
  %v6673 = vadd.f32 %v6353, %v6583
  %v6674 = vadd.f32 %v6354, %v6585
  %v6675 = vadd.f32 %v6355, %v6588
  %v6676 = vadd.f32 %v6356, %v6590
  %v6677 = vadd.f32 %v6357, %v6593
  %v6678 = vadd.f32 %v6358, %v6595
  %v6679 = vadd.f32 %v6359, %v6598
  %v6680 = vadd.f32 %v6360, %v6600
  %v6681 = vadd.f32 %v6361, %v6603
  %v6682 = vadd.f32 %v6362, %v6605
  %v6683 = vadd.f32 %v6363, %v6608
  %v6684 = vadd.f32 %v6364, %v6610
  %v6685 = vadd.f32 %v6365, %v6613
  %v6686 = vadd.f32 %v6366, %v6615
  %v6687 = vadd.f32 %v6367, %v6618
  %v6688 = vadd.f32 %v6368, %v6620
  %v6689 = vadd.f32 %v6369, %v6623
  %v6690 = vadd.f32 %v6370, %v6625
  %v6691 = vrot.slane %v3674, 2
  %v6692 = vrot.slane %v3675, 2
  %v6693 = vsel %vm983, %v6691, %v6692
  %v6694 = vrot.slane %v3676, 2
  %v6695 = vsel %vm983, %v6692, %v6694
  %v6696 = vrot.slane %v3728, 2
  %v6697 = vrot.slane %v3729, 2
  %v6698 = vsel %vm983, %v6696, %v6697
  %v6699 = vrot.slane %v3730, 2
  %v6700 = vsel %vm983, %v6697, %v6699
  %v6705 = vpack.c.bf16 %v6695, %v6693
  %v6706 = vpack.c.bf16 %v6700, %v6698
  %s6707 = scalar_lea.vmem %s3, 512
  %v6708 = vld [vmem:[%s6707] sm:$0xf]
  %v6709 = vld [vmem:[%s6707 + $0x4] sm:$0xf]
  %v6710 = vld [vmem:[%s6707 + $0x8] sm:$0xf]
  %v6711 = vld [vmem:[%s6707 + $0xc] sm:$0xf]
  %v6712 = vld [vmem:[%s6707 + $0x10] sm:$0xf]
  %v6713 = vld [vmem:[%s6707 + $0x14] sm:$0xf]
  %v6714 = vld [vmem:[%s6707 + $0x18] sm:$0xf]
  %v6715 = vld [vmem:[%s6707 + $0x1c] sm:$0xf]
  %v6716 = vld [vmem:[%s6707 + $0x20] sm:$0xf]
  %v6717 = vld [vmem:[%s6707 + $0x24] sm:$0xf]
  %v6718 = vld [vmem:[%s6707 + $0x28] sm:$0xf]
  %v6719 = vld [vmem:[%s6707 + $0x2c] sm:$0xf]
  %v6720 = vld [vmem:[%s6707 + $0x30] sm:$0xf]
  %v6721 = vld [vmem:[%s6707 + $0x34] sm:$0xf]
  %v6722 = vld [vmem:[%s6707 + $0x38] sm:$0xf]
  %v6723 = vld [vmem:[%s6707 + $0x3c] sm:$0xf]
  %v6740 = vunpack.c.l.b16 %v6708
  %v6741 = vunpack.c.l.b16 %v6709
  %v6742 = vunpack.c.l.b16 %v6710
  %v6743 = vunpack.c.l.b16 %v6711
  %v6744 = vunpack.c.l.b16 %v6712
  %v6745 = vunpack.c.l.b16 %v6713
  %v6746 = vunpack.c.l.b16 %v6714
  %v6747 = vunpack.c.l.b16 %v6715
  %v6748 = vunpack.c.l.b16 %v6716
  %v6749 = vunpack.c.l.b16 %v6717
  %v6750 = vunpack.c.l.b16 %v6718
  %v6751 = vunpack.c.l.b16 %v6719
  %v6752 = vunpack.c.l.b16 %v6720
  %v6753 = vunpack.c.l.b16 %v6721
  %v6754 = vunpack.c.l.b16 %v6722
  %v6755 = vunpack.c.l.b16 %v6723
  %v6756 = vpack.c.b16 %v6741, %v6740
  %v6757 = vpack.c.b16 %v6743, %v6742
  %v6758 = vpack.c.b16 %v6745, %v6744
  %v6759 = vpack.c.b16 %v6747, %v6746
  %v6760 = vpack.c.b16 %v6749, %v6748
  %v6761 = vpack.c.b16 %v6751, %v6750
  %v6762 = vpack.c.b16 %v6753, %v6752
  %v6763 = vpack.c.b16 %v6755, %v6754
  %6772 = vmatpush.bf16.msra.mxu0 %v6763
  %6773 = vmatpush.bf16.msra.mxu0 %v6762
  %6774 = vmatpush.bf16.msra.mxu0 %v6761
  %6775 = vmatpush.bf16.msra.mxu0 %v6760
  %6776 = vmatpush.bf16.msra.mxu0 %v6759
  %6777 = vmatpush.bf16.msra.mxu0 %v6758
  %6778 = vmatpush.bf16.msra.mxu0 %v6757
  %6779 = vmatpush.bf16.msra.mxu0 %v6756
  %6780 = vmatmul.bf16.gmra.mxu0 %v4809
  %v6781 = vpop.f32.mrf.mxu0
  %v6782 = vadd.f32 0.0, %v6781
  %v6783 = vpop.f32.mrf.mxu0
  %v6784 = vadd.f32 0.0, %v6783
  %6785 = vmatmul.bf16.gmra.mxu0 %v4810
  %v6786 = vpop.f32.mrf.mxu0
  %v6787 = vadd.f32 0.0, %v6786
  %v6788 = vpop.f32.mrf.mxu0
  %v6789 = vadd.f32 0.0, %v6788
  %6790 = vmatmul.bf16.gmra.mxu0 %v4811
  %v6791 = vpop.f32.mrf.mxu0
  %v6792 = vadd.f32 0.0, %v6791
  %v6793 = vpop.f32.mrf.mxu0
  %v6794 = vadd.f32 0.0, %v6793
  %6795 = vmatmul.bf16.gmra.mxu0 %v4812
  %v6796 = vpop.f32.mrf.mxu0
  %v6797 = vadd.f32 0.0, %v6796
  %v6798 = vpop.f32.mrf.mxu0
  %v6799 = vadd.f32 0.0, %v6798
  %6800 = vmatmul.bf16.gmra.mxu0 %v4813
  %v6801 = vpop.f32.mrf.mxu0
  %v6802 = vadd.f32 0.0, %v6801
  %v6803 = vpop.f32.mrf.mxu0
  %v6804 = vadd.f32 0.0, %v6803
  %6805 = vmatmul.bf16.gmra.mxu0 %v4814
  %v6806 = vpop.f32.mrf.mxu0
  %v6807 = vadd.f32 0.0, %v6806
  %v6808 = vpop.f32.mrf.mxu0
  %v6809 = vadd.f32 0.0, %v6808
  %6810 = vmatmul.bf16.gmra.mxu0 %v4815
  %v6811 = vpop.f32.mrf.mxu0
  %v6812 = vadd.f32 0.0, %v6811
  %v6813 = vpop.f32.mrf.mxu0
  %v6814 = vadd.f32 0.0, %v6813
  %6815 = vmatmul.bf16.gmra.mxu0 %v4816
  %v6816 = vpop.f32.mrf.mxu0
  %v6817 = vadd.f32 0.0, %v6816
  %v6818 = vpop.f32.mrf.mxu0
  %v6819 = vadd.f32 0.0, %v6818
  %6820 = vmatmul.bf16.gmra.mxu0 %v4817
  %v6821 = vpop.f32.mrf.mxu0
  %v6822 = vadd.f32 0.0, %v6821
  %v6823 = vpop.f32.mrf.mxu0
  %v6824 = vadd.f32 0.0, %v6823
  %6825 = vmatmul.bf16.gmra.mxu0 %v4818
  %v6826 = vpop.f32.mrf.mxu0
  %v6827 = vadd.f32 0.0, %v6826
  %v6828 = vpop.f32.mrf.mxu0
  %v6829 = vadd.f32 0.0, %v6828
  %6830 = vmatmul.bf16.gmra.mxu0 %v4819
  %v6831 = vpop.f32.mrf.mxu0
  %v6832 = vadd.f32 0.0, %v6831
  %v6833 = vpop.f32.mrf.mxu0
  %v6834 = vadd.f32 0.0, %v6833
  %6835 = vmatmul.bf16.gmra.mxu0 %v4820
  %v6836 = vpop.f32.mrf.mxu0
  %v6837 = vadd.f32 0.0, %v6836
  %v6838 = vpop.f32.mrf.mxu0
  %v6839 = vadd.f32 0.0, %v6838
  %6840 = vmatmul.bf16.gmra.mxu0 %v4821
  %v6841 = vpop.f32.mrf.mxu0
  %v6842 = vadd.f32 0.0, %v6841
  %v6843 = vpop.f32.mrf.mxu0
  %v6844 = vadd.f32 0.0, %v6843
  %6845 = vmatmul.bf16.gmra.mxu0 %v4822
  %v6846 = vpop.f32.mrf.mxu0
  %v6847 = vadd.f32 0.0, %v6846
  %v6848 = vpop.f32.mrf.mxu0
  %v6849 = vadd.f32 0.0, %v6848
  %6850 = vmatmul.bf16.gmra.mxu0 %v5771
  %v6851 = vpop.f32.mrf.mxu0
  %v6852 = vadd.f32 0.0, %v6851
  %v6853 = vpop.f32.mrf.mxu0
  %v6854 = vadd.f32 0.0, %v6853
  %6855 = vmatmul.bf16.gmra.mxu0 %v6705
  %v6856 = vpop.f32.mrf.mxu0
  %v6857 = vadd.f32 0.0, %v6856
  %v6858 = vpop.f32.mrf.mxu0
  %v6859 = vadd.f32 0.0, %v6858
  %6860 = vmatmul.bf16.gmra.mxu0 %v4825
  %v6861 = vpop.f32.mrf.mxu0
  %v6862 = vadd.f32 0.0, %v6861
  %v6863 = vpop.f32.mrf.mxu0
  %v6864 = vadd.f32 0.0, %v6863
  %6865 = vmatmul.bf16.gmra.mxu0 %v4826
  %v6866 = vpop.f32.mrf.mxu0
  %v6867 = vadd.f32 0.0, %v6866
  %v6868 = vpop.f32.mrf.mxu0
  %v6869 = vadd.f32 0.0, %v6868
  %6870 = vmatmul.bf16.gmra.mxu0 %v4827
  %v6871 = vpop.f32.mrf.mxu0
  %v6872 = vadd.f32 0.0, %v6871
  %v6873 = vpop.f32.mrf.mxu0
  %v6874 = vadd.f32 0.0, %v6873
  %6875 = vmatmul.bf16.gmra.mxu0 %v4828
  %v6876 = vpop.f32.mrf.mxu0
  %v6877 = vadd.f32 0.0, %v6876
  %v6878 = vpop.f32.mrf.mxu0
  %v6879 = vadd.f32 0.0, %v6878
  %6880 = vmatmul.bf16.gmra.mxu0 %v4829
  %v6881 = vpop.f32.mrf.mxu0
  %v6882 = vadd.f32 0.0, %v6881
  %v6883 = vpop.f32.mrf.mxu0
  %v6884 = vadd.f32 0.0, %v6883
  %6885 = vmatmul.bf16.gmra.mxu0 %v4830
  %v6886 = vpop.f32.mrf.mxu0
  %v6887 = vadd.f32 0.0, %v6886
  %v6888 = vpop.f32.mrf.mxu0
  %v6889 = vadd.f32 0.0, %v6888
  %6890 = vmatmul.bf16.gmra.mxu0 %v4831
  %v6891 = vpop.f32.mrf.mxu0
  %v6892 = vadd.f32 0.0, %v6891
  %v6893 = vpop.f32.mrf.mxu0
  %v6894 = vadd.f32 0.0, %v6893
  %6895 = vmatmul.bf16.gmra.mxu0 %v4832
  %v6896 = vpop.f32.mrf.mxu0
  %v6897 = vadd.f32 0.0, %v6896
  %v6898 = vpop.f32.mrf.mxu0
  %v6899 = vadd.f32 0.0, %v6898
  %6900 = vmatmul.bf16.gmra.mxu0 %v4833
  %v6901 = vpop.f32.mrf.mxu0
  %v6902 = vadd.f32 0.0, %v6901
  %v6903 = vpop.f32.mrf.mxu0
  %v6904 = vadd.f32 0.0, %v6903
  %6905 = vmatmul.bf16.gmra.mxu0 %v4834
  %v6906 = vpop.f32.mrf.mxu0
  %v6907 = vadd.f32 0.0, %v6906
  %v6908 = vpop.f32.mrf.mxu0
  %v6909 = vadd.f32 0.0, %v6908
  %6910 = vmatmul.bf16.gmra.mxu0 %v4835
  %v6911 = vpop.f32.mrf.mxu0
  %v6912 = vadd.f32 0.0, %v6911
  %v6913 = vpop.f32.mrf.mxu0
  %v6914 = vadd.f32 0.0, %v6913
  %6915 = vmatmul.bf16.gmra.mxu0 %v4836
  %v6916 = vpop.f32.mrf.mxu0
  %v6917 = vadd.f32 0.0, %v6916
  %v6918 = vpop.f32.mrf.mxu0
  %v6919 = vadd.f32 0.0, %v6918
  %6920 = vmatmul.bf16.gmra.mxu0 %v4837
  %v6921 = vpop.f32.mrf.mxu0
  %v6922 = vadd.f32 0.0, %v6921
  %v6923 = vpop.f32.mrf.mxu0
  %v6924 = vadd.f32 0.0, %v6923
  %6925 = vmatmul.bf16.gmra.mxu0 %v4838
  %v6926 = vpop.f32.mrf.mxu0
  %v6927 = vadd.f32 0.0, %v6926
  %v6928 = vpop.f32.mrf.mxu0
  %v6929 = vadd.f32 0.0, %v6928
  %6930 = vmatmul.bf16.gmra.mxu0 %v5772
  %v6931 = vpop.f32.mrf.mxu0
  %v6932 = vadd.f32 0.0, %v6931
  %v6933 = vpop.f32.mrf.mxu0
  %v6934 = vadd.f32 0.0, %v6933
  %6935 = vmatmul.bf16.gmra.mxu0 %v6706
  %v6936 = vpop.f32.mrf.mxu0
  %v6937 = vadd.f32 0.0, %v6936
  %v6938 = vpop.f32.mrf.mxu0
  %v6939 = vadd.f32 0.0, %v6938
  %6940 = vdwg.mxu0
  %v6941 = vadd.f32 %v6627, %v6782
  %v6942 = vadd.f32 %v6628, %v6784
  %v6943 = vadd.f32 %v6629, %v6787
  %v6944 = vadd.f32 %v6630, %v6789
  %v6945 = vadd.f32 %v6631, %v6792
  %v6946 = vadd.f32 %v6632, %v6794
  %v6947 = vadd.f32 %v6633, %v6797
  %v6948 = vadd.f32 %v6634, %v6799
  %v6949 = vadd.f32 %v6635, %v6802
  %v6950 = vadd.f32 %v6636, %v6804
  %v6951 = vadd.f32 %v6637, %v6807
  %v6952 = vadd.f32 %v6638, %v6809
  %v6953 = vadd.f32 %v6639, %v6812
  %v6954 = vadd.f32 %v6640, %v6814
  %v6955 = vadd.f32 %v6641, %v6817
  %v6956 = vadd.f32 %v6642, %v6819
  %v6957 = vadd.f32 %v6643, %v6822
  %v6958 = vadd.f32 %v6644, %v6824
  %v6959 = vadd.f32 %v6645, %v6827
  %v6960 = vadd.f32 %v6646, %v6829
  %v6961 = vadd.f32 %v6647, %v6832
  %v6962 = vadd.f32 %v6648, %v6834
  %v6963 = vadd.f32 %v6649, %v6837
  %v6964 = vadd.f32 %v6650, %v6839
  %v6965 = vadd.f32 %v6651, %v6842
  %v6966 = vadd.f32 %v6652, %v6844
  %v6967 = vadd.f32 %v6653, %v6847
  %v6968 = vadd.f32 %v6654, %v6849
  %v6969 = vadd.f32 %v6655, %v6852
  %v6970 = vadd.f32 %v6656, %v6854
  %v6971 = vadd.f32 %v6657, %v6857
  %v6972 = vadd.f32 %v6658, %v6859
  %v6973 = vadd.f32 %v6659, %v6862
  %v6974 = vadd.f32 %v6660, %v6864
  %v6975 = vadd.f32 %v6661, %v6867
  %v6976 = vadd.f32 %v6662, %v6869
  %v6977 = vadd.f32 %v6663, %v6872
  %v6978 = vadd.f32 %v6664, %v6874
  %v6979 = vadd.f32 %v6665, %v6877
  %v6980 = vadd.f32 %v6666, %v6879
  %v6981 = vadd.f32 %v6667, %v6882
  %v6982 = vadd.f32 %v6668, %v6884
  %v6983 = vadd.f32 %v6669, %v6887
  %v6984 = vadd.f32 %v6670, %v6889
  %v6985 = vadd.f32 %v6671, %v6892
  %v6986 = vadd.f32 %v6672, %v6894
  %v6987 = vadd.f32 %v6673, %v6897
  %v6988 = vadd.f32 %v6674, %v6899
  %v6989 = vadd.f32 %v6675, %v6902
  %v6990 = vadd.f32 %v6676, %v6904
  %v6991 = vadd.f32 %v6677, %v6907
  %v6992 = vadd.f32 %v6678, %v6909
  %v6993 = vadd.f32 %v6679, %v6912
  %v6994 = vadd.f32 %v6680, %v6914
  %v6995 = vadd.f32 %v6681, %v6917
  %v6996 = vadd.f32 %v6682, %v6919
  %v6997 = vadd.f32 %v6683, %v6922
  %v6998 = vadd.f32 %v6684, %v6924
  %v6999 = vadd.f32 %v6685, %v6927
  %v7000 = vadd.f32 %v6686, %v6929
  %v7001 = vadd.f32 %v6687, %v6932
  %v7002 = vadd.f32 %v6688, %v6934
  %v7003 = vadd.f32 %v6689, %v6937
  %v7004 = vadd.f32 %v6690, %v6939
  %v7006 = vperm.slane %v3731, 0
  %v7008 = vadd.f32 %v6941, %v7006
  %v7009 = vadd.f32 %v6942, %v7006
  %v7010 = vadd.f32 %v6943, %v7006
  %v7011 = vadd.f32 %v6944, %v7006
  %v7012 = vadd.f32 %v6945, %v7006
  %v7013 = vadd.f32 %v6946, %v7006
  %v7014 = vadd.f32 %v6947, %v7006
  %v7015 = vadd.f32 %v6948, %v7006
  %v7016 = vadd.f32 %v6949, %v7006
  %v7017 = vadd.f32 %v6950, %v7006
  %v7018 = vadd.f32 %v6951, %v7006
  %v7019 = vadd.f32 %v6952, %v7006
  %v7020 = vadd.f32 %v6953, %v7006
  %v7021 = vadd.f32 %v6954, %v7006
  %v7022 = vadd.f32 %v6955, %v7006
  %v7023 = vadd.f32 %v6956, %v7006
  %v7024 = vadd.f32 %v6957, %v7006
  %v7025 = vadd.f32 %v6958, %v7006
  %v7026 = vadd.f32 %v6959, %v7006
  %v7027 = vadd.f32 %v6960, %v7006
  %v7028 = vadd.f32 %v6961, %v7006
  %v7029 = vadd.f32 %v6962, %v7006
  %v7030 = vadd.f32 %v6963, %v7006
  %v7031 = vadd.f32 %v6964, %v7006
  %v7032 = vadd.f32 %v6965, %v7006
  %v7033 = vadd.f32 %v6966, %v7006
  %v7034 = vadd.f32 %v6967, %v7006
  %v7035 = vadd.f32 %v6968, %v7006
  %v7036 = vadd.f32 %v6969, %v7006
  %v7037 = vadd.f32 %v6970, %v7006
  %v7038 = vadd.f32 %v6971, %v7006
  %v7039 = vadd.f32 %v6972, %v7006
  %v7040 = vadd.f32 %v6973, %v7006
  %v7041 = vadd.f32 %v6974, %v7006
  %v7042 = vadd.f32 %v6975, %v7006
  %v7043 = vadd.f32 %v6976, %v7006
  %v7044 = vadd.f32 %v6977, %v7006
  %v7045 = vadd.f32 %v6978, %v7006
  %v7046 = vadd.f32 %v6979, %v7006
  %v7047 = vadd.f32 %v6980, %v7006
  %v7048 = vadd.f32 %v6981, %v7006
  %v7049 = vadd.f32 %v6982, %v7006
  %v7050 = vadd.f32 %v6983, %v7006
  %v7051 = vadd.f32 %v6984, %v7006
  %v7052 = vadd.f32 %v6985, %v7006
  %v7053 = vadd.f32 %v6986, %v7006
  %v7054 = vadd.f32 %v6987, %v7006
  %v7055 = vadd.f32 %v6988, %v7006
  %v7056 = vadd.f32 %v6989, %v7006
  %v7057 = vadd.f32 %v6990, %v7006
  %v7058 = vadd.f32 %v6991, %v7006
  %v7059 = vadd.f32 %v6992, %v7006
  %v7060 = vadd.f32 %v6993, %v7006
  %v7061 = vadd.f32 %v6994, %v7006
  %v7062 = vadd.f32 %v6995, %v7006
  %v7063 = vadd.f32 %v6996, %v7006
  %v7064 = vadd.f32 %v6997, %v7006
  %v7065 = vadd.f32 %v6998, %v7006
  %v7066 = vadd.f32 %v6999, %v7006
  %v7067 = vadd.f32 %v7000, %v7006
  %v7068 = vadd.f32 %v7001, %v7006
  %v7069 = vadd.f32 %v7002, %v7006
  %v7070 = vadd.f32 %v7003, %v7006
  %v7071 = vadd.f32 %v7004, %v7006
  %7072 = vst [vmem:[%s5] sm:$0xff] %v7008
  %7073 = vst [vmem:[%s5 + $0x8] sm:$0xff] %v7009
  %7074 = vst [vmem:[%s5 + $0x10] sm:$0xff] %v7010
  %7075 = vst [vmem:[%s5 + $0x18] sm:$0xff] %v7011
  %7076 = vst [vmem:[%s5 + $0x20] sm:$0xff] %v7012
  %7077 = vst [vmem:[%s5 + $0x28] sm:$0xff] %v7013
  %7078 = vst [vmem:[%s5 + $0x30] sm:$0xff] %v7014
  %7079 = vst [vmem:[%s5 + $0x38] sm:$0xff] %v7015
  %7080 = vst [vmem:[%s5 + $0x40] sm:$0xff] %v7016
  %7081 = vst [vmem:[%s5 + $0x48] sm:$0xff] %v7017
  %7082 = vst [vmem:[%s5 + $0x50] sm:$0xff] %v7018
  %7083 = vst [vmem:[%s5 + $0x58] sm:$0xff] %v7019
  %7084 = vst [vmem:[%s5 + $0x60] sm:$0xff] %v7020
  %7085 = vst [vmem:[%s5 + $0x68] sm:$0xff] %v7021
  %7086 = vst [vmem:[%s5 + $0x70] sm:$0xff] %v7022
  %7087 = vst [vmem:[%s5 + $0x78] sm:$0xff] %v7023
  %7088 = vst [vmem:[%s5 + $0x80] sm:$0xff] %v7024
  %7089 = vst [vmem:[%s5 + $0x88] sm:$0xff] %v7025
  %7090 = vst [vmem:[%s5 + $0x90] sm:$0xff] %v7026
  %7091 = vst [vmem:[%s5 + $0x98] sm:$0xff] %v7027
  %7092 = vst [vmem:[%s5 + $0xa0] sm:$0xff] %v7028
  %7093 = vst [vmem:[%s5 + $0xa8] sm:$0xff] %v7029
  %7094 = vst [vmem:[%s5 + $0xb0] sm:$0xff] %v7030
  %7095 = vst [vmem:[%s5 + $0xb8] sm:$0xff] %v7031
  %7096 = vst [vmem:[%s5 + $0xc0] sm:$0xff] %v7032
  %7097 = vst [vmem:[%s5 + $0xc8] sm:$0xff] %v7033
  %7098 = vst [vmem:[%s5 + $0xd0] sm:$0xff] %v7034
  %7099 = vst [vmem:[%s5 + $0xd8] sm:$0xff] %v7035
  %7100 = vst [vmem:[%s5 + $0xe0] sm:$0xff] %v7036
  %7101 = vst [vmem:[%s5 + $0xe8] sm:$0xff] %v7037
  %7102 = vst [vmem:[%s5 + $0xf0] sm:$0xff] %v7038
  %7103 = vst [vmem:[%s5 + $0xf8] sm:$0xff] %v7039
  %7104 = vst [vmem:[%s5 + $0x100] sm:$0xff] %v7040
  %7105 = vst [vmem:[%s5 + $0x108] sm:$0xff] %v7041
  %7106 = vst [vmem:[%s5 + $0x110] sm:$0xff] %v7042
  %7107 = vst [vmem:[%s5 + $0x118] sm:$0xff] %v7043
  %7108 = vst [vmem:[%s5 + $0x120] sm:$0xff] %v7044
  %7109 = vst [vmem:[%s5 + $0x128] sm:$0xff] %v7045
  %7110 = vst [vmem:[%s5 + $0x130] sm:$0xff] %v7046
  %7111 = vst [vmem:[%s5 + $0x138] sm:$0xff] %v7047
  %7112 = vst [vmem:[%s5 + $0x140] sm:$0xff] %v7048
  %7113 = vst [vmem:[%s5 + $0x148] sm:$0xff] %v7049
  %7114 = vst [vmem:[%s5 + $0x150] sm:$0xff] %v7050
  %7115 = vst [vmem:[%s5 + $0x158] sm:$0xff] %v7051
  %7116 = vst [vmem:[%s5 + $0x160] sm:$0xff] %v7052
  %7117 = vst [vmem:[%s5 + $0x168] sm:$0xff] %v7053
  %7118 = vst [vmem:[%s5 + $0x170] sm:$0xff] %v7054
  %7119 = vst [vmem:[%s5 + $0x178] sm:$0xff] %v7055
  %7120 = vst [vmem:[%s5 + $0x180] sm:$0xff] %v7056
  %7121 = vst [vmem:[%s5 + $0x188] sm:$0xff] %v7057
  %7122 = vst [vmem:[%s5 + $0x190] sm:$0xff] %v7058
  %7123 = vst [vmem:[%s5 + $0x198] sm:$0xff] %v7059
  %7124 = vst [vmem:[%s5 + $0x1a0] sm:$0xff] %v7060
  %7125 = vst [vmem:[%s5 + $0x1a8] sm:$0xff] %v7061
  %7126 = vst [vmem:[%s5 + $0x1b0] sm:$0xff] %v7062
  %7127 = vst [vmem:[%s5 + $0x1b8] sm:$0xff] %v7063
  %7128 = vst [vmem:[%s5 + $0x1c0] sm:$0xff] %v7064
  %7129 = vst [vmem:[%s5 + $0x1c8] sm:$0xff] %v7065
  %7130 = vst [vmem:[%s5 + $0x1d0] sm:$0xff] %v7066
  %7131 = vst [vmem:[%s5 + $0x1d8] sm:$0xff] %v7067
  %7132 = vst [vmem:[%s5 + $0x1e0] sm:$0xff] %v7068
  %7133 = vst [vmem:[%s5 + $0x1e8] sm:$0xff] %v7069
  %7134 = vst [vmem:[%s5 + $0x1f0] sm:$0xff] %v7070
  %7135 = vst [vmem:[%s5 + $0x1f8] sm:$0xff] %v7071
  %v7136 = vadd.f32 %v7008, %v7009
  %v7137 = vadd.f32 %v7136, %v7010
  %v7138 = vadd.f32 %v7137, %v7011
  %v7139 = vadd.f32 %v7138, %v7012
  %v7140 = vadd.f32 %v7139, %v7013
  %v7141 = vadd.f32 %v7140, %v7014
  %v7142 = vadd.f32 %v7141, %v7015
  %v7143 = vadd.f32 %v7142, %v7016
  %v7144 = vadd.f32 %v7143, %v7017
  %v7145 = vadd.f32 %v7144, %v7018
  %v7146 = vadd.f32 %v7145, %v7019
  %v7147 = vadd.f32 %v7146, %v7020
  %v7148 = vadd.f32 %v7147, %v7021
  %v7149 = vadd.f32 %v7148, %v7022
  %v7150 = vadd.f32 %v7149, %v7023
  %v7151 = vadd.f32 %v7150, %v7024
  %v7152 = vadd.f32 %v7151, %v7025
  %v7153 = vadd.f32 %v7152, %v7026
  %v7154 = vadd.f32 %v7153, %v7027
  %v7155 = vadd.f32 %v7154, %v7028
  %v7156 = vadd.f32 %v7155, %v7029
  %v7157 = vadd.f32 %v7156, %v7030
  %v7158 = vadd.f32 %v7157, %v7031
  %v7159 = vadd.f32 %v7158, %v7032
  %v7160 = vadd.f32 %v7159, %v7033
  %v7161 = vadd.f32 %v7160, %v7034
  %v7162 = vadd.f32 %v7161, %v7035
  %v7163 = vadd.f32 %v7162, %v7036
  %v7164 = vadd.f32 %v7163, %v7037
  %v7165 = vadd.f32 %v7164, %v7038
  %v7166 = vadd.f32 %v7165, %v7039
  %v7167 = vadd.f32 %v7166, %v7040
  %v7168 = vadd.f32 %v7167, %v7041
  %v7169 = vadd.f32 %v7168, %v7042
  %v7170 = vadd.f32 %v7169, %v7043
  %v7171 = vadd.f32 %v7170, %v7044
  %v7172 = vadd.f32 %v7171, %v7045
  %v7173 = vadd.f32 %v7172, %v7046
  %v7174 = vadd.f32 %v7173, %v7047
  %v7175 = vadd.f32 %v7174, %v7048
  %v7176 = vadd.f32 %v7175, %v7049
  %v7177 = vadd.f32 %v7176, %v7050
  %v7178 = vadd.f32 %v7177, %v7051
  %v7179 = vadd.f32 %v7178, %v7052
  %v7180 = vadd.f32 %v7179, %v7053
  %v7181 = vadd.f32 %v7180, %v7054
  %v7182 = vadd.f32 %v7181, %v7055
  %v7183 = vadd.f32 %v7182, %v7056
  %v7184 = vadd.f32 %v7183, %v7057
  %v7185 = vadd.f32 %v7184, %v7058
  %v7186 = vadd.f32 %v7185, %v7059
  %v7187 = vadd.f32 %v7186, %v7060
  %v7188 = vadd.f32 %v7187, %v7061
  %v7189 = vadd.f32 %v7188, %v7062
  %v7190 = vadd.f32 %v7189, %v7063
  %v7191 = vadd.f32 %v7190, %v7064
  %v7192 = vadd.f32 %v7191, %v7065
  %v7193 = vadd.f32 %v7192, %v7066
  %v7194 = vadd.f32 %v7193, %v7067
  %v7195 = vadd.f32 %v7194, %v7068
  %v7196 = vadd.f32 %v7195, %v7069
  %v7197 = vadd.f32 %v7196, %v7070
  %v7198 = vadd.f32 %v7197, %v7071
  %v7199 = vrot.slane %v7198, 4
  %v7200 = vadd.f32 %v7198, %v7199
  %v7201 = vrot.slane %v7200, 2
  %v7202 = vadd.f32 %v7200, %v7201
  %v7203 = vrot.slane %v7202, 1
  %v7204 = vadd.f32 %v7202, %v7203
  %v7205 = vmul.f32 %v7008, %v7008
  %v7206 = vmul.f32 %v7009, %v7009
  %v7207 = vmul.f32 %v7010, %v7010
  %v7208 = vmul.f32 %v7011, %v7011
  %v7209 = vmul.f32 %v7012, %v7012
  %v7210 = vmul.f32 %v7013, %v7013
  %v7211 = vmul.f32 %v7014, %v7014
  %v7212 = vmul.f32 %v7015, %v7015
  %v7213 = vmul.f32 %v7016, %v7016
  %v7214 = vmul.f32 %v7017, %v7017
  %v7215 = vmul.f32 %v7018, %v7018
  %v7216 = vmul.f32 %v7019, %v7019
  %v7217 = vmul.f32 %v7020, %v7020
  %v7218 = vmul.f32 %v7021, %v7021
  %v7219 = vmul.f32 %v7022, %v7022
  %v7220 = vmul.f32 %v7023, %v7023
  %v7221 = vmul.f32 %v7024, %v7024
  %v7222 = vmul.f32 %v7025, %v7025
  %v7223 = vmul.f32 %v7026, %v7026
  %v7224 = vmul.f32 %v7027, %v7027
  %v7225 = vmul.f32 %v7028, %v7028
  %v7226 = vmul.f32 %v7029, %v7029
  %v7227 = vmul.f32 %v7030, %v7030
  %v7228 = vmul.f32 %v7031, %v7031
  %v7229 = vmul.f32 %v7032, %v7032
  %v7230 = vmul.f32 %v7033, %v7033
  %v7231 = vmul.f32 %v7034, %v7034
  %v7232 = vmul.f32 %v7035, %v7035
  %v7233 = vmul.f32 %v7036, %v7036
  %v7234 = vmul.f32 %v7037, %v7037
  %v7235 = vmul.f32 %v7038, %v7038
  %v7236 = vmul.f32 %v7039, %v7039
  %v7237 = vmul.f32 %v7040, %v7040
  %v7238 = vmul.f32 %v7041, %v7041
  %v7239 = vmul.f32 %v7042, %v7042
  %v7240 = vmul.f32 %v7043, %v7043
  %v7241 = vmul.f32 %v7044, %v7044
  %v7242 = vmul.f32 %v7045, %v7045
  %v7243 = vmul.f32 %v7046, %v7046
  %v7244 = vmul.f32 %v7047, %v7047
  %v7245 = vmul.f32 %v7048, %v7048
  %v7246 = vmul.f32 %v7049, %v7049
  %v7247 = vmul.f32 %v7050, %v7050
  %v7248 = vmul.f32 %v7051, %v7051
  %v7249 = vmul.f32 %v7052, %v7052
  %v7250 = vmul.f32 %v7053, %v7053
  %v7251 = vmul.f32 %v7054, %v7054
  %v7252 = vmul.f32 %v7055, %v7055
  %v7253 = vmul.f32 %v7056, %v7056
  %v7254 = vmul.f32 %v7057, %v7057
  %v7255 = vmul.f32 %v7058, %v7058
  %v7256 = vmul.f32 %v7059, %v7059
  %v7257 = vmul.f32 %v7060, %v7060
  %v7258 = vmul.f32 %v7061, %v7061
  %v7259 = vmul.f32 %v7062, %v7062
  %v7260 = vmul.f32 %v7063, %v7063
  %v7261 = vmul.f32 %v7064, %v7064
  %v7262 = vmul.f32 %v7065, %v7065
  %v7263 = vmul.f32 %v7066, %v7066
  %v7264 = vmul.f32 %v7067, %v7067
  %v7265 = vmul.f32 %v7068, %v7068
  %v7266 = vmul.f32 %v7069, %v7069
  %v7267 = vmul.f32 %v7070, %v7070
  %v7268 = vmul.f32 %v7071, %v7071
  %v7269 = vadd.f32 %v7205, %v7206
  %v7270 = vadd.f32 %v7269, %v7207
  %v7271 = vadd.f32 %v7270, %v7208
  %v7272 = vadd.f32 %v7271, %v7209
  %v7273 = vadd.f32 %v7272, %v7210
  %v7274 = vadd.f32 %v7273, %v7211
  %v7275 = vadd.f32 %v7274, %v7212
  %v7276 = vadd.f32 %v7275, %v7213
  %v7277 = vadd.f32 %v7276, %v7214
  %v7278 = vadd.f32 %v7277, %v7215
  %v7279 = vadd.f32 %v7278, %v7216
  %v7280 = vadd.f32 %v7279, %v7217
  %v7281 = vadd.f32 %v7280, %v7218
  %v7282 = vadd.f32 %v7281, %v7219
  %v7283 = vadd.f32 %v7282, %v7220
  %v7284 = vadd.f32 %v7283, %v7221
  %v7285 = vadd.f32 %v7284, %v7222
  %v7286 = vadd.f32 %v7285, %v7223
  %v7287 = vadd.f32 %v7286, %v7224
  %v7288 = vadd.f32 %v7287, %v7225
  %v7289 = vadd.f32 %v7288, %v7226
  %v7290 = vadd.f32 %v7289, %v7227
  %v7291 = vadd.f32 %v7290, %v7228
  %v7292 = vadd.f32 %v7291, %v7229
  %v7293 = vadd.f32 %v7292, %v7230
  %v7294 = vadd.f32 %v7293, %v7231
  %v7295 = vadd.f32 %v7294, %v7232
  %v7296 = vadd.f32 %v7295, %v7233
  %v7297 = vadd.f32 %v7296, %v7234
  %v7298 = vadd.f32 %v7297, %v7235
  %v7299 = vadd.f32 %v7298, %v7236
  %v7300 = vadd.f32 %v7299, %v7237
  %v7301 = vadd.f32 %v7300, %v7238
  %v7302 = vadd.f32 %v7301, %v7239
  %v7303 = vadd.f32 %v7302, %v7240
  %v7304 = vadd.f32 %v7303, %v7241
  %v7305 = vadd.f32 %v7304, %v7242
  %v7306 = vadd.f32 %v7305, %v7243
  %v7307 = vadd.f32 %v7306, %v7244
  %v7308 = vadd.f32 %v7307, %v7245
  %v7309 = vadd.f32 %v7308, %v7246
  %v7310 = vadd.f32 %v7309, %v7247
  %v7311 = vadd.f32 %v7310, %v7248
  %v7312 = vadd.f32 %v7311, %v7249
  %v7313 = vadd.f32 %v7312, %v7250
  %v7314 = vadd.f32 %v7313, %v7251
  %v7315 = vadd.f32 %v7314, %v7252
  %v7316 = vadd.f32 %v7315, %v7253
  %v7317 = vadd.f32 %v7316, %v7254
  %v7318 = vadd.f32 %v7317, %v7255
  %v7319 = vadd.f32 %v7318, %v7256
  %v7320 = vadd.f32 %v7319, %v7257
  %v7321 = vadd.f32 %v7320, %v7258
  %v7322 = vadd.f32 %v7321, %v7259
  %v7323 = vadd.f32 %v7322, %v7260
  %v7324 = vadd.f32 %v7323, %v7261
  %v7325 = vadd.f32 %v7324, %v7262
  %v7326 = vadd.f32 %v7325, %v7263
  %v7327 = vadd.f32 %v7326, %v7264
  %v7328 = vadd.f32 %v7327, %v7265
  %v7329 = vadd.f32 %v7328, %v7266
  %v7330 = vadd.f32 %v7329, %v7267
  %v7331 = vadd.f32 %v7330, %v7268
  %v7332 = vrot.slane %v7331, 4
  %v7333 = vadd.f32 %v7331, %v7332
  %v7334 = vrot.slane %v7333, 2
  %v7335 = vadd.f32 %v7333, %v7334
  %v7336 = vrot.slane %v7335, 1
  %v7337 = vadd.f32 %v7335, %v7336
  %vm7338 = vcmask 1040384
  %v7339 = vsel %vm7338, %v7204, %v7337
  %7340 = vst [vmem:[%s6] sm:$0x3] %v7339
  // Predicated region
  $region22: #{downblock_forward.3} parent=0 // pred_check
    _
  $region23: #{downblock_forward.3} parent=0 // pred_check_branch
    %7342 = sbr.rel (0) target = $region25
  $region24: #{downblock_forward.3} parent=0 // pred_region
    _
  $region25: #{downblock_forward.3} parent=0 // pred_fallthru
    _
  // Predicated region
  $region26: #{downblock_forward.3} parent=0 // pred_check
    _
  $region27: #{downblock_forward.3} parent=0 // pred_check_branch
    %7344 = sbr.rel (0) target = $region29
  $region28: #{downblock_forward.3} parent=0 // pred_region
    _
  $region29: #{downblock_forward.3} parent=0 // pred_fallthru
    _
  // Predicated region
  $region30: #{downblock_forward.3} parent=0 // pred_check
    _
  $region31: #{downblock_forward.3} parent=0 // pred_check_branch
    %7346 = sbr.rel (0) target = $region33
  $region32: #{downblock_forward.3} parent=0 // pred_region
    _
  $region33: #{downblock_forward.3} parent=0 // pred_fallthru
    _
  // Predicated region
  $region34: #{downblock_forward.3} parent=0 // pred_check
    _
  $region35: #{downblock_forward.3} parent=0 // pred_check_branch
    %7348 = sbr.rel (0) target = $region37
  $region36: #{downblock_forward.3} parent=0 // pred_region
    _
  $region37: #{downblock_forward.3} parent=0 // pred_fallthru
    _

</llo_original>
